<compile_context>
chip_gen: v7x
topology: tpu7x:2x2x1
jax: 0.10.0
libtpu: 0.0.40
codegen_flags: <defaults>
</compile_context>

<pallas_src>
import jax
import jax.numpy as jnp
from jax.experimental import pallas as pl
from jax.experimental.pallas import tpu as pltpu


# ---------------------------------------------------------------------------
# in-kernel building blocks (x3 is an f32 value; weights are VMEM refs)
# ---------------------------------------------------------------------------

def _temporal_glu(x3, wpq_ref, bpq_ref, w_res_ref):
    """Gated temporal conv with residual.

    x3        : [T_in, N, Cin]
    wpq_ref   : [K, Cin, 2*Cout]   (P-half | Q-half of the 2*c_out conv)
    bpq_ref   : [1, 2*Cout]
    w_res_ref : [Cin, Cout] zero-pad projection, or None when Cin == Cout
    returns     [T_out, N, Cout]
    """
    K, cin, two_cout = wpq_ref.shape
    cout = two_cout // 2
    t_in, n, _ = x3.shape
    t_out = t_in - K + 1
    rows = t_out * n

    acc = jnp.zeros((rows, two_cout), jnp.float32)
    for k in range(K):                                   # K is small & static
        xk = jax.lax.slice_in_dim(x3, k, k + t_out, axis=0).reshape(rows, cin)
        wk = wpq_ref[k]                                  # [Cin, 2*Cout]
        if cin == 1:
            acc = acc + xk * wk                          # outer product on the VPU
        else:
            acc = acc + jnp.dot(xk, wk, preferred_element_type=jnp.float32)
    acc = acc + bpq_ref[...]

    p = acc[:, :cout]
    q = acc[:, cout:]

    xres = jax.lax.slice_in_dim(x3, K - 1, K - 1 + t_out, axis=0).reshape(rows, cin)
    if w_res_ref is None:                                # Cin == Cout: identity
        res = xres
    elif cin == 1:                                       # zero-pad: broadcast-mul
        res = xres * w_res_ref[...]
    else:
        res = jnp.dot(xres, w_res_ref[...], preferred_element_type=jnp.float32)

    out = (p + res) * jax.nn.sigmoid(q)
    return out.reshape(t_out, n, cout)


def _spatial_conv(x3, a_big_ref, w_ref, b_ref):
    """relu(kron(I_T, A_norm) @ (X @ W) + b), batched over T."""
    t_in, n, cin = x3.shape
    cout = w_ref.shape[1]
    y = jnp.dot(x3.reshape(t_in * n, cin), w_ref[...],
                preferred_element_type=jnp.float32)       # [T*N, Cout]
    z = jnp.dot(a_big_ref[...], y, preferred_element_type=jnp.float32)
    z = jnp.maximum(z + b_ref[...], 0.0)
    return z.reshape(t_in, n, cout)


def _layer_norm(x3, g_ref, b_ref, eps=1e-5):
    """LayerNorm over the trailing [N, C] dims, batched over T."""
    m = jnp.mean(jnp.mean(x3, axis=2, keepdims=True), axis=1, keepdims=True)
    d = x3 - m
    v = jnp.mean(jnp.mean(d * d, axis=2, keepdims=True), axis=1, keepdims=True)
    return (d * jax.lax.rsqrt(v + eps)) * g_ref[...] + b_ref[...]


# ---------------------------------------------------------------------------
# fused forward (pyramid=True branch of STpGCN_ab_bottom_up.forward)
# ---------------------------------------------------------------------------

def stpgcn_bottom_up_forward(params, x_nchw):
    """x_nchw: [B, 1, T, n] (PyTorch NCHW)  ->  logits [B, num_class]."""
    x = jnp.transpose(x_nchw, (0, 2, 3, 1))               # [B, T, N, 1]
    B, T, N, Cin = x.shape
    num_class = params["output"]["wlin"].shape[1]
    flat, treedef = jax.tree_util.tree_flatten(params)

    def kernel(x_ref, *rest):
        o_ref = rest[-1]
        prm = jax.tree_util.tree_unflatten(treedef, rest[:-1])

        def tconv(z, p):
            return _temporal_glu(z, p["wpq"], p["bpq"], p.get("w_res"))

        def sconv(z, p):
            return _spatial_conv(z, p["a_big"], p["w"], p["b"])

        def lnorm(z, p):
            return _layer_norm(z, p["g"], p["b"])

        f, s, th = prm["first"], prm["second"], prm["third"]
        x0 = x_ref[0].astype(jnp.float32)                  # [T, N, 1]

        # --- first branch: T S T N T S T N (kernel kt) ---
        x11 = tconv(x0, f["t0"])
        x12 = sconv(x11, f["s0"])
        x13 = tconv(x12, f["t1"])
        x14 = lnorm(x13, f["ln0"])
        x15 = tconv(x14, f["t2"])
        x16 = sconv(x15, f["s1"])
        x17 = tconv(x16, f["t3"])
        x18 = lnorm(x17, f["ln1"])

        # --- second branch: T S T N (kernel 2*(kt-1)+1) ---
        x21 = tconv(x0, s["t0"])
        x23 = sconv(x21, s["s0"])
        x24 = tconv(x23, s["t1"])
        x26 = lnorm(x24, s["ln0"])

        # --- third branch: T S N (kernel 4*(kt-1)+1) ---
        x31 = tconv(x0, th["t0"])
        x33 = sconv(x31, th["s0"])
        x34 = lnorm(x33, th["ln0"])

        # --- finalconv: Conv2d(32,32,(1,3),stride=(1,3)) over the node axis of
        #     torch.cat([x34, x26, x18], node), as 3 selection matmuls on the
        #     row-stacked branch outputs.
        t_f, n, c = x18.shape
        rows = t_f * n
        stack = jnp.concatenate(
            [x34.reshape(rows, c), x26.reshape(rows, c), x18.reshape(rows, c)],
            axis=0)                                        # [3*rows, C]
        fin = prm["final"]
        cf = fin["w"].shape[2]
        xf = jnp.zeros((rows, cf), jnp.float32) + fin["b"][...]
        for k in range(3):
            yk = jnp.dot(stack, fin["w"][k], preferred_element_type=jnp.float32)
            xf = xf + jnp.dot(fin["sel"][k], yk, preferred_element_type=jnp.float32)

        # --- output head: (T,1) conv -> LayerNorm([n,c]) -> 1x1 conv -> 1x1
        #     conv to one channel -> Linear(n, num_class) ---
        o = prm["output"]
        xf3 = xf.reshape(t_f, n, cf)
        h = jnp.zeros((n, cf), jnp.float32) + o["b1"][...]
        for t in range(t_f):                               # collapse time
            h = h + jnp.dot(xf3[t], o["w1"][t], preferred_element_type=jnp.float32)
        mean = jnp.mean(h, axis=(0, 1), keepdims=True)
        var = jnp.mean((h - mean) ** 2, axis=(0, 1), keepdims=True)
        hn = (h - mean) * jax.lax.rsqrt(var + 1e-5)
        hn = hn * o["g"][...] + o["be"][...]
        h2 = jnp.dot(hn, o["w2"][...], preferred_element_type=jnp.float32) + o["b2"][...]
        v = jnp.dot(h2, o["wfc"][...], preferred_element_type=jnp.float32) + o["bfc"][...]
        out = jnp.sum(v * o["wlin"][...], axis=0, keepdims=True) + o["blin"][...]
        o_ref[0] = out.astype(o_ref.dtype)

    def _const_map(nd):
        return lambda b: (0,) * nd

    in_specs = [pl.BlockSpec((1, T, N, Cin), lambda b: (b, 0, 0, 0))]
    in_specs += [pl.BlockSpec(a.shape, _const_map(a.ndim)) for a in flat]

    out = pl.pallas_call(
        kernel,
        out_shape=jax.ShapeDtypeStruct((B, 1, num_class), x.dtype),
        grid=(B,),
        in_specs=in_specs,
        out_specs=pl.BlockSpec((1, 1, num_class), lambda b: (b, 0, 0)),
        compiler_params=pltpu.CompilerParams(dimension_semantics=("parallel",)),
    )(x, *flat)
    return out[:, 0, :]


# ---------------------------------------------------------------------------
# deterministic in-script parameter construction
# ---------------------------------------------------------------------------

def _dense(key, shape, scale=0.1):
    return scale * jax.random.normal(key, shape, dtype=jnp.float32)


def make_adj(n):
    # Deterministic ring graph with self-loops, symmetric normalization
    # (stand-in for the fixed DGL graph + GraphConv norm='both').
    idx = jnp.arange(n)
    a = jnp.zeros((n, n), jnp.float32)
    a = a.at[idx, (idx + 1) % n].set(1.0)
    a = a.at[idx, (idx - 1) % n].set(1.0)
    a = a + jnp.eye(n, dtype=jnp.float32)
    dinv = 1.0 / jnp.sqrt(jnp.sum(a, axis=1))
    return a * dinv[:, None] * dinv[None, :]


def init_temporal(key, cin, cout, k):
    k1, k2 = jax.random.split(key)
    prm = dict(wpq=_dense(k1, (k, cin, 2 * cout)), bpq=_dense(k2, (1, 2 * cout)))
    if cin != cout:
        # residual: identity when cin == cout (no param), zero-pad channels otherwise
        m = min(cin, cout)
        prm["w_res"] = (jnp.zeros((cin, cout), jnp.float32)
                        .at[jnp.arange(m), jnp.arange(m)].set(1.0))
    return prm


def init_spatial(key, cin, cout, a_norm, t_len):
    k1, k2 = jax.random.split(key)
    a_big = jnp.kron(jnp.eye(t_len, dtype=jnp.float32), a_norm)   # [t*n, t*n]
    return dict(w=_dense(k1, (cin, cout)), b=_dense(k2, (1, cout)), a_big=a_big)


def init_ln(n, c):
    return dict(g=jnp.ones((n, c), jnp.float32), b=jnp.zeros((n, c), jnp.float32))


def init_final(key, n, t_f, cin, cout):
    k1, k2 = jax.random.split(key)
    rows = t_f * n
    jj = jnp.arange(n)
    tt = jnp.arange(t_f)
    mats = []
    for k in range(3):
        m = 3 * jj + k                 # position in the concatenated node axis
        s_idx = m // n                 # which branch output (0: x34, 1: x26, 2: x18)
        ii = m % n                     # node within that branch
        src = (s_idx[None, :] * rows + tt[:, None] * n + ii[None, :]).reshape(-1)
        dst = (tt[:, None] * n + jj[None, :]).reshape(-1)
        mats.append(jnp.zeros((rows, 3 * rows), jnp.float32).at[dst, src].set(1.0))
    return dict(sel=jnp.stack(mats, 0),
                w=_dense(k1, (3, cin, cout)), b=_dense(k2, (1, cout)))


def init_output(key, c, t_out, n, num_class):
    ks = jax.random.split(key, 8)
    return dict(w1=_dense(ks[0], (t_out, c, c)), b1=_dense(ks[1], (1, c)),
                g=jnp.ones((n, c), jnp.float32), be=jnp.zeros((n, c), jnp.float32),
                w2=_dense(ks[2], (c, c)), b2=_dense(ks[3], (1, c)),
                wfc=_dense(ks[4], (c, 1)), bfc=_dense(ks[5], (1, 1)),
                wlin=_dense(ks[6], (n, num_class)), blin=_dense(ks[7], (1, num_class)))


def init_params(key, c, T, kt, n, num_class):
    keys = jax.random.split(key, 16)
    ki = iter(keys)
    A = make_adj(n)
    K1, K2, K3 = kt, (kt - 1) * 2 + 1, (kt - 1) * 4 + 1
    # time lengths seen by each spatial layer
    t_f0 = T - (K1 - 1)                # first branch, after t0
    t_f2 = t_f0 - 2 * (K1 - 1)         # first branch, after t1 and t2
    t_s0 = T - (K2 - 1)                # second branch, after t0
    t_t0 = T - (K3 - 1)                # third branch, after t0
    # control_str = 'TSTNTSTN', pyramid=True
    first = dict(
        t0=init_temporal(next(ki), c[0], c[1], K1),
        s0=init_spatial(next(ki), c[1], c[2], A, t_f0),
        t1=init_temporal(next(ki), c[2], c[3], K1),
        ln0=init_ln(n, c[3]),
        t2=init_temporal(next(ki), c[3], c[4], K1),
        s1=init_spatial(next(ki), c[4], c[5], A, t_f2),
        t3=init_temporal(next(ki), c[5], c[6], K1),
        ln1=init_ln(n, c[6]),
    )
    second = dict(
        t0=init_temporal(next(ki), c[0], c[1], K2),
        s0=init_spatial(next(ki), c[1], c[2], A, t_s0),
        t1=init_temporal(next(ki), c[2], c[3], K2),
        ln0=init_ln(n, c[3]),
    )
    third = dict(
        t0=init_temporal(next(ki), c[0], c[1], K3),
        s0=init_spatial(next(ki), c[1], c[1], A, t_t0),
        ln0=init_ln(n, c[6]),
    )
    t_out = T - (kt - 1) * 4           # 4 temporal layers in 'TSTNTSTN'
    final = init_final(next(ki), n, t_out, 32, 32)   # finalconv is Conv2d(32, 32, ...)
    output = init_output(next(ki), c[6], t_out, n, num_class)
    return dict(first=first, second=second, third=third, final=final, output=output)


if __name__ == "__main__":
    B, T, N, kt, num_class = 2, 8, 16, 2, 7
    # finalconv is hard-wired Conv2d(32, 32, ...), so hidden width must be 32.
    c = [1, 32, 32, 32, 32, 32, 32]

    key = jax.random.PRNGKey(0)
    kp, kx = jax.random.split(key)
    params = init_params(kp, c, T, kt, N, num_class)
    x = jax.random.normal(kx, (B, 1, T, N), dtype=jnp.float32)   # NCHW, like torch

    fwd = jax.jit(stpgcn_bottom_up_forward)
    y = jax.block_until_ready(fwd(params, x))
    assert y.shape == (B, num_class), y.shape
    assert bool(jnp.all(jnp.isfinite(y)))
    print("KERNEL_OK")
</pallas_src>

<mosaic_0001>
module attributes {stable_mosaic.version = 11 : i64} {
  func.func @kernel(%arg0: i32, %arg1: memref<1x8x16x1xf32, #tpu.memory_space<vmem>>, %arg2: memref<1x32xf32, #tpu.memory_space<vmem>>, %arg3: memref<3x64x192xf32, #tpu.memory_space<vmem>>, %arg4: memref<3x32x32xf32, #tpu.memory_space<vmem>>, %arg5: memref<16x32xf32, #tpu.memory_space<vmem>>, %arg6: memref<16x32xf32, #tpu.memory_space<vmem>>, %arg7: memref<16x32xf32, #tpu.memory_space<vmem>>, %arg8: memref<16x32xf32, #tpu.memory_space<vmem>>, %arg9: memref<112x112xf32, #tpu.memory_space<vmem>>, %arg10: memref<1x32xf32, #tpu.memory_space<vmem>>, %arg11: memref<32x32xf32, #tpu.memory_space<vmem>>, %arg12: memref<80x80xf32, #tpu.memory_space<vmem>>, %arg13: memref<1x32xf32, #tpu.memory_space<vmem>>, %arg14: memref<32x32xf32, #tpu.memory_space<vmem>>, %arg15: memref<1x64xf32, #tpu.memory_space<vmem>>, %arg16: memref<1x32xf32, #tpu.memory_space<vmem>>, %arg17: memref<2x1x64xf32, #tpu.memory_space<vmem>>, %arg18: memref<1x64xf32, #tpu.memory_space<vmem>>, %arg19: memref<2x32x64xf32, #tpu.memory_space<vmem>>, %arg20: memref<1x64xf32, #tpu.memory_space<vmem>>, %arg21: memref<2x32x64xf32, #tpu.memory_space<vmem>>, %arg22: memref<1x64xf32, #tpu.memory_space<vmem>>, %arg23: memref<2x32x64xf32, #tpu.memory_space<vmem>>, %arg24: memref<1x32xf32, #tpu.memory_space<vmem>>, %arg25: memref<1x32xf32, #tpu.memory_space<vmem>>, %arg26: memref<16x32xf32, #tpu.memory_space<vmem>>, %arg27: memref<1x1xf32, #tpu.memory_space<vmem>>, %arg28: memref<1x7xf32, #tpu.memory_space<vmem>>, %arg29: memref<16x32xf32, #tpu.memory_space<vmem>>, %arg30: memref<4x32x32xf32, #tpu.memory_space<vmem>>, %arg31: memref<32x32xf32, #tpu.memory_space<vmem>>, %arg32: memref<32x1xf32, #tpu.memory_space<vmem>>, %arg33: memref<16x7xf32, #tpu.memory_space<vmem>>, %arg34: memref<16x32xf32, #tpu.memory_space<vmem>>, %arg35: memref<16x32xf32, #tpu.memory_space<vmem>>, %arg36: memref<96x96xf32, #tpu.memory_space<vmem>>, %arg37: memref<1x32xf32, #tpu.memory_space<vmem>>, %arg38: memref<32x32xf32, #tpu.memory_space<vmem>>, %arg39: memref<1x64xf32, #tpu.memory_space<vmem>>, %arg40: memref<1x32xf32, #tpu.memory_space<vmem>>, %arg41: memref<3x1x64xf32, #tpu.memory_space<vmem>>, %arg42: memref<1x64xf32, #tpu.memory_space<vmem>>, %arg43: memref<3x32x64xf32, #tpu.memory_space<vmem>>, %arg44: memref<16x32xf32, #tpu.memory_space<vmem>>, %arg45: memref<16x32xf32, #tpu.memory_space<vmem>>, %arg46: memref<64x64xf32, #tpu.memory_space<vmem>>, %arg47: memref<1x32xf32, #tpu.memory_space<vmem>>, %arg48: memref<32x32xf32, #tpu.memory_space<vmem>>, %arg49: memref<1x64xf32, #tpu.memory_space<vmem>>, %arg50: memref<1x32xf32, #tpu.memory_space<vmem>>, %arg51: memref<5x1x64xf32, #tpu.memory_space<vmem>>, %arg52: memref<1x1x7xf32, #tpu.memory_space<vmem>>) attributes {dimension_semantics = [#tpu.dimension_semantics<parallel>], iteration_bounds = array<i64: 2>, scalar_prefetch = 0 : i64, scratch_operands = 0 : i64, tpu.core_type = #tpu.core_type<tc>, window_params = [{transform_indices = @transform_0, window_bounds = array<i64: 1, 8, 16, 1>}, {pipeline_mode = #tpu.pipeline_mode<synchronous>, transform_indices = @transform_1, window_bounds = array<i64: 1, 32>}, {pipeline_mode = #tpu.pipeline_mode<synchronous>, transform_indices = @transform_2, window_bounds = array<i64: 3, 64, 192>}, {pipeline_mode = #tpu.pipeline_mode<synchronous>, transform_indices = @transform_3, window_bounds = array<i64: 3, 32, 32>}, {pipeline_mode = #tpu.pipeline_mode<synchronous>, transform_indices = @transform_4, window_bounds = array<i64: 16, 32>}, {pipeline_mode = #tpu.pipeline_mode<synchronous>, transform_indices = @transform_5, window_bounds = array<i64: 16, 32>}, {pipeline_mode = #tpu.pipeline_mode<synchronous>, transform_indices = @transform_6, window_bounds = array<i64: 16, 32>}, {pipeline_mode = #tpu.pipeline_mode<synchronous>, transform_indices = @transform_7, window_bounds = array<i64: 16, 32>}, {pipeline_mode = #tpu.pipeline_mode<synchronous>, transform_indices = @transform_8, window_bounds = array<i64: 112, 112>}, {pipeline_mode = #tpu.pipeline_mode<synchronous>, transform_indices = @transform_9, window_bounds = array<i64: 1, 32>}, {pipeline_mode = #tpu.pipeline_mode<synchronous>, transform_indices = @transform_10, window_bounds = array<i64: 32, 32>}, {pipeline_mode = #tpu.pipeline_mode<synchronous>, transform_indices = @transform_11, window_bounds = array<i64: 80, 80>}, {pipeline_mode = #tpu.pipeline_mode<synchronous>, transform_indices = @transform_12, window_bounds = array<i64: 1, 32>}, {pipeline_mode = #tpu.pipeline_mode<synchronous>, transform_indices = @transform_13, window_bounds = array<i64: 32, 32>}, {pipeline_mode = #tpu.pipeline_mode<synchronous>, transform_indices = @transform_14, window_bounds = array<i64: 1, 64>}, {pipeline_mode = #tpu.pipeline_mode<synchronous>, transform_indices = @transform_15, window_bounds = array<i64: 1, 32>}, {pipeline_mode = #tpu.pipeline_mode<synchronous>, transform_indices = @transform_16, window_bounds = array<i64: 2, 1, 64>}, {pipeline_mode = #tpu.pipeline_mode<synchronous>, transform_indices = @transform_17, window_bounds = array<i64: 1, 64>}, {pipeline_mode = #tpu.pipeline_mode<synchronous>, transform_indices = @transform_18, window_bounds = array<i64: 2, 32, 64>}, {pipeline_mode = #tpu.pipeline_mode<synchronous>, transform_indices = @transform_19, window_bounds = array<i64: 1, 64>}, {pipeline_mode = #tpu.pipeline_mode<synchronous>, transform_indices = @transform_20, window_bounds = array<i64: 2, 32, 64>}, {pipeline_mode = #tpu.pipeline_mode<synchronous>, transform_indices = @transform_21, window_bounds = array<i64: 1, 64>}, {pipeline_mode = #tpu.pipeline_mode<synchronous>, transform_indices = @transform_22, window_bounds = array<i64: 2, 32, 64>}, {pipeline_mode = #tpu.pipeline_mode<synchronous>, transform_indices = @transform_23, window_bounds = array<i64: 1, 32>}, {pipeline_mode = #tpu.pipeline_mode<synchronous>, transform_indices = @transform_24, window_bounds = array<i64: 1, 32>}, {pipeline_mode = #tpu.pipeline_mode<synchronous>, transform_indices = @transform_25, window_bounds = array<i64: 16, 32>}, {pipeline_mode = #tpu.pipeline_mode<synchronous>, transform_indices = @transform_26, window_bounds = array<i64: 1, 1>}, {pipeline_mode = #tpu.pipeline_mode<synchronous>, transform_indices = @transform_27, window_bounds = array<i64: 1, 7>}, {pipeline_mode = #tpu.pipeline_mode<synchronous>, transform_indices = @transform_28, window_bounds = array<i64: 16, 32>}, {pipeline_mode = #tpu.pipeline_mode<synchronous>, transform_indices = @transform_29, window_bounds = array<i64: 4, 32, 32>}, {pipeline_mode = #tpu.pipeline_mode<synchronous>, transform_indices = @transform_30, window_bounds = array<i64: 32, 32>}, {pipeline_mode = #tpu.pipeline_mode<synchronous>, transform_indices = @transform_31, window_bounds = array<i64: 32, 1>}, {pipeline_mode = #tpu.pipeline_mode<synchronous>, transform_indices = @transform_32, window_bounds = array<i64: 16, 7>}, {pipeline_mode = #tpu.pipeline_mode<synchronous>, transform_indices = @transform_33, window_bounds = array<i64: 16, 32>}, {pipeline_mode = #tpu.pipeline_mode<synchronous>, transform_indices = @transform_34, window_bounds = array<i64: 16, 32>}, {pipeline_mode = #tpu.pipeline_mode<synchronous>, transform_indices = @transform_35, window_bounds = array<i64: 96, 96>}, {pipeline_mode = #tpu.pipeline_mode<synchronous>, transform_indices = @transform_36, window_bounds = array<i64: 1, 32>}, {pipeline_mode = #tpu.pipeline_mode<synchronous>, transform_indices = @transform_37, window_bounds = array<i64: 32, 32>}, {pipeline_mode = #tpu.pipeline_mode<synchronous>, transform_indices = @transform_38, window_bounds = array<i64: 1, 64>}, {pipeline_mode = #tpu.pipeline_mode<synchronous>, transform_indices = @transform_39, window_bounds = array<i64: 1, 32>}, {pipeline_mode = #tpu.pipeline_mode<synchronous>, transform_indices = @transform_40, window_bounds = array<i64: 3, 1, 64>}, {pipeline_mode = #tpu.pipeline_mode<synchronous>, transform_indices = @transform_41, window_bounds = array<i64: 1, 64>}, {pipeline_mode = #tpu.pipeline_mode<synchronous>, transform_indices = @transform_42, window_bounds = array<i64: 3, 32, 64>}, {pipeline_mode = #tpu.pipeline_mode<synchronous>, transform_indices = @transform_43, window_bounds = array<i64: 16, 32>}, {pipeline_mode = #tpu.pipeline_mode<synchronous>, transform_indices = @transform_44, window_bounds = array<i64: 16, 32>}, {pipeline_mode = #tpu.pipeline_mode<synchronous>, transform_indices = @transform_45, window_bounds = array<i64: 64, 64>}, {pipeline_mode = #tpu.pipeline_mode<synchronous>, transform_indices = @transform_46, window_bounds = array<i64: 1, 32>}, {pipeline_mode = #tpu.pipeline_mode<synchronous>, transform_indices = @transform_47, window_bounds = array<i64: 32, 32>}, {pipeline_mode = #tpu.pipeline_mode<synchronous>, transform_indices = @transform_48, window_bounds = array<i64: 1, 64>}, {pipeline_mode = #tpu.pipeline_mode<synchronous>, transform_indices = @transform_49, window_bounds = array<i64: 1, 32>}, {pipeline_mode = #tpu.pipeline_mode<synchronous>, transform_indices = @transform_50, window_bounds = array<i64: 5, 1, 64>}, {transform_indices = @transform_51, window_bounds = array<i64: 1, 1, 7>}]} {
    %c0 = arith.constant 0 : index
    %c0_0 = arith.constant 0 : index
    %c0_1 = arith.constant 0 : index
    %c0_2 = arith.constant 0 : index
    %0 = vector.load %arg1[%c0, %c0_0, %c0_1, %c0_2] : memref<1x8x16x1xf32, #tpu.memory_space<vmem>>, vector<1x8x16x1xf32>
    %1 = vector.shape_cast %0 : vector<1x8x16x1xf32> to vector<8x16x1xf32>
    %cst = arith.constant 0.000000e+00 : f32
    %2 = vector.broadcast %cst : f32 to vector<112x64xf32>
    %3 = vector.extract_strided_slice %1 {offsets = [0, 0, 0], sizes = [7, 16, 1], strides = [1, 1, 1]} : vector<8x16x1xf32> to vector<7x16x1xf32>
    %4 = vector.shape_cast %3 : vector<7x16x1xf32> to vector<112x1xf32>
    %c0_3 = arith.constant 0 : index
    %c0_4 = arith.constant 0 : index
    %c0_5 = arith.constant 0 : index
    %5 = vector.load %arg17[%c0_3, %c0_4, %c0_5] : memref<2x1x64xf32, #tpu.memory_space<vmem>>, vector<1x1x64xf32>
    %6 = vector.shape_cast %5 : vector<1x1x64xf32> to vector<1x64xf32>
    %7 = vector.broadcast %4 : vector<112x1xf32> to vector<112x64xf32>
    %8 = vector.broadcast %6 : vector<1x64xf32> to vector<112x64xf32>
    %9 = arith.mulf %7, %8 : vector<112x64xf32>
    %10 = arith.addf %2, %9 : vector<112x64xf32>
    %11 = vector.extract_strided_slice %1 {offsets = [1, 0, 0], sizes = [7, 16, 1], strides = [1, 1, 1]} : vector<8x16x1xf32> to vector<7x16x1xf32>
    %12 = vector.shape_cast %11 : vector<7x16x1xf32> to vector<112x1xf32>
    %c1 = arith.constant 1 : index
    %c0_6 = arith.constant 0 : index
    %c0_7 = arith.constant 0 : index
    %13 = vector.load %arg17[%c1, %c0_6, %c0_7] : memref<2x1x64xf32, #tpu.memory_space<vmem>>, vector<1x1x64xf32>
    %14 = vector.shape_cast %13 : vector<1x1x64xf32> to vector<1x64xf32>
    %15 = vector.broadcast %12 : vector<112x1xf32> to vector<112x64xf32>
    %16 = vector.broadcast %14 : vector<1x64xf32> to vector<112x64xf32>
    %17 = arith.mulf %15, %16 : vector<112x64xf32>
    %18 = arith.addf %10, %17 : vector<112x64xf32>
    %c0_8 = arith.constant 0 : index
    %c0_9 = arith.constant 0 : index
    %19 = vector.load %arg15[%c0_8, %c0_9] : memref<1x64xf32, #tpu.memory_space<vmem>>, vector<1x64xf32>
    %20 = vector.broadcast %19 : vector<1x64xf32> to vector<112x64xf32>
    %21 = arith.addf %18, %20 : vector<112x64xf32>
    %22 = vector.extract_strided_slice %21 {offsets = [0, 0], sizes = [112, 32], strides = [1, 1]} : vector<112x64xf32> to vector<112x32xf32>
    %23 = vector.extract_strided_slice %21 {offsets = [0, 32], sizes = [112, 32], strides = [1, 1]} : vector<112x64xf32> to vector<112x32xf32>
    %24 = vector.extract_strided_slice %1 {offsets = [1, 0, 0], sizes = [7, 16, 1], strides = [1, 1, 1]} : vector<8x16x1xf32> to vector<7x16x1xf32>
    %25 = vector.shape_cast %24 : vector<7x16x1xf32> to vector<112x1xf32>
    %c0_10 = arith.constant 0 : index
    %c0_11 = arith.constant 0 : index
    %26 = vector.load %arg16[%c0_10, %c0_11] : memref<1x32xf32, #tpu.memory_space<vmem>>, vector<1x32xf32>
    %27 = vector.broadcast %25 : vector<112x1xf32> to vector<112x32xf32>
    %28 = vector.broadcast %26 : vector<1x32xf32> to vector<112x32xf32>
    %29 = arith.mulf %27, %28 : vector<112x32xf32>
    %30 = arith.addf %22, %29 : vector<112x32xf32>
    %31 = arith.negf %23 : vector<112x32xf32>
    %32 = math.exp %31 : vector<112x32xf32>
    %cst_12 = arith.constant 1.000000e+00 : f32
    %33 = vector.broadcast %cst_12 : f32 to vector<112x32xf32>
    %34 = arith.addf %33, %32 : vector<112x32xf32>
    %35 = arith.divf %33, %34 : vector<112x32xf32>
    %36 = arith.mulf %30, %35 : vector<112x32xf32>
    %37 = vector.shape_cast %36 : vector<112x32xf32> to vector<7x16x32xf32>
    %38 = vector.shape_cast %37 : vector<7x16x32xf32> to vector<112x32xf32>
    %c0_13 = arith.constant 0 : index
    %c0_14 = arith.constant 0 : index
    %39 = vector.load %arg11[%c0_13, %c0_14] : memref<32x32xf32, #tpu.memory_space<vmem>>, vector<32x32xf32>
    %cst_15 = arith.constant dense<0.000000e+00> : vector<112x32xf32>
    %40 = tpu.matmul %38, %39, %cst_15 {dimension_numbers = #tpu.dot_dimension_numbers<[1], [0], [0], [1], [0, 0, 1, 1], [], []>} : vector<112x32xf32>, vector<32x32xf32>, vector<112x32xf32> -> vector<112x32xf32>
    %c0_16 = arith.constant 0 : index
    %c0_17 = arith.constant 0 : index
    %41 = vector.load %arg9[%c0_16, %c0_17] : memref<112x112xf32, #tpu.memory_space<vmem>>, vector<112x112xf32>
    %cst_18 = arith.constant dense<0.000000e+00> : vector<112x32xf32>
    %42 = tpu.matmul %41, %40, %cst_18 {dimension_numbers = #tpu.dot_dimension_numbers<[1], [0], [0], [1], [0, 0, 1, 1], [], []>} : vector<112x112xf32>, vector<112x32xf32>, vector<112x32xf32> -> vector<112x32xf32>
    %c0_19 = arith.constant 0 : index
    %c0_20 = arith.constant 0 : index
    %43 = vector.load %arg10[%c0_19, %c0_20] : memref<1x32xf32, #tpu.memory_space<vmem>>, vector<1x32xf32>
    %44 = vector.broadcast %43 : vector<1x32xf32> to vector<112x32xf32>
    %45 = arith.addf %42, %44 : vector<112x32xf32>
    %cst_21 = arith.constant 0.000000e+00 : f32
    %46 = vector.broadcast %cst_21 : f32 to vector<112x32xf32>
    %47 = arith.maximumf %45, %46 : vector<112x32xf32>
    %48 = vector.shape_cast %47 : vector<112x32xf32> to vector<7x16x32xf32>
    %cst_22 = arith.constant 0.000000e+00 : f32
    %49 = vector.broadcast %cst_22 : f32 to vector<96x64xf32>
    %50 = vector.extract_strided_slice %48 {offsets = [0, 0, 0], sizes = [6, 16, 32], strides = [1, 1, 1]} : vector<7x16x32xf32> to vector<6x16x32xf32>
    %51 = vector.shape_cast %50 : vector<6x16x32xf32> to vector<96x32xf32>
    %c0_23 = arith.constant 0 : index
    %c0_24 = arith.constant 0 : index
    %c0_25 = arith.constant 0 : index
    %52 = vector.load %arg19[%c0_23, %c0_24, %c0_25] : memref<2x32x64xf32, #tpu.memory_space<vmem>>, vector<1x32x64xf32>
    %53 = vector.shape_cast %52 : vector<1x32x64xf32> to vector<32x64xf32>
    %cst_26 = arith.constant dense<0.000000e+00> : vector<96x64xf32>
    %54 = tpu.matmul %51, %53, %cst_26 {dimension_numbers = #tpu.dot_dimension_numbers<[1], [0], [0], [1], [0, 0, 1, 1], [], []>} : vector<96x32xf32>, vector<32x64xf32>, vector<96x64xf32> -> vector<96x64xf32>
    %55 = arith.addf %49, %54 : vector<96x64xf32>
    %56 = vector.extract_strided_slice %48 {offsets = [1, 0, 0], sizes = [6, 16, 32], strides = [1, 1, 1]} : vector<7x16x32xf32> to vector<6x16x32xf32>
    %57 = vector.shape_cast %56 : vector<6x16x32xf32> to vector<96x32xf32>
    %c1_27 = arith.constant 1 : index
    %c0_28 = arith.constant 0 : index
    %c0_29 = arith.constant 0 : index
    %58 = vector.load %arg19[%c1_27, %c0_28, %c0_29] : memref<2x32x64xf32, #tpu.memory_space<vmem>>, vector<1x32x64xf32>
    %59 = vector.shape_cast %58 : vector<1x32x64xf32> to vector<32x64xf32>
    %cst_30 = arith.constant dense<0.000000e+00> : vector<96x64xf32>
    %60 = tpu.matmul %57, %59, %cst_30 {dimension_numbers = #tpu.dot_dimension_numbers<[1], [0], [0], [1], [0, 0, 1, 1], [], []>} : vector<96x32xf32>, vector<32x64xf32>, vector<96x64xf32> -> vector<96x64xf32>
    %61 = arith.addf %55, %60 : vector<96x64xf32>
    %c0_31 = arith.constant 0 : index
    %c0_32 = arith.constant 0 : index
    %62 = vector.load %arg18[%c0_31, %c0_32] : memref<1x64xf32, #tpu.memory_space<vmem>>, vector<1x64xf32>
    %63 = vector.broadcast %62 : vector<1x64xf32> to vector<96x64xf32>
    %64 = arith.addf %61, %63 : vector<96x64xf32>
    %65 = vector.extract_strided_slice %64 {offsets = [0, 0], sizes = [96, 32], strides = [1, 1]} : vector<96x64xf32> to vector<96x32xf32>
    %66 = vector.extract_strided_slice %64 {offsets = [0, 32], sizes = [96, 32], strides = [1, 1]} : vector<96x64xf32> to vector<96x32xf32>
    %67 = vector.extract_strided_slice %48 {offsets = [1, 0, 0], sizes = [6, 16, 32], strides = [1, 1, 1]} : vector<7x16x32xf32> to vector<6x16x32xf32>
    %68 = vector.shape_cast %67 : vector<6x16x32xf32> to vector<96x32xf32>
    %69 = arith.addf %65, %68 : vector<96x32xf32>
    %70 = arith.negf %66 : vector<96x32xf32>
    %71 = math.exp %70 : vector<96x32xf32>
    %cst_33 = arith.constant 1.000000e+00 : f32
    %72 = vector.broadcast %cst_33 : f32 to vector<96x32xf32>
    %73 = arith.addf %72, %71 : vector<96x32xf32>
    %74 = arith.divf %72, %73 : vector<96x32xf32>
    %75 = arith.mulf %69, %74 : vector<96x32xf32>
    %76 = vector.shape_cast %75 : vector<96x32xf32> to vector<6x16x32xf32>
    %cst_34 = arith.constant dense<0.000000e+00> : vector<6x16xf32>
    %77 = vector.multi_reduction <add>, %76, %cst_34 [2] : vector<6x16x32xf32> to vector<6x16xf32>
    %78 = vector.shape_cast %77 : vector<6x16xf32> to vector<6x16x1xf32>
    %cst_35 = arith.constant 3.200000e+01 : f32
    %79 = vector.broadcast %cst_35 : f32 to vector<6x16x1xf32>
    %80 = arith.divf %78, %79 : vector<6x16x1xf32>
    %cst_36 = arith.constant dense<0.000000e+00> : vector<6x1xf32>
    %81 = vector.multi_reduction <add>, %80, %cst_36 [1] : vector<6x16x1xf32> to vector<6x1xf32>
    %82 = vector.shape_cast %81 : vector<6x1xf32> to vector<6x1x1xf32>
    %cst_37 = arith.constant 1.600000e+01 : f32
    %83 = vector.broadcast %cst_37 : f32 to vector<6x1x1xf32>
    %84 = arith.divf %82, %83 : vector<6x1x1xf32>
    %85 = vector.broadcast %84 : vector<6x1x1xf32> to vector<6x16x32xf32>
    %86 = arith.subf %76, %85 : vector<6x16x32xf32>
    %87 = arith.mulf %86, %86 : vector<6x16x32xf32>
    %cst_38 = arith.constant dense<0.000000e+00> : vector<6x16xf32>
    %88 = vector.multi_reduction <add>, %87, %cst_38 [2] : vector<6x16x32xf32> to vector<6x16xf32>
    %89 = vector.shape_cast %88 : vector<6x16xf32> to vector<6x16x1xf32>
    %cst_39 = arith.constant 3.200000e+01 : f32
    %90 = vector.broadcast %cst_39 : f32 to vector<6x16x1xf32>
    %91 = arith.divf %89, %90 : vector<6x16x1xf32>
    %cst_40 = arith.constant dense<0.000000e+00> : vector<6x1xf32>
    %92 = vector.multi_reduction <add>, %91, %cst_40 [1] : vector<6x16x1xf32> to vector<6x1xf32>
    %93 = vector.shape_cast %92 : vector<6x1xf32> to vector<6x1x1xf32>
    %cst_41 = arith.constant 1.600000e+01 : f32
    %94 = vector.broadcast %cst_41 : f32 to vector<6x1x1xf32>
    %95 = arith.divf %93, %94 : vector<6x1x1xf32>
    %cst_42 = arith.constant 9.99999974E-6 : f32
    %96 = vector.broadcast %cst_42 : f32 to vector<6x1x1xf32>
    %97 = arith.addf %95, %96 : vector<6x1x1xf32>
    %98 = math.rsqrt %97 : vector<6x1x1xf32>
    %99 = vector.broadcast %98 : vector<6x1x1xf32> to vector<6x16x32xf32>
    %100 = arith.mulf %86, %99 : vector<6x16x32xf32>
    %c0_43 = arith.constant 0 : index
    %c0_44 = arith.constant 0 : index
    %101 = vector.load %arg6[%c0_43, %c0_44] : memref<16x32xf32, #tpu.memory_space<vmem>>, vector<16x32xf32>
    %102 = vector.shape_cast %101 : vector<16x32xf32> to vector<1x16x32xf32>
    %103 = vector.broadcast %102 : vector<1x16x32xf32> to vector<6x16x32xf32>
    %104 = arith.mulf %100, %103 : vector<6x16x32xf32>
    %c0_45 = arith.constant 0 : index
    %c0_46 = arith.constant 0 : index
    %105 = vector.load %arg5[%c0_45, %c0_46] : memref<16x32xf32, #tpu.memory_space<vmem>>, vector<16x32xf32>
    %106 = vector.shape_cast %105 : vector<16x32xf32> to vector<1x16x32xf32>
    %107 = vector.broadcast %106 : vector<1x16x32xf32> to vector<6x16x32xf32>
    %108 = arith.addf %104, %107 : vector<6x16x32xf32>
    %cst_47 = arith.constant 0.000000e+00 : f32
    %109 = vector.broadcast %cst_47 : f32 to vector<80x64xf32>
    %110 = vector.extract_strided_slice %108 {offsets = [0, 0, 0], sizes = [5, 16, 32], strides = [1, 1, 1]} : vector<6x16x32xf32> to vector<5x16x32xf32>
    %111 = vector.shape_cast %110 : vector<5x16x32xf32> to vector<80x32xf32>
    %c0_48 = arith.constant 0 : index
    %c0_49 = arith.constant 0 : index
    %c0_50 = arith.constant 0 : index
    %112 = vector.load %arg21[%c0_48, %c0_49, %c0_50] : memref<2x32x64xf32, #tpu.memory_space<vmem>>, vector<1x32x64xf32>
    %113 = vector.shape_cast %112 : vector<1x32x64xf32> to vector<32x64xf32>
    %cst_51 = arith.constant dense<0.000000e+00> : vector<80x64xf32>
    %114 = tpu.matmul %111, %113, %cst_51 {dimension_numbers = #tpu.dot_dimension_numbers<[1], [0], [0], [1], [0, 0, 1, 1], [], []>} : vector<80x32xf32>, vector<32x64xf32>, vector<80x64xf32> -> vector<80x64xf32>
    %115 = arith.addf %109, %114 : vector<80x64xf32>
    %116 = vector.extract_strided_slice %108 {offsets = [1, 0, 0], sizes = [5, 16, 32], strides = [1, 1, 1]} : vector<6x16x32xf32> to vector<5x16x32xf32>
    %117 = vector.shape_cast %116 : vector<5x16x32xf32> to vector<80x32xf32>
    %c1_52 = arith.constant 1 : index
    %c0_53 = arith.constant 0 : index
    %c0_54 = arith.constant 0 : index
    %118 = vector.load %arg21[%c1_52, %c0_53, %c0_54] : memref<2x32x64xf32, #tpu.memory_space<vmem>>, vector<1x32x64xf32>
    %119 = vector.shape_cast %118 : vector<1x32x64xf32> to vector<32x64xf32>
    %cst_55 = arith.constant dense<0.000000e+00> : vector<80x64xf32>
    %120 = tpu.matmul %117, %119, %cst_55 {dimension_numbers = #tpu.dot_dimension_numbers<[1], [0], [0], [1], [0, 0, 1, 1], [], []>} : vector<80x32xf32>, vector<32x64xf32>, vector<80x64xf32> -> vector<80x64xf32>
    %121 = arith.addf %115, %120 : vector<80x64xf32>
    %c0_56 = arith.constant 0 : index
    %c0_57 = arith.constant 0 : index
    %122 = vector.load %arg20[%c0_56, %c0_57] : memref<1x64xf32, #tpu.memory_space<vmem>>, vector<1x64xf32>
    %123 = vector.broadcast %122 : vector<1x64xf32> to vector<80x64xf32>
    %124 = arith.addf %121, %123 : vector<80x64xf32>
    %125 = vector.extract_strided_slice %124 {offsets = [0, 0], sizes = [80, 32], strides = [1, 1]} : vector<80x64xf32> to vector<80x32xf32>
    %126 = vector.extract_strided_slice %124 {offsets = [0, 32], sizes = [80, 32], strides = [1, 1]} : vector<80x64xf32> to vector<80x32xf32>
    %127 = vector.extract_strided_slice %108 {offsets = [1, 0, 0], sizes = [5, 16, 32], strides = [1, 1, 1]} : vector<6x16x32xf32> to vector<5x16x32xf32>
    %128 = vector.shape_cast %127 : vector<5x16x32xf32> to vector<80x32xf32>
    %129 = arith.addf %125, %128 : vector<80x32xf32>
    %130 = arith.negf %126 : vector<80x32xf32>
    %131 = math.exp %130 : vector<80x32xf32>
    %cst_58 = arith.constant 1.000000e+00 : f32
    %132 = vector.broadcast %cst_58 : f32 to vector<80x32xf32>
    %133 = arith.addf %132, %131 : vector<80x32xf32>
    %134 = arith.divf %132, %133 : vector<80x32xf32>
    %135 = arith.mulf %129, %134 : vector<80x32xf32>
    %136 = vector.shape_cast %135 : vector<80x32xf32> to vector<5x16x32xf32>
    %137 = vector.shape_cast %136 : vector<5x16x32xf32> to vector<80x32xf32>
    %c0_59 = arith.constant 0 : index
    %c0_60 = arith.constant 0 : index
    %138 = vector.load %arg14[%c0_59, %c0_60] : memref<32x32xf32, #tpu.memory_space<vmem>>, vector<32x32xf32>
    %cst_61 = arith.constant dense<0.000000e+00> : vector<80x32xf32>
    %139 = tpu.matmul %137, %138, %cst_61 {dimension_numbers = #tpu.dot_dimension_numbers<[1], [0], [0], [1], [0, 0, 1, 1], [], []>} : vector<80x32xf32>, vector<32x32xf32>, vector<80x32xf32> -> vector<80x32xf32>
    %c0_62 = arith.constant 0 : index
    %c0_63 = arith.constant 0 : index
    %140 = vector.load %arg12[%c0_62, %c0_63] : memref<80x80xf32, #tpu.memory_space<vmem>>, vector<80x80xf32>
    %cst_64 = arith.constant dense<0.000000e+00> : vector<80x32xf32>
    %141 = tpu.matmul %140, %139, %cst_64 {dimension_numbers = #tpu.dot_dimension_numbers<[1], [0], [0], [1], [0, 0, 1, 1], [], []>} : vector<80x80xf32>, vector<80x32xf32>, vector<80x32xf32> -> vector<80x32xf32>
    %c0_65 = arith.constant 0 : index
    %c0_66 = arith.constant 0 : index
    %142 = vector.load %arg13[%c0_65, %c0_66] : memref<1x32xf32, #tpu.memory_space<vmem>>, vector<1x32xf32>
    %143 = vector.broadcast %142 : vector<1x32xf32> to vector<80x32xf32>
    %144 = arith.addf %141, %143 : vector<80x32xf32>
    %cst_67 = arith.constant 0.000000e+00 : f32
    %145 = vector.broadcast %cst_67 : f32 to vector<80x32xf32>
    %146 = arith.maximumf %144, %145 : vector<80x32xf32>
    %147 = vector.shape_cast %146 : vector<80x32xf32> to vector<5x16x32xf32>
    %cst_68 = arith.constant 0.000000e+00 : f32
    %148 = vector.broadcast %cst_68 : f32 to vector<64x64xf32>
    %149 = vector.extract_strided_slice %147 {offsets = [0, 0, 0], sizes = [4, 16, 32], strides = [1, 1, 1]} : vector<5x16x32xf32> to vector<4x16x32xf32>
    %150 = vector.shape_cast %149 : vector<4x16x32xf32> to vector<64x32xf32>
    %c0_69 = arith.constant 0 : index
    %c0_70 = arith.constant 0 : index
    %c0_71 = arith.constant 0 : index
    %151 = vector.load %arg23[%c0_69, %c0_70, %c0_71] : memref<2x32x64xf32, #tpu.memory_space<vmem>>, vector<1x32x64xf32>
    %152 = vector.shape_cast %151 : vector<1x32x64xf32> to vector<32x64xf32>
    %cst_72 = arith.constant dense<0.000000e+00> : vector<64x64xf32>
    %153 = tpu.matmul %150, %152, %cst_72 {dimension_numbers = #tpu.dot_dimension_numbers<[1], [0], [0], [1], [0, 0, 1, 1], [], []>} : vector<64x32xf32>, vector<32x64xf32>, vector<64x64xf32> -> vector<64x64xf32>
    %154 = arith.addf %148, %153 : vector<64x64xf32>
    %155 = vector.extract_strided_slice %147 {offsets = [1, 0, 0], sizes = [4, 16, 32], strides = [1, 1, 1]} : vector<5x16x32xf32> to vector<4x16x32xf32>
    %156 = vector.shape_cast %155 : vector<4x16x32xf32> to vector<64x32xf32>
    %c1_73 = arith.constant 1 : index
    %c0_74 = arith.constant 0 : index
    %c0_75 = arith.constant 0 : index
    %157 = vector.load %arg23[%c1_73, %c0_74, %c0_75] : memref<2x32x64xf32, #tpu.memory_space<vmem>>, vector<1x32x64xf32>
    %158 = vector.shape_cast %157 : vector<1x32x64xf32> to vector<32x64xf32>
    %cst_76 = arith.constant dense<0.000000e+00> : vector<64x64xf32>
    %159 = tpu.matmul %156, %158, %cst_76 {dimension_numbers = #tpu.dot_dimension_numbers<[1], [0], [0], [1], [0, 0, 1, 1], [], []>} : vector<64x32xf32>, vector<32x64xf32>, vector<64x64xf32> -> vector<64x64xf32>
    %160 = arith.addf %154, %159 : vector<64x64xf32>
    %c0_77 = arith.constant 0 : index
    %c0_78 = arith.constant 0 : index
    %161 = vector.load %arg22[%c0_77, %c0_78] : memref<1x64xf32, #tpu.memory_space<vmem>>, vector<1x64xf32>
    %162 = vector.broadcast %161 : vector<1x64xf32> to vector<64x64xf32>
    %163 = arith.addf %160, %162 : vector<64x64xf32>
    %164 = vector.extract_strided_slice %163 {offsets = [0, 0], sizes = [64, 32], strides = [1, 1]} : vector<64x64xf32> to vector<64x32xf32>
    %165 = vector.extract_strided_slice %163 {offsets = [0, 32], sizes = [64, 32], strides = [1, 1]} : vector<64x64xf32> to vector<64x32xf32>
    %166 = vector.extract_strided_slice %147 {offsets = [1, 0, 0], sizes = [4, 16, 32], strides = [1, 1, 1]} : vector<5x16x32xf32> to vector<4x16x32xf32>
    %167 = vector.shape_cast %166 : vector<4x16x32xf32> to vector<64x32xf32>
    %168 = arith.addf %164, %167 : vector<64x32xf32>
    %169 = arith.negf %165 : vector<64x32xf32>
    %170 = math.exp %169 : vector<64x32xf32>
    %cst_79 = arith.constant 1.000000e+00 : f32
    %171 = vector.broadcast %cst_79 : f32 to vector<64x32xf32>
    %172 = arith.addf %171, %170 : vector<64x32xf32>
    %173 = arith.divf %171, %172 : vector<64x32xf32>
    %174 = arith.mulf %168, %173 : vector<64x32xf32>
    %175 = vector.shape_cast %174 : vector<64x32xf32> to vector<4x16x32xf32>
    %cst_80 = arith.constant dense<0.000000e+00> : vector<4x16xf32>
    %176 = vector.multi_reduction <add>, %175, %cst_80 [2] : vector<4x16x32xf32> to vector<4x16xf32>
    %177 = vector.shape_cast %176 : vector<4x16xf32> to vector<4x16x1xf32>
    %cst_81 = arith.constant 3.200000e+01 : f32
    %178 = vector.broadcast %cst_81 : f32 to vector<4x16x1xf32>
    %179 = arith.divf %177, %178 : vector<4x16x1xf32>
    %cst_82 = arith.constant dense<0.000000e+00> : vector<4x1xf32>
    %180 = vector.multi_reduction <add>, %179, %cst_82 [1] : vector<4x16x1xf32> to vector<4x1xf32>
    %181 = vector.shape_cast %180 : vector<4x1xf32> to vector<4x1x1xf32>
    %cst_83 = arith.constant 1.600000e+01 : f32
    %182 = vector.broadcast %cst_83 : f32 to vector<4x1x1xf32>
    %183 = arith.divf %181, %182 : vector<4x1x1xf32>
    %184 = vector.broadcast %183 : vector<4x1x1xf32> to vector<4x16x32xf32>
    %185 = arith.subf %175, %184 : vector<4x16x32xf32>
    %186 = arith.mulf %185, %185 : vector<4x16x32xf32>
    %cst_84 = arith.constant dense<0.000000e+00> : vector<4x16xf32>
    %187 = vector.multi_reduction <add>, %186, %cst_84 [2] : vector<4x16x32xf32> to vector<4x16xf32>
    %188 = vector.shape_cast %187 : vector<4x16xf32> to vector<4x16x1xf32>
    %cst_85 = arith.constant 3.200000e+01 : f32
    %189 = vector.broadcast %cst_85 : f32 to vector<4x16x1xf32>
    %190 = arith.divf %188, %189 : vector<4x16x1xf32>
    %cst_86 = arith.constant dense<0.000000e+00> : vector<4x1xf32>
    %191 = vector.multi_reduction <add>, %190, %cst_86 [1] : vector<4x16x1xf32> to vector<4x1xf32>
    %192 = vector.shape_cast %191 : vector<4x1xf32> to vector<4x1x1xf32>
    %cst_87 = arith.constant 1.600000e+01 : f32
    %193 = vector.broadcast %cst_87 : f32 to vector<4x1x1xf32>
    %194 = arith.divf %192, %193 : vector<4x1x1xf32>
    %cst_88 = arith.constant 9.99999974E-6 : f32
    %195 = vector.broadcast %cst_88 : f32 to vector<4x1x1xf32>
    %196 = arith.addf %194, %195 : vector<4x1x1xf32>
    %197 = math.rsqrt %196 : vector<4x1x1xf32>
    %198 = vector.broadcast %197 : vector<4x1x1xf32> to vector<4x16x32xf32>
    %199 = arith.mulf %185, %198 : vector<4x16x32xf32>
    %c0_89 = arith.constant 0 : index
    %c0_90 = arith.constant 0 : index
    %200 = vector.load %arg8[%c0_89, %c0_90] : memref<16x32xf32, #tpu.memory_space<vmem>>, vector<16x32xf32>
    %201 = vector.shape_cast %200 : vector<16x32xf32> to vector<1x16x32xf32>
    %202 = vector.broadcast %201 : vector<1x16x32xf32> to vector<4x16x32xf32>
    %203 = arith.mulf %199, %202 : vector<4x16x32xf32>
    %c0_91 = arith.constant 0 : index
    %c0_92 = arith.constant 0 : index
    %204 = vector.load %arg7[%c0_91, %c0_92] : memref<16x32xf32, #tpu.memory_space<vmem>>, vector<16x32xf32>
    %205 = vector.shape_cast %204 : vector<16x32xf32> to vector<1x16x32xf32>
    %206 = vector.broadcast %205 : vector<1x16x32xf32> to vector<4x16x32xf32>
    %207 = arith.addf %203, %206 : vector<4x16x32xf32>
    %cst_93 = arith.constant 0.000000e+00 : f32
    %208 = vector.broadcast %cst_93 : f32 to vector<96x64xf32>
    %209 = vector.extract_strided_slice %1 {offsets = [0, 0, 0], sizes = [6, 16, 1], strides = [1, 1, 1]} : vector<8x16x1xf32> to vector<6x16x1xf32>
    %210 = vector.shape_cast %209 : vector<6x16x1xf32> to vector<96x1xf32>
    %c0_94 = arith.constant 0 : index
    %c0_95 = arith.constant 0 : index
    %c0_96 = arith.constant 0 : index
    %211 = vector.load %arg41[%c0_94, %c0_95, %c0_96] : memref<3x1x64xf32, #tpu.memory_space<vmem>>, vector<1x1x64xf32>
    %212 = vector.shape_cast %211 : vector<1x1x64xf32> to vector<1x64xf32>
    %213 = vector.broadcast %210 : vector<96x1xf32> to vector<96x64xf32>
    %214 = vector.broadcast %212 : vector<1x64xf32> to vector<96x64xf32>
    %215 = arith.mulf %213, %214 : vector<96x64xf32>
    %216 = arith.addf %208, %215 : vector<96x64xf32>
    %217 = vector.extract_strided_slice %1 {offsets = [1, 0, 0], sizes = [6, 16, 1], strides = [1, 1, 1]} : vector<8x16x1xf32> to vector<6x16x1xf32>
    %218 = vector.shape_cast %217 : vector<6x16x1xf32> to vector<96x1xf32>
    %c1_97 = arith.constant 1 : index
    %c0_98 = arith.constant 0 : index
    %c0_99 = arith.constant 0 : index
    %219 = vector.load %arg41[%c1_97, %c0_98, %c0_99] : memref<3x1x64xf32, #tpu.memory_space<vmem>>, vector<1x1x64xf32>
    %220 = vector.shape_cast %219 : vector<1x1x64xf32> to vector<1x64xf32>
    %221 = vector.broadcast %218 : vector<96x1xf32> to vector<96x64xf32>
    %222 = vector.broadcast %220 : vector<1x64xf32> to vector<96x64xf32>
    %223 = arith.mulf %221, %222 : vector<96x64xf32>
    %224 = arith.addf %216, %223 : vector<96x64xf32>
    %225 = vector.extract_strided_slice %1 {offsets = [2, 0, 0], sizes = [6, 16, 1], strides = [1, 1, 1]} : vector<8x16x1xf32> to vector<6x16x1xf32>
    %226 = vector.shape_cast %225 : vector<6x16x1xf32> to vector<96x1xf32>
    %c2 = arith.constant 2 : index
    %c0_100 = arith.constant 0 : index
    %c0_101 = arith.constant 0 : index
    %227 = vector.load %arg41[%c2, %c0_100, %c0_101] : memref<3x1x64xf32, #tpu.memory_space<vmem>>, vector<1x1x64xf32>
    %228 = vector.shape_cast %227 : vector<1x1x64xf32> to vector<1x64xf32>
    %229 = vector.broadcast %226 : vector<96x1xf32> to vector<96x64xf32>
    %230 = vector.broadcast %228 : vector<1x64xf32> to vector<96x64xf32>
    %231 = arith.mulf %229, %230 : vector<96x64xf32>
    %232 = arith.addf %224, %231 : vector<96x64xf32>
    %c0_102 = arith.constant 0 : index
    %c0_103 = arith.constant 0 : index
    %233 = vector.load %arg39[%c0_102, %c0_103] : memref<1x64xf32, #tpu.memory_space<vmem>>, vector<1x64xf32>
    %234 = vector.broadcast %233 : vector<1x64xf32> to vector<96x64xf32>
    %235 = arith.addf %232, %234 : vector<96x64xf32>
    %236 = vector.extract_strided_slice %235 {offsets = [0, 0], sizes = [96, 32], strides = [1, 1]} : vector<96x64xf32> to vector<96x32xf32>
    %237 = vector.extract_strided_slice %235 {offsets = [0, 32], sizes = [96, 32], strides = [1, 1]} : vector<96x64xf32> to vector<96x32xf32>
    %238 = vector.extract_strided_slice %1 {offsets = [2, 0, 0], sizes = [6, 16, 1], strides = [1, 1, 1]} : vector<8x16x1xf32> to vector<6x16x1xf32>
    %239 = vector.shape_cast %238 : vector<6x16x1xf32> to vector<96x1xf32>
    %c0_104 = arith.constant 0 : index
    %c0_105 = arith.constant 0 : index
    %240 = vector.load %arg40[%c0_104, %c0_105] : memref<1x32xf32, #tpu.memory_space<vmem>>, vector<1x32xf32>
    %241 = vector.broadcast %239 : vector<96x1xf32> to vector<96x32xf32>
    %242 = vector.broadcast %240 : vector<1x32xf32> to vector<96x32xf32>
    %243 = arith.mulf %241, %242 : vector<96x32xf32>
    %244 = arith.addf %236, %243 : vector<96x32xf32>
    %245 = arith.negf %237 : vector<96x32xf32>
    %246 = math.exp %245 : vector<96x32xf32>
    %cst_106 = arith.constant 1.000000e+00 : f32
    %247 = vector.broadcast %cst_106 : f32 to vector<96x32xf32>
    %248 = arith.addf %247, %246 : vector<96x32xf32>
    %249 = arith.divf %247, %248 : vector<96x32xf32>
    %250 = arith.mulf %244, %249 : vector<96x32xf32>
    %251 = vector.shape_cast %250 : vector<96x32xf32> to vector<6x16x32xf32>
    %252 = vector.shape_cast %251 : vector<6x16x32xf32> to vector<96x32xf32>
    %c0_107 = arith.constant 0 : index
    %c0_108 = arith.constant 0 : index
    %253 = vector.load %arg38[%c0_107, %c0_108] : memref<32x32xf32, #tpu.memory_space<vmem>>, vector<32x32xf32>
    %cst_109 = arith.constant dense<0.000000e+00> : vector<96x32xf32>
    %254 = tpu.matmul %252, %253, %cst_109 {dimension_numbers = #tpu.dot_dimension_numbers<[1], [0], [0], [1], [0, 0, 1, 1], [], []>} : vector<96x32xf32>, vector<32x32xf32>, vector<96x32xf32> -> vector<96x32xf32>
    %c0_110 = arith.constant 0 : index
    %c0_111 = arith.constant 0 : index
    %255 = vector.load %arg36[%c0_110, %c0_111] : memref<96x96xf32, #tpu.memory_space<vmem>>, vector<96x96xf32>
    %cst_112 = arith.constant dense<0.000000e+00> : vector<96x32xf32>
    %256 = tpu.matmul %255, %254, %cst_112 {dimension_numbers = #tpu.dot_dimension_numbers<[1], [0], [0], [1], [0, 0, 1, 1], [], []>} : vector<96x96xf32>, vector<96x32xf32>, vector<96x32xf32> -> vector<96x32xf32>
    %c0_113 = arith.constant 0 : index
    %c0_114 = arith.constant 0 : index
    %257 = vector.load %arg37[%c0_113, %c0_114] : memref<1x32xf32, #tpu.memory_space<vmem>>, vector<1x32xf32>
    %258 = vector.broadcast %257 : vector<1x32xf32> to vector<96x32xf32>
    %259 = arith.addf %256, %258 : vector<96x32xf32>
    %cst_115 = arith.constant 0.000000e+00 : f32
    %260 = vector.broadcast %cst_115 : f32 to vector<96x32xf32>
    %261 = arith.maximumf %259, %260 : vector<96x32xf32>
    %262 = vector.shape_cast %261 : vector<96x32xf32> to vector<6x16x32xf32>
    %cst_116 = arith.constant 0.000000e+00 : f32
    %263 = vector.broadcast %cst_116 : f32 to vector<64x64xf32>
    %264 = vector.extract_strided_slice %262 {offsets = [0, 0, 0], sizes = [4, 16, 32], strides = [1, 1, 1]} : vector<6x16x32xf32> to vector<4x16x32xf32>
    %265 = vector.shape_cast %264 : vector<4x16x32xf32> to vector<64x32xf32>
    %c0_117 = arith.constant 0 : index
    %c0_118 = arith.constant 0 : index
    %c0_119 = arith.constant 0 : index
    %266 = vector.load %arg43[%c0_117, %c0_118, %c0_119] : memref<3x32x64xf32, #tpu.memory_space<vmem>>, vector<1x32x64xf32>
    %267 = vector.shape_cast %266 : vector<1x32x64xf32> to vector<32x64xf32>
    %cst_120 = arith.constant dense<0.000000e+00> : vector<64x64xf32>
    %268 = tpu.matmul %265, %267, %cst_120 {dimension_numbers = #tpu.dot_dimension_numbers<[1], [0], [0], [1], [0, 0, 1, 1], [], []>} : vector<64x32xf32>, vector<32x64xf32>, vector<64x64xf32> -> vector<64x64xf32>
    %269 = arith.addf %263, %268 : vector<64x64xf32>
    %270 = vector.extract_strided_slice %262 {offsets = [1, 0, 0], sizes = [4, 16, 32], strides = [1, 1, 1]} : vector<6x16x32xf32> to vector<4x16x32xf32>
    %271 = vector.shape_cast %270 : vector<4x16x32xf32> to vector<64x32xf32>
    %c1_121 = arith.constant 1 : index
    %c0_122 = arith.constant 0 : index
    %c0_123 = arith.constant 0 : index
    %272 = vector.load %arg43[%c1_121, %c0_122, %c0_123] : memref<3x32x64xf32, #tpu.memory_space<vmem>>, vector<1x32x64xf32>
    %273 = vector.shape_cast %272 : vector<1x32x64xf32> to vector<32x64xf32>
    %cst_124 = arith.constant dense<0.000000e+00> : vector<64x64xf32>
    %274 = tpu.matmul %271, %273, %cst_124 {dimension_numbers = #tpu.dot_dimension_numbers<[1], [0], [0], [1], [0, 0, 1, 1], [], []>} : vector<64x32xf32>, vector<32x64xf32>, vector<64x64xf32> -> vector<64x64xf32>
    %275 = arith.addf %269, %274 : vector<64x64xf32>
    %276 = vector.extract_strided_slice %262 {offsets = [2, 0, 0], sizes = [4, 16, 32], strides = [1, 1, 1]} : vector<6x16x32xf32> to vector<4x16x32xf32>
    %277 = vector.shape_cast %276 : vector<4x16x32xf32> to vector<64x32xf32>
    %c2_125 = arith.constant 2 : index
    %c0_126 = arith.constant 0 : index
    %c0_127 = arith.constant 0 : index
    %278 = vector.load %arg43[%c2_125, %c0_126, %c0_127] : memref<3x32x64xf32, #tpu.memory_space<vmem>>, vector<1x32x64xf32>
    %279 = vector.shape_cast %278 : vector<1x32x64xf32> to vector<32x64xf32>
    %cst_128 = arith.constant dense<0.000000e+00> : vector<64x64xf32>
    %280 = tpu.matmul %277, %279, %cst_128 {dimension_numbers = #tpu.dot_dimension_numbers<[1], [0], [0], [1], [0, 0, 1, 1], [], []>} : vector<64x32xf32>, vector<32x64xf32>, vector<64x64xf32> -> vector<64x64xf32>
    %281 = arith.addf %275, %280 : vector<64x64xf32>
    %c0_129 = arith.constant 0 : index
    %c0_130 = arith.constant 0 : index
    %282 = vector.load %arg42[%c0_129, %c0_130] : memref<1x64xf32, #tpu.memory_space<vmem>>, vector<1x64xf32>
    %283 = vector.broadcast %282 : vector<1x64xf32> to vector<64x64xf32>
    %284 = arith.addf %281, %283 : vector<64x64xf32>
    %285 = vector.extract_strided_slice %284 {offsets = [0, 0], sizes = [64, 32], strides = [1, 1]} : vector<64x64xf32> to vector<64x32xf32>
    %286 = vector.extract_strided_slice %284 {offsets = [0, 32], sizes = [64, 32], strides = [1, 1]} : vector<64x64xf32> to vector<64x32xf32>
    %287 = vector.extract_strided_slice %262 {offsets = [2, 0, 0], sizes = [4, 16, 32], strides = [1, 1, 1]} : vector<6x16x32xf32> to vector<4x16x32xf32>
    %288 = vector.shape_cast %287 : vector<4x16x32xf32> to vector<64x32xf32>
    %289 = arith.addf %285, %288 : vector<64x32xf32>
    %290 = arith.negf %286 : vector<64x32xf32>
    %291 = math.exp %290 : vector<64x32xf32>
    %cst_131 = arith.constant 1.000000e+00 : f32
    %292 = vector.broadcast %cst_131 : f32 to vector<64x32xf32>
    %293 = arith.addf %292, %291 : vector<64x32xf32>
    %294 = arith.divf %292, %293 : vector<64x32xf32>
    %295 = arith.mulf %289, %294 : vector<64x32xf32>
    %296 = vector.shape_cast %295 : vector<64x32xf32> to vector<4x16x32xf32>
    %cst_132 = arith.constant dense<0.000000e+00> : vector<4x16xf32>
    %297 = vector.multi_reduction <add>, %296, %cst_132 [2] : vector<4x16x32xf32> to vector<4x16xf32>
    %298 = vector.shape_cast %297 : vector<4x16xf32> to vector<4x16x1xf32>
    %cst_133 = arith.constant 3.200000e+01 : f32
    %299 = vector.broadcast %cst_133 : f32 to vector<4x16x1xf32>
    %300 = arith.divf %298, %299 : vector<4x16x1xf32>
    %cst_134 = arith.constant dense<0.000000e+00> : vector<4x1xf32>
    %301 = vector.multi_reduction <add>, %300, %cst_134 [1] : vector<4x16x1xf32> to vector<4x1xf32>
    %302 = vector.shape_cast %301 : vector<4x1xf32> to vector<4x1x1xf32>
    %cst_135 = arith.constant 1.600000e+01 : f32
    %303 = vector.broadcast %cst_135 : f32 to vector<4x1x1xf32>
    %304 = arith.divf %302, %303 : vector<4x1x1xf32>
    %305 = vector.broadcast %304 : vector<4x1x1xf32> to vector<4x16x32xf32>
    %306 = arith.subf %296, %305 : vector<4x16x32xf32>
    %307 = arith.mulf %306, %306 : vector<4x16x32xf32>
    %cst_136 = arith.constant dense<0.000000e+00> : vector<4x16xf32>
    %308 = vector.multi_reduction <add>, %307, %cst_136 [2] : vector<4x16x32xf32> to vector<4x16xf32>
    %309 = vector.shape_cast %308 : vector<4x16xf32> to vector<4x16x1xf32>
    %cst_137 = arith.constant 3.200000e+01 : f32
    %310 = vector.broadcast %cst_137 : f32 to vector<4x16x1xf32>
    %311 = arith.divf %309, %310 : vector<4x16x1xf32>
    %cst_138 = arith.constant dense<0.000000e+00> : vector<4x1xf32>
    %312 = vector.multi_reduction <add>, %311, %cst_138 [1] : vector<4x16x1xf32> to vector<4x1xf32>
    %313 = vector.shape_cast %312 : vector<4x1xf32> to vector<4x1x1xf32>
    %cst_139 = arith.constant 1.600000e+01 : f32
    %314 = vector.broadcast %cst_139 : f32 to vector<4x1x1xf32>
    %315 = arith.divf %313, %314 : vector<4x1x1xf32>
    %cst_140 = arith.constant 9.99999974E-6 : f32
    %316 = vector.broadcast %cst_140 : f32 to vector<4x1x1xf32>
    %317 = arith.addf %315, %316 : vector<4x1x1xf32>
    %318 = math.rsqrt %317 : vector<4x1x1xf32>
    %319 = vector.broadcast %318 : vector<4x1x1xf32> to vector<4x16x32xf32>
    %320 = arith.mulf %306, %319 : vector<4x16x32xf32>
    %c0_141 = arith.constant 0 : index
    %c0_142 = arith.constant 0 : index
    %321 = vector.load %arg35[%c0_141, %c0_142] : memref<16x32xf32, #tpu.memory_space<vmem>>, vector<16x32xf32>
    %322 = vector.shape_cast %321 : vector<16x32xf32> to vector<1x16x32xf32>
    %323 = vector.broadcast %322 : vector<1x16x32xf32> to vector<4x16x32xf32>
    %324 = arith.mulf %320, %323 : vector<4x16x32xf32>
    %c0_143 = arith.constant 0 : index
    %c0_144 = arith.constant 0 : index
    %325 = vector.load %arg34[%c0_143, %c0_144] : memref<16x32xf32, #tpu.memory_space<vmem>>, vector<16x32xf32>
    %326 = vector.shape_cast %325 : vector<16x32xf32> to vector<1x16x32xf32>
    %327 = vector.broadcast %326 : vector<1x16x32xf32> to vector<4x16x32xf32>
    %328 = arith.addf %324, %327 : vector<4x16x32xf32>
    %cst_145 = arith.constant 0.000000e+00 : f32
    %329 = vector.broadcast %cst_145 : f32 to vector<64x64xf32>
    %330 = vector.extract_strided_slice %1 {offsets = [0, 0, 0], sizes = [4, 16, 1], strides = [1, 1, 1]} : vector<8x16x1xf32> to vector<4x16x1xf32>
    %331 = vector.shape_cast %330 : vector<4x16x1xf32> to vector<64x1xf32>
    %c0_146 = arith.constant 0 : index
    %c0_147 = arith.constant 0 : index
    %c0_148 = arith.constant 0 : index
    %332 = vector.load %arg51[%c0_146, %c0_147, %c0_148] : memref<5x1x64xf32, #tpu.memory_space<vmem>>, vector<1x1x64xf32>
    %333 = vector.shape_cast %332 : vector<1x1x64xf32> to vector<1x64xf32>
    %334 = vector.broadcast %331 : vector<64x1xf32> to vector<64x64xf32>
    %335 = vector.broadcast %333 : vector<1x64xf32> to vector<64x64xf32>
    %336 = arith.mulf %334, %335 : vector<64x64xf32>
    %337 = arith.addf %329, %336 : vector<64x64xf32>
    %338 = vector.extract_strided_slice %1 {offsets = [1, 0, 0], sizes = [4, 16, 1], strides = [1, 1, 1]} : vector<8x16x1xf32> to vector<4x16x1xf32>
    %339 = vector.shape_cast %338 : vector<4x16x1xf32> to vector<64x1xf32>
    %c1_149 = arith.constant 1 : index
    %c0_150 = arith.constant 0 : index
    %c0_151 = arith.constant 0 : index
    %340 = vector.load %arg51[%c1_149, %c0_150, %c0_151] : memref<5x1x64xf32, #tpu.memory_space<vmem>>, vector<1x1x64xf32>
    %341 = vector.shape_cast %340 : vector<1x1x64xf32> to vector<1x64xf32>
    %342 = vector.broadcast %339 : vector<64x1xf32> to vector<64x64xf32>
    %343 = vector.broadcast %341 : vector<1x64xf32> to vector<64x64xf32>
    %344 = arith.mulf %342, %343 : vector<64x64xf32>
    %345 = arith.addf %337, %344 : vector<64x64xf32>
    %346 = vector.extract_strided_slice %1 {offsets = [2, 0, 0], sizes = [4, 16, 1], strides = [1, 1, 1]} : vector<8x16x1xf32> to vector<4x16x1xf32>
    %347 = vector.shape_cast %346 : vector<4x16x1xf32> to vector<64x1xf32>
    %c2_152 = arith.constant 2 : index
    %c0_153 = arith.constant 0 : index
    %c0_154 = arith.constant 0 : index
    %348 = vector.load %arg51[%c2_152, %c0_153, %c0_154] : memref<5x1x64xf32, #tpu.memory_space<vmem>>, vector<1x1x64xf32>
    %349 = vector.shape_cast %348 : vector<1x1x64xf32> to vector<1x64xf32>
    %350 = vector.broadcast %347 : vector<64x1xf32> to vector<64x64xf32>
    %351 = vector.broadcast %349 : vector<1x64xf32> to vector<64x64xf32>
    %352 = arith.mulf %350, %351 : vector<64x64xf32>
    %353 = arith.addf %345, %352 : vector<64x64xf32>
    %354 = vector.extract_strided_slice %1 {offsets = [3, 0, 0], sizes = [4, 16, 1], strides = [1, 1, 1]} : vector<8x16x1xf32> to vector<4x16x1xf32>
    %355 = vector.shape_cast %354 : vector<4x16x1xf32> to vector<64x1xf32>
    %c3 = arith.constant 3 : index
    %c0_155 = arith.constant 0 : index
    %c0_156 = arith.constant 0 : index
    %356 = vector.load %arg51[%c3, %c0_155, %c0_156] : memref<5x1x64xf32, #tpu.memory_space<vmem>>, vector<1x1x64xf32>
    %357 = vector.shape_cast %356 : vector<1x1x64xf32> to vector<1x64xf32>
    %358 = vector.broadcast %355 : vector<64x1xf32> to vector<64x64xf32>
    %359 = vector.broadcast %357 : vector<1x64xf32> to vector<64x64xf32>
    %360 = arith.mulf %358, %359 : vector<64x64xf32>
    %361 = arith.addf %353, %360 : vector<64x64xf32>
    %362 = vector.extract_strided_slice %1 {offsets = [4, 0, 0], sizes = [4, 16, 1], strides = [1, 1, 1]} : vector<8x16x1xf32> to vector<4x16x1xf32>
    %363 = vector.shape_cast %362 : vector<4x16x1xf32> to vector<64x1xf32>
    %c4 = arith.constant 4 : index
    %c0_157 = arith.constant 0 : index
    %c0_158 = arith.constant 0 : index
    %364 = vector.load %arg51[%c4, %c0_157, %c0_158] : memref<5x1x64xf32, #tpu.memory_space<vmem>>, vector<1x1x64xf32>
    %365 = vector.shape_cast %364 : vector<1x1x64xf32> to vector<1x64xf32>
    %366 = vector.broadcast %363 : vector<64x1xf32> to vector<64x64xf32>
    %367 = vector.broadcast %365 : vector<1x64xf32> to vector<64x64xf32>
    %368 = arith.mulf %366, %367 : vector<64x64xf32>
    %369 = arith.addf %361, %368 : vector<64x64xf32>
    %c0_159 = arith.constant 0 : index
    %c0_160 = arith.constant 0 : index
    %370 = vector.load %arg49[%c0_159, %c0_160] : memref<1x64xf32, #tpu.memory_space<vmem>>, vector<1x64xf32>
    %371 = vector.broadcast %370 : vector<1x64xf32> to vector<64x64xf32>
    %372 = arith.addf %369, %371 : vector<64x64xf32>
    %373 = vector.extract_strided_slice %372 {offsets = [0, 0], sizes = [64, 32], strides = [1, 1]} : vector<64x64xf32> to vector<64x32xf32>
    %374 = vector.extract_strided_slice %372 {offsets = [0, 32], sizes = [64, 32], strides = [1, 1]} : vector<64x64xf32> to vector<64x32xf32>
    %375 = vector.extract_strided_slice %1 {offsets = [4, 0, 0], sizes = [4, 16, 1], strides = [1, 1, 1]} : vector<8x16x1xf32> to vector<4x16x1xf32>
    %376 = vector.shape_cast %375 : vector<4x16x1xf32> to vector<64x1xf32>
    %c0_161 = arith.constant 0 : index
    %c0_162 = arith.constant 0 : index
    %377 = vector.load %arg50[%c0_161, %c0_162] : memref<1x32xf32, #tpu.memory_space<vmem>>, vector<1x32xf32>
    %378 = vector.broadcast %376 : vector<64x1xf32> to vector<64x32xf32>
    %379 = vector.broadcast %377 : vector<1x32xf32> to vector<64x32xf32>
    %380 = arith.mulf %378, %379 : vector<64x32xf32>
    %381 = arith.addf %373, %380 : vector<64x32xf32>
    %382 = arith.negf %374 : vector<64x32xf32>
    %383 = math.exp %382 : vector<64x32xf32>
    %cst_163 = arith.constant 1.000000e+00 : f32
    %384 = vector.broadcast %cst_163 : f32 to vector<64x32xf32>
    %385 = arith.addf %384, %383 : vector<64x32xf32>
    %386 = arith.divf %384, %385 : vector<64x32xf32>
    %387 = arith.mulf %381, %386 : vector<64x32xf32>
    %388 = vector.shape_cast %387 : vector<64x32xf32> to vector<4x16x32xf32>
    %389 = vector.shape_cast %388 : vector<4x16x32xf32> to vector<64x32xf32>
    %c0_164 = arith.constant 0 : index
    %c0_165 = arith.constant 0 : index
    %390 = vector.load %arg48[%c0_164, %c0_165] : memref<32x32xf32, #tpu.memory_space<vmem>>, vector<32x32xf32>
    %cst_166 = arith.constant dense<0.000000e+00> : vector<64x32xf32>
    %391 = tpu.matmul %389, %390, %cst_166 {dimension_numbers = #tpu.dot_dimension_numbers<[1], [0], [0], [1], [0, 0, 1, 1], [], []>} : vector<64x32xf32>, vector<32x32xf32>, vector<64x32xf32> -> vector<64x32xf32>
    %c0_167 = arith.constant 0 : index
    %c0_168 = arith.constant 0 : index
    %392 = vector.load %arg46[%c0_167, %c0_168] : memref<64x64xf32, #tpu.memory_space<vmem>>, vector<64x64xf32>
    %cst_169 = arith.constant dense<0.000000e+00> : vector<64x32xf32>
    %393 = tpu.matmul %392, %391, %cst_169 {dimension_numbers = #tpu.dot_dimension_numbers<[1], [0], [0], [1], [0, 0, 1, 1], [], []>} : vector<64x64xf32>, vector<64x32xf32>, vector<64x32xf32> -> vector<64x32xf32>
    %c0_170 = arith.constant 0 : index
    %c0_171 = arith.constant 0 : index
    %394 = vector.load %arg47[%c0_170, %c0_171] : memref<1x32xf32, #tpu.memory_space<vmem>>, vector<1x32xf32>
    %395 = vector.broadcast %394 : vector<1x32xf32> to vector<64x32xf32>
    %396 = arith.addf %393, %395 : vector<64x32xf32>
    %cst_172 = arith.constant 0.000000e+00 : f32
    %397 = vector.broadcast %cst_172 : f32 to vector<64x32xf32>
    %398 = arith.maximumf %396, %397 : vector<64x32xf32>
    %399 = vector.shape_cast %398 : vector<64x32xf32> to vector<4x16x32xf32>
    %cst_173 = arith.constant dense<0.000000e+00> : vector<4x16xf32>
    %400 = vector.multi_reduction <add>, %399, %cst_173 [2] : vector<4x16x32xf32> to vector<4x16xf32>
    %401 = vector.shape_cast %400 : vector<4x16xf32> to vector<4x16x1xf32>
    %cst_174 = arith.constant 3.200000e+01 : f32
    %402 = vector.broadcast %cst_174 : f32 to vector<4x16x1xf32>
    %403 = arith.divf %401, %402 : vector<4x16x1xf32>
    %cst_175 = arith.constant dense<0.000000e+00> : vector<4x1xf32>
    %404 = vector.multi_reduction <add>, %403, %cst_175 [1] : vector<4x16x1xf32> to vector<4x1xf32>
    %405 = vector.shape_cast %404 : vector<4x1xf32> to vector<4x1x1xf32>
    %cst_176 = arith.constant 1.600000e+01 : f32
    %406 = vector.broadcast %cst_176 : f32 to vector<4x1x1xf32>
    %407 = arith.divf %405, %406 : vector<4x1x1xf32>
    %408 = vector.broadcast %407 : vector<4x1x1xf32> to vector<4x16x32xf32>
    %409 = arith.subf %399, %408 : vector<4x16x32xf32>
    %410 = arith.mulf %409, %409 : vector<4x16x32xf32>
    %cst_177 = arith.constant dense<0.000000e+00> : vector<4x16xf32>
    %411 = vector.multi_reduction <add>, %410, %cst_177 [2] : vector<4x16x32xf32> to vector<4x16xf32>
    %412 = vector.shape_cast %411 : vector<4x16xf32> to vector<4x16x1xf32>
    %cst_178 = arith.constant 3.200000e+01 : f32
    %413 = vector.broadcast %cst_178 : f32 to vector<4x16x1xf32>
    %414 = arith.divf %412, %413 : vector<4x16x1xf32>
    %cst_179 = arith.constant dense<0.000000e+00> : vector<4x1xf32>
    %415 = vector.multi_reduction <add>, %414, %cst_179 [1] : vector<4x16x1xf32> to vector<4x1xf32>
    %416 = vector.shape_cast %415 : vector<4x1xf32> to vector<4x1x1xf32>
    %cst_180 = arith.constant 1.600000e+01 : f32
    %417 = vector.broadcast %cst_180 : f32 to vector<4x1x1xf32>
    %418 = arith.divf %416, %417 : vector<4x1x1xf32>
    %cst_181 = arith.constant 9.99999974E-6 : f32
    %419 = vector.broadcast %cst_181 : f32 to vector<4x1x1xf32>
    %420 = arith.addf %418, %419 : vector<4x1x1xf32>
    %421 = math.rsqrt %420 : vector<4x1x1xf32>
    %422 = vector.broadcast %421 : vector<4x1x1xf32> to vector<4x16x32xf32>
    %423 = arith.mulf %409, %422 : vector<4x16x32xf32>
    %c0_182 = arith.constant 0 : index
    %c0_183 = arith.constant 0 : index
    %424 = vector.load %arg45[%c0_182, %c0_183] : memref<16x32xf32, #tpu.memory_space<vmem>>, vector<16x32xf32>
    %425 = vector.shape_cast %424 : vector<16x32xf32> to vector<1x16x32xf32>
    %426 = vector.broadcast %425 : vector<1x16x32xf32> to vector<4x16x32xf32>
    %427 = arith.mulf %423, %426 : vector<4x16x32xf32>
    %c0_184 = arith.constant 0 : index
    %c0_185 = arith.constant 0 : index
    %428 = vector.load %arg44[%c0_184, %c0_185] : memref<16x32xf32, #tpu.memory_space<vmem>>, vector<16x32xf32>
    %429 = vector.shape_cast %428 : vector<16x32xf32> to vector<1x16x32xf32>
    %430 = vector.broadcast %429 : vector<1x16x32xf32> to vector<4x16x32xf32>
    %431 = arith.addf %427, %430 : vector<4x16x32xf32>
    %432 = vector.shape_cast %431 : vector<4x16x32xf32> to vector<64x32xf32>
    %433 = vector.shape_cast %328 : vector<4x16x32xf32> to vector<64x32xf32>
    %434 = vector.shape_cast %207 : vector<4x16x32xf32> to vector<64x32xf32>
    %435 = tpu.concatenate %432, %433, %434 in 0 : vector<64x32xf32>, vector<64x32xf32>, vector<64x32xf32> -> vector<192x32xf32>
    %cst_186 = arith.constant 0.000000e+00 : f32
    %436 = vector.broadcast %cst_186 : f32 to vector<64x32xf32>
    %c0_187 = arith.constant 0 : index
    %c0_188 = arith.constant 0 : index
    %437 = vector.load %arg2[%c0_187, %c0_188] : memref<1x32xf32, #tpu.memory_space<vmem>>, vector<1x32xf32>
    %438 = vector.broadcast %437 : vector<1x32xf32> to vector<64x32xf32>
    %439 = arith.addf %436, %438 : vector<64x32xf32>
    %c0_189 = arith.constant 0 : index
    %c0_190 = arith.constant 0 : index
    %c0_191 = arith.constant 0 : index
    %440 = vector.load %arg4[%c0_189, %c0_190, %c0_191] : memref<3x32x32xf32, #tpu.memory_space<vmem>>, vector<1x32x32xf32>
    %441 = vector.shape_cast %440 : vector<1x32x32xf32> to vector<32x32xf32>
    %cst_192 = arith.constant dense<0.000000e+00> : vector<192x32xf32>
    %442 = tpu.matmul %435, %441, %cst_192 {dimension_numbers = #tpu.dot_dimension_numbers<[1], [0], [0], [1], [0, 0, 1, 1], [], []>} : vector<192x32xf32>, vector<32x32xf32>, vector<192x32xf32> -> vector<192x32xf32>
    %c0_193 = arith.constant 0 : index
    %c0_194 = arith.constant 0 : index
    %c0_195 = arith.constant 0 : index
    %443 = vector.load %arg3[%c0_193, %c0_194, %c0_195] : memref<3x64x192xf32, #tpu.memory_space<vmem>>, vector<1x64x192xf32>
    %444 = vector.shape_cast %443 : vector<1x64x192xf32> to vector<64x192xf32>
    %cst_196 = arith.constant dense<0.000000e+00> : vector<64x32xf32>
    %445 = tpu.matmul %444, %442, %cst_196 {dimension_numbers = #tpu.dot_dimension_numbers<[1], [0], [0], [1], [0, 0, 1, 1], [], []>} : vector<64x192xf32>, vector<192x32xf32>, vector<64x32xf32> -> vector<64x32xf32>
    %446 = arith.addf %439, %445 : vector<64x32xf32>
    %c1_197 = arith.constant 1 : index
    %c0_198 = arith.constant 0 : index
    %c0_199 = arith.constant 0 : index
    %447 = vector.load %arg4[%c1_197, %c0_198, %c0_199] : memref<3x32x32xf32, #tpu.memory_space<vmem>>, vector<1x32x32xf32>
    %448 = vector.shape_cast %447 : vector<1x32x32xf32> to vector<32x32xf32>
    %cst_200 = arith.constant dense<0.000000e+00> : vector<192x32xf32>
    %449 = tpu.matmul %435, %448, %cst_200 {dimension_numbers = #tpu.dot_dimension_numbers<[1], [0], [0], [1], [0, 0, 1, 1], [], []>} : vector<192x32xf32>, vector<32x32xf32>, vector<192x32xf32> -> vector<192x32xf32>
    %c1_201 = arith.constant 1 : index
    %c0_202 = arith.constant 0 : index
    %c0_203 = arith.constant 0 : index
    %450 = vector.load %arg3[%c1_201, %c0_202, %c0_203] : memref<3x64x192xf32, #tpu.memory_space<vmem>>, vector<1x64x192xf32>
    %451 = vector.shape_cast %450 : vector<1x64x192xf32> to vector<64x192xf32>
    %cst_204 = arith.constant dense<0.000000e+00> : vector<64x32xf32>
    %452 = tpu.matmul %451, %449, %cst_204 {dimension_numbers = #tpu.dot_dimension_numbers<[1], [0], [0], [1], [0, 0, 1, 1], [], []>} : vector<64x192xf32>, vector<192x32xf32>, vector<64x32xf32> -> vector<64x32xf32>
    %453 = arith.addf %446, %452 : vector<64x32xf32>
    %c2_205 = arith.constant 2 : index
    %c0_206 = arith.constant 0 : index
    %c0_207 = arith.constant 0 : index
    %454 = vector.load %arg4[%c2_205, %c0_206, %c0_207] : memref<3x32x32xf32, #tpu.memory_space<vmem>>, vector<1x32x32xf32>
    %455 = vector.shape_cast %454 : vector<1x32x32xf32> to vector<32x32xf32>
    %cst_208 = arith.constant dense<0.000000e+00> : vector<192x32xf32>
    %456 = tpu.matmul %435, %455, %cst_208 {dimension_numbers = #tpu.dot_dimension_numbers<[1], [0], [0], [1], [0, 0, 1, 1], [], []>} : vector<192x32xf32>, vector<32x32xf32>, vector<192x32xf32> -> vector<192x32xf32>
    %c2_209 = arith.constant 2 : index
    %c0_210 = arith.constant 0 : index
    %c0_211 = arith.constant 0 : index
    %457 = vector.load %arg3[%c2_209, %c0_210, %c0_211] : memref<3x64x192xf32, #tpu.memory_space<vmem>>, vector<1x64x192xf32>
    %458 = vector.shape_cast %457 : vector<1x64x192xf32> to vector<64x192xf32>
    %cst_212 = arith.constant dense<0.000000e+00> : vector<64x32xf32>
    %459 = tpu.matmul %458, %456, %cst_212 {dimension_numbers = #tpu.dot_dimension_numbers<[1], [0], [0], [1], [0, 0, 1, 1], [], []>} : vector<64x192xf32>, vector<192x32xf32>, vector<64x32xf32> -> vector<64x32xf32>
    %460 = arith.addf %453, %459 : vector<64x32xf32>
    %461 = vector.shape_cast %460 : vector<64x32xf32> to vector<4x16x32xf32>
    %cst_213 = arith.constant 0.000000e+00 : f32
    %462 = vector.broadcast %cst_213 : f32 to vector<16x32xf32>
    %c0_214 = arith.constant 0 : index
    %c0_215 = arith.constant 0 : index
    %463 = vector.load %arg24[%c0_214, %c0_215] : memref<1x32xf32, #tpu.memory_space<vmem>>, vector<1x32xf32>
    %464 = vector.broadcast %463 : vector<1x32xf32> to vector<16x32xf32>
    %465 = arith.addf %462, %464 : vector<16x32xf32>
    %466 = vector.extract_strided_slice %461 {offsets = [0, 0, 0], sizes = [1, 16, 32], strides = [1, 1, 1]} : vector<4x16x32xf32> to vector<1x16x32xf32>
    %467 = vector.shape_cast %466 : vector<1x16x32xf32> to vector<16x32xf32>
    %c0_216 = arith.constant 0 : index
    %c0_217 = arith.constant 0 : index
    %c0_218 = arith.constant 0 : index
    %468 = vector.load %arg30[%c0_216, %c0_217, %c0_218] : memref<4x32x32xf32, #tpu.memory_space<vmem>>, vector<1x32x32xf32>
    %469 = vector.shape_cast %468 : vector<1x32x32xf32> to vector<32x32xf32>
    %cst_219 = arith.constant dense<0.000000e+00> : vector<16x32xf32>
    %470 = tpu.matmul %467, %469, %cst_219 {dimension_numbers = #tpu.dot_dimension_numbers<[1], [0], [0], [1], [0, 0, 1, 1], [], []>} : vector<16x32xf32>, vector<32x32xf32>, vector<16x32xf32> -> vector<16x32xf32>
    %471 = arith.addf %465, %470 : vector<16x32xf32>
    %472 = vector.extract_strided_slice %461 {offsets = [1, 0, 0], sizes = [1, 16, 32], strides = [1, 1, 1]} : vector<4x16x32xf32> to vector<1x16x32xf32>
    %473 = vector.shape_cast %472 : vector<1x16x32xf32> to vector<16x32xf32>
    %c1_220 = arith.constant 1 : index
    %c0_221 = arith.constant 0 : index
    %c0_222 = arith.constant 0 : index
    %474 = vector.load %arg30[%c1_220, %c0_221, %c0_222] : memref<4x32x32xf32, #tpu.memory_space<vmem>>, vector<1x32x32xf32>
    %475 = vector.shape_cast %474 : vector<1x32x32xf32> to vector<32x32xf32>
    %cst_223 = arith.constant dense<0.000000e+00> : vector<16x32xf32>
    %476 = tpu.matmul %473, %475, %cst_223 {dimension_numbers = #tpu.dot_dimension_numbers<[1], [0], [0], [1], [0, 0, 1, 1], [], []>} : vector<16x32xf32>, vector<32x32xf32>, vector<16x32xf32> -> vector<16x32xf32>
    %477 = arith.addf %471, %476 : vector<16x32xf32>
    %478 = vector.extract_strided_slice %461 {offsets = [2, 0, 0], sizes = [1, 16, 32], strides = [1, 1, 1]} : vector<4x16x32xf32> to vector<1x16x32xf32>
    %479 = vector.shape_cast %478 : vector<1x16x32xf32> to vector<16x32xf32>
    %c2_224 = arith.constant 2 : index
    %c0_225 = arith.constant 0 : index
    %c0_226 = arith.constant 0 : index
    %480 = vector.load %arg30[%c2_224, %c0_225, %c0_226] : memref<4x32x32xf32, #tpu.memory_space<vmem>>, vector<1x32x32xf32>
    %481 = vector.shape_cast %480 : vector<1x32x32xf32> to vector<32x32xf32>
    %cst_227 = arith.constant dense<0.000000e+00> : vector<16x32xf32>
    %482 = tpu.matmul %479, %481, %cst_227 {dimension_numbers = #tpu.dot_dimension_numbers<[1], [0], [0], [1], [0, 0, 1, 1], [], []>} : vector<16x32xf32>, vector<32x32xf32>, vector<16x32xf32> -> vector<16x32xf32>
    %483 = arith.addf %477, %482 : vector<16x32xf32>
    %484 = vector.extract_strided_slice %461 {offsets = [3, 0, 0], sizes = [1, 16, 32], strides = [1, 1, 1]} : vector<4x16x32xf32> to vector<1x16x32xf32>
    %485 = vector.shape_cast %484 : vector<1x16x32xf32> to vector<16x32xf32>
    %c3_228 = arith.constant 3 : index
    %c0_229 = arith.constant 0 : index
    %c0_230 = arith.constant 0 : index
    %486 = vector.load %arg30[%c3_228, %c0_229, %c0_230] : memref<4x32x32xf32, #tpu.memory_space<vmem>>, vector<1x32x32xf32>
    %487 = vector.shape_cast %486 : vector<1x32x32xf32> to vector<32x32xf32>
    %cst_231 = arith.constant dense<0.000000e+00> : vector<16x32xf32>
    %488 = tpu.matmul %485, %487, %cst_231 {dimension_numbers = #tpu.dot_dimension_numbers<[1], [0], [0], [1], [0, 0, 1, 1], [], []>} : vector<16x32xf32>, vector<32x32xf32>, vector<16x32xf32> -> vector<16x32xf32>
    %489 = arith.addf %483, %488 : vector<16x32xf32>
    %490 = vector.shape_cast %489 : vector<16x32xf32> to vector<1x16x32xf32>
    %cst_232 = arith.constant dense<0.000000e+00> : vector<1xf32>
    %491 = vector.multi_reduction <add>, %490, %cst_232 [1, 2] : vector<1x16x32xf32> to vector<1xf32>
    %492 = vector.shape_cast %491 : vector<1xf32> to vector<1x1x1xf32>
    %493 = vector.extract %492[0, 0, 0] : f32 from vector<1x1x1xf32>
    %494 = vector.broadcast %493 : f32 to vector<1x1xf32>
    %cst_233 = arith.constant 5.120000e+02 : f32
    %495 = vector.broadcast %cst_233 : f32 to vector<1x1xf32>
    %496 = arith.divf %494, %495 : vector<1x1xf32>
    %497 = vector.broadcast %496 : vector<1x1xf32> to vector<16x32xf32>
    %498 = arith.subf %489, %497 : vector<16x32xf32>
    %499 = arith.mulf %498, %498 : vector<16x32xf32>
    %500 = vector.shape_cast %499 : vector<16x32xf32> to vector<1x16x32xf32>
    %cst_234 = arith.constant dense<0.000000e+00> : vector<1xf32>
    %501 = vector.multi_reduction <add>, %500, %cst_234 [1, 2] : vector<1x16x32xf32> to vector<1xf32>
    %502 = vector.shape_cast %501 : vector<1xf32> to vector<1x1x1xf32>
    %503 = vector.extract %502[0, 0, 0] : f32 from vector<1x1x1xf32>
    %504 = vector.broadcast %503 : f32 to vector<1x1xf32>
    %cst_235 = arith.constant 5.120000e+02 : f32
    %505 = vector.broadcast %cst_235 : f32 to vector<1x1xf32>
    %506 = arith.divf %504, %505 : vector<1x1xf32>
    %507 = vector.broadcast %496 : vector<1x1xf32> to vector<16x32xf32>
    %508 = arith.subf %489, %507 : vector<16x32xf32>
    %cst_236 = arith.constant 9.99999974E-6 : f32
    %509 = vector.broadcast %cst_236 : f32 to vector<1x1xf32>
    %510 = arith.addf %506, %509 : vector<1x1xf32>
    %511 = math.rsqrt %510 : vector<1x1xf32>
    %512 = vector.broadcast %511 : vector<1x1xf32> to vector<16x32xf32>
    %513 = arith.mulf %508, %512 : vector<16x32xf32>
    %c0_237 = arith.constant 0 : index
    %c0_238 = arith.constant 0 : index
    %514 = vector.load %arg29[%c0_237, %c0_238] : memref<16x32xf32, #tpu.memory_space<vmem>>, vector<16x32xf32>
    %515 = arith.mulf %513, %514 : vector<16x32xf32>
    %c0_239 = arith.constant 0 : index
    %c0_240 = arith.constant 0 : index
    %516 = vector.load %arg26[%c0_239, %c0_240] : memref<16x32xf32, #tpu.memory_space<vmem>>, vector<16x32xf32>
    %517 = arith.addf %515, %516 : vector<16x32xf32>
    %c0_241 = arith.constant 0 : index
    %c0_242 = arith.constant 0 : index
    %518 = vector.load %arg31[%c0_241, %c0_242] : memref<32x32xf32, #tpu.memory_space<vmem>>, vector<32x32xf32>
    %cst_243 = arith.constant dense<0.000000e+00> : vector<16x32xf32>
    %519 = tpu.matmul %517, %518, %cst_243 {dimension_numbers = #tpu.dot_dimension_numbers<[1], [0], [0], [1], [0, 0, 1, 1], [], []>} : vector<16x32xf32>, vector<32x32xf32>, vector<16x32xf32> -> vector<16x32xf32>
    %c0_244 = arith.constant 0 : index
    %c0_245 = arith.constant 0 : index
    %520 = vector.load %arg25[%c0_244, %c0_245] : memref<1x32xf32, #tpu.memory_space<vmem>>, vector<1x32xf32>
    %521 = vector.broadcast %520 : vector<1x32xf32> to vector<16x32xf32>
    %522 = arith.addf %519, %521 : vector<16x32xf32>
    %c0_246 = arith.constant 0 : index
    %c0_247 = arith.constant 0 : index
    %523 = vector.load %arg32[%c0_246, %c0_247] : memref<32x1xf32, #tpu.memory_space<vmem>>, vector<32x1xf32>
    %cst_248 = arith.constant dense<0.000000e+00> : vector<16x1xf32>
    %524 = tpu.matmul %522, %523, %cst_248 {dimension_numbers = #tpu.dot_dimension_numbers<[1], [0], [0], [1], [0, 0, 1, 1], [], []>} : vector<16x32xf32>, vector<32x1xf32>, vector<16x1xf32> -> vector<16x1xf32>
    %c0_249 = arith.constant 0 : index
    %c0_250 = arith.constant 0 : index
    %525 = vector.load %arg27[%c0_249, %c0_250] : memref<1x1xf32, #tpu.memory_space<vmem>>, vector<1x1xf32>
    %526 = vector.broadcast %525 : vector<1x1xf32> to vector<16x1xf32>
    %527 = arith.addf %524, %526 : vector<16x1xf32>
    %c0_251 = arith.constant 0 : index
    %c0_252 = arith.constant 0 : index
    %528 = vector.load %arg33[%c0_251, %c0_252] : memref<16x7xf32, #tpu.memory_space<vmem>>, vector<16x7xf32>
    %529 = vector.broadcast %527 : vector<16x1xf32> to vector<16x7xf32>
    %530 = arith.mulf %529, %528 : vector<16x7xf32>
    %cst_253 = arith.constant dense<0.000000e+00> : vector<7xf32>
    %531 = vector.multi_reduction <add>, %530, %cst_253 [0] : vector<16x7xf32> to vector<7xf32>
    %532 = vector.shape_cast %531 : vector<7xf32> to vector<1x7xf32>
    %c0_254 = arith.constant 0 : index
    %c0_255 = arith.constant 0 : index
    %533 = vector.load %arg28[%c0_254, %c0_255] : memref<1x7xf32, #tpu.memory_space<vmem>>, vector<1x7xf32>
    %534 = arith.addf %532, %533 : vector<1x7xf32>
    %c0_256 = arith.constant 0 : index
    %c0_257 = arith.constant 0 : index
    %c0_258 = arith.constant 0 : index
    %535 = vector.load %arg52[%c0_256, %c0_257, %c0_258] : memref<1x1x7xf32, #tpu.memory_space<vmem>>, vector<1x1x7xf32>
    %536 = vector.shape_cast %535 : vector<1x1x7xf32> to vector<1x7xf32>
    %537 = vector.shape_cast %534 : vector<1x7xf32> to vector<1x1x7xf32>
    tpu.vector_store %arg52[%c0_256, %c0_257, %c0_258], %537 {strides = array<i32>} : memref<1x1x7xf32, #tpu.memory_space<vmem>>, vector<1x1x7xf32>,
    return
  }
  func.func @transform_0(%arg0: i32) -> (i32, i32, i32, i32) {
    %c0_i32 = arith.constant 0 : i32
    %c0_i32_0 = arith.constant 0 : i32
    %c0_i32_1 = arith.constant 0 : i32
    %c0_i32_2 = arith.constant 0 : i32
    return %arg0, %c0_i32, %c0_i32_0, %c0_i32_1 : i32, i32, i32, i32
  }
  func.func @transform_1(%arg0: i32) -> (i32, i32) {
    %c0_i32 = arith.constant 0 : i32
    %c0_i32_0 = arith.constant 0 : i32
    %c0_i32_1 = arith.constant 0 : i32
    return %c0_i32, %c0_i32_0 : i32, i32
  }
  func.func @transform_2(%arg0: i32) -> (i32, i32, i32) {
    %c0_i32 = arith.constant 0 : i32
    %c0_i32_0 = arith.constant 0 : i32
    %c0_i32_1 = arith.constant 0 : i32
    %c0_i32_2 = arith.constant 0 : i32
    return %c0_i32, %c0_i32_0, %c0_i32_1 : i32, i32, i32
  }
  func.func @transform_3(%arg0: i32) -> (i32, i32, i32) {
    %c0_i32 = arith.constant 0 : i32
    %c0_i32_0 = arith.constant 0 : i32
    %c0_i32_1 = arith.constant 0 : i32
    %c0_i32_2 = arith.constant 0 : i32
    return %c0_i32, %c0_i32_0, %c0_i32_1 : i32, i32, i32
  }
  func.func @transform_4(%arg0: i32) -> (i32, i32) {
    %c0_i32 = arith.constant 0 : i32
    %c0_i32_0 = arith.constant 0 : i32
    %c0_i32_1 = arith.constant 0 : i32
    return %c0_i32, %c0_i32_0 : i32, i32
  }
  func.func @transform_5(%arg0: i32) -> (i32, i32) {
    %c0_i32 = arith.constant 0 : i32
    %c0_i32_0 = arith.constant 0 : i32
    %c0_i32_1 = arith.constant 0 : i32
    return %c0_i32, %c0_i32_0 : i32, i32
  }
  func.func @transform_6(%arg0: i32) -> (i32, i32) {
    %c0_i32 = arith.constant 0 : i32
    %c0_i32_0 = arith.constant 0 : i32
    %c0_i32_1 = arith.constant 0 : i32
    return %c0_i32, %c0_i32_0 : i32, i32
  }
  func.func @transform_7(%arg0: i32) -> (i32, i32) {
    %c0_i32 = arith.constant 0 : i32
    %c0_i32_0 = arith.constant 0 : i32
    %c0_i32_1 = arith.constant 0 : i32
    return %c0_i32, %c0_i32_0 : i32, i32
  }
  func.func @transform_8(%arg0: i32) -> (i32, i32) {
    %c0_i32 = arith.constant 0 : i32
    %c0_i32_0 = arith.constant 0 : i32
    %c0_i32_1 = arith.constant 0 : i32
    return %c0_i32, %c0_i32_0 : i32, i32
  }
  func.func @transform_9(%arg0: i32) -> (i32, i32) {
    %c0_i32 = arith.constant 0 : i32
    %c0_i32_0 = arith.constant 0 : i32
    %c0_i32_1 = arith.constant 0 : i32
    return %c0_i32, %c0_i32_0 : i32, i32
  }
  func.func @transform_10(%arg0: i32) -> (i32, i32) {
    %c0_i32 = arith.constant 0 : i32
    %c0_i32_0 = arith.constant 0 : i32
    %c0_i32_1 = arith.constant 0 : i32
    return %c0_i32, %c0_i32_0 : i32, i32
  }
  func.func @transform_11(%arg0: i32) -> (i32, i32) {
    %c0_i32 = arith.constant 0 : i32
    %c0_i32_0 = arith.constant 0 : i32
    %c0_i32_1 = arith.constant 0 : i32
    return %c0_i32, %c0_i32_0 : i32, i32
  }
  func.func @transform_12(%arg0: i32) -> (i32, i32) {
    %c0_i32 = arith.constant 0 : i32
    %c0_i32_0 = arith.constant 0 : i32
    %c0_i32_1 = arith.constant 0 : i32
    return %c0_i32, %c0_i32_0 : i32, i32
  }
  func.func @transform_13(%arg0: i32) -> (i32, i32) {
    %c0_i32 = arith.constant 0 : i32
    %c0_i32_0 = arith.constant 0 : i32
    %c0_i32_1 = arith.constant 0 : i32
    return %c0_i32, %c0_i32_0 : i32, i32
  }
  func.func @transform_14(%arg0: i32) -> (i32, i32) {
    %c0_i32 = arith.constant 0 : i32
    %c0_i32_0 = arith.constant 0 : i32
    %c0_i32_1 = arith.constant 0 : i32
    return %c0_i32, %c0_i32_0 : i32, i32
  }
  func.func @transform_15(%arg0: i32) -> (i32, i32) {
    %c0_i32 = arith.constant 0 : i32
    %c0_i32_0 = arith.constant 0 : i32
    %c0_i32_1 = arith.constant 0 : i32
    return %c0_i32, %c0_i32_0 : i32, i32
  }
  func.func @transform_16(%arg0: i32) -> (i32, i32, i32) {
    %c0_i32 = arith.constant 0 : i32
    %c0_i32_0 = arith.constant 0 : i32
    %c0_i32_1 = arith.constant 0 : i32
    %c0_i32_2 = arith.constant 0 : i32
    return %c0_i32, %c0_i32_0, %c0_i32_1 : i32, i32, i32
  }
  func.func @transform_17(%arg0: i32) -> (i32, i32) {
    %c0_i32 = arith.constant 0 : i32
    %c0_i32_0 = arith.constant 0 : i32
    %c0_i32_1 = arith.constant 0 : i32
    return %c0_i32, %c0_i32_0 : i32, i32
  }
  func.func @transform_18(%arg0: i32) -> (i32, i32, i32) {
    %c0_i32 = arith.constant 0 : i32
    %c0_i32_0 = arith.constant 0 : i32
    %c0_i32_1 = arith.constant 0 : i32
    %c0_i32_2 = arith.constant 0 : i32
    return %c0_i32, %c0_i32_0, %c0_i32_1 : i32, i32, i32
  }
  func.func @transform_19(%arg0: i32) -> (i32, i32) {
    %c0_i32 = arith.constant 0 : i32
    %c0_i32_0 = arith.constant 0 : i32
    %c0_i32_1 = arith.constant 0 : i32
    return %c0_i32, %c0_i32_0 : i32, i32
  }
  func.func @transform_20(%arg0: i32) -> (i32, i32, i32) {
    %c0_i32 = arith.constant 0 : i32
    %c0_i32_0 = arith.constant 0 : i32
    %c0_i32_1 = arith.constant 0 : i32
    %c0_i32_2 = arith.constant 0 : i32
    return %c0_i32, %c0_i32_0, %c0_i32_1 : i32, i32, i32
  }
  func.func @transform_21(%arg0: i32) -> (i32, i32) {
    %c0_i32 = arith.constant 0 : i32
    %c0_i32_0 = arith.constant 0 : i32
    %c0_i32_1 = arith.constant 0 : i32
    return %c0_i32, %c0_i32_0 : i32, i32
  }
  func.func @transform_22(%arg0: i32) -> (i32, i32, i32) {
    %c0_i32 = arith.constant 0 : i32
    %c0_i32_0 = arith.constant 0 : i32
    %c0_i32_1 = arith.constant 0 : i32
    %c0_i32_2 = arith.constant 0 : i32
    return %c0_i32, %c0_i32_0, %c0_i32_1 : i32, i32, i32
  }
  func.func @transform_23(%arg0: i32) -> (i32, i32) {
    %c0_i32 = arith.constant 0 : i32
    %c0_i32_0 = arith.constant 0 : i32
    %c0_i32_1 = arith.constant 0 : i32
    return %c0_i32, %c0_i32_0 : i32, i32
  }
  func.func @transform_24(%arg0: i32) -> (i32, i32) {
    %c0_i32 = arith.constant 0 : i32
    %c0_i32_0 = arith.constant 0 : i32
    %c0_i32_1 = arith.constant 0 : i32
    return %c0_i32, %c0_i32_0 : i32, i32
  }
  func.func @transform_25(%arg0: i32) -> (i32, i32) {
    %c0_i32 = arith.constant 0 : i32
    %c0_i32_0 = arith.constant 0 : i32
    %c0_i32_1 = arith.constant 0 : i32
    return %c0_i32, %c0_i32_0 : i32, i32
  }
  func.func @transform_26(%arg0: i32) -> (i32, i32) {
    %c0_i32 = arith.constant 0 : i32
    %c0_i32_0 = arith.constant 0 : i32
    %c0_i32_1 = arith.constant 0 : i32
    return %c0_i32, %c0_i32_0 : i32, i32
  }
  func.func @transform_27(%arg0: i32) -> (i32, i32) {
    %c0_i32 = arith.constant 0 : i32
    %c0_i32_0 = arith.constant 0 : i32
    %c0_i32_1 = arith.constant 0 : i32
    return %c0_i32, %c0_i32_0 : i32, i32
  }
  func.func @transform_28(%arg0: i32) -> (i32, i32) {
    %c0_i32 = arith.constant 0 : i32
    %c0_i32_0 = arith.constant 0 : i32
    %c0_i32_1 = arith.constant 0 : i32
    return %c0_i32, %c0_i32_0 : i32, i32
  }
  func.func @transform_29(%arg0: i32) -> (i32, i32, i32) {
    %c0_i32 = arith.constant 0 : i32
    %c0_i32_0 = arith.constant 0 : i32
    %c0_i32_1 = arith.constant 0 : i32
    %c0_i32_2 = arith.constant 0 : i32
    return %c0_i32, %c0_i32_0, %c0_i32_1 : i32, i32, i32
  }
  func.func @transform_30(%arg0: i32) -> (i32, i32) {
    %c0_i32 = arith.constant 0 : i32
    %c0_i32_0 = arith.constant 0 : i32
    %c0_i32_1 = arith.constant 0 : i32
    return %c0_i32, %c0_i32_0 : i32, i32
  }
  func.func @transform_31(%arg0: i32) -> (i32, i32) {
    %c0_i32 = arith.constant 0 : i32
    %c0_i32_0 = arith.constant 0 : i32
    %c0_i32_1 = arith.constant 0 : i32
    return %c0_i32, %c0_i32_0 : i32, i32
  }
  func.func @transform_32(%arg0: i32) -> (i32, i32) {
    %c0_i32 = arith.constant 0 : i32
    %c0_i32_0 = arith.constant 0 : i32
    %c0_i32_1 = arith.constant 0 : i32
    return %c0_i32, %c0_i32_0 : i32, i32
  }
  func.func @transform_33(%arg0: i32) -> (i32, i32) {
    %c0_i32 = arith.constant 0 : i32
    %c0_i32_0 = arith.constant 0 : i32
    %c0_i32_1 = arith.constant 0 : i32
    return %c0_i32, %c0_i32_0 : i32, i32
  }
  func.func @transform_34(%arg0: i32) -> (i32, i32) {
    %c0_i32 = arith.constant 0 : i32
    %c0_i32_0 = arith.constant 0 : i32
    %c0_i32_1 = arith.constant 0 : i32
    return %c0_i32, %c0_i32_0 : i32, i32
  }
  func.func @transform_35(%arg0: i32) -> (i32, i32) {
    %c0_i32 = arith.constant 0 : i32
    %c0_i32_0 = arith.constant 0 : i32
    %c0_i32_1 = arith.constant 0 : i32
    return %c0_i32, %c0_i32_0 : i32, i32
  }
  func.func @transform_36(%arg0: i32) -> (i32, i32) {
    %c0_i32 = arith.constant 0 : i32
    %c0_i32_0 = arith.constant 0 : i32
    %c0_i32_1 = arith.constant 0 : i32
    return %c0_i32, %c0_i32_0 : i32, i32
  }
  func.func @transform_37(%arg0: i32) -> (i32, i32) {
    %c0_i32 = arith.constant 0 : i32
    %c0_i32_0 = arith.constant 0 : i32
    %c0_i32_1 = arith.constant 0 : i32
    return %c0_i32, %c0_i32_0 : i32, i32
  }
  func.func @transform_38(%arg0: i32) -> (i32, i32) {
    %c0_i32 = arith.constant 0 : i32
    %c0_i32_0 = arith.constant 0 : i32
    %c0_i32_1 = arith.constant 0 : i32
    return %c0_i32, %c0_i32_0 : i32, i32
  }
  func.func @transform_39(%arg0: i32) -> (i32, i32) {
    %c0_i32 = arith.constant 0 : i32
    %c0_i32_0 = arith.constant 0 : i32
    %c0_i32_1 = arith.constant 0 : i32
    return %c0_i32, %c0_i32_0 : i32, i32
  }
  func.func @transform_40(%arg0: i32) -> (i32, i32, i32) {
    %c0_i32 = arith.constant 0 : i32
    %c0_i32_0 = arith.constant 0 : i32
    %c0_i32_1 = arith.constant 0 : i32
    %c0_i32_2 = arith.constant 0 : i32
    return %c0_i32, %c0_i32_0, %c0_i32_1 : i32, i32, i32
  }
  func.func @transform_41(%arg0: i32) -> (i32, i32) {
    %c0_i32 = arith.constant 0 : i32
    %c0_i32_0 = arith.constant 0 : i32
    %c0_i32_1 = arith.constant 0 : i32
    return %c0_i32, %c0_i32_0 : i32, i32
  }
  func.func @transform_42(%arg0: i32) -> (i32, i32, i32) {
    %c0_i32 = arith.constant 0 : i32
    %c0_i32_0 = arith.constant 0 : i32
    %c0_i32_1 = arith.constant 0 : i32
    %c0_i32_2 = arith.constant 0 : i32
    return %c0_i32, %c0_i32_0, %c0_i32_1 : i32, i32, i32
  }
  func.func @transform_43(%arg0: i32) -> (i32, i32) {
    %c0_i32 = arith.constant 0 : i32
    %c0_i32_0 = arith.constant 0 : i32
    %c0_i32_1 = arith.constant 0 : i32
    return %c0_i32, %c0_i32_0 : i32, i32
  }
  func.func @transform_44(%arg0: i32) -> (i32, i32) {
    %c0_i32 = arith.constant 0 : i32
    %c0_i32_0 = arith.constant 0 : i32
    %c0_i32_1 = arith.constant 0 : i32
    return %c0_i32, %c0_i32_0 : i32, i32
  }
  func.func @transform_45(%arg0: i32) -> (i32, i32) {
    %c0_i32 = arith.constant 0 : i32
    %c0_i32_0 = arith.constant 0 : i32
    %c0_i32_1 = arith.constant 0 : i32
    return %c0_i32, %c0_i32_0 : i32, i32
  }
  func.func @transform_46(%arg0: i32) -> (i32, i32) {
    %c0_i32 = arith.constant 0 : i32
    %c0_i32_0 = arith.constant 0 : i32
    %c0_i32_1 = arith.constant 0 : i32
    return %c0_i32, %c0_i32_0 : i32, i32
  }
  func.func @transform_47(%arg0: i32) -> (i32, i32) {
    %c0_i32 = arith.constant 0 : i32
    %c0_i32_0 = arith.constant 0 : i32
    %c0_i32_1 = arith.constant 0 : i32
    return %c0_i32, %c0_i32_0 : i32, i32
  }
  func.func @transform_48(%arg0: i32) -> (i32, i32) {
    %c0_i32 = arith.constant 0 : i32
    %c0_i32_0 = arith.constant 0 : i32
    %c0_i32_1 = arith.constant 0 : i32
    return %c0_i32, %c0_i32_0 : i32, i32
  }
  func.func @transform_49(%arg0: i32) -> (i32, i32) {
    %c0_i32 = arith.constant 0 : i32
    %c0_i32_0 = arith.constant 0 : i32
    %c0_i32_1 = arith.constant 0 : i32
    return %c0_i32, %c0_i32_0 : i32, i32
  }
  func.func @transform_50(%arg0: i32) -> (i32, i32, i32) {
    %c0_i32 = arith.constant 0 : i32
    %c0_i32_0 = arith.constant 0 : i32
    %c0_i32_1 = arith.constant 0 : i32
    %c0_i32_2 = arith.constant 0 : i32
    return %c0_i32, %c0_i32_0, %c0_i32_1 : i32, i32, i32
  }
  func.func @transform_51(%arg0: i32) -> (i32, i32, i32) {
    %c0_i32 = arith.constant 0 : i32
    %c0_i32_0 = arith.constant 0 : i32
    %c0_i32_1 = arith.constant 0 : i32
    return %arg0, %c0_i32, %c0_i32_0 : i32, i32, i32
  }
}

</mosaic_0001>

<llo_original>
// kernel: stpgcn_bottom_up_forward.1
$region0: #{stpgcn_bottom_up_forward.1}
  #allocation0 [shape = 'u32[]', space=smem, size = 0x4, offset = 0x4, fixed_abs, tag = 'smem constant byte address 0x4 - core index']
  #allocation1 [shape = 'u32[144,128]{1,0:T(1,128)}', space=vmem, size = 0x12000, scoped, tag = 'internal scratch']
  #allocation2 [shape = 'f32[1,1]{1,0:T(1,128)S(1)}', space=vmem, size = 0x200, scoped, tag = 'scoped memory for stpgcn_bottom_up_forward.1']
  %s0 = inlined_call_operand.smem [shape: u32[52], index: -1, kind: input, shape index: {}]
  %s1 = sld [smem:[%s0]]
  %s2 = scalar_lea.smem %s0, 1
  %s3 = sld [smem:[%s2]]
  %s4 = scalar_lea.smem %s0, 2
  %s5 = sld [smem:[%s4]]
  %s6 = scalar_lea.smem %s0, 3
  %s7 = sld [smem:[%s6]]
  %s8 = scalar_lea.smem %s0, 4
  %s9 = sld [smem:[%s8]]
  %s10 = scalar_lea.smem %s0, 5
  %s11 = sld [smem:[%s10]]
  %s12 = scalar_lea.smem %s0, 6
  %s13 = sld [smem:[%s12]]
  %s14 = scalar_lea.smem %s0, 7
  %s15 = sld [smem:[%s14]]
  %s16 = scalar_lea.smem %s0, 8
  %s17 = sld [smem:[%s16]]
  %s18 = scalar_lea.smem %s0, 9
  %s19 = sld [smem:[%s18]]
  %s20 = scalar_lea.smem %s0, 10
  %s21 = sld [smem:[%s20]]
  %s22 = scalar_lea.smem %s0, 11
  %s23 = sld [smem:[%s22]]
  %s24 = scalar_lea.smem %s0, 12
  %s25 = sld [smem:[%s24]]
  %s26 = scalar_lea.smem %s0, 13
  %s27 = sld [smem:[%s26]]
  %s28 = scalar_lea.smem %s0, 14
  %s29 = sld [smem:[%s28]]
  %s30 = scalar_lea.smem %s0, 15
  %s31 = sld [smem:[%s30]]
  %s32 = scalar_lea.smem %s0, 16
  %s33 = sld [smem:[%s32]]
  %s34 = scalar_lea.smem %s0, 17
  %s35 = sld [smem:[%s34]]
  %s36 = scalar_lea.smem %s0, 18
  %s37 = sld [smem:[%s36]]
  %s38 = scalar_lea.smem %s0, 19
  %s39 = sld [smem:[%s38]]
  %s40 = scalar_lea.smem %s0, 20
  %s41 = sld [smem:[%s40]]
  %s42 = scalar_lea.smem %s0, 21
  %s43 = sld [smem:[%s42]]
  %s44 = scalar_lea.smem %s0, 22
  %s45 = sld [smem:[%s44]]
  %s46 = scalar_lea.smem %s0, 23
  %s47 = sld [smem:[%s46]]
  %s48 = scalar_lea.smem %s0, 24
  %s49 = sld [smem:[%s48]]
  %s50 = scalar_lea.smem %s0, 25
  %s51 = sld [smem:[%s50]]
  %s52 = scalar_lea.smem %s0, 26
  %s53 = sld [smem:[%s52]]
  %s54 = scalar_lea.smem %s0, 27
  %s55 = sld [smem:[%s54]]
  %s56 = scalar_lea.smem %s0, 28
  %s57 = sld [smem:[%s56]]
  %s58 = scalar_lea.smem %s0, 29
  %s59 = sld [smem:[%s58]]
  %s60 = scalar_lea.smem %s0, 30
  %s61 = sld [smem:[%s60]]
  %s62 = scalar_lea.smem %s0, 31
  %s63 = sld [smem:[%s62]]
  %s64 = scalar_lea.smem %s0, 32
  %s65 = sld [smem:[%s64]]
  %s66 = scalar_lea.smem %s0, 33
  %s67 = sld [smem:[%s66]]
  %s68 = scalar_lea.smem %s0, 34
  %s69 = sld [smem:[%s68]]
  %s70 = scalar_lea.smem %s0, 35
  %s71 = sld [smem:[%s70]]
  %s72 = scalar_lea.smem %s0, 36
  %s73 = sld [smem:[%s72]]
  %s74 = scalar_lea.smem %s0, 37
  %s75 = sld [smem:[%s74]]
  %s76 = scalar_lea.smem %s0, 38
  %s77 = sld [smem:[%s76]]
  %s78 = scalar_lea.smem %s0, 39
  %s79 = sld [smem:[%s78]]
  %s80 = scalar_lea.smem %s0, 40
  %s81 = sld [smem:[%s80]]
  %s82 = scalar_lea.smem %s0, 41
  %s83 = sld [smem:[%s82]]
  %s84 = scalar_lea.smem %s0, 42
  %s85 = sld [smem:[%s84]]
  %s86 = scalar_lea.smem %s0, 43
  %s87 = sld [smem:[%s86]]
  %s88 = scalar_lea.smem %s0, 44
  %s89 = sld [smem:[%s88]]
  %s90 = scalar_lea.smem %s0, 45
  %s91 = sld [smem:[%s90]]
  %s92 = scalar_lea.smem %s0, 46
  %s93 = sld [smem:[%s92]]
  %s94 = scalar_lea.smem %s0, 47
  %s95 = sld [smem:[%s94]]
  %s96 = scalar_lea.smem %s0, 48
  %s97 = sld [smem:[%s96]]
  %s98 = scalar_lea.smem %s0, 49
  %s99 = sld [smem:[%s98]]
  %s100 = scalar_lea.smem %s0, 50
  %s101 = sld [smem:[%s100]]
  %s102 = scalar_lea.smem %s0, 51
  %s103 = sld [smem:[%s102]]
  %s104 = sld [smem:[#allocation0]]
  $region393: #{stpgcn_bottom_up_forward.1} parent=0
    _
  %s106 = ssub.s32 1, %s104
  %s107 = scalar_select 0, %s106, %s104
  %v108 = vstv %s53
  %109 = vst [vmem:[#allocation2] sm:$0x1] %v108
  $region1: #{stpgcn_bottom_up_forward.1} parent=0
    #allocation3 [shape = 'u8[512]{0}', space=vmem, size = 0x400, scoped, tag = 'input window, operand 1, single buffered']
    #allocation4 [shape = 's32[2]{0}', space=sflag, size = 0x8, scoped, tag = 'scoped memory for stpgcn_bottom_up_forward.1']
    #allocation5 [shape = 's32[2]{0}', space=sflag, size = 0x8, scoped, tag = 'scoped memory for stpgcn_bottom_up_forward.1']
    #allocation6 [shape = 'u8[196608]{0}', space=vmem, size = 0x30000, scoped, tag = 'input window, operand 2, single buffered']
    #allocation7 [shape = 's32[1]{0}', space=sflag, size = 0x4, scoped, tag = 'scoped memory for stpgcn_bottom_up_forward.1']
    #allocation8 [shape = 'u8[8192]{0}', space=vmem, size = 0x2000, scoped, tag = 'input window, operand 4, single buffered']
    #allocation9 [shape = 'u8[8192]{0}', space=vmem, size = 0x2000, scoped, tag = 'input window, operand 5, single buffered']
    #allocation10 [shape = 's32[1]{0}', space=sflag, size = 0x4, scoped, tag = 'scoped memory for stpgcn_bottom_up_forward.1']
    #allocation11 [shape = 'u8[8192]{0}', space=vmem, size = 0x2000, scoped, tag = 'input window, operand 6, single buffered']
    #allocation12 [shape = 'u8[8192]{0}', space=vmem, size = 0x2000, scoped, tag = 'input window, operand 7, single buffered']
    #allocation13 [shape = 's32[1]{0}', space=sflag, size = 0x4, scoped, tag = 'scoped memory for stpgcn_bottom_up_forward.1']
    #allocation14 [shape = 'u8[16384]{0}', space=vmem, size = 0x4000, scoped, tag = 'input window, operand 10, single buffered']
    #allocation15 [shape = 'u8[40960]{0}', space=vmem, size = 0xa000, scoped, tag = 'input window, operand 11, single buffered']
    #allocation16 [shape = 's32[1]{0}', space=sflag, size = 0x4, scoped, tag = 'scoped memory for stpgcn_bottom_up_forward.1']
    #allocation17 [shape = 'u8[512]{0}', space=vmem, size = 0x400, scoped, tag = 'input window, operand 12, single buffered']
    #allocation18 [shape = 'u8[16384]{0}', space=vmem, size = 0x4000, scoped, tag = 'input window, operand 13, single buffered']
    #allocation19 [shape = 's32[1]{0}', space=sflag, size = 0x4, scoped, tag = 'scoped memory for stpgcn_bottom_up_forward.1']
    #allocation20 [shape = 'u8[512]{0}', space=vmem, size = 0x400, scoped, tag = 'input window, operand 14, single buffered']
    #allocation21 [shape = 'u8[512]{0}', space=vmem, size = 0x400, scoped, tag = 'input window, operand 15, single buffered']
    #allocation22 [shape = 's32[1]{0}', space=sflag, size = 0x4, scoped, tag = 'scoped memory for stpgcn_bottom_up_forward.1']
    #allocation23 [shape = 'u8[1024]{0}', space=vmem, size = 0x400, scoped, tag = 'input window, operand 16, single buffered']
    #allocation24 [shape = 'u8[512]{0}', space=vmem, size = 0x400, scoped, tag = 'input window, operand 17, single buffered']
    #allocation25 [shape = 's32[1]{0}', space=sflag, size = 0x4, scoped, tag = 'scoped memory for stpgcn_bottom_up_forward.1']
    #allocation26 [shape = 'u8[32768]{0}', space=vmem, size = 0x8000, scoped, tag = 'input window, operand 18, single buffered']
    #allocation27 [shape = 'u8[512]{0}', space=vmem, size = 0x400, scoped, tag = 'input window, operand 19, single buffered']
    #allocation28 [shape = 's32[1]{0}', space=sflag, size = 0x4, scoped, tag = 'scoped memory for stpgcn_bottom_up_forward.1']
    #allocation29 [shape = 'u8[32768]{0}', space=vmem, size = 0x8000, scoped, tag = 'input window, operand 20, single buffered']
    #allocation30 [shape = 'u8[512]{0}', space=vmem, size = 0x400, scoped, tag = 'input window, operand 21, single buffered']
    #allocation31 [shape = 's32[1]{0}', space=sflag, size = 0x4, scoped, tag = 'scoped memory for stpgcn_bottom_up_forward.1']
    #allocation32 [shape = 'u8[32768]{0}', space=vmem, size = 0x8000, scoped, tag = 'input window, operand 22, single buffered']
    #allocation33 [shape = 'u8[512]{0}', space=vmem, size = 0x400, scoped, tag = 'input window, operand 23, single buffered']
    #allocation34 [shape = 's32[1]{0}', space=sflag, size = 0x4, scoped, tag = 'scoped memory for stpgcn_bottom_up_forward.1']
    #allocation35 [shape = 'u8[512]{0}', space=vmem, size = 0x400, scoped, tag = 'input window, operand 24, single buffered']
    #allocation36 [shape = 'u8[8192]{0}', space=vmem, size = 0x2000, scoped, tag = 'input window, operand 25, single buffered']
    #allocation37 [shape = 's32[1]{0}', space=sflag, size = 0x4, scoped, tag = 'scoped memory for stpgcn_bottom_up_forward.1']
    #allocation38 [shape = 'u8[512]{0}', space=vmem, size = 0x400, scoped, tag = 'input window, operand 27, single buffered']
    #allocation39 [shape = 'u8[8192]{0}', space=vmem, size = 0x2000, scoped, tag = 'input window, operand 28, single buffered']
    #allocation40 [shape = 's32[1]{0}', space=sflag, size = 0x4, scoped, tag = 'scoped memory for stpgcn_bottom_up_forward.1']
    #allocation41 [shape = 'u8[16384]{0}', space=vmem, size = 0x4000, scoped, tag = 'input window, operand 30, single buffered']
    #allocation42 [shape = 'u8[8192]{0}', space=vmem, size = 0x2000, scoped, tag = 'input window, operand 33, single buffered']
    #allocation43 [shape = 's32[1]{0}', space=sflag, size = 0x4, scoped, tag = 'scoped memory for stpgcn_bottom_up_forward.1']
    #allocation44 [shape = 'u8[8192]{0}', space=vmem, size = 0x2000, scoped, tag = 'input window, operand 34, single buffered']
    #allocation45 [shape = 'u8[512]{0}', space=vmem, size = 0x400, scoped, tag = 'input window, operand 36, single buffered']
    #allocation46 [shape = 's32[1]{0}', space=sflag, size = 0x4, scoped, tag = 'scoped memory for stpgcn_bottom_up_forward.1']
    #allocation47 [shape = 'u8[512]{0}', space=vmem, size = 0x400, scoped, tag = 'input window, operand 38, single buffered']
    #allocation48 [shape = 'u8[512]{0}', space=vmem, size = 0x400, scoped, tag = 'input window, operand 39, single buffered']
    #allocation49 [shape = 's32[1]{0}', space=sflag, size = 0x4, scoped, tag = 'scoped memory for stpgcn_bottom_up_forward.1']
    #allocation50 [shape = 'u8[1536]{0}', space=vmem, size = 0x800, scoped, tag = 'input window, operand 40, single buffered']
    #allocation51 [shape = 'u8[512]{0}', space=vmem, size = 0x400, scoped, tag = 'input window, operand 41, single buffered']
    #allocation52 [shape = 's32[1]{0}', space=sflag, size = 0x4, scoped, tag = 'scoped memory for stpgcn_bottom_up_forward.1']
    #allocation53 [shape = 'u8[49152]{0}', space=vmem, size = 0xc000, scoped, tag = 'input window, operand 42, single buffered']
    #allocation54 [shape = 'u8[8192]{0}', space=vmem, size = 0x2000, scoped, tag = 'input window, operand 43, single buffered']
    #allocation55 [shape = 's32[1]{0}', space=sflag, size = 0x4, scoped, tag = 'scoped memory for stpgcn_bottom_up_forward.1']
    #allocation56 [shape = 'u8[8192]{0}', space=vmem, size = 0x2000, scoped, tag = 'input window, operand 44, single buffered']
    #allocation57 [shape = 'u8[32768]{0}', space=vmem, size = 0x8000, scoped, tag = 'input window, operand 45, single buffered']
    #allocation58 [shape = 's32[1]{0}', space=sflag, size = 0x4, scoped, tag = 'scoped memory for stpgcn_bottom_up_forward.1']
    #allocation59 [shape = 'u8[512]{0}', space=vmem, size = 0x400, scoped, tag = 'input window, operand 46, single buffered']
    #allocation60 [shape = 'u8[512]{0}', space=vmem, size = 0x400, scoped, tag = 'input window, operand 48, single buffered']
    #allocation61 [shape = 's32[1]{0}', space=sflag, size = 0x4, scoped, tag = 'scoped memory for stpgcn_bottom_up_forward.1']
    #allocation62 [shape = 'u8[512]{0}', space=vmem, size = 0x400, scoped, tag = 'input window, operand 49, single buffered']
    #allocation63 [shape = 'u8[1024]{0}', space=vmem, size = 0x400, scoped, tag = 'output window, operand 0']
    %110 = vsyncpa [#allocation4], 0
    %111 = vsyncpa [#allocation7], 0
    %112 = vsyncpa [#allocation10], 0
    %113 = vsyncpa [#allocation13], 0
    %114 = vsyncpa [#allocation16], 0
    %115 = vsyncpa [#allocation19], 0
    %116 = vsyncpa [#allocation22], 0
    %117 = vsyncpa [#allocation25], 0
    %118 = vsyncpa [#allocation28], 0
    %119 = vsyncpa [#allocation31], 0
    %120 = vsyncpa [#allocation34], 0
    %121 = vsyncpa [#allocation37], 0
    %122 = vsyncpa [#allocation40], 0
    %123 = vsyncpa [#allocation43], 0
    %124 = vsyncpa [#allocation46], 0
    %125 = vsyncpa [#allocation49], 0
    %126 = vsyncpa [#allocation52], 0
    %127 = vsyncpa [#allocation55], 0
    %128 = vsyncpa [#allocation58], 0
    %129 = vsyncpa [#allocation61], 0
    %130 = vsyncpa [#allocation5], 0
    %s131 = scalar_lea.sflag [#allocation5], 1
    %132 = vsyncpa %s131, 0
    loop: start=0, step=1, limit=4
    $region2: #{stpgcn_bottom_up_forward.1} parent=1 // loop_pre_header
      _
    $region3: #{stpgcn_bottom_up_forward.1} parent=1 // loop_header
      %s134 = sphi 0, %s138
      %p135 = scmp.ge.s32.totalorder %s134, 4
      %s144 = sphi 0, %s146
      %s147 = sphi 0, %s144
      %s148 = sphi 0, %s147
      %s164 = sphi 0, %s148
      %s168 = sphi 0, %s168
      %s170 = sphi 0, %s168
      %s171 = sphi 0, %s170
      %s185 = sphi 0, %s171
      %s189 = sphi 0, %s189
      %s191 = sphi 0, %s189
      %s192 = sphi 0, %s191
      %s206 = sphi 0, %s192
      %s210 = sphi 0, %s210
      %s212 = sphi 0, %s210
      %s213 = sphi 0, %s212
      %s227 = sphi 0, %s213
      %s231 = sphi 0, %s231
      %s233 = sphi 0, %s231
      %s234 = sphi 0, %s233
      %s248 = sphi 0, %s234
      %s252 = sphi 0, %s252
      %s254 = sphi 0, %s252
      %s255 = sphi 0, %s254
      %s269 = sphi 0, %s255
      %s273 = sphi 0, %s273
      %s275 = sphi 0, %s273
      %s276 = sphi 0, %s275
      %s290 = sphi 0, %s276
      %s294 = sphi 0, %s294
      %s296 = sphi 0, %s294
      %s297 = sphi 0, %s296
      %s311 = sphi 0, %s297
      %s315 = sphi 0, %s315
      %s317 = sphi 0, %s315
      %s318 = sphi 0, %s317
      %s332 = sphi 0, %s318
      %s336 = sphi 0, %s336
      %s338 = sphi 0, %s336
      %s339 = sphi 0, %s338
      %s353 = sphi 0, %s339
      %s357 = sphi 0, %s357
      %s359 = sphi 0, %s357
      %s360 = sphi 0, %s359
      %s374 = sphi 0, %s360
      %s378 = sphi 0, %s378
      %s380 = sphi 0, %s378
      %s381 = sphi 0, %s380
      %s395 = sphi 0, %s381
      %s399 = sphi 0, %s399
      %s401 = sphi 0, %s399
      %s402 = sphi 0, %s401
      %s416 = sphi 0, %s402
      %s420 = sphi 0, %s420
      %s422 = sphi 0, %s420
      %s423 = sphi 0, %s422
      %s437 = sphi 0, %s423
      %s441 = sphi 0, %s441
      %s443 = sphi 0, %s441
      %s444 = sphi 0, %s443
      %s458 = sphi 0, %s444
      %s462 = sphi 0, %s462
      %s464 = sphi 0, %s462
      %s465 = sphi 0, %s464
      %s479 = sphi 0, %s465
      %s483 = sphi 0, %s483
      %s485 = sphi 0, %s483
      %s486 = sphi 0, %s485
      %s500 = sphi 0, %s486
      %s504 = sphi 0, %s504
      %s506 = sphi 0, %s504
      %s507 = sphi 0, %s506
      %s521 = sphi 0, %s507
      %s525 = sphi 0, %s525
      %s527 = sphi 0, %s525
      %s528 = sphi 0, %s527
      %s542 = sphi 0, %s528
      %s546 = sphi 0, %s546
      %s548 = sphi 0, %s546
      %s549 = sphi 0, %s548
      %s563 = sphi 0, %s549
      %s567 = sphi 0, %s567
      %s569 = sphi 0, %s567
      %s570 = sphi 0, %s569
      %s584 = sphi 0, %s570
      %s588 = sphi 0, %s588
      %s590 = sphi 0, %s588
      %s591 = sphi 0, %s590
      %s605 = sphi 0, %s591
      %s609 = sphi 0, %s609
      %s611 = sphi 0, %s609
      %s612 = sphi 0, %s611
      %s626 = sphi 0, %s612
      %s630 = sphi 0, %s630
      %s632 = sphi 0, %s630
      %s633 = sphi 0, %s632
      %s647 = sphi 0, %s633
      %s651 = sphi 0, %s651
      %s653 = sphi 0, %s651
      %s654 = sphi 0, %s653
      %s668 = sphi 0, %s654
      %s672 = sphi 0, %s672
      %s674 = sphi 0, %s672
      %s675 = sphi 0, %s674
      %s689 = sphi 0, %s675
      %s693 = sphi 0, %s693
      %s695 = sphi 0, %s693
      %s696 = sphi 0, %s695
      %s710 = sphi 0, %s696
      %s714 = sphi 0, %s714
      %s716 = sphi 0, %s714
      %s717 = sphi 0, %s716
      %s731 = sphi 0, %s717
      %s735 = sphi 0, %s735
      %s737 = sphi 0, %s735
      %s738 = sphi 0, %s737
      %s752 = sphi 0, %s738
      %s756 = sphi 0, %s756
      %s758 = sphi 0, %s756
      %s759 = sphi 0, %s758
      %s773 = sphi 0, %s759
      %s777 = sphi 0, %s777
      %s779 = sphi 0, %s777
      %s780 = sphi 0, %s779
      %s794 = sphi 0, %s780
      %s798 = sphi 0, %s798
      %s800 = sphi 0, %s798
      %s801 = sphi 0, %s800
      %s815 = sphi 0, %s801
      %s819 = sphi 0, %s819
      %s821 = sphi 0, %s819
      %s822 = sphi 0, %s821
      %s836 = sphi 0, %s822
      %s840 = sphi 0, %s840
      %s842 = sphi 0, %s840
      %s843 = sphi 0, %s842
      %s857 = sphi 0, %s843
      %s861 = sphi 0, %s861
      %s863 = sphi 0, %s861
      %s864 = sphi 0, %s863
      %s878 = sphi 0, %s864
      %s882 = sphi 0, %s882
      %s884 = sphi 0, %s882
      %s885 = sphi 0, %s884
      %s899 = sphi 0, %s885
      %s903 = sphi 0, %s903
      %s905 = sphi 0, %s903
      %s906 = sphi 0, %s905
      %s920 = sphi 0, %s906
      %s924 = sphi 0, %s924
      %s926 = sphi 0, %s924
      %s927 = sphi 0, %s926
      %s941 = sphi 0, %s927
      %s945 = sphi 0, %s945
      %s947 = sphi 0, %s945
      %s948 = sphi 0, %s947
      %s962 = sphi 0, %s948
      %s966 = sphi 0, %s966
      %s968 = sphi 0, %s966
      %s969 = sphi 0, %s968
      %s983 = sphi 0, %s969
      %s987 = sphi 0, %s987
      %s989 = sphi 0, %s987
      %s990 = sphi 0, %s989
      %s1004 = sphi 0, %s990
      %s1008 = sphi 0, %s1008
      %s1010 = sphi 0, %s1008
      %s1011 = sphi 0, %s1010
      %s1025 = sphi 0, %s1011
      %s1029 = sphi 0, %s1029
      %s1031 = sphi 0, %s1029
      %s1032 = sphi 0, %s1031
      %s1046 = sphi 0, %s1032
      %s1050 = sphi 0, %s1050
      %s1052 = sphi 0, %s1050
      %s1053 = sphi 0, %s1052
      %s1067 = sphi 0, %s1053
      %s1071 = sphi 0, %s1071
      %s1073 = sphi 0, %s1071
      %s1074 = sphi 0, %s1073
      %s1088 = sphi 0, %s1074
      %s1092 = sphi 0, %s1092
      %s1094 = sphi 0, %s1092
      %s1095 = sphi 0, %s1094
      %s1109 = sphi 0, %s1095
      %s1113 = sphi 0, %s1113
      %s1115 = sphi 0, %s1113
      %s1116 = sphi 0, %s1115
      %s1130 = sphi 0, %s1116
      %s1134 = sphi 0, %s1134
      %s1136 = sphi 0, %s1134
      %s1137 = sphi 0, %s1136
      %s1151 = sphi 0, %s1137
      %s1155 = sphi 0, %s1155
      %s1157 = sphi 0, %s1155
      %s1158 = sphi 0, %s1157
      %s1172 = sphi 0, %s1158
      %s1176 = sphi 0, %s1176
      %s1178 = sphi 0, %s1176
      %s1179 = sphi 0, %s1178
      %s1193 = sphi 0, %s1179
      %s1197 = sphi 0, %s1197
      %s1199 = sphi 0, %s1197
      %s1200 = sphi 0, %s1199
      %s1214 = sphi 0, %s1200
      %s1220 = sphi 0, %s1222
      %s1223 = sphi 0, %s1220
      %s1224 = sphi 0, %s1223
      %s1240 = sphi 0, %s1224
    $region4: #{stpgcn_bottom_up_forward.1} parent=1 // loop_header_branch
      %137 = sbr.rel (%p135) target = $region8
    $region5: #{stpgcn_bottom_up_forward.1} parent=1 // loop_body
      %s139 = ssub.s32 %s134, 1
      %s140 = ssub.s32 %s134, 2
      %s141 = sadd.s32 %s134, 1
      %s142 = ssub.s32 %s134, %s141
      %p143 = scmp.eq.s32.totalorder %s142, 0
      %s145 = sadd.s32 %s144, 1
      %s146 = scalar_select %p143, %s144, %s145
      %p149 = pneg %p143
      %p150 = scmp.eq.s32.totalorder %s134, 1
      %p151 = por %p149, %p150
      %p152 = scmp.ne.s32.totalorder %s144, %s147
      %p153 = scmp.eq.s32.totalorder %s134, 0
      %p154 = por %p152, %p153
      %p155 = scmp.ne.s32.totalorder %s144, %s147
      %p156 = scmp.eq.s32.totalorder %s139, 1
      %p157 = por %p155, %p156
      %p158 = scmp.ne.s32.totalorder %s147, %s148
      %p159 = scmp.eq.s32.totalorder %s139, 0
      %p160 = por %p158, %p159
      %p161 = scmp.ne.s32.totalorder %s147, %s148
      %p162 = scmp.eq.s32.totalorder %s140, 1
      %p163 = por %p161, %p162
      %p165 = scmp.ne.s32.totalorder %s148, %s164
      %p166 = scmp.eq.s32.totalorder %s140, 0
      %p167 = por %p165, %p166
      %s169 = sadd.s32 %s168, 1
      %p172 = scmp.eq.s32.totalorder %s134, 1
      %p173 = scmp.ne.s32.totalorder %s168, %s170
      %p174 = scmp.eq.s32.totalorder %s134, 0
      %p175 = por %p173, %p174
      %p176 = scmp.ne.s32.totalorder %s168, %s170
      %p177 = scmp.eq.s32.totalorder %s139, 1
      %p178 = por %p176, %p177
      %p179 = scmp.ne.s32.totalorder %s170, %s171
      %p180 = scmp.eq.s32.totalorder %s139, 0
      %p181 = por %p179, %p180
      %p182 = scmp.ne.s32.totalorder %s170, %s171
      %p183 = scmp.eq.s32.totalorder %s140, 1
      %p184 = por %p182, %p183
      %p186 = scmp.ne.s32.totalorder %s171, %s185
      %p187 = scmp.eq.s32.totalorder %s140, 0
      %p188 = por %p186, %p187
      %s190 = sadd.s32 %s189, 1
      %p193 = scmp.eq.s32.totalorder %s134, 1
      %p194 = scmp.ne.s32.totalorder %s189, %s191
      %p195 = scmp.eq.s32.totalorder %s134, 0
      %p196 = por %p194, %p195
      %p197 = scmp.ne.s32.totalorder %s189, %s191
      %p198 = scmp.eq.s32.totalorder %s139, 1
      %p199 = por %p197, %p198
      %p200 = scmp.ne.s32.totalorder %s191, %s192
      %p201 = scmp.eq.s32.totalorder %s139, 0
      %p202 = por %p200, %p201
      %p203 = scmp.ne.s32.totalorder %s191, %s192
      %p204 = scmp.eq.s32.totalorder %s140, 1
      %p205 = por %p203, %p204
      %p207 = scmp.ne.s32.totalorder %s192, %s206
      %p208 = scmp.eq.s32.totalorder %s140, 0
      %p209 = por %p207, %p208
      %s211 = sadd.s32 %s210, 1
      %p214 = scmp.eq.s32.totalorder %s134, 1
      %p215 = scmp.ne.s32.totalorder %s210, %s212
      %p216 = scmp.eq.s32.totalorder %s134, 0
      %p217 = por %p215, %p216
      %p218 = scmp.ne.s32.totalorder %s210, %s212
      %p219 = scmp.eq.s32.totalorder %s139, 1
      %p220 = por %p218, %p219
      %p221 = scmp.ne.s32.totalorder %s212, %s213
      %p222 = scmp.eq.s32.totalorder %s139, 0
      %p223 = por %p221, %p222
      %p224 = scmp.ne.s32.totalorder %s212, %s213
      %p225 = scmp.eq.s32.totalorder %s140, 1
      %p226 = por %p224, %p225
      %p228 = scmp.ne.s32.totalorder %s213, %s227
      %p229 = scmp.eq.s32.totalorder %s140, 0
      %p230 = por %p228, %p229
      %s232 = sadd.s32 %s231, 1
      %p235 = scmp.eq.s32.totalorder %s134, 1
      %p236 = scmp.ne.s32.totalorder %s231, %s233
      %p237 = scmp.eq.s32.totalorder %s134, 0
      %p238 = por %p236, %p237
      %p239 = scmp.ne.s32.totalorder %s231, %s233
      %p240 = scmp.eq.s32.totalorder %s139, 1
      %p241 = por %p239, %p240
      %p242 = scmp.ne.s32.totalorder %s233, %s234
      %p243 = scmp.eq.s32.totalorder %s139, 0
      %p244 = por %p242, %p243
      %p245 = scmp.ne.s32.totalorder %s233, %s234
      %p246 = scmp.eq.s32.totalorder %s140, 1
      %p247 = por %p245, %p246
      %p249 = scmp.ne.s32.totalorder %s234, %s248
      %p250 = scmp.eq.s32.totalorder %s140, 0
      %p251 = por %p249, %p250
      %s253 = sadd.s32 %s252, 1
      %p256 = scmp.eq.s32.totalorder %s134, 1
      %p257 = scmp.ne.s32.totalorder %s252, %s254
      %p258 = scmp.eq.s32.totalorder %s134, 0
      %p259 = por %p257, %p258
      %p260 = scmp.ne.s32.totalorder %s252, %s254
      %p261 = scmp.eq.s32.totalorder %s139, 1
      %p262 = por %p260, %p261
      %p263 = scmp.ne.s32.totalorder %s254, %s255
      %p264 = scmp.eq.s32.totalorder %s139, 0
      %p265 = por %p263, %p264
      %p266 = scmp.ne.s32.totalorder %s254, %s255
      %p267 = scmp.eq.s32.totalorder %s140, 1
      %p268 = por %p266, %p267
      %p270 = scmp.ne.s32.totalorder %s255, %s269
      %p271 = scmp.eq.s32.totalorder %s140, 0
      %p272 = por %p270, %p271
      %s274 = sadd.s32 %s273, 1
      %p277 = scmp.eq.s32.totalorder %s134, 1
      %p278 = scmp.ne.s32.totalorder %s273, %s275
      %p279 = scmp.eq.s32.totalorder %s134, 0
      %p280 = por %p278, %p279
      %p281 = scmp.ne.s32.totalorder %s273, %s275
      %p282 = scmp.eq.s32.totalorder %s139, 1
      %p283 = por %p281, %p282
      %p284 = scmp.ne.s32.totalorder %s275, %s276
      %p285 = scmp.eq.s32.totalorder %s139, 0
      %p286 = por %p284, %p285
      %p287 = scmp.ne.s32.totalorder %s275, %s276
      %p288 = scmp.eq.s32.totalorder %s140, 1
      %p289 = por %p287, %p288
      %p291 = scmp.ne.s32.totalorder %s276, %s290
      %p292 = scmp.eq.s32.totalorder %s140, 0
      %p293 = por %p291, %p292
      %s295 = sadd.s32 %s294, 1
      %p298 = scmp.eq.s32.totalorder %s134, 1
      %p299 = scmp.ne.s32.totalorder %s294, %s296
      %p300 = scmp.eq.s32.totalorder %s134, 0
      %p301 = por %p299, %p300
      %p302 = scmp.ne.s32.totalorder %s294, %s296
      %p303 = scmp.eq.s32.totalorder %s139, 1
      %p304 = por %p302, %p303
      %p305 = scmp.ne.s32.totalorder %s296, %s297
      %p306 = scmp.eq.s32.totalorder %s139, 0
      %p307 = por %p305, %p306
      %p308 = scmp.ne.s32.totalorder %s296, %s297
      %p309 = scmp.eq.s32.totalorder %s140, 1
      %p310 = por %p308, %p309
      %p312 = scmp.ne.s32.totalorder %s297, %s311
      %p313 = scmp.eq.s32.totalorder %s140, 0
      %p314 = por %p312, %p313
      %s316 = sadd.s32 %s315, 1
      %p319 = scmp.eq.s32.totalorder %s134, 1
      %p320 = scmp.ne.s32.totalorder %s315, %s317
      %p321 = scmp.eq.s32.totalorder %s134, 0
      %p322 = por %p320, %p321
      %p323 = scmp.ne.s32.totalorder %s315, %s317
      %p324 = scmp.eq.s32.totalorder %s139, 1
      %p325 = por %p323, %p324
      %p326 = scmp.ne.s32.totalorder %s317, %s318
      %p327 = scmp.eq.s32.totalorder %s139, 0
      %p328 = por %p326, %p327
      %p329 = scmp.ne.s32.totalorder %s317, %s318
      %p330 = scmp.eq.s32.totalorder %s140, 1
      %p331 = por %p329, %p330
      %p333 = scmp.ne.s32.totalorder %s318, %s332
      %p334 = scmp.eq.s32.totalorder %s140, 0
      %p335 = por %p333, %p334
      %s337 = sadd.s32 %s336, 1
      %p340 = scmp.eq.s32.totalorder %s134, 1
      %p341 = scmp.ne.s32.totalorder %s336, %s338
      %p342 = scmp.eq.s32.totalorder %s134, 0
      %p343 = por %p341, %p342
      %p344 = scmp.ne.s32.totalorder %s336, %s338
      %p345 = scmp.eq.s32.totalorder %s139, 1
      %p346 = por %p344, %p345
      %p347 = scmp.ne.s32.totalorder %s338, %s339
      %p348 = scmp.eq.s32.totalorder %s139, 0
      %p349 = por %p347, %p348
      %p350 = scmp.ne.s32.totalorder %s338, %s339
      %p351 = scmp.eq.s32.totalorder %s140, 1
      %p352 = por %p350, %p351
      %p354 = scmp.ne.s32.totalorder %s339, %s353
      %p355 = scmp.eq.s32.totalorder %s140, 0
      %p356 = por %p354, %p355
      %s358 = sadd.s32 %s357, 1
      %p361 = scmp.eq.s32.totalorder %s134, 1
      %p362 = scmp.ne.s32.totalorder %s357, %s359
      %p363 = scmp.eq.s32.totalorder %s134, 0
      %p364 = por %p362, %p363
      %p365 = scmp.ne.s32.totalorder %s357, %s359
      %p366 = scmp.eq.s32.totalorder %s139, 1
      %p367 = por %p365, %p366
      %p368 = scmp.ne.s32.totalorder %s359, %s360
      %p369 = scmp.eq.s32.totalorder %s139, 0
      %p370 = por %p368, %p369
      %p371 = scmp.ne.s32.totalorder %s359, %s360
      %p372 = scmp.eq.s32.totalorder %s140, 1
      %p373 = por %p371, %p372
      %p375 = scmp.ne.s32.totalorder %s360, %s374
      %p376 = scmp.eq.s32.totalorder %s140, 0
      %p377 = por %p375, %p376
      %s379 = sadd.s32 %s378, 1
      %p382 = scmp.eq.s32.totalorder %s134, 1
      %p383 = scmp.ne.s32.totalorder %s378, %s380
      %p384 = scmp.eq.s32.totalorder %s134, 0
      %p385 = por %p383, %p384
      %p386 = scmp.ne.s32.totalorder %s378, %s380
      %p387 = scmp.eq.s32.totalorder %s139, 1
      %p388 = por %p386, %p387
      %p389 = scmp.ne.s32.totalorder %s380, %s381
      %p390 = scmp.eq.s32.totalorder %s139, 0
      %p391 = por %p389, %p390
      %p392 = scmp.ne.s32.totalorder %s380, %s381
      %p393 = scmp.eq.s32.totalorder %s140, 1
      %p394 = por %p392, %p393
      %p396 = scmp.ne.s32.totalorder %s381, %s395
      %p397 = scmp.eq.s32.totalorder %s140, 0
      %p398 = por %p396, %p397
      %s400 = sadd.s32 %s399, 1
      %p403 = scmp.eq.s32.totalorder %s134, 1
      %p404 = scmp.ne.s32.totalorder %s399, %s401
      %p405 = scmp.eq.s32.totalorder %s134, 0
      %p406 = por %p404, %p405
      %p407 = scmp.ne.s32.totalorder %s399, %s401
      %p408 = scmp.eq.s32.totalorder %s139, 1
      %p409 = por %p407, %p408
      %p410 = scmp.ne.s32.totalorder %s401, %s402
      %p411 = scmp.eq.s32.totalorder %s139, 0
      %p412 = por %p410, %p411
      %p413 = scmp.ne.s32.totalorder %s401, %s402
      %p414 = scmp.eq.s32.totalorder %s140, 1
      %p415 = por %p413, %p414
      %p417 = scmp.ne.s32.totalorder %s402, %s416
      %p418 = scmp.eq.s32.totalorder %s140, 0
      %p419 = por %p417, %p418
      %s421 = sadd.s32 %s420, 1
      %p424 = scmp.eq.s32.totalorder %s134, 1
      %p425 = scmp.ne.s32.totalorder %s420, %s422
      %p426 = scmp.eq.s32.totalorder %s134, 0
      %p427 = por %p425, %p426
      %p428 = scmp.ne.s32.totalorder %s420, %s422
      %p429 = scmp.eq.s32.totalorder %s139, 1
      %p430 = por %p428, %p429
      %p431 = scmp.ne.s32.totalorder %s422, %s423
      %p432 = scmp.eq.s32.totalorder %s139, 0
      %p433 = por %p431, %p432
      %p434 = scmp.ne.s32.totalorder %s422, %s423
      %p435 = scmp.eq.s32.totalorder %s140, 1
      %p436 = por %p434, %p435
      %p438 = scmp.ne.s32.totalorder %s423, %s437
      %p439 = scmp.eq.s32.totalorder %s140, 0
      %p440 = por %p438, %p439
      %s442 = sadd.s32 %s441, 1
      %p445 = scmp.eq.s32.totalorder %s134, 1
      %p446 = scmp.ne.s32.totalorder %s441, %s443
      %p447 = scmp.eq.s32.totalorder %s134, 0
      %p448 = por %p446, %p447
      %p449 = scmp.ne.s32.totalorder %s441, %s443
      %p450 = scmp.eq.s32.totalorder %s139, 1
      %p451 = por %p449, %p450
      %p452 = scmp.ne.s32.totalorder %s443, %s444
      %p453 = scmp.eq.s32.totalorder %s139, 0
      %p454 = por %p452, %p453
      %p455 = scmp.ne.s32.totalorder %s443, %s444
      %p456 = scmp.eq.s32.totalorder %s140, 1
      %p457 = por %p455, %p456
      %p459 = scmp.ne.s32.totalorder %s444, %s458
      %p460 = scmp.eq.s32.totalorder %s140, 0
      %p461 = por %p459, %p460
      %s463 = sadd.s32 %s462, 1
      %p466 = scmp.eq.s32.totalorder %s134, 1
      %p467 = scmp.ne.s32.totalorder %s462, %s464
      %p468 = scmp.eq.s32.totalorder %s134, 0
      %p469 = por %p467, %p468
      %p470 = scmp.ne.s32.totalorder %s462, %s464
      %p471 = scmp.eq.s32.totalorder %s139, 1
      %p472 = por %p470, %p471
      %p473 = scmp.ne.s32.totalorder %s464, %s465
      %p474 = scmp.eq.s32.totalorder %s139, 0
      %p475 = por %p473, %p474
      %p476 = scmp.ne.s32.totalorder %s464, %s465
      %p477 = scmp.eq.s32.totalorder %s140, 1
      %p478 = por %p476, %p477
      %p480 = scmp.ne.s32.totalorder %s465, %s479
      %p481 = scmp.eq.s32.totalorder %s140, 0
      %p482 = por %p480, %p481
      %s484 = sadd.s32 %s483, 1
      %p487 = scmp.eq.s32.totalorder %s134, 1
      %p488 = scmp.ne.s32.totalorder %s483, %s485
      %p489 = scmp.eq.s32.totalorder %s134, 0
      %p490 = por %p488, %p489
      %p491 = scmp.ne.s32.totalorder %s483, %s485
      %p492 = scmp.eq.s32.totalorder %s139, 1
      %p493 = por %p491, %p492
      %p494 = scmp.ne.s32.totalorder %s485, %s486
      %p495 = scmp.eq.s32.totalorder %s139, 0
      %p496 = por %p494, %p495
      %p497 = scmp.ne.s32.totalorder %s485, %s486
      %p498 = scmp.eq.s32.totalorder %s140, 1
      %p499 = por %p497, %p498
      %p501 = scmp.ne.s32.totalorder %s486, %s500
      %p502 = scmp.eq.s32.totalorder %s140, 0
      %p503 = por %p501, %p502
      %s505 = sadd.s32 %s504, 1
      %p508 = scmp.eq.s32.totalorder %s134, 1
      %p509 = scmp.ne.s32.totalorder %s504, %s506
      %p510 = scmp.eq.s32.totalorder %s134, 0
      %p511 = por %p509, %p510
      %p512 = scmp.ne.s32.totalorder %s504, %s506
      %p513 = scmp.eq.s32.totalorder %s139, 1
      %p514 = por %p512, %p513
      %p515 = scmp.ne.s32.totalorder %s506, %s507
      %p516 = scmp.eq.s32.totalorder %s139, 0
      %p517 = por %p515, %p516
      %p518 = scmp.ne.s32.totalorder %s506, %s507
      %p519 = scmp.eq.s32.totalorder %s140, 1
      %p520 = por %p518, %p519
      %p522 = scmp.ne.s32.totalorder %s507, %s521
      %p523 = scmp.eq.s32.totalorder %s140, 0
      %p524 = por %p522, %p523
      %s526 = sadd.s32 %s525, 1
      %p529 = scmp.eq.s32.totalorder %s134, 1
      %p530 = scmp.ne.s32.totalorder %s525, %s527
      %p531 = scmp.eq.s32.totalorder %s134, 0
      %p532 = por %p530, %p531
      %p533 = scmp.ne.s32.totalorder %s525, %s527
      %p534 = scmp.eq.s32.totalorder %s139, 1
      %p535 = por %p533, %p534
      %p536 = scmp.ne.s32.totalorder %s527, %s528
      %p537 = scmp.eq.s32.totalorder %s139, 0
      %p538 = por %p536, %p537
      %p539 = scmp.ne.s32.totalorder %s527, %s528
      %p540 = scmp.eq.s32.totalorder %s140, 1
      %p541 = por %p539, %p540
      %p543 = scmp.ne.s32.totalorder %s528, %s542
      %p544 = scmp.eq.s32.totalorder %s140, 0
      %p545 = por %p543, %p544
      %s547 = sadd.s32 %s546, 1
      %p550 = scmp.eq.s32.totalorder %s134, 1
      %p551 = scmp.ne.s32.totalorder %s546, %s548
      %p552 = scmp.eq.s32.totalorder %s134, 0
      %p553 = por %p551, %p552
      %p554 = scmp.ne.s32.totalorder %s546, %s548
      %p555 = scmp.eq.s32.totalorder %s139, 1
      %p556 = por %p554, %p555
      %p557 = scmp.ne.s32.totalorder %s548, %s549
      %p558 = scmp.eq.s32.totalorder %s139, 0
      %p559 = por %p557, %p558
      %p560 = scmp.ne.s32.totalorder %s548, %s549
      %p561 = scmp.eq.s32.totalorder %s140, 1
      %p562 = por %p560, %p561
      %p564 = scmp.ne.s32.totalorder %s549, %s563
      %p565 = scmp.eq.s32.totalorder %s140, 0
      %p566 = por %p564, %p565
      %s568 = sadd.s32 %s567, 1
      %p571 = scmp.eq.s32.totalorder %s134, 1
      %p572 = scmp.ne.s32.totalorder %s567, %s569
      %p573 = scmp.eq.s32.totalorder %s134, 0
      %p574 = por %p572, %p573
      %p575 = scmp.ne.s32.totalorder %s567, %s569
      %p576 = scmp.eq.s32.totalorder %s139, 1
      %p577 = por %p575, %p576
      %p578 = scmp.ne.s32.totalorder %s569, %s570
      %p579 = scmp.eq.s32.totalorder %s139, 0
      %p580 = por %p578, %p579
      %p581 = scmp.ne.s32.totalorder %s569, %s570
      %p582 = scmp.eq.s32.totalorder %s140, 1
      %p583 = por %p581, %p582
      %p585 = scmp.ne.s32.totalorder %s570, %s584
      %p586 = scmp.eq.s32.totalorder %s140, 0
      %p587 = por %p585, %p586
      %s589 = sadd.s32 %s588, 1
      %p592 = scmp.eq.s32.totalorder %s134, 1
      %p593 = scmp.ne.s32.totalorder %s588, %s590
      %p594 = scmp.eq.s32.totalorder %s134, 0
      %p595 = por %p593, %p594
      %p596 = scmp.ne.s32.totalorder %s588, %s590
      %p597 = scmp.eq.s32.totalorder %s139, 1
      %p598 = por %p596, %p597
      %p599 = scmp.ne.s32.totalorder %s590, %s591
      %p600 = scmp.eq.s32.totalorder %s139, 0
      %p601 = por %p599, %p600
      %p602 = scmp.ne.s32.totalorder %s590, %s591
      %p603 = scmp.eq.s32.totalorder %s140, 1
      %p604 = por %p602, %p603
      %p606 = scmp.ne.s32.totalorder %s591, %s605
      %p607 = scmp.eq.s32.totalorder %s140, 0
      %p608 = por %p606, %p607
      %s610 = sadd.s32 %s609, 1
      %p613 = scmp.eq.s32.totalorder %s134, 1
      %p614 = scmp.ne.s32.totalorder %s609, %s611
      %p615 = scmp.eq.s32.totalorder %s134, 0
      %p616 = por %p614, %p615
      %p617 = scmp.ne.s32.totalorder %s609, %s611
      %p618 = scmp.eq.s32.totalorder %s139, 1
      %p619 = por %p617, %p618
      %p620 = scmp.ne.s32.totalorder %s611, %s612
      %p621 = scmp.eq.s32.totalorder %s139, 0
      %p622 = por %p620, %p621
      %p623 = scmp.ne.s32.totalorder %s611, %s612
      %p624 = scmp.eq.s32.totalorder %s140, 1
      %p625 = por %p623, %p624
      %p627 = scmp.ne.s32.totalorder %s612, %s626
      %p628 = scmp.eq.s32.totalorder %s140, 0
      %p629 = por %p627, %p628
      %s631 = sadd.s32 %s630, 1
      %p634 = scmp.eq.s32.totalorder %s134, 1
      %p635 = scmp.ne.s32.totalorder %s630, %s632
      %p636 = scmp.eq.s32.totalorder %s134, 0
      %p637 = por %p635, %p636
      %p638 = scmp.ne.s32.totalorder %s630, %s632
      %p639 = scmp.eq.s32.totalorder %s139, 1
      %p640 = por %p638, %p639
      %p641 = scmp.ne.s32.totalorder %s632, %s633
      %p642 = scmp.eq.s32.totalorder %s139, 0
      %p643 = por %p641, %p642
      %p644 = scmp.ne.s32.totalorder %s632, %s633
      %p645 = scmp.eq.s32.totalorder %s140, 1
      %p646 = por %p644, %p645
      %p648 = scmp.ne.s32.totalorder %s633, %s647
      %p649 = scmp.eq.s32.totalorder %s140, 0
      %p650 = por %p648, %p649
      %s652 = sadd.s32 %s651, 1
      %p655 = scmp.eq.s32.totalorder %s134, 1
      %p656 = scmp.ne.s32.totalorder %s651, %s653
      %p657 = scmp.eq.s32.totalorder %s134, 0
      %p658 = por %p656, %p657
      %p659 = scmp.ne.s32.totalorder %s651, %s653
      %p660 = scmp.eq.s32.totalorder %s139, 1
      %p661 = por %p659, %p660
      %p662 = scmp.ne.s32.totalorder %s653, %s654
      %p663 = scmp.eq.s32.totalorder %s139, 0
      %p664 = por %p662, %p663
      %p665 = scmp.ne.s32.totalorder %s653, %s654
      %p666 = scmp.eq.s32.totalorder %s140, 1
      %p667 = por %p665, %p666
      %p669 = scmp.ne.s32.totalorder %s654, %s668
      %p670 = scmp.eq.s32.totalorder %s140, 0
      %p671 = por %p669, %p670
      %s673 = sadd.s32 %s672, 1
      %p676 = scmp.eq.s32.totalorder %s134, 1
      %p677 = scmp.ne.s32.totalorder %s672, %s674
      %p678 = scmp.eq.s32.totalorder %s134, 0
      %p679 = por %p677, %p678
      %p680 = scmp.ne.s32.totalorder %s672, %s674
      %p681 = scmp.eq.s32.totalorder %s139, 1
      %p682 = por %p680, %p681
      %p683 = scmp.ne.s32.totalorder %s674, %s675
      %p684 = scmp.eq.s32.totalorder %s139, 0
      %p685 = por %p683, %p684
      %p686 = scmp.ne.s32.totalorder %s674, %s675
      %p687 = scmp.eq.s32.totalorder %s140, 1
      %p688 = por %p686, %p687
      %p690 = scmp.ne.s32.totalorder %s675, %s689
      %p691 = scmp.eq.s32.totalorder %s140, 0
      %p692 = por %p690, %p691
      %s694 = sadd.s32 %s693, 1
      %p697 = scmp.eq.s32.totalorder %s134, 1
      %p698 = scmp.ne.s32.totalorder %s693, %s695
      %p699 = scmp.eq.s32.totalorder %s134, 0
      %p700 = por %p698, %p699
      %p701 = scmp.ne.s32.totalorder %s693, %s695
      %p702 = scmp.eq.s32.totalorder %s139, 1
      %p703 = por %p701, %p702
      %p704 = scmp.ne.s32.totalorder %s695, %s696
      %p705 = scmp.eq.s32.totalorder %s139, 0
      %p706 = por %p704, %p705
      %p707 = scmp.ne.s32.totalorder %s695, %s696
      %p708 = scmp.eq.s32.totalorder %s140, 1
      %p709 = por %p707, %p708
      %p711 = scmp.ne.s32.totalorder %s696, %s710
      %p712 = scmp.eq.s32.totalorder %s140, 0
      %p713 = por %p711, %p712
      %s715 = sadd.s32 %s714, 1
      %p718 = scmp.eq.s32.totalorder %s134, 1
      %p719 = scmp.ne.s32.totalorder %s714, %s716
      %p720 = scmp.eq.s32.totalorder %s134, 0
      %p721 = por %p719, %p720
      %p722 = scmp.ne.s32.totalorder %s714, %s716
      %p723 = scmp.eq.s32.totalorder %s139, 1
      %p724 = por %p722, %p723
      %p725 = scmp.ne.s32.totalorder %s716, %s717
      %p726 = scmp.eq.s32.totalorder %s139, 0
      %p727 = por %p725, %p726
      %p728 = scmp.ne.s32.totalorder %s716, %s717
      %p729 = scmp.eq.s32.totalorder %s140, 1
      %p730 = por %p728, %p729
      %p732 = scmp.ne.s32.totalorder %s717, %s731
      %p733 = scmp.eq.s32.totalorder %s140, 0
      %p734 = por %p732, %p733
      %s736 = sadd.s32 %s735, 1
      %p739 = scmp.eq.s32.totalorder %s134, 1
      %p740 = scmp.ne.s32.totalorder %s735, %s737
      %p741 = scmp.eq.s32.totalorder %s134, 0
      %p742 = por %p740, %p741
      %p743 = scmp.ne.s32.totalorder %s735, %s737
      %p744 = scmp.eq.s32.totalorder %s139, 1
      %p745 = por %p743, %p744
      %p746 = scmp.ne.s32.totalorder %s737, %s738
      %p747 = scmp.eq.s32.totalorder %s139, 0
      %p748 = por %p746, %p747
      %p749 = scmp.ne.s32.totalorder %s737, %s738
      %p750 = scmp.eq.s32.totalorder %s140, 1
      %p751 = por %p749, %p750
      %p753 = scmp.ne.s32.totalorder %s738, %s752
      %p754 = scmp.eq.s32.totalorder %s140, 0
      %p755 = por %p753, %p754
      %s757 = sadd.s32 %s756, 1
      %p760 = scmp.eq.s32.totalorder %s134, 1
      %p761 = scmp.ne.s32.totalorder %s756, %s758
      %p762 = scmp.eq.s32.totalorder %s134, 0
      %p763 = por %p761, %p762
      %p764 = scmp.ne.s32.totalorder %s756, %s758
      %p765 = scmp.eq.s32.totalorder %s139, 1
      %p766 = por %p764, %p765
      %p767 = scmp.ne.s32.totalorder %s758, %s759
      %p768 = scmp.eq.s32.totalorder %s139, 0
      %p769 = por %p767, %p768
      %p770 = scmp.ne.s32.totalorder %s758, %s759
      %p771 = scmp.eq.s32.totalorder %s140, 1
      %p772 = por %p770, %p771
      %p774 = scmp.ne.s32.totalorder %s759, %s773
      %p775 = scmp.eq.s32.totalorder %s140, 0
      %p776 = por %p774, %p775
      %s778 = sadd.s32 %s777, 1
      %p781 = scmp.eq.s32.totalorder %s134, 1
      %p782 = scmp.ne.s32.totalorder %s777, %s779
      %p783 = scmp.eq.s32.totalorder %s134, 0
      %p784 = por %p782, %p783
      %p785 = scmp.ne.s32.totalorder %s777, %s779
      %p786 = scmp.eq.s32.totalorder %s139, 1
      %p787 = por %p785, %p786
      %p788 = scmp.ne.s32.totalorder %s779, %s780
      %p789 = scmp.eq.s32.totalorder %s139, 0
      %p790 = por %p788, %p789
      %p791 = scmp.ne.s32.totalorder %s779, %s780
      %p792 = scmp.eq.s32.totalorder %s140, 1
      %p793 = por %p791, %p792
      %p795 = scmp.ne.s32.totalorder %s780, %s794
      %p796 = scmp.eq.s32.totalorder %s140, 0
      %p797 = por %p795, %p796
      %s799 = sadd.s32 %s798, 1
      %p802 = scmp.eq.s32.totalorder %s134, 1
      %p803 = scmp.ne.s32.totalorder %s798, %s800
      %p804 = scmp.eq.s32.totalorder %s134, 0
      %p805 = por %p803, %p804
      %p806 = scmp.ne.s32.totalorder %s798, %s800
      %p807 = scmp.eq.s32.totalorder %s139, 1
      %p808 = por %p806, %p807
      %p809 = scmp.ne.s32.totalorder %s800, %s801
      %p810 = scmp.eq.s32.totalorder %s139, 0
      %p811 = por %p809, %p810
      %p812 = scmp.ne.s32.totalorder %s800, %s801
      %p813 = scmp.eq.s32.totalorder %s140, 1
      %p814 = por %p812, %p813
      %p816 = scmp.ne.s32.totalorder %s801, %s815
      %p817 = scmp.eq.s32.totalorder %s140, 0
      %p818 = por %p816, %p817
      %s820 = sadd.s32 %s819, 1
      %p823 = scmp.eq.s32.totalorder %s134, 1
      %p824 = scmp.ne.s32.totalorder %s819, %s821
      %p825 = scmp.eq.s32.totalorder %s134, 0
      %p826 = por %p824, %p825
      %p827 = scmp.ne.s32.totalorder %s819, %s821
      %p828 = scmp.eq.s32.totalorder %s139, 1
      %p829 = por %p827, %p828
      %p830 = scmp.ne.s32.totalorder %s821, %s822
      %p831 = scmp.eq.s32.totalorder %s139, 0
      %p832 = por %p830, %p831
      %p833 = scmp.ne.s32.totalorder %s821, %s822
      %p834 = scmp.eq.s32.totalorder %s140, 1
      %p835 = por %p833, %p834
      %p837 = scmp.ne.s32.totalorder %s822, %s836
      %p838 = scmp.eq.s32.totalorder %s140, 0
      %p839 = por %p837, %p838
      %s841 = sadd.s32 %s840, 1
      %p844 = scmp.eq.s32.totalorder %s134, 1
      %p845 = scmp.ne.s32.totalorder %s840, %s842
      %p846 = scmp.eq.s32.totalorder %s134, 0
      %p847 = por %p845, %p846
      %p848 = scmp.ne.s32.totalorder %s840, %s842
      %p849 = scmp.eq.s32.totalorder %s139, 1
      %p850 = por %p848, %p849
      %p851 = scmp.ne.s32.totalorder %s842, %s843
      %p852 = scmp.eq.s32.totalorder %s139, 0
      %p853 = por %p851, %p852
      %p854 = scmp.ne.s32.totalorder %s842, %s843
      %p855 = scmp.eq.s32.totalorder %s140, 1
      %p856 = por %p854, %p855
      %p858 = scmp.ne.s32.totalorder %s843, %s857
      %p859 = scmp.eq.s32.totalorder %s140, 0
      %p860 = por %p858, %p859
      %s862 = sadd.s32 %s861, 1
      %p865 = scmp.eq.s32.totalorder %s134, 1
      %p866 = scmp.ne.s32.totalorder %s861, %s863
      %p867 = scmp.eq.s32.totalorder %s134, 0
      %p868 = por %p866, %p867
      %p869 = scmp.ne.s32.totalorder %s861, %s863
      %p870 = scmp.eq.s32.totalorder %s139, 1
      %p871 = por %p869, %p870
      %p872 = scmp.ne.s32.totalorder %s863, %s864
      %p873 = scmp.eq.s32.totalorder %s139, 0
      %p874 = por %p872, %p873
      %p875 = scmp.ne.s32.totalorder %s863, %s864
      %p876 = scmp.eq.s32.totalorder %s140, 1
      %p877 = por %p875, %p876
      %p879 = scmp.ne.s32.totalorder %s864, %s878
      %p880 = scmp.eq.s32.totalorder %s140, 0
      %p881 = por %p879, %p880
      %s883 = sadd.s32 %s882, 1
      %p886 = scmp.eq.s32.totalorder %s134, 1
      %p887 = scmp.ne.s32.totalorder %s882, %s884
      %p888 = scmp.eq.s32.totalorder %s134, 0
      %p889 = por %p887, %p888
      %p890 = scmp.ne.s32.totalorder %s882, %s884
      %p891 = scmp.eq.s32.totalorder %s139, 1
      %p892 = por %p890, %p891
      %p893 = scmp.ne.s32.totalorder %s884, %s885
      %p894 = scmp.eq.s32.totalorder %s139, 0
      %p895 = por %p893, %p894
      %p896 = scmp.ne.s32.totalorder %s884, %s885
      %p897 = scmp.eq.s32.totalorder %s140, 1
      %p898 = por %p896, %p897
      %p900 = scmp.ne.s32.totalorder %s885, %s899
      %p901 = scmp.eq.s32.totalorder %s140, 0
      %p902 = por %p900, %p901
      %s904 = sadd.s32 %s903, 1
      %p907 = scmp.eq.s32.totalorder %s134, 1
      %p908 = scmp.ne.s32.totalorder %s903, %s905
      %p909 = scmp.eq.s32.totalorder %s134, 0
      %p910 = por %p908, %p909
      %p911 = scmp.ne.s32.totalorder %s903, %s905
      %p912 = scmp.eq.s32.totalorder %s139, 1
      %p913 = por %p911, %p912
      %p914 = scmp.ne.s32.totalorder %s905, %s906
      %p915 = scmp.eq.s32.totalorder %s139, 0
      %p916 = por %p914, %p915
      %p917 = scmp.ne.s32.totalorder %s905, %s906
      %p918 = scmp.eq.s32.totalorder %s140, 1
      %p919 = por %p917, %p918
      %p921 = scmp.ne.s32.totalorder %s906, %s920
      %p922 = scmp.eq.s32.totalorder %s140, 0
      %p923 = por %p921, %p922
      %s925 = sadd.s32 %s924, 1
      %p928 = scmp.eq.s32.totalorder %s134, 1
      %p929 = scmp.ne.s32.totalorder %s924, %s926
      %p930 = scmp.eq.s32.totalorder %s134, 0
      %p931 = por %p929, %p930
      %p932 = scmp.ne.s32.totalorder %s924, %s926
      %p933 = scmp.eq.s32.totalorder %s139, 1
      %p934 = por %p932, %p933
      %p935 = scmp.ne.s32.totalorder %s926, %s927
      %p936 = scmp.eq.s32.totalorder %s139, 0
      %p937 = por %p935, %p936
      %p938 = scmp.ne.s32.totalorder %s926, %s927
      %p939 = scmp.eq.s32.totalorder %s140, 1
      %p940 = por %p938, %p939
      %p942 = scmp.ne.s32.totalorder %s927, %s941
      %p943 = scmp.eq.s32.totalorder %s140, 0
      %p944 = por %p942, %p943
      %s946 = sadd.s32 %s945, 1
      %p949 = scmp.eq.s32.totalorder %s134, 1
      %p950 = scmp.ne.s32.totalorder %s945, %s947
      %p951 = scmp.eq.s32.totalorder %s134, 0
      %p952 = por %p950, %p951
      %p953 = scmp.ne.s32.totalorder %s945, %s947
      %p954 = scmp.eq.s32.totalorder %s139, 1
      %p955 = por %p953, %p954
      %p956 = scmp.ne.s32.totalorder %s947, %s948
      %p957 = scmp.eq.s32.totalorder %s139, 0
      %p958 = por %p956, %p957
      %p959 = scmp.ne.s32.totalorder %s947, %s948
      %p960 = scmp.eq.s32.totalorder %s140, 1
      %p961 = por %p959, %p960
      %p963 = scmp.ne.s32.totalorder %s948, %s962
      %p964 = scmp.eq.s32.totalorder %s140, 0
      %p965 = por %p963, %p964
      %s967 = sadd.s32 %s966, 1
      %p970 = scmp.eq.s32.totalorder %s134, 1
      %p971 = scmp.ne.s32.totalorder %s966, %s968
      %p972 = scmp.eq.s32.totalorder %s134, 0
      %p973 = por %p971, %p972
      %p974 = scmp.ne.s32.totalorder %s966, %s968
      %p975 = scmp.eq.s32.totalorder %s139, 1
      %p976 = por %p974, %p975
      %p977 = scmp.ne.s32.totalorder %s968, %s969
      %p978 = scmp.eq.s32.totalorder %s139, 0
      %p979 = por %p977, %p978
      %p980 = scmp.ne.s32.totalorder %s968, %s969
      %p981 = scmp.eq.s32.totalorder %s140, 1
      %p982 = por %p980, %p981
      %p984 = scmp.ne.s32.totalorder %s969, %s983
      %p985 = scmp.eq.s32.totalorder %s140, 0
      %p986 = por %p984, %p985
      %s988 = sadd.s32 %s987, 1
      %p991 = scmp.eq.s32.totalorder %s134, 1
      %p992 = scmp.ne.s32.totalorder %s987, %s989
      %p993 = scmp.eq.s32.totalorder %s134, 0
      %p994 = por %p992, %p993
      %p995 = scmp.ne.s32.totalorder %s987, %s989
      %p996 = scmp.eq.s32.totalorder %s139, 1
      %p997 = por %p995, %p996
      %p998 = scmp.ne.s32.totalorder %s989, %s990
      %p999 = scmp.eq.s32.totalorder %s139, 0
      %p1000 = por %p998, %p999
      %p1001 = scmp.ne.s32.totalorder %s989, %s990
      %p1002 = scmp.eq.s32.totalorder %s140, 1
      %p1003 = por %p1001, %p1002
      %p1005 = scmp.ne.s32.totalorder %s990, %s1004
      %p1006 = scmp.eq.s32.totalorder %s140, 0
      %p1007 = por %p1005, %p1006
      %s1009 = sadd.s32 %s1008, 1
      %p1012 = scmp.eq.s32.totalorder %s134, 1
      %p1013 = scmp.ne.s32.totalorder %s1008, %s1010
      %p1014 = scmp.eq.s32.totalorder %s134, 0
      %p1015 = por %p1013, %p1014
      %p1016 = scmp.ne.s32.totalorder %s1008, %s1010
      %p1017 = scmp.eq.s32.totalorder %s139, 1
      %p1018 = por %p1016, %p1017
      %p1019 = scmp.ne.s32.totalorder %s1010, %s1011
      %p1020 = scmp.eq.s32.totalorder %s139, 0
      %p1021 = por %p1019, %p1020
      %p1022 = scmp.ne.s32.totalorder %s1010, %s1011
      %p1023 = scmp.eq.s32.totalorder %s140, 1
      %p1024 = por %p1022, %p1023
      %p1026 = scmp.ne.s32.totalorder %s1011, %s1025
      %p1027 = scmp.eq.s32.totalorder %s140, 0
      %p1028 = por %p1026, %p1027
      %s1030 = sadd.s32 %s1029, 1
      %p1033 = scmp.eq.s32.totalorder %s134, 1
      %p1034 = scmp.ne.s32.totalorder %s1029, %s1031
      %p1035 = scmp.eq.s32.totalorder %s134, 0
      %p1036 = por %p1034, %p1035
      %p1037 = scmp.ne.s32.totalorder %s1029, %s1031
      %p1038 = scmp.eq.s32.totalorder %s139, 1
      %p1039 = por %p1037, %p1038
      %p1040 = scmp.ne.s32.totalorder %s1031, %s1032
      %p1041 = scmp.eq.s32.totalorder %s139, 0
      %p1042 = por %p1040, %p1041
      %p1043 = scmp.ne.s32.totalorder %s1031, %s1032
      %p1044 = scmp.eq.s32.totalorder %s140, 1
      %p1045 = por %p1043, %p1044
      %p1047 = scmp.ne.s32.totalorder %s1032, %s1046
      %p1048 = scmp.eq.s32.totalorder %s140, 0
      %p1049 = por %p1047, %p1048
      %s1051 = sadd.s32 %s1050, 1
      %p1054 = scmp.eq.s32.totalorder %s134, 1
      %p1055 = scmp.ne.s32.totalorder %s1050, %s1052
      %p1056 = scmp.eq.s32.totalorder %s134, 0
      %p1057 = por %p1055, %p1056
      %p1058 = scmp.ne.s32.totalorder %s1050, %s1052
      %p1059 = scmp.eq.s32.totalorder %s139, 1
      %p1060 = por %p1058, %p1059
      %p1061 = scmp.ne.s32.totalorder %s1052, %s1053
      %p1062 = scmp.eq.s32.totalorder %s139, 0
      %p1063 = por %p1061, %p1062
      %p1064 = scmp.ne.s32.totalorder %s1052, %s1053
      %p1065 = scmp.eq.s32.totalorder %s140, 1
      %p1066 = por %p1064, %p1065
      %p1068 = scmp.ne.s32.totalorder %s1053, %s1067
      %p1069 = scmp.eq.s32.totalorder %s140, 0
      %p1070 = por %p1068, %p1069
      %s1072 = sadd.s32 %s1071, 1
      %p1075 = scmp.eq.s32.totalorder %s134, 1
      %p1076 = scmp.ne.s32.totalorder %s1071, %s1073
      %p1077 = scmp.eq.s32.totalorder %s134, 0
      %p1078 = por %p1076, %p1077
      %p1079 = scmp.ne.s32.totalorder %s1071, %s1073
      %p1080 = scmp.eq.s32.totalorder %s139, 1
      %p1081 = por %p1079, %p1080
      %p1082 = scmp.ne.s32.totalorder %s1073, %s1074
      %p1083 = scmp.eq.s32.totalorder %s139, 0
      %p1084 = por %p1082, %p1083
      %p1085 = scmp.ne.s32.totalorder %s1073, %s1074
      %p1086 = scmp.eq.s32.totalorder %s140, 1
      %p1087 = por %p1085, %p1086
      %p1089 = scmp.ne.s32.totalorder %s1074, %s1088
      %p1090 = scmp.eq.s32.totalorder %s140, 0
      %p1091 = por %p1089, %p1090
      %s1093 = sadd.s32 %s1092, 1
      %p1096 = scmp.eq.s32.totalorder %s134, 1
      %p1097 = scmp.ne.s32.totalorder %s1092, %s1094
      %p1098 = scmp.eq.s32.totalorder %s134, 0
      %p1099 = por %p1097, %p1098
      %p1100 = scmp.ne.s32.totalorder %s1092, %s1094
      %p1101 = scmp.eq.s32.totalorder %s139, 1
      %p1102 = por %p1100, %p1101
      %p1103 = scmp.ne.s32.totalorder %s1094, %s1095
      %p1104 = scmp.eq.s32.totalorder %s139, 0
      %p1105 = por %p1103, %p1104
      %p1106 = scmp.ne.s32.totalorder %s1094, %s1095
      %p1107 = scmp.eq.s32.totalorder %s140, 1
      %p1108 = por %p1106, %p1107
      %p1110 = scmp.ne.s32.totalorder %s1095, %s1109
      %p1111 = scmp.eq.s32.totalorder %s140, 0
      %p1112 = por %p1110, %p1111
      %s1114 = sadd.s32 %s1113, 1
      %p1117 = scmp.eq.s32.totalorder %s134, 1
      %p1118 = scmp.ne.s32.totalorder %s1113, %s1115
      %p1119 = scmp.eq.s32.totalorder %s134, 0
      %p1120 = por %p1118, %p1119
      %p1121 = scmp.ne.s32.totalorder %s1113, %s1115
      %p1122 = scmp.eq.s32.totalorder %s139, 1
      %p1123 = por %p1121, %p1122
      %p1124 = scmp.ne.s32.totalorder %s1115, %s1116
      %p1125 = scmp.eq.s32.totalorder %s139, 0
      %p1126 = por %p1124, %p1125
      %p1127 = scmp.ne.s32.totalorder %s1115, %s1116
      %p1128 = scmp.eq.s32.totalorder %s140, 1
      %p1129 = por %p1127, %p1128
      %p1131 = scmp.ne.s32.totalorder %s1116, %s1130
      %p1132 = scmp.eq.s32.totalorder %s140, 0
      %p1133 = por %p1131, %p1132
      %s1135 = sadd.s32 %s1134, 1
      %p1138 = scmp.eq.s32.totalorder %s134, 1
      %p1139 = scmp.ne.s32.totalorder %s1134, %s1136
      %p1140 = scmp.eq.s32.totalorder %s134, 0
      %p1141 = por %p1139, %p1140
      %p1142 = scmp.ne.s32.totalorder %s1134, %s1136
      %p1143 = scmp.eq.s32.totalorder %s139, 1
      %p1144 = por %p1142, %p1143
      %p1145 = scmp.ne.s32.totalorder %s1136, %s1137
      %p1146 = scmp.eq.s32.totalorder %s139, 0
      %p1147 = por %p1145, %p1146
      %p1148 = scmp.ne.s32.totalorder %s1136, %s1137
      %p1149 = scmp.eq.s32.totalorder %s140, 1
      %p1150 = por %p1148, %p1149
      %p1152 = scmp.ne.s32.totalorder %s1137, %s1151
      %p1153 = scmp.eq.s32.totalorder %s140, 0
      %p1154 = por %p1152, %p1153
      %s1156 = sadd.s32 %s1155, 1
      %p1159 = scmp.eq.s32.totalorder %s134, 1
      %p1160 = scmp.ne.s32.totalorder %s1155, %s1157
      %p1161 = scmp.eq.s32.totalorder %s134, 0
      %p1162 = por %p1160, %p1161
      %p1163 = scmp.ne.s32.totalorder %s1155, %s1157
      %p1164 = scmp.eq.s32.totalorder %s139, 1
      %p1165 = por %p1163, %p1164
      %p1166 = scmp.ne.s32.totalorder %s1157, %s1158
      %p1167 = scmp.eq.s32.totalorder %s139, 0
      %p1168 = por %p1166, %p1167
      %p1169 = scmp.ne.s32.totalorder %s1157, %s1158
      %p1170 = scmp.eq.s32.totalorder %s140, 1
      %p1171 = por %p1169, %p1170
      %p1173 = scmp.ne.s32.totalorder %s1158, %s1172
      %p1174 = scmp.eq.s32.totalorder %s140, 0
      %p1175 = por %p1173, %p1174
      %s1177 = sadd.s32 %s1176, 1
      %p1180 = scmp.eq.s32.totalorder %s134, 1
      %p1181 = scmp.ne.s32.totalorder %s1176, %s1178
      %p1182 = scmp.eq.s32.totalorder %s134, 0
      %p1183 = por %p1181, %p1182
      %p1184 = scmp.ne.s32.totalorder %s1176, %s1178
      %p1185 = scmp.eq.s32.totalorder %s139, 1
      %p1186 = por %p1184, %p1185
      %p1187 = scmp.ne.s32.totalorder %s1178, %s1179
      %p1188 = scmp.eq.s32.totalorder %s139, 0
      %p1189 = por %p1187, %p1188
      %p1190 = scmp.ne.s32.totalorder %s1178, %s1179
      %p1191 = scmp.eq.s32.totalorder %s140, 1
      %p1192 = por %p1190, %p1191
      %p1194 = scmp.ne.s32.totalorder %s1179, %s1193
      %p1195 = scmp.eq.s32.totalorder %s140, 0
      %p1196 = por %p1194, %p1195
      %s1198 = sadd.s32 %s1197, 1
      %p1201 = scmp.eq.s32.totalorder %s134, 1
      %p1202 = scmp.ne.s32.totalorder %s1197, %s1199
      %p1203 = scmp.eq.s32.totalorder %s134, 0
      %p1204 = por %p1202, %p1203
      %p1205 = scmp.ne.s32.totalorder %s1197, %s1199
      %p1206 = scmp.eq.s32.totalorder %s139, 1
      %p1207 = por %p1205, %p1206
      %p1208 = scmp.ne.s32.totalorder %s1199, %s1200
      %p1209 = scmp.eq.s32.totalorder %s139, 0
      %p1210 = por %p1208, %p1209
      %p1211 = scmp.ne.s32.totalorder %s1199, %s1200
      %p1212 = scmp.eq.s32.totalorder %s140, 1
      %p1213 = por %p1211, %p1212
      %p1215 = scmp.ne.s32.totalorder %s1200, %s1214
      %p1216 = scmp.eq.s32.totalorder %s140, 0
      %p1217 = por %p1215, %p1216
      %s1218 = ssub.s32 %s134, %s141
      %p1219 = scmp.eq.s32.totalorder %s1218, 0
      %s1221 = sadd.s32 %s1220, 1
      %s1222 = scalar_select %p1219, %s1220, %s1221
      %p1225 = pneg %p1219
      %p1226 = scmp.eq.s32.totalorder %s134, 1
      %p1227 = por %p1225, %p1226
      %p1228 = scmp.ne.s32.totalorder %s1220, %s1223
      %p1229 = scmp.eq.s32.totalorder %s134, 0
      %p1230 = por %p1228, %p1229
      %p1231 = scmp.ne.s32.totalorder %s1220, %s1223
      %p1232 = scmp.eq.s32.totalorder %s139, 1
      %p1233 = por %p1231, %p1232
      %p1234 = scmp.ne.s32.totalorder %s1223, %s1224
      %p1235 = scmp.eq.s32.totalorder %s139, 0
      %p1236 = por %p1234, %p1235
      %p1237 = scmp.ne.s32.totalorder %s1223, %s1224
      %p1238 = scmp.eq.s32.totalorder %s140, 1
      %p1239 = por %p1237, %p1238
      %p1241 = scmp.ne.s32.totalorder %s1224, %s1240
      %p1242 = scmp.eq.s32.totalorder %s140, 0
      %p1243 = por %p1241, %p1242
      %p1244 = scmp.le.s32.totalorder 1, %s134
      %p1245 = scmp.lt.s32.totalorder %s134, 3
      %p1246 = pnand %p1244, %p1245
      %p1247 = pneg %p1246
      // Predicated region
      $region9: #{stpgcn_bottom_up_forward.1} parent=5 // pred_check
        _
      $region10: #{stpgcn_bottom_up_forward.1} parent=5 // pred_check_branch
        %1249 = sbr.rel (%p1246) target = $region12
      $region11: #{stpgcn_bottom_up_forward.1} parent=5 // pred_region
        %s1250 = ssub.s32 %s134, 1
        // Predicated region
        $region13: #{stpgcn_bottom_up_forward.1} parent=11 // pred_check
          %p1251 = pneg %p181
        $region14: #{stpgcn_bottom_up_forward.1} parent=11 // pred_check_branch
          %1253 = sbr.rel (%p1251) target = $region16
        $region15: #{stpgcn_bottom_up_forward.1} parent=11 // pred_region
          %s1255 = ssub.s32 16, 16
          %1256 = vsyncadd [#allocation4], %s1255
          %s1258 = sshll.u32 [#allocation3], 4
          %s1259 = int_to_ptr.vmem [resolvable:$true] %s1258
          %1261 = dma.hbm_to_vmem [thread:$0]  %s3, 16, %s1259, [#allocation4]
        $region16: #{stpgcn_bottom_up_forward.1} parent=11 // pred_fallthru
          _
        // Predicated region
        $region17: #{stpgcn_bottom_up_forward.1} parent=11 // pred_check
          %p1262 = pneg %p202
        $region18: #{stpgcn_bottom_up_forward.1} parent=11 // pred_check_branch
          %1264 = sbr.rel (%p1262) target = $region20
        $region19: #{stpgcn_bottom_up_forward.1} parent=11 // pred_region
          %s1266 = ssub.s32 6144, 6144
          %1267 = vsyncadd [#allocation7], %s1266
          %s1268 = sshll.u32 [#allocation6], 4
          %s1269 = int_to_ptr.vmem [resolvable:$true] %s1268
          %1274 = dma.hbm_to_vmem [thread:$0]  %s5, 6144, %s1269, [#allocation7], 256, 256, 16
        $region20: #{stpgcn_bottom_up_forward.1} parent=11 // pred_fallthru
          _
        // Predicated region
        $region21: #{stpgcn_bottom_up_forward.1} parent=11 // pred_check
          %p1275 = pneg %p223
        $region22: #{stpgcn_bottom_up_forward.1} parent=11 // pred_check_branch
          %1277 = sbr.rel (%p1275) target = $region24
        $region23: #{stpgcn_bottom_up_forward.1} parent=11 // pred_region
          _
        $region24: #{stpgcn_bottom_up_forward.1} parent=11 // pred_fallthru
          _
        // Predicated region
        $region25: #{stpgcn_bottom_up_forward.1} parent=11 // pred_check
          %p1278 = pneg %p244
        $region26: #{stpgcn_bottom_up_forward.1} parent=11 // pred_check_branch
          %1280 = sbr.rel (%p1278) target = $region28
        $region27: #{stpgcn_bottom_up_forward.1} parent=11 // pred_region
          %s1282 = ssub.s32 256, 256
          %1283 = vsyncadd [#allocation7], %s1282
          %s1284 = sshll.u32 [#allocation8], 4
          %s1285 = int_to_ptr.vmem [resolvable:$true] %s1284
          %1290 = dma.hbm_to_vmem [thread:$0]  %s9, 256, %s1285, [#allocation7], 128, 128, 8
        $region28: #{stpgcn_bottom_up_forward.1} parent=11 // pred_fallthru
          _
        // Predicated region
        $region29: #{stpgcn_bottom_up_forward.1} parent=11 // pred_check
          %p1291 = pneg %p265
        $region30: #{stpgcn_bottom_up_forward.1} parent=11 // pred_check_branch
          %1293 = sbr.rel (%p1291) target = $region32
        $region31: #{stpgcn_bottom_up_forward.1} parent=11 // pred_region
          %s1295 = ssub.s32 256, 256
          %1296 = vsyncadd [#allocation10], %s1295
          %s1297 = sshll.u32 [#allocation9], 4
          %s1298 = int_to_ptr.vmem [resolvable:$true] %s1297
          %1303 = dma.hbm_to_vmem [thread:$0]  %s11, 256, %s1298, [#allocation10], 128, 128, 8
        $region32: #{stpgcn_bottom_up_forward.1} parent=11 // pred_fallthru
          _
        // Predicated region
        $region33: #{stpgcn_bottom_up_forward.1} parent=11 // pred_check
          %p1304 = pneg %p286
        $region34: #{stpgcn_bottom_up_forward.1} parent=11 // pred_check_branch
          %1306 = sbr.rel (%p1304) target = $region36
        $region35: #{stpgcn_bottom_up_forward.1} parent=11 // pred_region
          %s1308 = ssub.s32 256, 256
          %1309 = vsyncadd [#allocation10], %s1308
          %s1310 = sshll.u32 [#allocation11], 4
          %s1311 = int_to_ptr.vmem [resolvable:$true] %s1310
          %1316 = dma.hbm_to_vmem [thread:$0]  %s13, 256, %s1311, [#allocation10], 128, 128, 8
        $region36: #{stpgcn_bottom_up_forward.1} parent=11 // pred_fallthru
          _
        // Predicated region
        $region37: #{stpgcn_bottom_up_forward.1} parent=11 // pred_check
          %p1317 = pneg %p307
        $region38: #{stpgcn_bottom_up_forward.1} parent=11 // pred_check_branch
          %1319 = sbr.rel (%p1317) target = $region40
        $region39: #{stpgcn_bottom_up_forward.1} parent=11 // pred_region
          %s1321 = ssub.s32 256, 256
          %1322 = vsyncadd [#allocation13], %s1321
          %s1323 = sshll.u32 [#allocation12], 4
          %s1324 = int_to_ptr.vmem [resolvable:$true] %s1323
          %1329 = dma.hbm_to_vmem [thread:$0]  %s15, 256, %s1324, [#allocation13], 128, 128, 8
        $region40: #{stpgcn_bottom_up_forward.1} parent=11 // pred_fallthru
          _
        // Predicated region
        $region41: #{stpgcn_bottom_up_forward.1} parent=11 // pred_check
          %p1330 = pneg %p328
        $region42: #{stpgcn_bottom_up_forward.1} parent=11 // pred_check_branch
          %1332 = sbr.rel (%p1330) target = $region44
        $region43: #{stpgcn_bottom_up_forward.1} parent=11 // pred_region
          _
        $region44: #{stpgcn_bottom_up_forward.1} parent=11 // pred_fallthru
          _
        // Predicated region
        $region45: #{stpgcn_bottom_up_forward.1} parent=11 // pred_check
          %p1333 = pneg %p349
        $region46: #{stpgcn_bottom_up_forward.1} parent=11 // pred_check_branch
          %1335 = sbr.rel (%p1333) target = $region48
        $region47: #{stpgcn_bottom_up_forward.1} parent=11 // pred_region
          _
        $region48: #{stpgcn_bottom_up_forward.1} parent=11 // pred_fallthru
          _
        // Predicated region
        $region49: #{stpgcn_bottom_up_forward.1} parent=11 // pred_check
          %p1336 = pneg %p370
        $region50: #{stpgcn_bottom_up_forward.1} parent=11 // pred_check_branch
          %1338 = sbr.rel (%p1336) target = $region52
        $region51: #{stpgcn_bottom_up_forward.1} parent=11 // pred_region
          %s1340 = ssub.s32 512, 512
          %1341 = vsyncadd [#allocation13], %s1340
          %s1342 = sshll.u32 [#allocation14], 4
          %s1343 = int_to_ptr.vmem [resolvable:$true] %s1342
          %1348 = dma.hbm_to_vmem [thread:$0]  %s21, 512, %s1343, [#allocation13], 128, 128, 8
        $region52: #{stpgcn_bottom_up_forward.1} parent=11 // pred_fallthru
          _
        // Predicated region
        $region53: #{stpgcn_bottom_up_forward.1} parent=11 // pred_check
          %p1349 = pneg %p391
        $region54: #{stpgcn_bottom_up_forward.1} parent=11 // pred_check_branch
          %1351 = sbr.rel (%p1349) target = $region56
        $region55: #{stpgcn_bottom_up_forward.1} parent=11 // pred_region
          %s1353 = ssub.s32 1280, 1280
          %1354 = vsyncadd [#allocation16], %s1353
          %s1355 = sshll.u32 [#allocation15], 4
          %s1356 = int_to_ptr.vmem [resolvable:$true] %s1355
          %1361 = dma.hbm_to_vmem [thread:$0]  %s23, 1280, %s1356, [#allocation16], 128, 128, 8
        $region56: #{stpgcn_bottom_up_forward.1} parent=11 // pred_fallthru
          _
        // Predicated region
        $region57: #{stpgcn_bottom_up_forward.1} parent=11 // pred_check
          %p1362 = pneg %p412
        $region58: #{stpgcn_bottom_up_forward.1} parent=11 // pred_check_branch
          %1364 = sbr.rel (%p1362) target = $region60
        $region59: #{stpgcn_bottom_up_forward.1} parent=11 // pred_region
          %s1366 = ssub.s32 16, 16
          %1367 = vsyncadd [#allocation16], %s1366
          %s1369 = sshll.u32 [#allocation17], 4
          %s1370 = int_to_ptr.vmem [resolvable:$true] %s1369
          %1372 = dma.hbm_to_vmem [thread:$0]  %s25, 16, %s1370, [#allocation16]
        $region60: #{stpgcn_bottom_up_forward.1} parent=11 // pred_fallthru
          _
        // Predicated region
        $region61: #{stpgcn_bottom_up_forward.1} parent=11 // pred_check
          %p1373 = pneg %p433
        $region62: #{stpgcn_bottom_up_forward.1} parent=11 // pred_check_branch
          %1375 = sbr.rel (%p1373) target = $region64
        $region63: #{stpgcn_bottom_up_forward.1} parent=11 // pred_region
          %s1377 = ssub.s32 512, 512
          %1378 = vsyncadd [#allocation19], %s1377
          %s1379 = sshll.u32 [#allocation18], 4
          %s1380 = int_to_ptr.vmem [resolvable:$true] %s1379
          %1385 = dma.hbm_to_vmem [thread:$0]  %s27, 512, %s1380, [#allocation19], 128, 128, 8
        $region64: #{stpgcn_bottom_up_forward.1} parent=11 // pred_fallthru
          _
        // Predicated region
        $region65: #{stpgcn_bottom_up_forward.1} parent=11 // pred_check
          %p1386 = pneg %p454
        $region66: #{stpgcn_bottom_up_forward.1} parent=11 // pred_check_branch
          %1388 = sbr.rel (%p1386) target = $region68
        $region67: #{stpgcn_bottom_up_forward.1} parent=11 // pred_region
          %s1390 = ssub.s32 16, 16
          %1391 = vsyncadd [#allocation19], %s1390
          %s1393 = sshll.u32 [#allocation20], 4
          %s1394 = int_to_ptr.vmem [resolvable:$true] %s1393
          %1396 = dma.hbm_to_vmem [thread:$0]  %s29, 16, %s1394, [#allocation19]
        $region68: #{stpgcn_bottom_up_forward.1} parent=11 // pred_fallthru
          _
        // Predicated region
        $region69: #{stpgcn_bottom_up_forward.1} parent=11 // pred_check
          %p1397 = pneg %p475
        $region70: #{stpgcn_bottom_up_forward.1} parent=11 // pred_check_branch
          %1399 = sbr.rel (%p1397) target = $region72
        $region71: #{stpgcn_bottom_up_forward.1} parent=11 // pred_region
          %s1401 = ssub.s32 16, 16
          %1402 = vsyncadd [#allocation22], %s1401
          %s1404 = sshll.u32 [#allocation21], 4
          %s1405 = int_to_ptr.vmem [resolvable:$true] %s1404
          %1407 = dma.hbm_to_vmem [thread:$0]  %s31, 16, %s1405, [#allocation22]
        $region72: #{stpgcn_bottom_up_forward.1} parent=11 // pred_fallthru
          _
        // Predicated region
        $region73: #{stpgcn_bottom_up_forward.1} parent=11 // pred_check
          %p1408 = pneg %p496
        $region74: #{stpgcn_bottom_up_forward.1} parent=11 // pred_check_branch
          %1410 = sbr.rel (%p1408) target = $region76
        $region75: #{stpgcn_bottom_up_forward.1} parent=11 // pred_region
          %s1412 = ssub.s32 32, 32
          %1413 = vsyncadd [#allocation22], %s1412
          %s1414 = sshll.u32 [#allocation23], 4
          %s1415 = int_to_ptr.vmem [resolvable:$true] %s1414
          %1420 = dma.hbm_to_vmem [thread:$0]  %s33, 32, %s1415, [#allocation22], 16, 16, 1
        $region76: #{stpgcn_bottom_up_forward.1} parent=11 // pred_fallthru
          _
        // Predicated region
        $region77: #{stpgcn_bottom_up_forward.1} parent=11 // pred_check
          %p1421 = pneg %p517
        $region78: #{stpgcn_bottom_up_forward.1} parent=11 // pred_check_branch
          %1423 = sbr.rel (%p1421) target = $region80
        $region79: #{stpgcn_bottom_up_forward.1} parent=11 // pred_region
          %s1425 = ssub.s32 16, 16
          %1426 = vsyncadd [#allocation25], %s1425
          %s1428 = sshll.u32 [#allocation24], 4
          %s1429 = int_to_ptr.vmem [resolvable:$true] %s1428
          %1431 = dma.hbm_to_vmem [thread:$0]  %s35, 16, %s1429, [#allocation25]
        $region80: #{stpgcn_bottom_up_forward.1} parent=11 // pred_fallthru
          _
        // Predicated region
        $region81: #{stpgcn_bottom_up_forward.1} parent=11 // pred_check
          %p1432 = pneg %p538
        $region82: #{stpgcn_bottom_up_forward.1} parent=11 // pred_check_branch
          %1434 = sbr.rel (%p1432) target = $region84
        $region83: #{stpgcn_bottom_up_forward.1} parent=11 // pred_region
          %s1436 = ssub.s32 1024, 1024
          %1437 = vsyncadd [#allocation25], %s1436
          %s1438 = sshll.u32 [#allocation26], 4
          %s1439 = int_to_ptr.vmem [resolvable:$true] %s1438
          %1444 = dma.hbm_to_vmem [thread:$0]  %s37, 1024, %s1439, [#allocation25], 128, 128, 8
        $region84: #{stpgcn_bottom_up_forward.1} parent=11 // pred_fallthru
          _
        // Predicated region
        $region85: #{stpgcn_bottom_up_forward.1} parent=11 // pred_check
          %p1445 = pneg %p559
        $region86: #{stpgcn_bottom_up_forward.1} parent=11 // pred_check_branch
          %1447 = sbr.rel (%p1445) target = $region88
        $region87: #{stpgcn_bottom_up_forward.1} parent=11 // pred_region
          %s1449 = ssub.s32 16, 16
          %1450 = vsyncadd [#allocation28], %s1449
          %s1452 = sshll.u32 [#allocation27], 4
          %s1453 = int_to_ptr.vmem [resolvable:$true] %s1452
          %1455 = dma.hbm_to_vmem [thread:$0]  %s39, 16, %s1453, [#allocation28]
        $region88: #{stpgcn_bottom_up_forward.1} parent=11 // pred_fallthru
          _
        // Predicated region
        $region89: #{stpgcn_bottom_up_forward.1} parent=11 // pred_check
          %p1456 = pneg %p580
        $region90: #{stpgcn_bottom_up_forward.1} parent=11 // pred_check_branch
          %1458 = sbr.rel (%p1456) target = $region92
        $region91: #{stpgcn_bottom_up_forward.1} parent=11 // pred_region
          %s1460 = ssub.s32 1024, 1024
          %1461 = vsyncadd [#allocation28], %s1460
          %s1462 = sshll.u32 [#allocation29], 4
          %s1463 = int_to_ptr.vmem [resolvable:$true] %s1462
          %1468 = dma.hbm_to_vmem [thread:$0]  %s41, 1024, %s1463, [#allocation28], 128, 128, 8
        $region92: #{stpgcn_bottom_up_forward.1} parent=11 // pred_fallthru
          _
        // Predicated region
        $region93: #{stpgcn_bottom_up_forward.1} parent=11 // pred_check
          %p1469 = pneg %p601
        $region94: #{stpgcn_bottom_up_forward.1} parent=11 // pred_check_branch
          %1471 = sbr.rel (%p1469) target = $region96
        $region95: #{stpgcn_bottom_up_forward.1} parent=11 // pred_region
          %s1473 = ssub.s32 16, 16
          %1474 = vsyncadd [#allocation31], %s1473
          %s1476 = sshll.u32 [#allocation30], 4
          %s1477 = int_to_ptr.vmem [resolvable:$true] %s1476
          %1479 = dma.hbm_to_vmem [thread:$0]  %s43, 16, %s1477, [#allocation31]
        $region96: #{stpgcn_bottom_up_forward.1} parent=11 // pred_fallthru
          _
        // Predicated region
        $region97: #{stpgcn_bottom_up_forward.1} parent=11 // pred_check
          %p1480 = pneg %p622
        $region98: #{stpgcn_bottom_up_forward.1} parent=11 // pred_check_branch
          %1482 = sbr.rel (%p1480) target = $region100
        $region99: #{stpgcn_bottom_up_forward.1} parent=11 // pred_region
          %s1484 = ssub.s32 1024, 1024
          %1485 = vsyncadd [#allocation31], %s1484
          %s1486 = sshll.u32 [#allocation32], 4
          %s1487 = int_to_ptr.vmem [resolvable:$true] %s1486
          %1492 = dma.hbm_to_vmem [thread:$0]  %s45, 1024, %s1487, [#allocation31], 128, 128, 8
        $region100: #{stpgcn_bottom_up_forward.1} parent=11 // pred_fallthru
          _
        // Predicated region
        $region101: #{stpgcn_bottom_up_forward.1} parent=11 // pred_check
          %p1493 = pneg %p643
        $region102: #{stpgcn_bottom_up_forward.1} parent=11 // pred_check_branch
          %1495 = sbr.rel (%p1493) target = $region104
        $region103: #{stpgcn_bottom_up_forward.1} parent=11 // pred_region
          %s1497 = ssub.s32 16, 16
          %1498 = vsyncadd [#allocation34], %s1497
          %s1500 = sshll.u32 [#allocation33], 4
          %s1501 = int_to_ptr.vmem [resolvable:$true] %s1500
          %1503 = dma.hbm_to_vmem [thread:$0]  %s47, 16, %s1501, [#allocation34]
        $region104: #{stpgcn_bottom_up_forward.1} parent=11 // pred_fallthru
          _
        // Predicated region
        $region105: #{stpgcn_bottom_up_forward.1} parent=11 // pred_check
          %p1504 = pneg %p664
        $region106: #{stpgcn_bottom_up_forward.1} parent=11 // pred_check_branch
          %1506 = sbr.rel (%p1504) target = $region108
        $region107: #{stpgcn_bottom_up_forward.1} parent=11 // pred_region
          %s1508 = ssub.s32 16, 16
          %1509 = vsyncadd [#allocation34], %s1508
          %s1511 = sshll.u32 [#allocation35], 4
          %s1512 = int_to_ptr.vmem [resolvable:$true] %s1511
          %1514 = dma.hbm_to_vmem [thread:$0]  %s49, 16, %s1512, [#allocation34]
        $region108: #{stpgcn_bottom_up_forward.1} parent=11 // pred_fallthru
          _
        // Predicated region
        $region109: #{stpgcn_bottom_up_forward.1} parent=11 // pred_check
          %p1515 = pneg %p685
        $region110: #{stpgcn_bottom_up_forward.1} parent=11 // pred_check_branch
          %1517 = sbr.rel (%p1515) target = $region112
        $region111: #{stpgcn_bottom_up_forward.1} parent=11 // pred_region
          %s1519 = ssub.s32 256, 256
          %1520 = vsyncadd [#allocation37], %s1519
          %s1521 = sshll.u32 [#allocation36], 4
          %s1522 = int_to_ptr.vmem [resolvable:$true] %s1521
          %1527 = dma.hbm_to_vmem [thread:$0]  %s51, 256, %s1522, [#allocation37], 128, 128, 8
        $region112: #{stpgcn_bottom_up_forward.1} parent=11 // pred_fallthru
          _
        // Predicated region
        $region113: #{stpgcn_bottom_up_forward.1} parent=11 // pred_check
          %p1528 = pneg %p706
        $region114: #{stpgcn_bottom_up_forward.1} parent=11 // pred_check_branch
          %1530 = sbr.rel (%p1528) target = $region116
        $region115: #{stpgcn_bottom_up_forward.1} parent=11 // pred_region
          _
        $region116: #{stpgcn_bottom_up_forward.1} parent=11 // pred_fallthru
          _
        // Predicated region
        $region117: #{stpgcn_bottom_up_forward.1} parent=11 // pred_check
          %p1531 = pneg %p727
        $region118: #{stpgcn_bottom_up_forward.1} parent=11 // pred_check_branch
          %1533 = sbr.rel (%p1531) target = $region120
        $region119: #{stpgcn_bottom_up_forward.1} parent=11 // pred_region
          %s1535 = ssub.s32 16, 16
          %1536 = vsyncadd [#allocation37], %s1535
          %s1538 = sshll.u32 [#allocation38], 4
          %s1539 = int_to_ptr.vmem [resolvable:$true] %s1538
          %1541 = dma.hbm_to_vmem [thread:$0]  %s55, 16, %s1539, [#allocation37]
        $region120: #{stpgcn_bottom_up_forward.1} parent=11 // pred_fallthru
          _
        // Predicated region
        $region121: #{stpgcn_bottom_up_forward.1} parent=11 // pred_check
          %p1542 = pneg %p748
        $region122: #{stpgcn_bottom_up_forward.1} parent=11 // pred_check_branch
          %1544 = sbr.rel (%p1542) target = $region124
        $region123: #{stpgcn_bottom_up_forward.1} parent=11 // pred_region
          %s1546 = ssub.s32 256, 256
          %1547 = vsyncadd [#allocation40], %s1546
          %s1548 = sshll.u32 [#allocation39], 4
          %s1549 = int_to_ptr.vmem [resolvable:$true] %s1548
          %1554 = dma.hbm_to_vmem [thread:$0]  %s57, 256, %s1549, [#allocation40], 128, 128, 8
        $region124: #{stpgcn_bottom_up_forward.1} parent=11 // pred_fallthru
          _
        // Predicated region
        $region125: #{stpgcn_bottom_up_forward.1} parent=11 // pred_check
          %p1555 = pneg %p769
        $region126: #{stpgcn_bottom_up_forward.1} parent=11 // pred_check_branch
          %1557 = sbr.rel (%p1555) target = $region128
        $region127: #{stpgcn_bottom_up_forward.1} parent=11 // pred_region
          _
        $region128: #{stpgcn_bottom_up_forward.1} parent=11 // pred_fallthru
          _
        // Predicated region
        $region129: #{stpgcn_bottom_up_forward.1} parent=11 // pred_check
          %p1558 = pneg %p790
        $region130: #{stpgcn_bottom_up_forward.1} parent=11 // pred_check_branch
          %1560 = sbr.rel (%p1558) target = $region132
        $region131: #{stpgcn_bottom_up_forward.1} parent=11 // pred_region
          %s1562 = ssub.s32 512, 512
          %1563 = vsyncadd [#allocation40], %s1562
          %s1564 = sshll.u32 [#allocation41], 4
          %s1565 = int_to_ptr.vmem [resolvable:$true] %s1564
          %1570 = dma.hbm_to_vmem [thread:$0]  %s61, 512, %s1565, [#allocation40], 128, 128, 8
        $region132: #{stpgcn_bottom_up_forward.1} parent=11 // pred_fallthru
          _
        // Predicated region
        $region133: #{stpgcn_bottom_up_forward.1} parent=11 // pred_check
          %p1571 = pneg %p811
        $region134: #{stpgcn_bottom_up_forward.1} parent=11 // pred_check_branch
          %1573 = sbr.rel (%p1571) target = $region136
        $region135: #{stpgcn_bottom_up_forward.1} parent=11 // pred_region
          _
        $region136: #{stpgcn_bottom_up_forward.1} parent=11 // pred_fallthru
          _
        // Predicated region
        $region137: #{stpgcn_bottom_up_forward.1} parent=11 // pred_check
          %p1574 = pneg %p832
        $region138: #{stpgcn_bottom_up_forward.1} parent=11 // pred_check_branch
          %1576 = sbr.rel (%p1574) target = $region140
        $region139: #{stpgcn_bottom_up_forward.1} parent=11 // pred_region
          _
        $region140: #{stpgcn_bottom_up_forward.1} parent=11 // pred_fallthru
          _
        // Predicated region
        $region141: #{stpgcn_bottom_up_forward.1} parent=11 // pred_check
          %p1577 = pneg %p853
        $region142: #{stpgcn_bottom_up_forward.1} parent=11 // pred_check_branch
          %1579 = sbr.rel (%p1577) target = $region144
        $region143: #{stpgcn_bottom_up_forward.1} parent=11 // pred_region
          %s1581 = ssub.s32 256, 256
          %1582 = vsyncadd [#allocation43], %s1581
          %s1583 = sshll.u32 [#allocation42], 4
          %s1584 = int_to_ptr.vmem [resolvable:$true] %s1583
          %1589 = dma.hbm_to_vmem [thread:$0]  %s67, 256, %s1584, [#allocation43], 128, 128, 8
        $region144: #{stpgcn_bottom_up_forward.1} parent=11 // pred_fallthru
          _
        // Predicated region
        $region145: #{stpgcn_bottom_up_forward.1} parent=11 // pred_check
          %p1590 = pneg %p874
        $region146: #{stpgcn_bottom_up_forward.1} parent=11 // pred_check_branch
          %1592 = sbr.rel (%p1590) target = $region148
        $region147: #{stpgcn_bottom_up_forward.1} parent=11 // pred_region
          %s1594 = ssub.s32 256, 256
          %1595 = vsyncadd [#allocation43], %s1594
          %s1596 = sshll.u32 [#allocation44], 4
          %s1597 = int_to_ptr.vmem [resolvable:$true] %s1596
          %1602 = dma.hbm_to_vmem [thread:$0]  %s69, 256, %s1597, [#allocation43], 128, 128, 8
        $region148: #{stpgcn_bottom_up_forward.1} parent=11 // pred_fallthru
          _
        // Predicated region
        $region149: #{stpgcn_bottom_up_forward.1} parent=11 // pred_check
          %p1603 = pneg %p895
        $region150: #{stpgcn_bottom_up_forward.1} parent=11 // pred_check_branch
          %1605 = sbr.rel (%p1603) target = $region152
        $region151: #{stpgcn_bottom_up_forward.1} parent=11 // pred_region
          _
        $region152: #{stpgcn_bottom_up_forward.1} parent=11 // pred_fallthru
          _
        // Predicated region
        $region153: #{stpgcn_bottom_up_forward.1} parent=11 // pred_check
          %p1606 = pneg %p916
        $region154: #{stpgcn_bottom_up_forward.1} parent=11 // pred_check_branch
          %1608 = sbr.rel (%p1606) target = $region156
        $region155: #{stpgcn_bottom_up_forward.1} parent=11 // pred_region
          %s1610 = ssub.s32 16, 16
          %1611 = vsyncadd [#allocation46], %s1610
          %s1613 = sshll.u32 [#allocation45], 4
          %s1614 = int_to_ptr.vmem [resolvable:$true] %s1613
          %1616 = dma.hbm_to_vmem [thread:$0]  %s73, 16, %s1614, [#allocation46]
        $region156: #{stpgcn_bottom_up_forward.1} parent=11 // pred_fallthru
          _
        // Predicated region
        $region157: #{stpgcn_bottom_up_forward.1} parent=11 // pred_check
          %p1617 = pneg %p937
        $region158: #{stpgcn_bottom_up_forward.1} parent=11 // pred_check_branch
          %1619 = sbr.rel (%p1617) target = $region160
        $region159: #{stpgcn_bottom_up_forward.1} parent=11 // pred_region
          _
        $region160: #{stpgcn_bottom_up_forward.1} parent=11 // pred_fallthru
          _
        // Predicated region
        $region161: #{stpgcn_bottom_up_forward.1} parent=11 // pred_check
          %p1620 = pneg %p958
        $region162: #{stpgcn_bottom_up_forward.1} parent=11 // pred_check_branch
          %1622 = sbr.rel (%p1620) target = $region164
        $region163: #{stpgcn_bottom_up_forward.1} parent=11 // pred_region
          %s1624 = ssub.s32 16, 16
          %1625 = vsyncadd [#allocation46], %s1624
          %s1627 = sshll.u32 [#allocation47], 4
          %s1628 = int_to_ptr.vmem [resolvable:$true] %s1627
          %1630 = dma.hbm_to_vmem [thread:$0]  %s77, 16, %s1628, [#allocation46]
        $region164: #{stpgcn_bottom_up_forward.1} parent=11 // pred_fallthru
          _
        // Predicated region
        $region165: #{stpgcn_bottom_up_forward.1} parent=11 // pred_check
          %p1631 = pneg %p979
        $region166: #{stpgcn_bottom_up_forward.1} parent=11 // pred_check_branch
          %1633 = sbr.rel (%p1631) target = $region168
        $region167: #{stpgcn_bottom_up_forward.1} parent=11 // pred_region
          %s1635 = ssub.s32 16, 16
          %1636 = vsyncadd [#allocation49], %s1635
          %s1638 = sshll.u32 [#allocation48], 4
          %s1639 = int_to_ptr.vmem [resolvable:$true] %s1638
          %1641 = dma.hbm_to_vmem [thread:$0]  %s79, 16, %s1639, [#allocation49]
        $region168: #{stpgcn_bottom_up_forward.1} parent=11 // pred_fallthru
          _
        // Predicated region
        $region169: #{stpgcn_bottom_up_forward.1} parent=11 // pred_check
          %p1642 = pneg %p1000
        $region170: #{stpgcn_bottom_up_forward.1} parent=11 // pred_check_branch
          %1644 = sbr.rel (%p1642) target = $region172
        $region171: #{stpgcn_bottom_up_forward.1} parent=11 // pred_region
          %s1646 = ssub.s32 48, 48
          %1647 = vsyncadd [#allocation49], %s1646
          %s1648 = sshll.u32 [#allocation50], 4
          %s1649 = int_to_ptr.vmem [resolvable:$true] %s1648
          %1654 = dma.hbm_to_vmem [thread:$0]  %s81, 48, %s1649, [#allocation49], 16, 16, 1
        $region172: #{stpgcn_bottom_up_forward.1} parent=11 // pred_fallthru
          _
        // Predicated region
        $region173: #{stpgcn_bottom_up_forward.1} parent=11 // pred_check
          %p1655 = pneg %p1021
        $region174: #{stpgcn_bottom_up_forward.1} parent=11 // pred_check_branch
          %1657 = sbr.rel (%p1655) target = $region176
        $region175: #{stpgcn_bottom_up_forward.1} parent=11 // pred_region
          %s1659 = ssub.s32 16, 16
          %1660 = vsyncadd [#allocation52], %s1659
          %s1662 = sshll.u32 [#allocation51], 4
          %s1663 = int_to_ptr.vmem [resolvable:$true] %s1662
          %1665 = dma.hbm_to_vmem [thread:$0]  %s83, 16, %s1663, [#allocation52]
        $region176: #{stpgcn_bottom_up_forward.1} parent=11 // pred_fallthru
          _
        // Predicated region
        $region177: #{stpgcn_bottom_up_forward.1} parent=11 // pred_check
          %p1666 = pneg %p1042
        $region178: #{stpgcn_bottom_up_forward.1} parent=11 // pred_check_branch
          %1668 = sbr.rel (%p1666) target = $region180
        $region179: #{stpgcn_bottom_up_forward.1} parent=11 // pred_region
          %s1670 = ssub.s32 1536, 1536
          %1671 = vsyncadd [#allocation52], %s1670
          %s1672 = sshll.u32 [#allocation53], 4
          %s1673 = int_to_ptr.vmem [resolvable:$true] %s1672
          %1678 = dma.hbm_to_vmem [thread:$0]  %s85, 1536, %s1673, [#allocation52], 128, 128, 8
        $region180: #{stpgcn_bottom_up_forward.1} parent=11 // pred_fallthru
          _
        // Predicated region
        $region181: #{stpgcn_bottom_up_forward.1} parent=11 // pred_check
          %p1679 = pneg %p1063
        $region182: #{stpgcn_bottom_up_forward.1} parent=11 // pred_check_branch
          %1681 = sbr.rel (%p1679) target = $region184
        $region183: #{stpgcn_bottom_up_forward.1} parent=11 // pred_region
          %s1683 = ssub.s32 256, 256
          %1684 = vsyncadd [#allocation55], %s1683
          %s1685 = sshll.u32 [#allocation54], 4
          %s1686 = int_to_ptr.vmem [resolvable:$true] %s1685
          %1691 = dma.hbm_to_vmem [thread:$0]  %s87, 256, %s1686, [#allocation55], 128, 128, 8
        $region184: #{stpgcn_bottom_up_forward.1} parent=11 // pred_fallthru
          _
        // Predicated region
        $region185: #{stpgcn_bottom_up_forward.1} parent=11 // pred_check
          %p1692 = pneg %p1084
        $region186: #{stpgcn_bottom_up_forward.1} parent=11 // pred_check_branch
          %1694 = sbr.rel (%p1692) target = $region188
        $region187: #{stpgcn_bottom_up_forward.1} parent=11 // pred_region
          %s1696 = ssub.s32 256, 256
          %1697 = vsyncadd [#allocation55], %s1696
          %s1698 = sshll.u32 [#allocation56], 4
          %s1699 = int_to_ptr.vmem [resolvable:$true] %s1698
          %1704 = dma.hbm_to_vmem [thread:$0]  %s89, 256, %s1699, [#allocation55], 128, 128, 8
        $region188: #{stpgcn_bottom_up_forward.1} parent=11 // pred_fallthru
          _
        // Predicated region
        $region189: #{stpgcn_bottom_up_forward.1} parent=11 // pred_check
          %p1705 = pneg %p1105
        $region190: #{stpgcn_bottom_up_forward.1} parent=11 // pred_check_branch
          %1707 = sbr.rel (%p1705) target = $region192
        $region191: #{stpgcn_bottom_up_forward.1} parent=11 // pred_region
          %s1709 = ssub.s32 1024, 1024
          %1710 = vsyncadd [#allocation58], %s1709
          %s1711 = sshll.u32 [#allocation57], 4
          %s1712 = int_to_ptr.vmem [resolvable:$true] %s1711
          %1717 = dma.hbm_to_vmem [thread:$0]  %s91, 1024, %s1712, [#allocation58], 128, 128, 8
        $region192: #{stpgcn_bottom_up_forward.1} parent=11 // pred_fallthru
          _
        // Predicated region
        $region193: #{stpgcn_bottom_up_forward.1} parent=11 // pred_check
          %p1718 = pneg %p1126
        $region194: #{stpgcn_bottom_up_forward.1} parent=11 // pred_check_branch
          %1720 = sbr.rel (%p1718) target = $region196
        $region195: #{stpgcn_bottom_up_forward.1} parent=11 // pred_region
          %s1722 = ssub.s32 16, 16
          %1723 = vsyncadd [#allocation58], %s1722
          %s1725 = sshll.u32 [#allocation59], 4
          %s1726 = int_to_ptr.vmem [resolvable:$true] %s1725
          %1728 = dma.hbm_to_vmem [thread:$0]  %s93, 16, %s1726, [#allocation58]
        $region196: #{stpgcn_bottom_up_forward.1} parent=11 // pred_fallthru
          _
        // Predicated region
        $region197: #{stpgcn_bottom_up_forward.1} parent=11 // pred_check
          %p1729 = pneg %p1147
        $region198: #{stpgcn_bottom_up_forward.1} parent=11 // pred_check_branch
          %1731 = sbr.rel (%p1729) target = $region200
        $region199: #{stpgcn_bottom_up_forward.1} parent=11 // pred_region
          _
        $region200: #{stpgcn_bottom_up_forward.1} parent=11 // pred_fallthru
          _
        // Predicated region
        $region201: #{stpgcn_bottom_up_forward.1} parent=11 // pred_check
          %p1732 = pneg %p1168
        $region202: #{stpgcn_bottom_up_forward.1} parent=11 // pred_check_branch
          %1734 = sbr.rel (%p1732) target = $region204
        $region203: #{stpgcn_bottom_up_forward.1} parent=11 // pred_region
          %s1736 = ssub.s32 16, 16
          %1737 = vsyncadd [#allocation61], %s1736
          %s1739 = sshll.u32 [#allocation60], 4
          %s1740 = int_to_ptr.vmem [resolvable:$true] %s1739
          %1742 = dma.hbm_to_vmem [thread:$0]  %s97, 16, %s1740, [#allocation61]
        $region204: #{stpgcn_bottom_up_forward.1} parent=11 // pred_fallthru
          _
        // Predicated region
        $region205: #{stpgcn_bottom_up_forward.1} parent=11 // pred_check
          %p1743 = pneg %p1189
        $region206: #{stpgcn_bottom_up_forward.1} parent=11 // pred_check_branch
          %1745 = sbr.rel (%p1743) target = $region208
        $region207: #{stpgcn_bottom_up_forward.1} parent=11 // pred_region
          %s1747 = ssub.s32 16, 16
          %1748 = vsyncadd [#allocation61], %s1747
          %s1750 = sshll.u32 [#allocation62], 4
          %s1751 = int_to_ptr.vmem [resolvable:$true] %s1750
          %1753 = dma.hbm_to_vmem [thread:$0]  %s99, 16, %s1751, [#allocation61]
        $region208: #{stpgcn_bottom_up_forward.1} parent=11 // pred_fallthru
          _
        // Predicated region
        $region209: #{stpgcn_bottom_up_forward.1} parent=11 // pred_check
          %p1754 = pneg %p1210
        $region210: #{stpgcn_bottom_up_forward.1} parent=11 // pred_check_branch
          %1756 = sbr.rel (%p1754) target = $region212
        $region211: #{stpgcn_bottom_up_forward.1} parent=11 // pred_region
          _
        $region212: #{stpgcn_bottom_up_forward.1} parent=11 // pred_fallthru
          _
      $region12: #{stpgcn_bottom_up_forward.1} parent=5 // pred_fallthru
        _
      %p1757 = scmp.lt.s32.totalorder %s134, 2
      // Predicated region
      $region213: #{stpgcn_bottom_up_forward.1} parent=5 // pred_check
        %p1758 = pneg %p1757
      $region214: #{stpgcn_bottom_up_forward.1} parent=5 // pred_check_branch
        %1760 = sbr.rel (%p1758) target = $region216
      $region215: #{stpgcn_bottom_up_forward.1} parent=5 // pred_region
        // Predicated region
        $region217: #{stpgcn_bottom_up_forward.1} parent=215 // pred_check
          %p1761 = pneg %p154
        $region218: #{stpgcn_bottom_up_forward.1} parent=215 // pred_check_branch
          %1763 = sbr.rel (%p1761) target = $region220
        $region219: #{stpgcn_bottom_up_forward.1} parent=215 // pred_region
          %p1764 = scmp.lt.s32.totalorder %s134, 1
          %s1765 = scalar_select %p1764, %s134, 1
          %s1766 = smul.addr %s1765, 16
          %s1767 = smul.addr %s1766, 8
          %s1768 = scalar_lea.vmem %s1, %s1767
        $region220: #{stpgcn_bottom_up_forward.1} parent=215 // pred_fallthru
          _
      $region216: #{stpgcn_bottom_up_forward.1} parent=5 // pred_fallthru
        _
      %p1769 = scmp.le.s32.totalorder 1, %s134
      %p1770 = scmp.lt.s32.totalorder %s134, 3
      %p1771 = pnand %p1769, %p1770
      %p1772 = pneg %p1771
      // Predicated region
      $region221: #{stpgcn_bottom_up_forward.1} parent=5 // pred_check
        _
      $region222: #{stpgcn_bottom_up_forward.1} parent=5 // pred_check_branch
        %1774 = sbr.rel (%p1771) target = $region224
      $region223: #{stpgcn_bottom_up_forward.1} parent=5 // pred_region
        %s1775 = ssub.s32 %s134, 1
        // Predicated region
        $region225: #{stpgcn_bottom_up_forward.1} parent=223 // pred_check
          %p1776 = pneg %p181
        $region226: #{stpgcn_bottom_up_forward.1} parent=223 // pred_check_branch
          %1778 = sbr.rel (%p1776) target = $region228
        $region227: #{stpgcn_bottom_up_forward.1} parent=223 // pred_region
          %1779 = dma.done [#allocation4], 16
        $region228: #{stpgcn_bottom_up_forward.1} parent=223 // pred_fallthru
          _
        // Predicated region
        $region229: #{stpgcn_bottom_up_forward.1} parent=223 // pred_check
          %p1780 = pneg %p202
        $region230: #{stpgcn_bottom_up_forward.1} parent=223 // pred_check_branch
          %1782 = sbr.rel (%p1780) target = $region232
        $region231: #{stpgcn_bottom_up_forward.1} parent=223 // pred_region
          %1783 = dma.done [#allocation7], 6144
        $region232: #{stpgcn_bottom_up_forward.1} parent=223 // pred_fallthru
          _
        // Predicated region
        $region233: #{stpgcn_bottom_up_forward.1} parent=223 // pred_check
          %p1784 = pneg %p244
        $region234: #{stpgcn_bottom_up_forward.1} parent=223 // pred_check_branch
          %1786 = sbr.rel (%p1784) target = $region236
        $region235: #{stpgcn_bottom_up_forward.1} parent=223 // pred_region
          %1787 = dma.done [#allocation7], 256
        $region236: #{stpgcn_bottom_up_forward.1} parent=223 // pred_fallthru
          _
        // Predicated region
        $region237: #{stpgcn_bottom_up_forward.1} parent=223 // pred_check
          %p1788 = pneg %p265
        $region238: #{stpgcn_bottom_up_forward.1} parent=223 // pred_check_branch
          %1790 = sbr.rel (%p1788) target = $region240
        $region239: #{stpgcn_bottom_up_forward.1} parent=223 // pred_region
          %1791 = dma.done [#allocation10], 256
        $region240: #{stpgcn_bottom_up_forward.1} parent=223 // pred_fallthru
          _
        // Predicated region
        $region241: #{stpgcn_bottom_up_forward.1} parent=223 // pred_check
          %p1792 = pneg %p286
        $region242: #{stpgcn_bottom_up_forward.1} parent=223 // pred_check_branch
          %1794 = sbr.rel (%p1792) target = $region244
        $region243: #{stpgcn_bottom_up_forward.1} parent=223 // pred_region
          %1795 = dma.done [#allocation10], 256
        $region244: #{stpgcn_bottom_up_forward.1} parent=223 // pred_fallthru
          _
        // Predicated region
        $region245: #{stpgcn_bottom_up_forward.1} parent=223 // pred_check
          %p1796 = pneg %p307
        $region246: #{stpgcn_bottom_up_forward.1} parent=223 // pred_check_branch
          %1798 = sbr.rel (%p1796) target = $region248
        $region247: #{stpgcn_bottom_up_forward.1} parent=223 // pred_region
          %1799 = dma.done [#allocation13], 256
        $region248: #{stpgcn_bottom_up_forward.1} parent=223 // pred_fallthru
          _
        // Predicated region
        $region249: #{stpgcn_bottom_up_forward.1} parent=223 // pred_check
          %p1800 = pneg %p370
        $region250: #{stpgcn_bottom_up_forward.1} parent=223 // pred_check_branch
          %1802 = sbr.rel (%p1800) target = $region252
        $region251: #{stpgcn_bottom_up_forward.1} parent=223 // pred_region
          %1803 = dma.done [#allocation13], 512
        $region252: #{stpgcn_bottom_up_forward.1} parent=223 // pred_fallthru
          _
        // Predicated region
        $region253: #{stpgcn_bottom_up_forward.1} parent=223 // pred_check
          %p1804 = pneg %p391
        $region254: #{stpgcn_bottom_up_forward.1} parent=223 // pred_check_branch
          %1806 = sbr.rel (%p1804) target = $region256
        $region255: #{stpgcn_bottom_up_forward.1} parent=223 // pred_region
          %1807 = dma.done [#allocation16], 1280
        $region256: #{stpgcn_bottom_up_forward.1} parent=223 // pred_fallthru
          _
        // Predicated region
        $region257: #{stpgcn_bottom_up_forward.1} parent=223 // pred_check
          %p1808 = pneg %p412
        $region258: #{stpgcn_bottom_up_forward.1} parent=223 // pred_check_branch
          %1810 = sbr.rel (%p1808) target = $region260
        $region259: #{stpgcn_bottom_up_forward.1} parent=223 // pred_region
          %1811 = dma.done [#allocation16], 16
        $region260: #{stpgcn_bottom_up_forward.1} parent=223 // pred_fallthru
          _
        // Predicated region
        $region261: #{stpgcn_bottom_up_forward.1} parent=223 // pred_check
          %p1812 = pneg %p433
        $region262: #{stpgcn_bottom_up_forward.1} parent=223 // pred_check_branch
          %1814 = sbr.rel (%p1812) target = $region264
        $region263: #{stpgcn_bottom_up_forward.1} parent=223 // pred_region
          %1815 = dma.done [#allocation19], 512
        $region264: #{stpgcn_bottom_up_forward.1} parent=223 // pred_fallthru
          _
        // Predicated region
        $region265: #{stpgcn_bottom_up_forward.1} parent=223 // pred_check
          %p1816 = pneg %p454
        $region266: #{stpgcn_bottom_up_forward.1} parent=223 // pred_check_branch
          %1818 = sbr.rel (%p1816) target = $region268
        $region267: #{stpgcn_bottom_up_forward.1} parent=223 // pred_region
          %1819 = dma.done [#allocation19], 16
        $region268: #{stpgcn_bottom_up_forward.1} parent=223 // pred_fallthru
          _
        // Predicated region
        $region269: #{stpgcn_bottom_up_forward.1} parent=223 // pred_check
          %p1820 = pneg %p475
        $region270: #{stpgcn_bottom_up_forward.1} parent=223 // pred_check_branch
          %1822 = sbr.rel (%p1820) target = $region272
        $region271: #{stpgcn_bottom_up_forward.1} parent=223 // pred_region
          %1823 = dma.done [#allocation22], 16
        $region272: #{stpgcn_bottom_up_forward.1} parent=223 // pred_fallthru
          _
        // Predicated region
        $region273: #{stpgcn_bottom_up_forward.1} parent=223 // pred_check
          %p1824 = pneg %p496
        $region274: #{stpgcn_bottom_up_forward.1} parent=223 // pred_check_branch
          %1826 = sbr.rel (%p1824) target = $region276
        $region275: #{stpgcn_bottom_up_forward.1} parent=223 // pred_region
          %1827 = dma.done [#allocation22], 32
        $region276: #{stpgcn_bottom_up_forward.1} parent=223 // pred_fallthru
          _
        // Predicated region
        $region277: #{stpgcn_bottom_up_forward.1} parent=223 // pred_check
          %p1828 = pneg %p517
        $region278: #{stpgcn_bottom_up_forward.1} parent=223 // pred_check_branch
          %1830 = sbr.rel (%p1828) target = $region280
        $region279: #{stpgcn_bottom_up_forward.1} parent=223 // pred_region
          %1831 = dma.done [#allocation25], 16
        $region280: #{stpgcn_bottom_up_forward.1} parent=223 // pred_fallthru
          _
        // Predicated region
        $region281: #{stpgcn_bottom_up_forward.1} parent=223 // pred_check
          %p1832 = pneg %p538
        $region282: #{stpgcn_bottom_up_forward.1} parent=223 // pred_check_branch
          %1834 = sbr.rel (%p1832) target = $region284
        $region283: #{stpgcn_bottom_up_forward.1} parent=223 // pred_region
          %1835 = dma.done [#allocation25], 1024
        $region284: #{stpgcn_bottom_up_forward.1} parent=223 // pred_fallthru
          _
        // Predicated region
        $region285: #{stpgcn_bottom_up_forward.1} parent=223 // pred_check
          %p1836 = pneg %p559
        $region286: #{stpgcn_bottom_up_forward.1} parent=223 // pred_check_branch
          %1838 = sbr.rel (%p1836) target = $region288
        $region287: #{stpgcn_bottom_up_forward.1} parent=223 // pred_region
          %1839 = dma.done [#allocation28], 16
        $region288: #{stpgcn_bottom_up_forward.1} parent=223 // pred_fallthru
          _
        // Predicated region
        $region289: #{stpgcn_bottom_up_forward.1} parent=223 // pred_check
          %p1840 = pneg %p580
        $region290: #{stpgcn_bottom_up_forward.1} parent=223 // pred_check_branch
          %1842 = sbr.rel (%p1840) target = $region292
        $region291: #{stpgcn_bottom_up_forward.1} parent=223 // pred_region
          %1843 = dma.done [#allocation28], 1024
        $region292: #{stpgcn_bottom_up_forward.1} parent=223 // pred_fallthru
          _
        // Predicated region
        $region293: #{stpgcn_bottom_up_forward.1} parent=223 // pred_check
          %p1844 = pneg %p601
        $region294: #{stpgcn_bottom_up_forward.1} parent=223 // pred_check_branch
          %1846 = sbr.rel (%p1844) target = $region296
        $region295: #{stpgcn_bottom_up_forward.1} parent=223 // pred_region
          %1847 = dma.done [#allocation31], 16
        $region296: #{stpgcn_bottom_up_forward.1} parent=223 // pred_fallthru
          _
        // Predicated region
        $region297: #{stpgcn_bottom_up_forward.1} parent=223 // pred_check
          %p1848 = pneg %p622
        $region298: #{stpgcn_bottom_up_forward.1} parent=223 // pred_check_branch
          %1850 = sbr.rel (%p1848) target = $region300
        $region299: #{stpgcn_bottom_up_forward.1} parent=223 // pred_region
          %1851 = dma.done [#allocation31], 1024
        $region300: #{stpgcn_bottom_up_forward.1} parent=223 // pred_fallthru
          _
        // Predicated region
        $region301: #{stpgcn_bottom_up_forward.1} parent=223 // pred_check
          %p1852 = pneg %p643
        $region302: #{stpgcn_bottom_up_forward.1} parent=223 // pred_check_branch
          %1854 = sbr.rel (%p1852) target = $region304
        $region303: #{stpgcn_bottom_up_forward.1} parent=223 // pred_region
          %1855 = dma.done [#allocation34], 16
        $region304: #{stpgcn_bottom_up_forward.1} parent=223 // pred_fallthru
          _
        // Predicated region
        $region305: #{stpgcn_bottom_up_forward.1} parent=223 // pred_check
          %p1856 = pneg %p664
        $region306: #{stpgcn_bottom_up_forward.1} parent=223 // pred_check_branch
          %1858 = sbr.rel (%p1856) target = $region308
        $region307: #{stpgcn_bottom_up_forward.1} parent=223 // pred_region
          %1859 = dma.done [#allocation34], 16
        $region308: #{stpgcn_bottom_up_forward.1} parent=223 // pred_fallthru
          _
        // Predicated region
        $region309: #{stpgcn_bottom_up_forward.1} parent=223 // pred_check
          %p1860 = pneg %p685
        $region310: #{stpgcn_bottom_up_forward.1} parent=223 // pred_check_branch
          %1862 = sbr.rel (%p1860) target = $region312
        $region311: #{stpgcn_bottom_up_forward.1} parent=223 // pred_region
          %1863 = dma.done [#allocation37], 256
        $region312: #{stpgcn_bottom_up_forward.1} parent=223 // pred_fallthru
          _
        // Predicated region
        $region313: #{stpgcn_bottom_up_forward.1} parent=223 // pred_check
          %p1864 = pneg %p727
        $region314: #{stpgcn_bottom_up_forward.1} parent=223 // pred_check_branch
          %1866 = sbr.rel (%p1864) target = $region316
        $region315: #{stpgcn_bottom_up_forward.1} parent=223 // pred_region
          %1867 = dma.done [#allocation37], 16
        $region316: #{stpgcn_bottom_up_forward.1} parent=223 // pred_fallthru
          _
        // Predicated region
        $region317: #{stpgcn_bottom_up_forward.1} parent=223 // pred_check
          %p1868 = pneg %p748
        $region318: #{stpgcn_bottom_up_forward.1} parent=223 // pred_check_branch
          %1870 = sbr.rel (%p1868) target = $region320
        $region319: #{stpgcn_bottom_up_forward.1} parent=223 // pred_region
          %1871 = dma.done [#allocation40], 256
        $region320: #{stpgcn_bottom_up_forward.1} parent=223 // pred_fallthru
          _
        // Predicated region
        $region321: #{stpgcn_bottom_up_forward.1} parent=223 // pred_check
          %p1872 = pneg %p790
        $region322: #{stpgcn_bottom_up_forward.1} parent=223 // pred_check_branch
          %1874 = sbr.rel (%p1872) target = $region324
        $region323: #{stpgcn_bottom_up_forward.1} parent=223 // pred_region
          %1875 = dma.done [#allocation40], 512
        $region324: #{stpgcn_bottom_up_forward.1} parent=223 // pred_fallthru
          _
        // Predicated region
        $region325: #{stpgcn_bottom_up_forward.1} parent=223 // pred_check
          %p1876 = pneg %p853
        $region326: #{stpgcn_bottom_up_forward.1} parent=223 // pred_check_branch
          %1878 = sbr.rel (%p1876) target = $region328
        $region327: #{stpgcn_bottom_up_forward.1} parent=223 // pred_region
          %1879 = dma.done [#allocation43], 256
        $region328: #{stpgcn_bottom_up_forward.1} parent=223 // pred_fallthru
          _
        // Predicated region
        $region329: #{stpgcn_bottom_up_forward.1} parent=223 // pred_check
          %p1880 = pneg %p874
        $region330: #{stpgcn_bottom_up_forward.1} parent=223 // pred_check_branch
          %1882 = sbr.rel (%p1880) target = $region332
        $region331: #{stpgcn_bottom_up_forward.1} parent=223 // pred_region
          %1883 = dma.done [#allocation43], 256
        $region332: #{stpgcn_bottom_up_forward.1} parent=223 // pred_fallthru
          _
        // Predicated region
        $region333: #{stpgcn_bottom_up_forward.1} parent=223 // pred_check
          %p1884 = pneg %p916
        $region334: #{stpgcn_bottom_up_forward.1} parent=223 // pred_check_branch
          %1886 = sbr.rel (%p1884) target = $region336
        $region335: #{stpgcn_bottom_up_forward.1} parent=223 // pred_region
          %1887 = dma.done [#allocation46], 16
        $region336: #{stpgcn_bottom_up_forward.1} parent=223 // pred_fallthru
          _
        // Predicated region
        $region337: #{stpgcn_bottom_up_forward.1} parent=223 // pred_check
          %p1888 = pneg %p958
        $region338: #{stpgcn_bottom_up_forward.1} parent=223 // pred_check_branch
          %1890 = sbr.rel (%p1888) target = $region340
        $region339: #{stpgcn_bottom_up_forward.1} parent=223 // pred_region
          %1891 = dma.done [#allocation46], 16
        $region340: #{stpgcn_bottom_up_forward.1} parent=223 // pred_fallthru
          _
        // Predicated region
        $region341: #{stpgcn_bottom_up_forward.1} parent=223 // pred_check
          %p1892 = pneg %p979
        $region342: #{stpgcn_bottom_up_forward.1} parent=223 // pred_check_branch
          %1894 = sbr.rel (%p1892) target = $region344
        $region343: #{stpgcn_bottom_up_forward.1} parent=223 // pred_region
          %1895 = dma.done [#allocation49], 16
        $region344: #{stpgcn_bottom_up_forward.1} parent=223 // pred_fallthru
          _
        // Predicated region
        $region345: #{stpgcn_bottom_up_forward.1} parent=223 // pred_check
          %p1896 = pneg %p1000
        $region346: #{stpgcn_bottom_up_forward.1} parent=223 // pred_check_branch
          %1898 = sbr.rel (%p1896) target = $region348
        $region347: #{stpgcn_bottom_up_forward.1} parent=223 // pred_region
          %1899 = dma.done [#allocation49], 48
        $region348: #{stpgcn_bottom_up_forward.1} parent=223 // pred_fallthru
          _
        // Predicated region
        $region349: #{stpgcn_bottom_up_forward.1} parent=223 // pred_check
          %p1900 = pneg %p1021
        $region350: #{stpgcn_bottom_up_forward.1} parent=223 // pred_check_branch
          %1902 = sbr.rel (%p1900) target = $region352
        $region351: #{stpgcn_bottom_up_forward.1} parent=223 // pred_region
          %1903 = dma.done [#allocation52], 16
        $region352: #{stpgcn_bottom_up_forward.1} parent=223 // pred_fallthru
          _
        // Predicated region
        $region353: #{stpgcn_bottom_up_forward.1} parent=223 // pred_check
          %p1904 = pneg %p1042
        $region354: #{stpgcn_bottom_up_forward.1} parent=223 // pred_check_branch
          %1906 = sbr.rel (%p1904) target = $region356
        $region355: #{stpgcn_bottom_up_forward.1} parent=223 // pred_region
          %1907 = dma.done [#allocation52], 1536
        $region356: #{stpgcn_bottom_up_forward.1} parent=223 // pred_fallthru
          _
        // Predicated region
        $region357: #{stpgcn_bottom_up_forward.1} parent=223 // pred_check
          %p1908 = pneg %p1063
        $region358: #{stpgcn_bottom_up_forward.1} parent=223 // pred_check_branch
          %1910 = sbr.rel (%p1908) target = $region360
        $region359: #{stpgcn_bottom_up_forward.1} parent=223 // pred_region
          %1911 = dma.done [#allocation55], 256
        $region360: #{stpgcn_bottom_up_forward.1} parent=223 // pred_fallthru
          _
        // Predicated region
        $region361: #{stpgcn_bottom_up_forward.1} parent=223 // pred_check
          %p1912 = pneg %p1084
        $region362: #{stpgcn_bottom_up_forward.1} parent=223 // pred_check_branch
          %1914 = sbr.rel (%p1912) target = $region364
        $region363: #{stpgcn_bottom_up_forward.1} parent=223 // pred_region
          %1915 = dma.done [#allocation55], 256
        $region364: #{stpgcn_bottom_up_forward.1} parent=223 // pred_fallthru
          _
        // Predicated region
        $region365: #{stpgcn_bottom_up_forward.1} parent=223 // pred_check
          %p1916 = pneg %p1105
        $region366: #{stpgcn_bottom_up_forward.1} parent=223 // pred_check_branch
          %1918 = sbr.rel (%p1916) target = $region368
        $region367: #{stpgcn_bottom_up_forward.1} parent=223 // pred_region
          %1919 = dma.done [#allocation58], 1024
        $region368: #{stpgcn_bottom_up_forward.1} parent=223 // pred_fallthru
          _
        // Predicated region
        $region369: #{stpgcn_bottom_up_forward.1} parent=223 // pred_check
          %p1920 = pneg %p1126
        $region370: #{stpgcn_bottom_up_forward.1} parent=223 // pred_check_branch
          %1922 = sbr.rel (%p1920) target = $region372
        $region371: #{stpgcn_bottom_up_forward.1} parent=223 // pred_region
          %1923 = dma.done [#allocation58], 16
        $region372: #{stpgcn_bottom_up_forward.1} parent=223 // pred_fallthru
          _
        // Predicated region
        $region373: #{stpgcn_bottom_up_forward.1} parent=223 // pred_check
          %p1924 = pneg %p1168
        $region374: #{stpgcn_bottom_up_forward.1} parent=223 // pred_check_branch
          %1926 = sbr.rel (%p1924) target = $region376
        $region375: #{stpgcn_bottom_up_forward.1} parent=223 // pred_region
          %1927 = dma.done [#allocation61], 16
        $region376: #{stpgcn_bottom_up_forward.1} parent=223 // pred_fallthru
          _
        // Predicated region
        $region377: #{stpgcn_bottom_up_forward.1} parent=223 // pred_check
          %p1928 = pneg %p1189
        $region378: #{stpgcn_bottom_up_forward.1} parent=223 // pred_check_branch
          %1930 = sbr.rel (%p1928) target = $region380
        $region379: #{stpgcn_bottom_up_forward.1} parent=223 // pred_region
          %1931 = dma.done [#allocation61], 16
        $region380: #{stpgcn_bottom_up_forward.1} parent=223 // pred_fallthru
          _
        %p1932 = scmp.lt.s32.totalorder %s139, 1
        %s1933 = scalar_select %p1932, %s139, 1
        %s1934 = smul.addr %s1933, 16
        %s1935 = smul.addr %s1934, 8
        %s1936 = scalar_lea.vmem %s1, %s1935
        %p1937 = pneg %p160
        %p1938 = pneg %p157
        %p1939 = pneg %p181
        %p1940 = pneg %p178
        %p1941 = pneg %p202
        %p1942 = pneg %p199
        %p1943 = pneg %p223
        %p1944 = pneg %p220
        %p1945 = pneg %p244
        %p1946 = pneg %p241
        %p1947 = pneg %p265
        %p1948 = pneg %p262
        %p1949 = pneg %p286
        %p1950 = pneg %p283
        %p1951 = pneg %p307
        %p1952 = pneg %p304
        %p1953 = pneg %p328
        %p1954 = pneg %p325
        %p1955 = pneg %p349
        %p1956 = pneg %p346
        %p1957 = pneg %p370
        %p1958 = pneg %p367
        %p1959 = pneg %p391
        %p1960 = pneg %p388
        %p1961 = pneg %p412
        %p1962 = pneg %p409
        %p1963 = pneg %p433
        %p1964 = pneg %p430
        %p1965 = pneg %p454
        %p1966 = pneg %p451
        %p1967 = pneg %p475
        %p1968 = pneg %p472
        %p1969 = pneg %p496
        %p1970 = pneg %p493
        %p1971 = pneg %p517
        %p1972 = pneg %p514
        %p1973 = pneg %p538
        %p1974 = pneg %p535
        %p1975 = pneg %p559
        %p1976 = pneg %p556
        %p1977 = pneg %p580
        %p1978 = pneg %p577
        %p1979 = pneg %p601
        %p1980 = pneg %p598
        %p1981 = pneg %p622
        %p1982 = pneg %p619
        %p1983 = pneg %p643
        %p1984 = pneg %p640
        %p1985 = pneg %p664
        %p1986 = pneg %p661
        %p1987 = pneg %p685
        %p1988 = pneg %p682
        %p1989 = pneg %p706
        %p1990 = pneg %p703
        %p1991 = pneg %p727
        %p1992 = pneg %p724
        %p1993 = pneg %p748
        %p1994 = pneg %p745
        %p1995 = pneg %p769
        %p1996 = pneg %p766
        %p1997 = pneg %p790
        %p1998 = pneg %p787
        %p1999 = pneg %p811
        %p2000 = pneg %p808
        %p2001 = pneg %p832
        %p2002 = pneg %p829
        %p2003 = pneg %p853
        %p2004 = pneg %p850
        %p2005 = pneg %p874
        %p2006 = pneg %p871
        %p2007 = pneg %p895
        %p2008 = pneg %p892
        %p2009 = pneg %p916
        %p2010 = pneg %p913
        %p2011 = pneg %p937
        %p2012 = pneg %p934
        %p2013 = pneg %p958
        %p2014 = pneg %p955
        %p2015 = pneg %p979
        %p2016 = pneg %p976
        %p2017 = pneg %p1000
        %p2018 = pneg %p997
        %p2019 = pneg %p1021
        %p2020 = pneg %p1018
        %p2021 = pneg %p1042
        %p2022 = pneg %p1039
        %p2023 = pneg %p1063
        %p2024 = pneg %p1060
        %p2025 = pneg %p1084
        %p2026 = pneg %p1081
        %p2027 = pneg %p1105
        %p2028 = pneg %p1102
        %p2029 = pneg %p1126
        %p2030 = pneg %p1123
        %p2031 = pneg %p1147
        %p2032 = pneg %p1144
        %p2033 = pneg %p1168
        %p2034 = pneg %p1165
        %p2035 = pneg %p1189
        %p2036 = pneg %p1186
        %p2037 = pneg %p1210
        %p2038 = pneg %p1207
        %p2039 = pneg %p1236
        %p2040 = pneg %p1233
        %s2041 = sand.u32 %s1223, 1
        %s2042 = scalar_lea.sflag [#allocation5], %s2041
        %s2043 = sand.u32 %s1223, 1
        %s2044 = scalar_lea.vmem [#allocation63], %s2043
        %p2045 = scmp.lt.s32.totalorder %s139, 1
        %s2046 = scalar_select %p2045, %s139, 1
        %s2047 = smul.addr %s2046, 16
        %s2048 = smul.addr %s2047, 8
        %s2049 = scalar_lea.vmem %s1, %s2048
        %v2050 = vld [vmem:[%s2049] sm:$0xff]
        %v2051 = vld [vmem:[%s2049 + $0x8] sm:$0xff]
        %v2052 = vld [vmem:[%s2049 + $0x10] sm:$0xff]
        %v2053 = vld [vmem:[%s2049 + $0x18] sm:$0xff]
        %v2054 = vld [vmem:[%s2049 + $0x20] sm:$0xff]
        %v2055 = vld [vmem:[%s2049 + $0x28] sm:$0xff]
        %v2056 = vld [vmem:[%s2049 + $0x30] sm:$0xff]
        %v2057 = vld [vmem:[%s2049 + $0x38] sm:$0xff]
        %v2058 = vld [vmem:[%s2049 + $0x40] sm:$0xff]
        %v2059 = vld [vmem:[%s2049 + $0x48] sm:$0xff]
        %v2060 = vld [vmem:[%s2049 + $0x50] sm:$0xff]
        %v2061 = vld [vmem:[%s2049 + $0x58] sm:$0xff]
        %v2062 = vld [vmem:[%s2049 + $0x60] sm:$0xff]
        %v2063 = vld [vmem:[%s2049 + $0x68] sm:$0xff]
        %v2064 = vld [vmem:[%s2049 + $0x70] sm:$0xff]
        %v2065 = vld [vmem:[%s2049 + $0x78] sm:$0xff]
        %v2066 = vld [vmem:[#allocation23] sm:$0x1]
        %2068 = vset.pattern.permute.xlu0 0
        %2069 = vperm.xlu0 %2068, %v2050
        %v2070 = vpop.permute.xlu0 %2069
        %2073 = vset.pattern.permute.xlu0 0
        %2074 = vperm.xlu0 %2073, %v2051
        %v2075 = vpop.permute.xlu0 %2074
        %2078 = vset.pattern.permute.xlu0 0
        %2079 = vperm.xlu0 %2078, %v2052
        %v2080 = vpop.permute.xlu0 %2079
        %2083 = vset.pattern.permute.xlu0 0
        %2084 = vperm.xlu0 %2083, %v2053
        %v2085 = vpop.permute.xlu0 %2084
        %2088 = vset.pattern.permute.xlu0 0
        %2089 = vperm.xlu0 %2088, %v2054
        %v2090 = vpop.permute.xlu0 %2089
        %2093 = vset.pattern.permute.xlu0 0
        %2094 = vperm.xlu0 %2093, %v2055
        %v2095 = vpop.permute.xlu0 %2094
        %2098 = vset.pattern.permute.xlu0 0
        %2099 = vperm.xlu0 %2098, %v2056
        %v2100 = vpop.permute.xlu0 %2099
        %2103 = vset.pattern.permute.xlu0 0
        %2104 = vperm.xlu0 %2103, %v2057
        %v2105 = vpop.permute.xlu0 %2104
        %2108 = vset.pattern.permute.xlu0 0
        %2109 = vperm.xlu0 %2108, %v2058
        %v2110 = vpop.permute.xlu0 %2109
        %2113 = vset.pattern.permute.xlu0 0
        %2114 = vperm.xlu0 %2113, %v2059
        %v2115 = vpop.permute.xlu0 %2114
        %2118 = vset.pattern.permute.xlu0 0
        %2119 = vperm.xlu0 %2118, %v2060
        %v2120 = vpop.permute.xlu0 %2119
        %2123 = vset.pattern.permute.xlu0 0
        %2124 = vperm.xlu0 %2123, %v2061
        %v2125 = vpop.permute.xlu0 %2124
        %2128 = vset.pattern.permute.xlu0 0
        %2129 = vperm.xlu0 %2128, %v2062
        %v2130 = vpop.permute.xlu0 %2129
        %2133 = vset.pattern.permute.xlu0 0
        %2134 = vperm.xlu0 %2133, %v2063
        %v2135 = vpop.permute.xlu0 %2134
        %v2138 = vlaneseq
        %v2139 = vshrl.u32 %v2138, 7
        %v2140 = vsub.s32 0, %v2139
        %v2141 = vrot.slane %v2066, %v2140
        %v2143 = vmul.f32 %v2070, %v2141
        %v2144 = vmul.f32 %v2075, %v2141
        %v2145 = vmul.f32 %v2080, %v2141
        %v2146 = vmul.f32 %v2085, %v2141
        %v2147 = vmul.f32 %v2090, %v2141
        %v2148 = vmul.f32 %v2095, %v2141
        %v2149 = vmul.f32 %v2100, %v2141
        %v2150 = vmul.f32 %v2105, %v2141
        %v2151 = vmul.f32 %v2110, %v2141
        %v2152 = vmul.f32 %v2115, %v2141
        %v2153 = vmul.f32 %v2120, %v2141
        %v2154 = vmul.f32 %v2125, %v2141
        %v2155 = vmul.f32 %v2130, %v2141
        %v2156 = vmul.f32 %v2135, %v2141
        %v2157 = vadd.f32 %v2143, 0.0
        %v2158 = vadd.f32 %v2144, 0.0
        %v2159 = vadd.f32 %v2145, 0.0
        %v2160 = vadd.f32 %v2146, 0.0
        %v2161 = vadd.f32 %v2147, 0.0
        %v2162 = vadd.f32 %v2148, 0.0
        %v2163 = vadd.f32 %v2149, 0.0
        %v2164 = vadd.f32 %v2150, 0.0
        %v2165 = vadd.f32 %v2151, 0.0
        %v2166 = vadd.f32 %v2152, 0.0
        %v2167 = vadd.f32 %v2153, 0.0
        %v2168 = vadd.f32 %v2154, 0.0
        %v2169 = vadd.f32 %v2155, 0.0
        %v2170 = vadd.f32 %v2156, 0.0
        %s2171 = scalar_lea.vmem [#allocation23], 1
        %v2172 = vld [vmem:[%s2171] sm:$0x1]
        %2174 = vset.pattern.permute.xlu0 0
        %2175 = vperm.xlu0 %2174, %v2064
        %v2176 = vpop.permute.xlu0 %2175
        %2179 = vset.pattern.permute.xlu0 0
        %2180 = vperm.xlu0 %2179, %v2065
        %v2181 = vpop.permute.xlu0 %2180
        %v2184 = vlaneseq
        %v2185 = vshrl.u32 %v2184, 7
        %v2186 = vsub.s32 0, %v2185
        %v2187 = vrot.slane %v2172, %v2186
        %v2189 = vmul.f32 %v2080, %v2187
        %v2190 = vmul.f32 %v2085, %v2187
        %v2191 = vmul.f32 %v2090, %v2187
        %v2192 = vmul.f32 %v2095, %v2187
        %v2193 = vmul.f32 %v2100, %v2187
        %v2194 = vmul.f32 %v2105, %v2187
        %v2195 = vmul.f32 %v2110, %v2187
        %v2196 = vmul.f32 %v2115, %v2187
        %v2197 = vmul.f32 %v2120, %v2187
        %v2198 = vmul.f32 %v2125, %v2187
        %v2199 = vmul.f32 %v2130, %v2187
        %v2200 = vmul.f32 %v2135, %v2187
        %v2201 = vmul.f32 %v2176, %v2187
        %v2202 = vmul.f32 %v2181, %v2187
        %v2203 = vadd.f32 %v2157, %v2189
        %v2204 = vadd.f32 %v2158, %v2190
        %v2205 = vadd.f32 %v2159, %v2191
        %v2206 = vadd.f32 %v2160, %v2192
        %v2207 = vadd.f32 %v2161, %v2193
        %v2208 = vadd.f32 %v2162, %v2194
        %v2209 = vadd.f32 %v2163, %v2195
        %v2210 = vadd.f32 %v2164, %v2196
        %v2211 = vadd.f32 %v2165, %v2197
        %v2212 = vadd.f32 %v2166, %v2198
        %v2213 = vadd.f32 %v2167, %v2199
        %v2214 = vadd.f32 %v2168, %v2200
        %v2215 = vadd.f32 %v2169, %v2201
        %v2216 = vadd.f32 %v2170, %v2202
        %v2217 = vld [vmem:[#allocation20] sm:$0x1]
        %v2219 = vlaneseq
        %v2220 = vshrl.u32 %v2219, 7
        %v2221 = vsub.s32 0, %v2220
        %v2222 = vrot.slane %v2217, %v2221
        %v2224 = vadd.f32 %v2203, %v2222
        %v2225 = vadd.f32 %v2204, %v2222
        %v2226 = vadd.f32 %v2205, %v2222
        %v2227 = vadd.f32 %v2206, %v2222
        %v2228 = vadd.f32 %v2207, %v2222
        %v2229 = vadd.f32 %v2208, %v2222
        %v2230 = vadd.f32 %v2209, %v2222
        %v2231 = vadd.f32 %v2210, %v2222
        %v2232 = vadd.f32 %v2211, %v2222
        %v2233 = vadd.f32 %v2212, %v2222
        %v2234 = vadd.f32 %v2213, %v2222
        %v2235 = vadd.f32 %v2214, %v2222
        %v2236 = vadd.f32 %v2215, %v2222
        %v2237 = vadd.f32 %v2216, %v2222
        %v2238 = vld [vmem:[#allocation21] sm:$0x1]
        %v2240 = vlaneseq
        %v2241 = vshrl.u32 %v2240, 7
        %v2242 = vsub.s32 0, %v2241
        %v2243 = vrot.slane %v2238, %v2242
        %v2245 = vmul.f32 %v2080, %v2243
        %v2246 = vmul.f32 %v2085, %v2243
        %v2247 = vmul.f32 %v2090, %v2243
        %v2248 = vmul.f32 %v2095, %v2243
        %v2249 = vmul.f32 %v2100, %v2243
        %v2250 = vmul.f32 %v2105, %v2243
        %v2251 = vmul.f32 %v2110, %v2243
        %v2252 = vmul.f32 %v2115, %v2243
        %v2253 = vmul.f32 %v2120, %v2243
        %v2254 = vmul.f32 %v2125, %v2243
        %v2255 = vmul.f32 %v2130, %v2243
        %v2256 = vmul.f32 %v2135, %v2243
        %v2257 = vmul.f32 %v2176, %v2243
        %v2258 = vmul.f32 %v2181, %v2243
        %v2259 = vadd.f32 %v2224, %v2245
        %v2260 = vadd.f32 %v2225, %v2246
        %v2261 = vadd.f32 %v2226, %v2247
        %v2262 = vadd.f32 %v2227, %v2248
        %v2263 = vadd.f32 %v2228, %v2249
        %v2264 = vadd.f32 %v2229, %v2250
        %v2265 = vadd.f32 %v2230, %v2251
        %v2266 = vadd.f32 %v2231, %v2252
        %v2267 = vadd.f32 %v2232, %v2253
        %v2268 = vadd.f32 %v2233, %v2254
        %v2269 = vadd.f32 %v2234, %v2255
        %v2270 = vadd.f32 %v2235, %v2256
        %v2271 = vadd.f32 %v2236, %v2257
        %v2272 = vadd.f32 %v2237, %v2258
        %v2273 = vxor.u32 %v2224, 2147483648
        %v2274 = vxor.u32 %v2225, 2147483648
        %v2275 = vxor.u32 %v2226, 2147483648
        %v2276 = vxor.u32 %v2227, 2147483648
        %v2277 = vxor.u32 %v2228, 2147483648
        %v2278 = vxor.u32 %v2229, 2147483648
        %v2279 = vxor.u32 %v2230, 2147483648
        %v2280 = vxor.u32 %v2231, 2147483648
        %v2281 = vxor.u32 %v2232, 2147483648
        %v2282 = vxor.u32 %v2233, 2147483648
        %v2283 = vxor.u32 %v2234, 2147483648
        %v2284 = vxor.u32 %v2235, 2147483648
        %v2285 = vxor.u32 %v2236, 2147483648
        %v2286 = vxor.u32 %v2237, 2147483648
        %v2287 = vmul.f32 %v2273, 1.442695
        %v2288 = vpow.pop %v2287
        %v2289 = vmul.f32 %v2274, 1.442695
        %v2290 = vpow.pop %v2289
        %v2291 = vmul.f32 %v2275, 1.442695
        %v2292 = vpow.pop %v2291
        %v2293 = vmul.f32 %v2276, 1.442695
        %v2294 = vpow.pop %v2293
        %v2295 = vmul.f32 %v2277, 1.442695
        %v2296 = vpow.pop %v2295
        %v2297 = vmul.f32 %v2278, 1.442695
        %v2298 = vpow.pop %v2297
        %v2299 = vmul.f32 %v2279, 1.442695
        %v2300 = vpow.pop %v2299
        %v2301 = vmul.f32 %v2280, 1.442695
        %v2302 = vpow.pop %v2301
        %v2303 = vmul.f32 %v2281, 1.442695
        %v2304 = vpow.pop %v2303
        %v2305 = vmul.f32 %v2282, 1.442695
        %v2306 = vpow.pop %v2305
        %v2307 = vmul.f32 %v2283, 1.442695
        %v2308 = vpow.pop %v2307
        %v2309 = vmul.f32 %v2284, 1.442695
        %v2310 = vpow.pop %v2309
        %v2311 = vmul.f32 %v2285, 1.442695
        %v2312 = vpow.pop %v2311
        %v2313 = vmul.f32 %v2286, 1.442695
        %v2314 = vpow.pop %v2313
        %v2315 = vadd.f32 %v2288, 1.0
        %v2316 = vadd.f32 %v2290, 1.0
        %v2317 = vadd.f32 %v2292, 1.0
        %v2318 = vadd.f32 %v2294, 1.0
        %v2319 = vadd.f32 %v2296, 1.0
        %v2320 = vadd.f32 %v2298, 1.0
        %v2321 = vadd.f32 %v2300, 1.0
        %v2322 = vadd.f32 %v2302, 1.0
        %v2323 = vadd.f32 %v2304, 1.0
        %v2324 = vadd.f32 %v2306, 1.0
        %v2325 = vadd.f32 %v2308, 1.0
        %v2326 = vadd.f32 %v2310, 1.0
        %v2327 = vadd.f32 %v2312, 1.0
        %v2328 = vadd.f32 %v2314, 1.0
        %v2329 = vrcp.pop %v2315
        %v2330 = vmul.f32 1.0, %v2329
        %v2331 = vrcp.pop %v2316
        %v2332 = vmul.f32 1.0, %v2331
        %v2333 = vrcp.pop %v2317
        %v2334 = vmul.f32 1.0, %v2333
        %v2335 = vrcp.pop %v2318
        %v2336 = vmul.f32 1.0, %v2335
        %v2337 = vrcp.pop %v2319
        %v2338 = vmul.f32 1.0, %v2337
        %v2339 = vrcp.pop %v2320
        %v2340 = vmul.f32 1.0, %v2339
        %v2341 = vrcp.pop %v2321
        %v2342 = vmul.f32 1.0, %v2341
        %v2343 = vrcp.pop %v2322
        %v2344 = vmul.f32 1.0, %v2343
        %v2345 = vrcp.pop %v2323
        %v2346 = vmul.f32 1.0, %v2345
        %v2347 = vrcp.pop %v2324
        %v2348 = vmul.f32 1.0, %v2347
        %v2349 = vrcp.pop %v2325
        %v2350 = vmul.f32 1.0, %v2349
        %v2351 = vrcp.pop %v2326
        %v2352 = vmul.f32 1.0, %v2351
        %v2353 = vrcp.pop %v2327
        %v2354 = vmul.f32 1.0, %v2353
        %v2355 = vrcp.pop %v2328
        %v2356 = vmul.f32 1.0, %v2355
        %2371 = vrot.lane.b32.xlu0 %v2330, 96
        %v2372 = vpop.permute.xlu0 %2371
        %2373 = vrot.lane.b32.xlu0 %v2332, 96
        %v2374 = vpop.permute.xlu0 %2373
        %2375 = vrot.lane.b32.xlu0 %v2334, 96
        %v2376 = vpop.permute.xlu0 %2375
        %2377 = vrot.lane.b32.xlu0 %v2336, 96
        %v2378 = vpop.permute.xlu0 %2377
        %2379 = vrot.lane.b32.xlu0 %v2338, 96
        %v2380 = vpop.permute.xlu0 %2379
        %2381 = vrot.lane.b32.xlu0 %v2340, 96
        %v2382 = vpop.permute.xlu0 %2381
        %2383 = vrot.lane.b32.xlu0 %v2342, 96
        %v2384 = vpop.permute.xlu0 %2383
        %2385 = vrot.lane.b32.xlu0 %v2344, 96
        %v2386 = vpop.permute.xlu0 %2385
        %2387 = vrot.lane.b32.xlu0 %v2346, 96
        %v2388 = vpop.permute.xlu0 %2387
        %2389 = vrot.lane.b32.xlu0 %v2348, 96
        %v2390 = vpop.permute.xlu0 %2389
        %2391 = vrot.lane.b32.xlu0 %v2350, 96
        %v2392 = vpop.permute.xlu0 %2391
        %2393 = vrot.lane.b32.xlu0 %v2352, 96
        %v2394 = vpop.permute.xlu0 %2393
        %2395 = vrot.lane.b32.xlu0 %v2354, 96
        %v2396 = vpop.permute.xlu0 %2395
        %2397 = vrot.lane.b32.xlu0 %v2356, 96
        %v2398 = vpop.permute.xlu0 %2397
        %v2413 = vmul.f32 %v2259, %v2372
        %v2414 = vmul.f32 %v2260, %v2374
        %v2415 = vmul.f32 %v2261, %v2376
        %v2416 = vmul.f32 %v2262, %v2378
        %v2417 = vmul.f32 %v2263, %v2380
        %v2418 = vmul.f32 %v2264, %v2382
        %v2419 = vmul.f32 %v2265, %v2384
        %v2420 = vmul.f32 %v2266, %v2386
        %v2421 = vmul.f32 %v2267, %v2388
        %v2422 = vmul.f32 %v2268, %v2390
        %v2423 = vmul.f32 %v2269, %v2392
        %v2424 = vmul.f32 %v2270, %v2394
        %v2425 = vmul.f32 %v2271, %v2396
        %v2426 = vmul.f32 %v2272, %v2398
        %v2427 = vld [vmem:[#allocation14] sm:$0xff]
        %v2428 = vld [vmem:[#allocation14 + $0x8] sm:$0xff]
        %v2429 = vld [vmem:[#allocation14 + $0x10] sm:$0xff]
        %v2430 = vld [vmem:[#allocation14 + $0x18] sm:$0xff]
        %vm2431 = vcmask 261120
        %v2433 = vsel %vm2431, %v2413, 0
        %v2436 = vsel %vm2431, %v2414, 0
        %v2439 = vsel %vm2431, %v2415, 0
        %v2442 = vsel %vm2431, %v2416, 0
        %v2445 = vsel %vm2431, %v2417, 0
        %v2448 = vsel %vm2431, %v2418, 0
        %v2451 = vsel %vm2431, %v2419, 0
        %v2454 = vsel %vm2431, %v2420, 0
        %v2457 = vsel %vm2431, %v2421, 0
        %v2460 = vsel %vm2431, %v2422, 0
        %v2463 = vsel %vm2431, %v2423, 0
        %v2466 = vsel %vm2431, %v2424, 0
        %v2469 = vsel %vm2431, %v2425, 0
        %v2472 = vsel %vm2431, %v2426, 0
        %2474 = vmatprep.subr.mxu0 0.0
        %2475 = vmatpush1.msra.mxu0 %v2427
        %2476 = vmatprep.subr.mxu0 0.0
        %2477 = vmatpush1.msra.mxu0 %v2428
        %2478 = vmatprep.subr.mxu0 0.0
        %2479 = vmatpush1.msra.mxu0 %v2429
        %2480 = vmatprep.subr.mxu0 0.0
        %2481 = vmatpush1.msra.mxu0 %v2430
        %2482 = vmatprep.subr.mxu0 0.0
        %2483 = vmatpush1.msra.mxu0 0.0
        %2484 = vmatprep.subr.mxu0 0.0
        %2485 = vmatpush1.msra.mxu0 0.0
        %2486 = vmatprep.subr.mxu0 0.0
        %2487 = vmatpush1.msra.mxu0 0.0
        %2488 = vmatprep.subr.mxu0 0.0
        %2489 = vmatpush1.msra.mxu0 0.0
        %2490 = vmatprep.subr.mxu0 0.0
        %2491 = vmatpush1.msra.mxu0 0.0
        %2492 = vmatprep.subr.mxu0 0.0
        %2493 = vmatpush1.msra.mxu0 0.0
        %2494 = vmatprep.subr.mxu0 0.0
        %2495 = vmatpush1.msra.mxu0 0.0
        %2496 = vmatprep.subr.mxu0 0.0
        %2497 = vmatpush1.msra.mxu0 0.0
        %2498 = vmatprep.subr.mxu0 0.0
        %2499 = vmatpush1.msra.mxu0 0.0
        %2500 = vmatprep.subr.mxu0 0.0
        %2501 = vmatpush1.msra.mxu0 0.0
        %2502 = vmatprep.subr.mxu0 0.0
        %2503 = vmatpush1.msra.mxu0 0.0
        %2504 = vmatprep.subr.mxu0 0.0
        %2505 = vmatpush1.msra.mxu0 0.0
        %2506 = vmatprep.subr.mxu0 0.0
        %2507 = vmatpush1.msra.mxu0 0.0
        %2508 = vmatprep.subr.mxu0 0.0
        %2509 = vmatpush1.msra.mxu0 0.0
        %2510 = vmatprep.subr.mxu0 0.0
        %2511 = vmatpush1.msra.mxu0 0.0
        %2512 = vmatprep.subr.mxu0 0.0
        %2513 = vmatpush1.msra.mxu0 0.0
        %2514 = vmatprep.subr.mxu0 0.0
        %2515 = vmatpush1.msra.mxu0 0.0
        %2516 = vmatprep.subr.mxu0 0.0
        %2517 = vmatpush1.msra.mxu0 0.0
        %2518 = vmatprep.subr.mxu0 0.0
        %2519 = vmatpush1.msra.mxu0 0.0
        %2520 = vmatprep.subr.mxu0 0.0
        %2521 = vmatpush1.msra.mxu0 0.0
        %2522 = vmatprep.subr.mxu0 0.0
        %2523 = vmatpush1.msra.mxu0 0.0
        %2524 = vmatprep.subr.mxu0 0.0
        %2525 = vmatpush1.msra.mxu0 0.0
        %2526 = vmatprep.subr.mxu0 0.0
        %2527 = vmatpush1.msra.mxu0 0.0
        %2528 = vmatprep.subr.mxu0 0.0
        %2529 = vmatpush1.msra.mxu0 0.0
        %2530 = vmatprep.subr.mxu0 0.0
        %2531 = vmatpush1.msra.mxu0 0.0
        %2532 = vmatprep.subr.mxu0 0.0
        %2533 = vmatpush1.msra.mxu0 0.0
        %2534 = vmatprep.subr.mxu0 0.0
        %2535 = vmatpush1.msra.mxu0 0.0
        %2536 = vmatprep.subr.mxu0 0.0
        %2537 = vmatpush1.msra.mxu0 0.0
        %2538 = vmatprep.mubr.f32.mxu0 0.0
        %2539 = vmatmul.mubr.f32.gmra.mrb[0].mxu0 %v2433
        %v2540 = vpop.f32.mrb[0].mxu0
        %v2541 = vadd.f32 0.0, %v2540
        %v2542 = vpop.f32.mrb[0].mxu0
        %2543 = vmatprep.mubr.f32.mxu0 0.0
        %2544 = vmatmul.mubr.f32.gmra.mrb[0].mxu0 %v2436
        %v2545 = vpop.f32.mrb[0].mxu0
        %v2546 = vadd.f32 0.0, %v2545
        %v2547 = vpop.f32.mrb[0].mxu0
        %2548 = vmatprep.mubr.f32.mxu0 0.0
        %2549 = vmatmul.mubr.f32.gmra.mrb[0].mxu0 %v2439
        %v2550 = vpop.f32.mrb[0].mxu0
        %v2551 = vadd.f32 0.0, %v2550
        %v2552 = vpop.f32.mrb[0].mxu0
        %2553 = vmatprep.mubr.f32.mxu0 0.0
        %2554 = vmatmul.mubr.f32.gmra.mrb[0].mxu0 %v2442
        %v2555 = vpop.f32.mrb[0].mxu0
        %v2556 = vadd.f32 0.0, %v2555
        %v2557 = vpop.f32.mrb[0].mxu0
        %2558 = vmatprep.mubr.f32.mxu0 0.0
        %2559 = vmatmul.mubr.f32.gmra.mrb[0].mxu0 %v2445
        %v2560 = vpop.f32.mrb[0].mxu0
        %v2561 = vadd.f32 0.0, %v2560
        %v2562 = vpop.f32.mrb[0].mxu0
        %2563 = vmatprep.mubr.f32.mxu0 0.0
        %2564 = vmatmul.mubr.f32.gmra.mrb[0].mxu0 %v2448
        %v2565 = vpop.f32.mrb[0].mxu0
        %v2566 = vadd.f32 0.0, %v2565
        %v2567 = vpop.f32.mrb[0].mxu0
        %2568 = vmatprep.mubr.f32.mxu0 0.0
        %2569 = vmatmul.mubr.f32.gmra.mrb[0].mxu0 %v2451
        %v2570 = vpop.f32.mrb[0].mxu0
        %v2571 = vadd.f32 0.0, %v2570
        %v2572 = vpop.f32.mrb[0].mxu0
        %2573 = vmatprep.mubr.f32.mxu0 0.0
        %2574 = vmatmul.mubr.f32.gmra.mrb[0].mxu0 %v2454
        %v2575 = vpop.f32.mrb[0].mxu0
        %v2576 = vadd.f32 0.0, %v2575
        %v2577 = vpop.f32.mrb[0].mxu0
        %2578 = vmatprep.mubr.f32.mxu0 0.0
        %2579 = vmatmul.mubr.f32.gmra.mrb[0].mxu0 %v2457
        %v2580 = vpop.f32.mrb[0].mxu0
        %v2581 = vadd.f32 0.0, %v2580
        %v2582 = vpop.f32.mrb[0].mxu0
        %2583 = vmatprep.mubr.f32.mxu0 0.0
        %2584 = vmatmul.mubr.f32.gmra.mrb[0].mxu0 %v2460
        %v2585 = vpop.f32.mrb[0].mxu0
        %v2586 = vadd.f32 0.0, %v2585
        %v2587 = vpop.f32.mrb[0].mxu0
        %2588 = vmatprep.mubr.f32.mxu0 0.0
        %2589 = vmatmul.mubr.f32.gmra.mrb[0].mxu0 %v2463
        %v2590 = vpop.f32.mrb[0].mxu0
        %v2591 = vadd.f32 0.0, %v2590
        %v2592 = vpop.f32.mrb[0].mxu0
        %2593 = vmatprep.mubr.f32.mxu0 0.0
        %2594 = vmatmul.mubr.f32.gmra.mrb[0].mxu0 %v2466
        %v2595 = vpop.f32.mrb[0].mxu0
        %v2596 = vadd.f32 0.0, %v2595
        %v2597 = vpop.f32.mrb[0].mxu0
        %2598 = vmatprep.mubr.f32.mxu0 0.0
        %2599 = vmatmul.mubr.f32.gmra.mrb[0].mxu0 %v2469
        %v2600 = vpop.f32.mrb[0].mxu0
        %v2601 = vadd.f32 0.0, %v2600
        %v2602 = vpop.f32.mrb[0].mxu0
        %2603 = vmatprep.mubr.f32.mxu0 0.0
        %2604 = vmatmul.mubr.f32.gmra.mrb[0].mxu0 %v2472
        %v2605 = vpop.f32.mrb[0].mxu0
        %v2606 = vadd.f32 0.0, %v2605
        %v2607 = vpop.f32.mrb[0].mxu0
        %2608 = vdwg.mxu0
        %v2609 = vld [vmem:[%s17] sm:$0xff]
        %v2610 = vld [vmem:[%s17 + $0x8] sm:$0xff]
        %v2611 = vld [vmem:[%s17 + $0x10] sm:$0xff]
        %v2612 = vld [vmem:[%s17 + $0x18] sm:$0xff]
        %v2613 = vld [vmem:[%s17 + $0x20] sm:$0xff]
        %v2614 = vld [vmem:[%s17 + $0x28] sm:$0xff]
        %v2615 = vld [vmem:[%s17 + $0x30] sm:$0xff]
        %v2616 = vld [vmem:[%s17 + $0x38] sm:$0xff]
        %v2617 = vld [vmem:[%s17 + $0x40] sm:$0xff]
        %v2618 = vld [vmem:[%s17 + $0x48] sm:$0xff]
        %v2619 = vld [vmem:[%s17 + $0x50] sm:$0xff]
        %v2620 = vld [vmem:[%s17 + $0x58] sm:$0xff]
        %v2621 = vld [vmem:[%s17 + $0x60] sm:$0xff]
        %v2622 = vld [vmem:[%s17 + $0x68] sm:$0xff]
        %v2623 = vld [vmem:[%s19] sm:$0x1]
        %v2625 = vlaneseq
        %v2626 = vshrl.u32 %v2625, 7
        %v2627 = vsub.s32 0, %v2626
        %v2628 = vrot.slane %v2623, %v2627
        %vm2630 = vcmask 916480
        %v2632 = vsel %vm2630, %v2609, 0
        %v2635 = vsel %vm2630, %v2610, 0
        %v2638 = vsel %vm2630, %v2611, 0
        %v2641 = vsel %vm2630, %v2612, 0
        %v2644 = vsel %vm2630, %v2613, 0
        %v2647 = vsel %vm2630, %v2614, 0
        %v2650 = vsel %vm2630, %v2615, 0
        %v2653 = vsel %vm2630, %v2616, 0
        %v2656 = vsel %vm2630, %v2617, 0
        %v2659 = vsel %vm2630, %v2618, 0
        %v2662 = vsel %vm2630, %v2619, 0
        %v2665 = vsel %vm2630, %v2620, 0
        %v2668 = vsel %vm2630, %v2621, 0
        %v2671 = vsel %vm2630, %v2622, 0
        %2673 = vmatprep.subr.mxu0 0.0
        %2674 = vmatpush1.msra.mxu0 %v2541
        %2675 = vmatprep.subr.mxu0 0.0
        %2676 = vmatpush1.msra.mxu0 %v2546
        %2677 = vmatprep.subr.mxu0 0.0
        %2678 = vmatpush1.msra.mxu0 %v2551
        %2679 = vmatprep.subr.mxu0 0.0
        %2680 = vmatpush1.msra.mxu0 %v2556
        %2681 = vmatprep.subr.mxu0 0.0
        %2682 = vmatpush1.msra.mxu0 %v2561
        %2683 = vmatprep.subr.mxu0 0.0
        %2684 = vmatpush1.msra.mxu0 %v2566
        %2685 = vmatprep.subr.mxu0 0.0
        %2686 = vmatpush1.msra.mxu0 %v2571
        %2687 = vmatprep.subr.mxu0 0.0
        %2688 = vmatpush1.msra.mxu0 %v2576
        %2689 = vmatprep.subr.mxu0 0.0
        %2690 = vmatpush1.msra.mxu0 %v2581
        %2691 = vmatprep.subr.mxu0 0.0
        %2692 = vmatpush1.msra.mxu0 %v2586
        %2693 = vmatprep.subr.mxu0 0.0
        %2694 = vmatpush1.msra.mxu0 %v2591
        %2695 = vmatprep.subr.mxu0 0.0
        %2696 = vmatpush1.msra.mxu0 %v2596
        %2697 = vmatprep.subr.mxu0 0.0
        %2698 = vmatpush1.msra.mxu0 %v2601
        %2699 = vmatprep.subr.mxu0 0.0
        %2700 = vmatpush1.msra.mxu0 %v2606
        %2701 = vmatprep.subr.mxu0 0.0
        %2702 = vmatpush1.msra.mxu0 0.0
        %2703 = vmatprep.subr.mxu0 0.0
        %2704 = vmatpush1.msra.mxu0 0.0
        %2705 = vmatprep.subr.mxu0 0.0
        %2706 = vmatpush1.msra.mxu0 0.0
        %2707 = vmatprep.subr.mxu0 0.0
        %2708 = vmatpush1.msra.mxu0 0.0
        %2709 = vmatprep.subr.mxu0 0.0
        %2710 = vmatpush1.msra.mxu0 0.0
        %2711 = vmatprep.subr.mxu0 0.0
        %2712 = vmatpush1.msra.mxu0 0.0
        %2713 = vmatprep.subr.mxu0 0.0
        %2714 = vmatpush1.msra.mxu0 0.0
        %2715 = vmatprep.subr.mxu0 0.0
        %2716 = vmatpush1.msra.mxu0 0.0
        %2717 = vmatprep.subr.mxu0 0.0
        %2718 = vmatpush1.msra.mxu0 0.0
        %2719 = vmatprep.subr.mxu0 0.0
        %2720 = vmatpush1.msra.mxu0 0.0
        %2721 = vmatprep.subr.mxu0 0.0
        %2722 = vmatpush1.msra.mxu0 0.0
        %2723 = vmatprep.subr.mxu0 0.0
        %2724 = vmatpush1.msra.mxu0 0.0
        %2725 = vmatprep.subr.mxu0 0.0
        %2726 = vmatpush1.msra.mxu0 0.0
        %2727 = vmatprep.subr.mxu0 0.0
        %2728 = vmatpush1.msra.mxu0 0.0
        %2729 = vmatprep.subr.mxu0 0.0
        %2730 = vmatpush1.msra.mxu0 0.0
        %2731 = vmatprep.subr.mxu0 0.0
        %2732 = vmatpush1.msra.mxu0 0.0
        %2733 = vmatprep.subr.mxu0 0.0
        %2734 = vmatpush1.msra.mxu0 0.0
        %2735 = vmatprep.subr.mxu0 0.0
        %2736 = vmatpush1.msra.mxu0 0.0
        %2737 = vmatprep.mubr.f32.mxu0 0.0
        %2738 = vmatmul.mubr.f32.gmra.mrb[0].mxu0 %v2632
        %v2739 = vpop.f32.mrb[0].mxu0
        %v2740 = vadd.f32 %v2628, %v2739
        %v2741 = vpop.f32.mrb[0].mxu0
        %2742 = vmatprep.mubr.f32.mxu0 0.0
        %2743 = vmatmul.mubr.f32.gmra.mrb[0].mxu0 %v2635
        %v2744 = vpop.f32.mrb[0].mxu0
        %v2745 = vadd.f32 %v2628, %v2744
        %v2746 = vpop.f32.mrb[0].mxu0
        %2747 = vmatprep.mubr.f32.mxu0 0.0
        %2748 = vmatmul.mubr.f32.gmra.mrb[0].mxu0 %v2638
        %v2749 = vpop.f32.mrb[0].mxu0
        %v2750 = vadd.f32 %v2628, %v2749
        %v2751 = vpop.f32.mrb[0].mxu0
        %2752 = vmatprep.mubr.f32.mxu0 0.0
        %2753 = vmatmul.mubr.f32.gmra.mrb[0].mxu0 %v2641
        %v2754 = vpop.f32.mrb[0].mxu0
        %v2755 = vadd.f32 %v2628, %v2754
        %v2756 = vpop.f32.mrb[0].mxu0
        %2757 = vmatprep.mubr.f32.mxu0 0.0
        %2758 = vmatmul.mubr.f32.gmra.mrb[0].mxu0 %v2644
        %v2759 = vpop.f32.mrb[0].mxu0
        %v2760 = vadd.f32 %v2628, %v2759
        %v2761 = vpop.f32.mrb[0].mxu0
        %2762 = vmatprep.mubr.f32.mxu0 0.0
        %2763 = vmatmul.mubr.f32.gmra.mrb[0].mxu0 %v2647
        %v2764 = vpop.f32.mrb[0].mxu0
        %v2765 = vadd.f32 %v2628, %v2764
        %v2766 = vpop.f32.mrb[0].mxu0
        %2767 = vmatprep.mubr.f32.mxu0 0.0
        %2768 = vmatmul.mubr.f32.gmra.mrb[0].mxu0 %v2650
        %v2769 = vpop.f32.mrb[0].mxu0
        %v2770 = vadd.f32 %v2628, %v2769
        %v2771 = vpop.f32.mrb[0].mxu0
        %2772 = vmatprep.mubr.f32.mxu0 0.0
        %2773 = vmatmul.mubr.f32.gmra.mrb[0].mxu0 %v2653
        %v2774 = vpop.f32.mrb[0].mxu0
        %v2775 = vadd.f32 %v2628, %v2774
        %v2776 = vpop.f32.mrb[0].mxu0
        %2777 = vmatprep.mubr.f32.mxu0 0.0
        %2778 = vmatmul.mubr.f32.gmra.mrb[0].mxu0 %v2656
        %v2779 = vpop.f32.mrb[0].mxu0
        %v2780 = vadd.f32 %v2628, %v2779
        %v2781 = vpop.f32.mrb[0].mxu0
        %2782 = vmatprep.mubr.f32.mxu0 0.0
        %2783 = vmatmul.mubr.f32.gmra.mrb[0].mxu0 %v2659
        %v2784 = vpop.f32.mrb[0].mxu0
        %v2785 = vadd.f32 %v2628, %v2784
        %v2786 = vpop.f32.mrb[0].mxu0
        %2787 = vmatprep.mubr.f32.mxu0 0.0
        %2788 = vmatmul.mubr.f32.gmra.mrb[0].mxu0 %v2662
        %v2789 = vpop.f32.mrb[0].mxu0
        %v2790 = vadd.f32 %v2628, %v2789
        %v2791 = vpop.f32.mrb[0].mxu0
        %2792 = vmatprep.mubr.f32.mxu0 0.0
        %2793 = vmatmul.mubr.f32.gmra.mrb[0].mxu0 %v2665
        %v2794 = vpop.f32.mrb[0].mxu0
        %v2795 = vadd.f32 %v2628, %v2794
        %v2796 = vpop.f32.mrb[0].mxu0
        %2797 = vmatprep.mubr.f32.mxu0 0.0
        %2798 = vmatmul.mubr.f32.gmra.mrb[0].mxu0 %v2668
        %v2799 = vpop.f32.mrb[0].mxu0
        %v2800 = vadd.f32 %v2628, %v2799
        %v2801 = vpop.f32.mrb[0].mxu0
        %2802 = vmatprep.mubr.f32.mxu0 0.0
        %2803 = vmatmul.mubr.f32.gmra.mrb[0].mxu0 %v2671
        %v2804 = vpop.f32.mrb[0].mxu0
        %v2805 = vadd.f32 %v2628, %v2804
        %v2806 = vpop.f32.mrb[0].mxu0
        %2807 = vdwg.mxu0
        %v2808 = vmax.f32 %v2740, 0.0
        %v2809 = vmax.f32 %v2745, 0.0
        %v2810 = vmax.f32 %v2750, 0.0
        %v2811 = vmax.f32 %v2755, 0.0
        %v2812 = vmax.f32 %v2760, 0.0
        %v2813 = vmax.f32 %v2765, 0.0
        %v2814 = vmax.f32 %v2770, 0.0
        %v2815 = vmax.f32 %v2775, 0.0
        %v2816 = vmax.f32 %v2780, 0.0
        %v2817 = vmax.f32 %v2785, 0.0
        %v2818 = vmax.f32 %v2790, 0.0
        %v2819 = vmax.f32 %v2795, 0.0
        %v2820 = vmax.f32 %v2800, 0.0
        %v2821 = vmax.f32 %v2805, 0.0
        %v2822 = vld [vmem:[#allocation26] sm:$0xff]
        %v2823 = vld [vmem:[#allocation26 + $0x8] sm:$0xff]
        %v2824 = vld [vmem:[#allocation26 + $0x10] sm:$0xff]
        %v2825 = vld [vmem:[#allocation26 + $0x18] sm:$0xff]
        %s2826 = scalar_lea.vmem [#allocation26], 32
        %v2827 = vld [vmem:[%s2826] sm:$0xff]
        %v2828 = vld [vmem:[%s2826 + $0x8] sm:$0xff]
        %v2829 = vld [vmem:[%s2826 + $0x10] sm:$0xff]
        %v2830 = vld [vmem:[%s2826 + $0x18] sm:$0xff]
        %v2832 = vsel %vm2431, %v2810, 0
        %v2835 = vsel %vm2431, %v2811, 0
        %v2838 = vsel %vm2431, %v2812, 0
        %v2841 = vsel %vm2431, %v2813, 0
        %v2844 = vsel %vm2431, %v2814, 0
        %v2847 = vsel %vm2431, %v2815, 0
        %v2850 = vsel %vm2431, %v2816, 0
        %v2853 = vsel %vm2431, %v2817, 0
        %v2856 = vsel %vm2431, %v2818, 0
        %v2859 = vsel %vm2431, %v2819, 0
        %v2862 = vsel %vm2431, %v2820, 0
        %v2865 = vsel %vm2431, %v2821, 0
        %2867 = vmatprep.subr.mxu0 0.0
        %2868 = vmatpush1.msra.mxu0 %v2827
        %2869 = vmatprep.subr.mxu0 0.0
        %2870 = vmatpush1.msra.mxu0 %v2828
        %2871 = vmatprep.subr.mxu0 0.0
        %2872 = vmatpush1.msra.mxu0 %v2829
        %2873 = vmatprep.subr.mxu0 0.0
        %2874 = vmatpush1.msra.mxu0 %v2830
        %2875 = vmatprep.subr.mxu0 0.0
        %2876 = vmatpush1.msra.mxu0 0.0
        %2877 = vmatprep.subr.mxu0 0.0
        %2878 = vmatpush1.msra.mxu0 0.0
        %2879 = vmatprep.subr.mxu0 0.0
        %2880 = vmatpush1.msra.mxu0 0.0
        %2881 = vmatprep.subr.mxu0 0.0
        %2882 = vmatpush1.msra.mxu0 0.0
        %2883 = vmatprep.subr.mxu0 0.0
        %2884 = vmatpush1.msra.mxu0 0.0
        %2885 = vmatprep.subr.mxu0 0.0
        %2886 = vmatpush1.msra.mxu0 0.0
        %2887 = vmatprep.subr.mxu0 0.0
        %2888 = vmatpush1.msra.mxu0 0.0
        %2889 = vmatprep.subr.mxu0 0.0
        %2890 = vmatpush1.msra.mxu0 0.0
        %2891 = vmatprep.subr.mxu0 0.0
        %2892 = vmatpush1.msra.mxu0 0.0
        %2893 = vmatprep.subr.mxu0 0.0
        %2894 = vmatpush1.msra.mxu0 0.0
        %2895 = vmatprep.subr.mxu0 0.0
        %2896 = vmatpush1.msra.mxu0 0.0
        %2897 = vmatprep.subr.mxu0 0.0
        %2898 = vmatpush1.msra.mxu0 0.0
        %2899 = vmatprep.subr.mxu0 0.0
        %2900 = vmatpush1.msra.mxu0 0.0
        %2901 = vmatprep.subr.mxu0 0.0
        %2902 = vmatpush1.msra.mxu0 0.0
        %2903 = vmatprep.subr.mxu0 0.0
        %2904 = vmatpush1.msra.mxu0 0.0
        %2905 = vmatprep.subr.mxu0 0.0
        %2906 = vmatpush1.msra.mxu0 0.0
        %2907 = vmatprep.subr.mxu0 0.0
        %2908 = vmatpush1.msra.mxu0 0.0
        %2909 = vmatprep.subr.mxu0 0.0
        %2910 = vmatpush1.msra.mxu0 0.0
        %2911 = vmatprep.subr.mxu0 0.0
        %2912 = vmatpush1.msra.mxu0 0.0
        %2913 = vmatprep.subr.mxu0 0.0
        %2914 = vmatpush1.msra.mxu0 0.0
        %2915 = vmatprep.subr.mxu0 0.0
        %2916 = vmatpush1.msra.mxu0 0.0
        %2917 = vmatprep.subr.mxu0 0.0
        %2918 = vmatpush1.msra.mxu0 0.0
        %2919 = vmatprep.subr.mxu0 0.0
        %2920 = vmatpush1.msra.mxu0 0.0
        %2921 = vmatprep.subr.mxu0 0.0
        %2922 = vmatpush1.msra.mxu0 0.0
        %2923 = vmatprep.subr.mxu0 0.0
        %2924 = vmatpush1.msra.mxu0 0.0
        %2925 = vmatprep.subr.mxu0 0.0
        %2926 = vmatpush1.msra.mxu0 0.0
        %2927 = vmatprep.subr.mxu0 0.0
        %2928 = vmatpush1.msra.mxu0 0.0
        %2929 = vmatprep.subr.mxu0 0.0
        %2930 = vmatpush1.msra.mxu0 0.0
        %2931 = vmatprep.mubr.f32.mxu0 0.0
        %2932 = vmatmul.mubr.f32.gmra.mrb[0].mxu0 %v2832
        %v2933 = vpop.f32.mrb[0].mxu0
        %v2934 = vadd.f32 0.0, %v2933
        %v2935 = vpop.f32.mrb[0].mxu0
        %2936 = vmatprep.mubr.f32.mxu0 0.0
        %2937 = vmatmul.mubr.f32.gmra.mrb[0].mxu0 %v2835
        %v2938 = vpop.f32.mrb[0].mxu0
        %v2939 = vadd.f32 0.0, %v2938
        %v2940 = vpop.f32.mrb[0].mxu0
        %2941 = vmatprep.mubr.f32.mxu0 0.0
        %2942 = vmatmul.mubr.f32.gmra.mrb[0].mxu0 %v2838
        %v2943 = vpop.f32.mrb[0].mxu0
        %v2944 = vadd.f32 0.0, %v2943
        %v2945 = vpop.f32.mrb[0].mxu0
        %2946 = vmatprep.mubr.f32.mxu0 0.0
        %2947 = vmatmul.mubr.f32.gmra.mrb[0].mxu0 %v2841
        %v2948 = vpop.f32.mrb[0].mxu0
        %v2949 = vadd.f32 0.0, %v2948
        %v2950 = vpop.f32.mrb[0].mxu0
        %2951 = vmatprep.mubr.f32.mxu0 0.0
        %2952 = vmatmul.mubr.f32.gmra.mrb[0].mxu0 %v2844
        %v2953 = vpop.f32.mrb[0].mxu0
        %v2954 = vadd.f32 0.0, %v2953
        %v2955 = vpop.f32.mrb[0].mxu0
        %2956 = vmatprep.mubr.f32.mxu0 0.0
        %2957 = vmatmul.mubr.f32.gmra.mrb[0].mxu0 %v2847
        %v2958 = vpop.f32.mrb[0].mxu0
        %v2959 = vadd.f32 0.0, %v2958
        %v2960 = vpop.f32.mrb[0].mxu0
        %2961 = vmatprep.mubr.f32.mxu0 0.0
        %2962 = vmatmul.mubr.f32.gmra.mrb[0].mxu0 %v2850
        %v2963 = vpop.f32.mrb[0].mxu0
        %v2964 = vadd.f32 0.0, %v2963
        %v2965 = vpop.f32.mrb[0].mxu0
        %2966 = vmatprep.mubr.f32.mxu0 0.0
        %2967 = vmatmul.mubr.f32.gmra.mrb[0].mxu0 %v2853
        %v2968 = vpop.f32.mrb[0].mxu0
        %v2969 = vadd.f32 0.0, %v2968
        %v2970 = vpop.f32.mrb[0].mxu0
        %2971 = vmatprep.mubr.f32.mxu0 0.0
        %2972 = vmatmul.mubr.f32.gmra.mrb[0].mxu0 %v2856
        %v2973 = vpop.f32.mrb[0].mxu0
        %v2974 = vadd.f32 0.0, %v2973
        %v2975 = vpop.f32.mrb[0].mxu0
        %2976 = vmatprep.mubr.f32.mxu0 0.0
        %2977 = vmatmul.mubr.f32.gmra.mrb[0].mxu0 %v2859
        %v2978 = vpop.f32.mrb[0].mxu0
        %v2979 = vadd.f32 0.0, %v2978
        %v2980 = vpop.f32.mrb[0].mxu0
        %2981 = vmatprep.mubr.f32.mxu0 0.0
        %2982 = vmatmul.mubr.f32.gmra.mrb[0].mxu0 %v2862
        %v2983 = vpop.f32.mrb[0].mxu0
        %v2984 = vadd.f32 0.0, %v2983
        %v2985 = vpop.f32.mrb[0].mxu0
        %2986 = vmatprep.mubr.f32.mxu0 0.0
        %2987 = vmatmul.mubr.f32.gmra.mrb[0].mxu0 %v2865
        %v2988 = vpop.f32.mrb[0].mxu0
        %v2989 = vadd.f32 0.0, %v2988
        %v2990 = vpop.f32.mrb[0].mxu0
        %2991 = vdwg.mxu0
        %v2993 = vsel %vm2431, %v2808, 0
        %v2996 = vsel %vm2431, %v2809, 0
        %2998 = vmatprep.subr.mxu0 0.0
        %2999 = vmatpush1.msra.mxu0 %v2822
        %3000 = vmatprep.subr.mxu0 0.0
        %3001 = vmatpush1.msra.mxu0 %v2823
        %3002 = vmatprep.subr.mxu0 0.0
        %3003 = vmatpush1.msra.mxu0 %v2824
        %3004 = vmatprep.subr.mxu0 0.0
        %3005 = vmatpush1.msra.mxu0 %v2825
        %3006 = vmatprep.subr.mxu0 0.0
        %3007 = vmatpush1.msra.mxu0 0.0
        %3008 = vmatprep.subr.mxu0 0.0
        %3009 = vmatpush1.msra.mxu0 0.0
        %3010 = vmatprep.subr.mxu0 0.0
        %3011 = vmatpush1.msra.mxu0 0.0
        %3012 = vmatprep.subr.mxu0 0.0
        %3013 = vmatpush1.msra.mxu0 0.0
        %3014 = vmatprep.subr.mxu0 0.0
        %3015 = vmatpush1.msra.mxu0 0.0
        %3016 = vmatprep.subr.mxu0 0.0
        %3017 = vmatpush1.msra.mxu0 0.0
        %3018 = vmatprep.subr.mxu0 0.0
        %3019 = vmatpush1.msra.mxu0 0.0
        %3020 = vmatprep.subr.mxu0 0.0
        %3021 = vmatpush1.msra.mxu0 0.0
        %3022 = vmatprep.subr.mxu0 0.0
        %3023 = vmatpush1.msra.mxu0 0.0
        %3024 = vmatprep.subr.mxu0 0.0
        %3025 = vmatpush1.msra.mxu0 0.0
        %3026 = vmatprep.subr.mxu0 0.0
        %3027 = vmatpush1.msra.mxu0 0.0
        %3028 = vmatprep.subr.mxu0 0.0
        %3029 = vmatpush1.msra.mxu0 0.0
        %3030 = vmatprep.subr.mxu0 0.0
        %3031 = vmatpush1.msra.mxu0 0.0
        %3032 = vmatprep.subr.mxu0 0.0
        %3033 = vmatpush1.msra.mxu0 0.0
        %3034 = vmatprep.subr.mxu0 0.0
        %3035 = vmatpush1.msra.mxu0 0.0
        %3036 = vmatprep.subr.mxu0 0.0
        %3037 = vmatpush1.msra.mxu0 0.0
        %3038 = vmatprep.subr.mxu0 0.0
        %3039 = vmatpush1.msra.mxu0 0.0
        %3040 = vmatprep.subr.mxu0 0.0
        %3041 = vmatpush1.msra.mxu0 0.0
        %3042 = vmatprep.subr.mxu0 0.0
        %3043 = vmatpush1.msra.mxu0 0.0
        %3044 = vmatprep.subr.mxu0 0.0
        %3045 = vmatpush1.msra.mxu0 0.0
        %3046 = vmatprep.subr.mxu0 0.0
        %3047 = vmatpush1.msra.mxu0 0.0
        %3048 = vmatprep.subr.mxu0 0.0
        %3049 = vmatpush1.msra.mxu0 0.0
        %3050 = vmatprep.subr.mxu0 0.0
        %3051 = vmatpush1.msra.mxu0 0.0
        %3052 = vmatprep.subr.mxu0 0.0
        %3053 = vmatpush1.msra.mxu0 0.0
        %3054 = vmatprep.subr.mxu0 0.0
        %3055 = vmatpush1.msra.mxu0 0.0
        %3056 = vmatprep.subr.mxu0 0.0
        %3057 = vmatpush1.msra.mxu0 0.0
        %3058 = vmatprep.subr.mxu0 0.0
        %3059 = vmatpush1.msra.mxu0 0.0
        %3060 = vmatprep.subr.mxu0 0.0
        %3061 = vmatpush1.msra.mxu0 0.0
        %3062 = vmatprep.mubr.f32.mxu0 0.0
        %3063 = vmatmul.mubr.f32.gmra.mrb[0].mxu0 %v2993
        %v3064 = vpop.f32.mrb[0].mxu0
        %v3065 = vadd.f32 %v2934, %v3064
        %v3066 = vpop.f32.mrb[0].mxu0
        %3067 = vmatprep.mubr.f32.mxu0 0.0
        %3068 = vmatmul.mubr.f32.gmra.mrb[0].mxu0 %v2996
        %v3069 = vpop.f32.mrb[0].mxu0
        %v3070 = vadd.f32 %v2939, %v3069
        %v3071 = vpop.f32.mrb[0].mxu0
        %3072 = vmatprep.mubr.f32.mxu0 0.0
        %3073 = vmatmul.mubr.f32.gmra.mrb[0].mxu0 %v2832
        %v3074 = vpop.f32.mrb[0].mxu0
        %v3075 = vadd.f32 %v2944, %v3074
        %v3076 = vpop.f32.mrb[0].mxu0
        %3077 = vmatprep.mubr.f32.mxu0 0.0
        %3078 = vmatmul.mubr.f32.gmra.mrb[0].mxu0 %v2835
        %v3079 = vpop.f32.mrb[0].mxu0
        %v3080 = vadd.f32 %v2949, %v3079
        %v3081 = vpop.f32.mrb[0].mxu0
        %3082 = vmatprep.mubr.f32.mxu0 0.0
        %3083 = vmatmul.mubr.f32.gmra.mrb[0].mxu0 %v2838
        %v3084 = vpop.f32.mrb[0].mxu0
        %v3085 = vadd.f32 %v2954, %v3084
        %v3086 = vpop.f32.mrb[0].mxu0
        %3087 = vmatprep.mubr.f32.mxu0 0.0
        %3088 = vmatmul.mubr.f32.gmra.mrb[0].mxu0 %v2841
        %v3089 = vpop.f32.mrb[0].mxu0
        %v3090 = vadd.f32 %v2959, %v3089
        %v3091 = vpop.f32.mrb[0].mxu0
        %3092 = vmatprep.mubr.f32.mxu0 0.0
        %3093 = vmatmul.mubr.f32.gmra.mrb[0].mxu0 %v2844
        %v3094 = vpop.f32.mrb[0].mxu0
        %v3095 = vadd.f32 %v2964, %v3094
        %v3096 = vpop.f32.mrb[0].mxu0
        %3097 = vmatprep.mubr.f32.mxu0 0.0
        %3098 = vmatmul.mubr.f32.gmra.mrb[0].mxu0 %v2847
        %v3099 = vpop.f32.mrb[0].mxu0
        %v3100 = vadd.f32 %v2969, %v3099
        %v3101 = vpop.f32.mrb[0].mxu0
        %3102 = vmatprep.mubr.f32.mxu0 0.0
        %3103 = vmatmul.mubr.f32.gmra.mrb[0].mxu0 %v2850
        %v3104 = vpop.f32.mrb[0].mxu0
        %v3105 = vadd.f32 %v2974, %v3104
        %v3106 = vpop.f32.mrb[0].mxu0
        %3107 = vmatprep.mubr.f32.mxu0 0.0
        %3108 = vmatmul.mubr.f32.gmra.mrb[0].mxu0 %v2853
        %v3109 = vpop.f32.mrb[0].mxu0
        %v3110 = vadd.f32 %v2979, %v3109
        %v3111 = vpop.f32.mrb[0].mxu0
        %3112 = vmatprep.mubr.f32.mxu0 0.0
        %3113 = vmatmul.mubr.f32.gmra.mrb[0].mxu0 %v2856
        %v3114 = vpop.f32.mrb[0].mxu0
        %v3115 = vadd.f32 %v2984, %v3114
        %v3116 = vpop.f32.mrb[0].mxu0
        %3117 = vmatprep.mubr.f32.mxu0 0.0
        %3118 = vmatmul.mubr.f32.gmra.mrb[0].mxu0 %v2859
        %v3119 = vpop.f32.mrb[0].mxu0
        %v3120 = vadd.f32 %v2989, %v3119
        %v3121 = vpop.f32.mrb[0].mxu0
        %3122 = vdwg.mxu0
        %v3123 = vld [vmem:[#allocation24] sm:$0x1]
        %v3125 = vlaneseq
        %v3126 = vshrl.u32 %v3125, 7
        %v3127 = vsub.s32 0, %v3126
        %v3128 = vrot.slane %v3123, %v3127
        %v3130 = vadd.f32 %v3065, %v3128
        %v3131 = vadd.f32 %v3070, %v3128
        %v3132 = vadd.f32 %v3075, %v3128
        %v3133 = vadd.f32 %v3080, %v3128
        %v3134 = vadd.f32 %v3085, %v3128
        %v3135 = vadd.f32 %v3090, %v3128
        %v3136 = vadd.f32 %v3095, %v3128
        %v3137 = vadd.f32 %v3100, %v3128
        %v3138 = vadd.f32 %v3105, %v3128
        %v3139 = vadd.f32 %v3110, %v3128
        %v3140 = vadd.f32 %v3115, %v3128
        %v3141 = vadd.f32 %v3120, %v3128
        %v3142 = vadd.f32 %v3130, %v2810
        %v3143 = vadd.f32 %v3131, %v2811
        %v3144 = vadd.f32 %v3132, %v2812
        %v3145 = vadd.f32 %v3133, %v2813
        %v3146 = vadd.f32 %v3134, %v2814
        %v3147 = vadd.f32 %v3135, %v2815
        %v3148 = vadd.f32 %v3136, %v2816
        %v3149 = vadd.f32 %v3137, %v2817
        %v3150 = vadd.f32 %v3138, %v2818
        %v3151 = vadd.f32 %v3139, %v2819
        %v3152 = vadd.f32 %v3140, %v2820
        %v3153 = vadd.f32 %v3141, %v2821
        %v3154 = vxor.u32 %v3130, 2147483648
        %v3155 = vxor.u32 %v3131, 2147483648
        %v3156 = vxor.u32 %v3132, 2147483648
        %v3157 = vxor.u32 %v3133, 2147483648
        %v3158 = vxor.u32 %v3134, 2147483648
        %v3159 = vxor.u32 %v3135, 2147483648
        %v3160 = vxor.u32 %v3136, 2147483648
        %v3161 = vxor.u32 %v3137, 2147483648
        %v3162 = vxor.u32 %v3138, 2147483648
        %v3163 = vxor.u32 %v3139, 2147483648
        %v3164 = vxor.u32 %v3140, 2147483648
        %v3165 = vxor.u32 %v3141, 2147483648
        %v3166 = vmul.f32 %v3154, 1.442695
        %v3167 = vpow.pop %v3166
        %v3168 = vmul.f32 %v3155, 1.442695
        %v3169 = vpow.pop %v3168
        %v3170 = vmul.f32 %v3156, 1.442695
        %v3171 = vpow.pop %v3170
        %v3172 = vmul.f32 %v3157, 1.442695
        %v3173 = vpow.pop %v3172
        %v3174 = vmul.f32 %v3158, 1.442695
        %v3175 = vpow.pop %v3174
        %v3176 = vmul.f32 %v3159, 1.442695
        %v3177 = vpow.pop %v3176
        %v3178 = vmul.f32 %v3160, 1.442695
        %v3179 = vpow.pop %v3178
        %v3180 = vmul.f32 %v3161, 1.442695
        %v3181 = vpow.pop %v3180
        %v3182 = vmul.f32 %v3162, 1.442695
        %v3183 = vpow.pop %v3182
        %v3184 = vmul.f32 %v3163, 1.442695
        %v3185 = vpow.pop %v3184
        %v3186 = vmul.f32 %v3164, 1.442695
        %v3187 = vpow.pop %v3186
        %v3188 = vmul.f32 %v3165, 1.442695
        %v3189 = vpow.pop %v3188
        %v3190 = vadd.f32 %v3167, 1.0
        %v3191 = vadd.f32 %v3169, 1.0
        %v3192 = vadd.f32 %v3171, 1.0
        %v3193 = vadd.f32 %v3173, 1.0
        %v3194 = vadd.f32 %v3175, 1.0
        %v3195 = vadd.f32 %v3177, 1.0
        %v3196 = vadd.f32 %v3179, 1.0
        %v3197 = vadd.f32 %v3181, 1.0
        %v3198 = vadd.f32 %v3183, 1.0
        %v3199 = vadd.f32 %v3185, 1.0
        %v3200 = vadd.f32 %v3187, 1.0
        %v3201 = vadd.f32 %v3189, 1.0
        %v3202 = vrcp.pop %v3190
        %v3203 = vmul.f32 1.0, %v3202
        %v3204 = vrcp.pop %v3191
        %v3205 = vmul.f32 1.0, %v3204
        %v3206 = vrcp.pop %v3192
        %v3207 = vmul.f32 1.0, %v3206
        %v3208 = vrcp.pop %v3193
        %v3209 = vmul.f32 1.0, %v3208
        %v3210 = vrcp.pop %v3194
        %v3211 = vmul.f32 1.0, %v3210
        %v3212 = vrcp.pop %v3195
        %v3213 = vmul.f32 1.0, %v3212
        %v3214 = vrcp.pop %v3196
        %v3215 = vmul.f32 1.0, %v3214
        %v3216 = vrcp.pop %v3197
        %v3217 = vmul.f32 1.0, %v3216
        %v3218 = vrcp.pop %v3198
        %v3219 = vmul.f32 1.0, %v3218
        %v3220 = vrcp.pop %v3199
        %v3221 = vmul.f32 1.0, %v3220
        %v3222 = vrcp.pop %v3200
        %v3223 = vmul.f32 1.0, %v3222
        %v3224 = vrcp.pop %v3201
        %v3225 = vmul.f32 1.0, %v3224
        %3238 = vrot.lane.b32.xlu0 %v3203, 96
        %v3239 = vpop.permute.xlu0 %3238
        %3240 = vrot.lane.b32.xlu0 %v3205, 96
        %v3241 = vpop.permute.xlu0 %3240
        %3242 = vrot.lane.b32.xlu0 %v3207, 96
        %v3243 = vpop.permute.xlu0 %3242
        %3244 = vrot.lane.b32.xlu0 %v3209, 96
        %v3245 = vpop.permute.xlu0 %3244
        %3246 = vrot.lane.b32.xlu0 %v3211, 96
        %v3247 = vpop.permute.xlu0 %3246
        %3248 = vrot.lane.b32.xlu0 %v3213, 96
        %v3249 = vpop.permute.xlu0 %3248
        %3250 = vrot.lane.b32.xlu0 %v3215, 96
        %v3251 = vpop.permute.xlu0 %3250
        %3252 = vrot.lane.b32.xlu0 %v3217, 96
        %v3253 = vpop.permute.xlu0 %3252
        %3254 = vrot.lane.b32.xlu0 %v3219, 96
        %v3255 = vpop.permute.xlu0 %3254
        %3256 = vrot.lane.b32.xlu0 %v3221, 96
        %v3257 = vpop.permute.xlu0 %3256
        %3258 = vrot.lane.b32.xlu0 %v3223, 96
        %v3259 = vpop.permute.xlu0 %3258
        %3260 = vrot.lane.b32.xlu0 %v3225, 96
        %v3261 = vpop.permute.xlu0 %3260
        %v3274 = vmul.f32 %v3142, %v3239
        %v3275 = vmul.f32 %v3143, %v3241
        %v3276 = vmul.f32 %v3144, %v3243
        %v3277 = vmul.f32 %v3145, %v3245
        %v3278 = vmul.f32 %v3146, %v3247
        %v3279 = vmul.f32 %v3147, %v3249
        %v3280 = vmul.f32 %v3148, %v3251
        %v3281 = vmul.f32 %v3149, %v3253
        %v3282 = vmul.f32 %v3150, %v3255
        %v3283 = vmul.f32 %v3151, %v3257
        %v3284 = vmul.f32 %v3152, %v3259
        %v3285 = vmul.f32 %v3153, %v3261
        %v3286 = vsel %vm2431, %v3274, 0.0
        %3287 = vadd.xlane.f32.xlu0 %v3286
        %v3288 = vpop.xlane.xlu0 %3287
        %v3289 = vsel %vm2431, %v3275, 0.0
        %3290 = vadd.xlane.f32.xlu0 %v3289
        %v3291 = vpop.xlane.xlu0 %3290
        %v3292 = vsel %vm2431, %v3276, 0.0
        %3293 = vadd.xlane.f32.xlu0 %v3292
        %v3294 = vpop.xlane.xlu0 %3293
        %v3295 = vsel %vm2431, %v3277, 0.0
        %3296 = vadd.xlane.f32.xlu0 %v3295
        %v3297 = vpop.xlane.xlu0 %3296
        %v3298 = vsel %vm2431, %v3278, 0.0
        %3299 = vadd.xlane.f32.xlu0 %v3298
        %v3300 = vpop.xlane.xlu0 %3299
        %v3301 = vsel %vm2431, %v3279, 0.0
        %3302 = vadd.xlane.f32.xlu0 %v3301
        %v3303 = vpop.xlane.xlu0 %3302
        %v3304 = vsel %vm2431, %v3280, 0.0
        %3305 = vadd.xlane.f32.xlu0 %v3304
        %v3306 = vpop.xlane.xlu0 %3305
        %v3307 = vsel %vm2431, %v3281, 0.0
        %3308 = vadd.xlane.f32.xlu0 %v3307
        %v3309 = vpop.xlane.xlu0 %3308
        %v3310 = vsel %vm2431, %v3282, 0.0
        %3311 = vadd.xlane.f32.xlu0 %v3310
        %v3312 = vpop.xlane.xlu0 %3311
        %v3313 = vsel %vm2431, %v3283, 0.0
        %3314 = vadd.xlane.f32.xlu0 %v3313
        %v3315 = vpop.xlane.xlu0 %3314
        %v3316 = vsel %vm2431, %v3284, 0.0
        %3317 = vadd.xlane.f32.xlu0 %v3316
        %v3318 = vpop.xlane.xlu0 %3317
        %v3319 = vsel %vm2431, %v3285, 0.0
        %3320 = vadd.xlane.f32.xlu0 %v3319
        %v3321 = vpop.xlane.xlu0 %3320
        %v3322 = vrcp.pop 32.0
        %v3323 = vmul.f32 %v3288, %v3322
        %v3324 = vmul.f32 %v3291, %v3322
        %v3325 = vmul.f32 %v3294, %v3322
        %v3326 = vmul.f32 %v3297, %v3322
        %v3327 = vmul.f32 %v3300, %v3322
        %v3328 = vmul.f32 %v3303, %v3322
        %v3329 = vmul.f32 %v3306, %v3322
        %v3330 = vmul.f32 %v3309, %v3322
        %v3331 = vmul.f32 %v3312, %v3322
        %v3332 = vmul.f32 %v3315, %v3322
        %v3333 = vmul.f32 %v3318, %v3322
        %v3334 = vmul.f32 %v3321, %v3322
        %v3335 = vadd.f32 %v3323, %v3324
        %v3336 = vrot.slane %v3335, 4
        %v3337 = vadd.f32 %v3335, %v3336
        %v3338 = vrot.slane %v3337, 2
        %v3339 = vadd.f32 %v3337, %v3338
        %v3340 = vrot.slane %v3339, 1
        %v3341 = vadd.f32 %v3339, %v3340
        %v3342 = vadd.f32 %v3325, %v3326
        %v3343 = vrot.slane %v3342, 4
        %v3344 = vadd.f32 %v3342, %v3343
        %v3345 = vrot.slane %v3344, 2
        %v3346 = vadd.f32 %v3344, %v3345
        %v3347 = vrot.slane %v3346, 1
        %v3348 = vadd.f32 %v3346, %v3347
        %v3349 = vadd.f32 %v3327, %v3328
        %v3350 = vrot.slane %v3349, 4
        %v3351 = vadd.f32 %v3349, %v3350
        %v3352 = vrot.slane %v3351, 2
        %v3353 = vadd.f32 %v3351, %v3352
        %v3354 = vrot.slane %v3353, 1
        %v3355 = vadd.f32 %v3353, %v3354
        %v3356 = vadd.f32 %v3329, %v3330
        %v3357 = vrot.slane %v3356, 4
        %v3358 = vadd.f32 %v3356, %v3357
        %v3359 = vrot.slane %v3358, 2
        %v3360 = vadd.f32 %v3358, %v3359
        %v3361 = vrot.slane %v3360, 1
        %v3362 = vadd.f32 %v3360, %v3361
        %v3363 = vadd.f32 %v3331, %v3332
        %v3364 = vrot.slane %v3363, 4
        %v3365 = vadd.f32 %v3363, %v3364
        %v3366 = vrot.slane %v3365, 2
        %v3367 = vadd.f32 %v3365, %v3366
        %v3368 = vrot.slane %v3367, 1
        %v3369 = vadd.f32 %v3367, %v3368
        %v3370 = vadd.f32 %v3333, %v3334
        %v3371 = vrot.slane %v3370, 4
        %v3372 = vadd.f32 %v3370, %v3371
        %v3373 = vrot.slane %v3372, 2
        %v3374 = vadd.f32 %v3372, %v3373
        %v3375 = vrot.slane %v3374, 1
        %v3376 = vadd.f32 %v3374, %v3375
        %v3377 = vrcp.pop 16.0
        %v3378 = vmul.f32 %v3341, %v3377
        %v3379 = vmul.f32 %v3348, %v3377
        %v3380 = vmul.f32 %v3355, %v3377
        %v3381 = vmul.f32 %v3362, %v3377
        %v3382 = vmul.f32 %v3369, %v3377
        %v3383 = vmul.f32 %v3376, %v3377
        %v3384 = vsub.f32 %v3274, %v3378
        %v3385 = vsub.f32 %v3275, %v3378
        %v3386 = vsub.f32 %v3276, %v3379
        %v3387 = vsub.f32 %v3277, %v3379
        %v3388 = vsub.f32 %v3278, %v3380
        %v3389 = vsub.f32 %v3279, %v3380
        %v3390 = vsub.f32 %v3280, %v3381
        %v3391 = vsub.f32 %v3281, %v3381
        %v3392 = vsub.f32 %v3282, %v3382
        %v3393 = vsub.f32 %v3283, %v3382
        %v3394 = vsub.f32 %v3284, %v3383
        %v3395 = vsub.f32 %v3285, %v3383
        %v3396 = vmul.f32 %v3384, %v3384
        %v3397 = vmul.f32 %v3385, %v3385
        %v3398 = vmul.f32 %v3386, %v3386
        %v3399 = vmul.f32 %v3387, %v3387
        %v3400 = vmul.f32 %v3388, %v3388
        %v3401 = vmul.f32 %v3389, %v3389
        %v3402 = vmul.f32 %v3390, %v3390
        %v3403 = vmul.f32 %v3391, %v3391
        %v3404 = vmul.f32 %v3392, %v3392
        %v3405 = vmul.f32 %v3393, %v3393
        %v3406 = vmul.f32 %v3394, %v3394
        %v3407 = vmul.f32 %v3395, %v3395
        %v3408 = vsel %vm2431, %v3396, 0.0
        %3409 = vadd.xlane.f32.xlu0 %v3408
        %v3410 = vpop.xlane.xlu0 %3409
        %v3411 = vsel %vm2431, %v3397, 0.0
        %3412 = vadd.xlane.f32.xlu0 %v3411
        %v3413 = vpop.xlane.xlu0 %3412
        %v3414 = vsel %vm2431, %v3398, 0.0
        %3415 = vadd.xlane.f32.xlu0 %v3414
        %v3416 = vpop.xlane.xlu0 %3415
        %v3417 = vsel %vm2431, %v3399, 0.0
        %3418 = vadd.xlane.f32.xlu0 %v3417
        %v3419 = vpop.xlane.xlu0 %3418
        %v3420 = vsel %vm2431, %v3400, 0.0
        %3421 = vadd.xlane.f32.xlu0 %v3420
        %v3422 = vpop.xlane.xlu0 %3421
        %v3423 = vsel %vm2431, %v3401, 0.0
        %3424 = vadd.xlane.f32.xlu0 %v3423
        %v3425 = vpop.xlane.xlu0 %3424
        %v3426 = vsel %vm2431, %v3402, 0.0
        %3427 = vadd.xlane.f32.xlu0 %v3426
        %v3428 = vpop.xlane.xlu0 %3427
        %v3429 = vsel %vm2431, %v3403, 0.0
        %3430 = vadd.xlane.f32.xlu0 %v3429
        %v3431 = vpop.xlane.xlu0 %3430
        %v3432 = vsel %vm2431, %v3404, 0.0
        %3433 = vadd.xlane.f32.xlu0 %v3432
        %v3434 = vpop.xlane.xlu0 %3433
        %v3435 = vsel %vm2431, %v3405, 0.0
        %3436 = vadd.xlane.f32.xlu0 %v3435
        %v3437 = vpop.xlane.xlu0 %3436
        %v3438 = vsel %vm2431, %v3406, 0.0
        %3439 = vadd.xlane.f32.xlu0 %v3438
        %v3440 = vpop.xlane.xlu0 %3439
        %v3441 = vsel %vm2431, %v3407, 0.0
        %3442 = vadd.xlane.f32.xlu0 %v3441
        %v3443 = vpop.xlane.xlu0 %3442
        %v3444 = vmul.f32 %v3410, %v3322
        %v3445 = vmul.f32 %v3413, %v3322
        %v3446 = vmul.f32 %v3416, %v3322
        %v3447 = vmul.f32 %v3419, %v3322
        %v3448 = vmul.f32 %v3422, %v3322
        %v3449 = vmul.f32 %v3425, %v3322
        %v3450 = vmul.f32 %v3428, %v3322
        %v3451 = vmul.f32 %v3431, %v3322
        %v3452 = vmul.f32 %v3434, %v3322
        %v3453 = vmul.f32 %v3437, %v3322
        %v3454 = vmul.f32 %v3440, %v3322
        %v3455 = vmul.f32 %v3443, %v3322
        %v3456 = vadd.f32 %v3444, %v3445
        %v3457 = vrot.slane %v3456, 4
        %v3458 = vadd.f32 %v3456, %v3457
        %v3459 = vrot.slane %v3458, 2
        %v3460 = vadd.f32 %v3458, %v3459
        %v3461 = vrot.slane %v3460, 1
        %v3462 = vadd.f32 %v3460, %v3461
        %v3463 = vadd.f32 %v3446, %v3447
        %v3464 = vrot.slane %v3463, 4
        %v3465 = vadd.f32 %v3463, %v3464
        %v3466 = vrot.slane %v3465, 2
        %v3467 = vadd.f32 %v3465, %v3466
        %v3468 = vrot.slane %v3467, 1
        %v3469 = vadd.f32 %v3467, %v3468
        %v3470 = vadd.f32 %v3448, %v3449
        %v3471 = vrot.slane %v3470, 4
        %v3472 = vadd.f32 %v3470, %v3471
        %v3473 = vrot.slane %v3472, 2
        %v3474 = vadd.f32 %v3472, %v3473
        %v3475 = vrot.slane %v3474, 1
        %v3476 = vadd.f32 %v3474, %v3475
        %v3477 = vadd.f32 %v3450, %v3451
        %v3478 = vrot.slane %v3477, 4
        %v3479 = vadd.f32 %v3477, %v3478
        %v3480 = vrot.slane %v3479, 2
        %v3481 = vadd.f32 %v3479, %v3480
        %v3482 = vrot.slane %v3481, 1
        %v3483 = vadd.f32 %v3481, %v3482
        %v3484 = vadd.f32 %v3452, %v3453
        %v3485 = vrot.slane %v3484, 4
        %v3486 = vadd.f32 %v3484, %v3485
        %v3487 = vrot.slane %v3486, 2
        %v3488 = vadd.f32 %v3486, %v3487
        %v3489 = vrot.slane %v3488, 1
        %v3490 = vadd.f32 %v3488, %v3489
        %v3491 = vadd.f32 %v3454, %v3455
        %v3492 = vrot.slane %v3491, 4
        %v3493 = vadd.f32 %v3491, %v3492
        %v3494 = vrot.slane %v3493, 2
        %v3495 = vadd.f32 %v3493, %v3494
        %v3496 = vrot.slane %v3495, 1
        %v3497 = vadd.f32 %v3495, %v3496
        %v3498 = vmul.f32 %v3462, %v3377
        %v3499 = vmul.f32 %v3469, %v3377
        %v3500 = vmul.f32 %v3476, %v3377
        %v3501 = vmul.f32 %v3483, %v3377
        %v3502 = vmul.f32 %v3490, %v3377
        %v3503 = vmul.f32 %v3497, %v3377
        %v3504 = vadd.f32 %v3498, 1e-05
        %v3505 = vadd.f32 %v3499, 1e-05
        %v3506 = vadd.f32 %v3500, 1e-05
        %v3507 = vadd.f32 %v3501, 1e-05
        %v3508 = vadd.f32 %v3502, 1e-05
        %v3509 = vadd.f32 %v3503, 1e-05
        %v3510 = vrsqrt.pop %v3504
        %v3511 = vrsqrt.pop %v3505
        %v3512 = vrsqrt.pop %v3506
        %v3513 = vrsqrt.pop %v3507
        %v3514 = vrsqrt.pop %v3508
        %v3515 = vrsqrt.pop %v3509
        %v3516 = vmul.f32 %v3384, %v3510
        %v3517 = vmul.f32 %v3385, %v3510
        %v3518 = vmul.f32 %v3386, %v3511
        %v3519 = vmul.f32 %v3387, %v3511
        %v3520 = vmul.f32 %v3388, %v3512
        %v3521 = vmul.f32 %v3389, %v3512
        %v3522 = vmul.f32 %v3390, %v3513
        %v3523 = vmul.f32 %v3391, %v3513
        %v3524 = vmul.f32 %v3392, %v3514
        %v3525 = vmul.f32 %v3393, %v3514
        %v3526 = vmul.f32 %v3394, %v3515
        %v3527 = vmul.f32 %v3395, %v3515
        %v3528 = vld [vmem:[#allocation9] sm:$0xff]
        %v3529 = vld [vmem:[#allocation9 + $0x8] sm:$0xff]
        %v3530 = vmul.f32 %v3516, %v3528
        %v3531 = vmul.f32 %v3517, %v3529
        %v3532 = vmul.f32 %v3518, %v3528
        %v3533 = vmul.f32 %v3519, %v3529
        %v3534 = vmul.f32 %v3520, %v3528
        %v3535 = vmul.f32 %v3521, %v3529
        %v3536 = vmul.f32 %v3522, %v3528
        %v3537 = vmul.f32 %v3523, %v3529
        %v3538 = vmul.f32 %v3524, %v3528
        %v3539 = vmul.f32 %v3525, %v3529
        %v3540 = vmul.f32 %v3526, %v3528
        %v3541 = vmul.f32 %v3527, %v3529
        %v3542 = vld [vmem:[#allocation8] sm:$0xff]
        %v3543 = vld [vmem:[#allocation8 + $0x8] sm:$0xff]
        %v3544 = vadd.f32 %v3530, %v3542
        %v3545 = vadd.f32 %v3531, %v3543
        %v3546 = vadd.f32 %v3532, %v3542
        %v3547 = vadd.f32 %v3533, %v3543
        %v3548 = vadd.f32 %v3534, %v3542
        %v3549 = vadd.f32 %v3535, %v3543
        %v3550 = vadd.f32 %v3536, %v3542
        %v3551 = vadd.f32 %v3537, %v3543
        %v3552 = vadd.f32 %v3538, %v3542
        %v3553 = vadd.f32 %v3539, %v3543
        %v3554 = vadd.f32 %v3540, %v3542
        %v3555 = vadd.f32 %v3541, %v3543
        %v3556 = vld [vmem:[#allocation29] sm:$0xff]
        %v3557 = vld [vmem:[#allocation29 + $0x8] sm:$0xff]
        %v3558 = vld [vmem:[#allocation29 + $0x10] sm:$0xff]
        %v3559 = vld [vmem:[#allocation29 + $0x18] sm:$0xff]
        %s3560 = scalar_lea.vmem [#allocation29], 32
        %v3561 = vld [vmem:[%s3560] sm:$0xff]
        %v3562 = vld [vmem:[%s3560 + $0x8] sm:$0xff]
        %v3563 = vld [vmem:[%s3560 + $0x10] sm:$0xff]
        %v3564 = vld [vmem:[%s3560 + $0x18] sm:$0xff]
        %v3566 = vsel %vm2431, %v3546, 0
        %v3569 = vsel %vm2431, %v3547, 0
        %v3572 = vsel %vm2431, %v3548, 0
        %v3575 = vsel %vm2431, %v3549, 0
        %v3578 = vsel %vm2431, %v3550, 0
        %v3581 = vsel %vm2431, %v3551, 0
        %v3584 = vsel %vm2431, %v3552, 0
        %v3587 = vsel %vm2431, %v3553, 0
        %v3590 = vsel %vm2431, %v3554, 0
        %v3593 = vsel %vm2431, %v3555, 0
        %3595 = vmatprep.subr.mxu0 0.0
        %3596 = vmatpush1.msra.mxu0 %v3561
        %3597 = vmatprep.subr.mxu0 0.0
        %3598 = vmatpush1.msra.mxu0 %v3562
        %3599 = vmatprep.subr.mxu0 0.0
        %3600 = vmatpush1.msra.mxu0 %v3563
        %3601 = vmatprep.subr.mxu0 0.0
        %3602 = vmatpush1.msra.mxu0 %v3564
        %3603 = vmatprep.subr.mxu0 0.0
        %3604 = vmatpush1.msra.mxu0 0.0
        %3605 = vmatprep.subr.mxu0 0.0
        %3606 = vmatpush1.msra.mxu0 0.0
        %3607 = vmatprep.subr.mxu0 0.0
        %3608 = vmatpush1.msra.mxu0 0.0
        %3609 = vmatprep.subr.mxu0 0.0
        %3610 = vmatpush1.msra.mxu0 0.0
        %3611 = vmatprep.subr.mxu0 0.0
        %3612 = vmatpush1.msra.mxu0 0.0
        %3613 = vmatprep.subr.mxu0 0.0
        %3614 = vmatpush1.msra.mxu0 0.0
        %3615 = vmatprep.subr.mxu0 0.0
        %3616 = vmatpush1.msra.mxu0 0.0
        %3617 = vmatprep.subr.mxu0 0.0
        %3618 = vmatpush1.msra.mxu0 0.0
        %3619 = vmatprep.subr.mxu0 0.0
        %3620 = vmatpush1.msra.mxu0 0.0
        %3621 = vmatprep.subr.mxu0 0.0
        %3622 = vmatpush1.msra.mxu0 0.0
        %3623 = vmatprep.subr.mxu0 0.0
        %3624 = vmatpush1.msra.mxu0 0.0
        %3625 = vmatprep.subr.mxu0 0.0
        %3626 = vmatpush1.msra.mxu0 0.0
        %3627 = vmatprep.subr.mxu0 0.0
        %3628 = vmatpush1.msra.mxu0 0.0
        %3629 = vmatprep.subr.mxu0 0.0
        %3630 = vmatpush1.msra.mxu0 0.0
        %3631 = vmatprep.subr.mxu0 0.0
        %3632 = vmatpush1.msra.mxu0 0.0
        %3633 = vmatprep.subr.mxu0 0.0
        %3634 = vmatpush1.msra.mxu0 0.0
        %3635 = vmatprep.subr.mxu0 0.0
        %3636 = vmatpush1.msra.mxu0 0.0
        %3637 = vmatprep.subr.mxu0 0.0
        %3638 = vmatpush1.msra.mxu0 0.0
        %3639 = vmatprep.subr.mxu0 0.0
        %3640 = vmatpush1.msra.mxu0 0.0
        %3641 = vmatprep.subr.mxu0 0.0
        %3642 = vmatpush1.msra.mxu0 0.0
        %3643 = vmatprep.subr.mxu0 0.0
        %3644 = vmatpush1.msra.mxu0 0.0
        %3645 = vmatprep.subr.mxu0 0.0
        %3646 = vmatpush1.msra.mxu0 0.0
        %3647 = vmatprep.subr.mxu0 0.0
        %3648 = vmatpush1.msra.mxu0 0.0
        %3649 = vmatprep.subr.mxu0 0.0
        %3650 = vmatpush1.msra.mxu0 0.0
        %3651 = vmatprep.subr.mxu0 0.0
        %3652 = vmatpush1.msra.mxu0 0.0
        %3653 = vmatprep.subr.mxu0 0.0
        %3654 = vmatpush1.msra.mxu0 0.0
        %3655 = vmatprep.subr.mxu0 0.0
        %3656 = vmatpush1.msra.mxu0 0.0
        %3657 = vmatprep.subr.mxu0 0.0
        %3658 = vmatpush1.msra.mxu0 0.0
        %3659 = vmatprep.mubr.f32.mxu0 0.0
        %3660 = vmatmul.mubr.f32.gmra.mrb[0].mxu0 %v3566
        %v3661 = vpop.f32.mrb[0].mxu0
        %v3662 = vadd.f32 0.0, %v3661
        %v3663 = vpop.f32.mrb[0].mxu0
        %3664 = vmatprep.mubr.f32.mxu0 0.0
        %3665 = vmatmul.mubr.f32.gmra.mrb[0].mxu0 %v3569
        %v3666 = vpop.f32.mrb[0].mxu0
        %v3667 = vadd.f32 0.0, %v3666
        %v3668 = vpop.f32.mrb[0].mxu0
        %3669 = vmatprep.mubr.f32.mxu0 0.0
        %3670 = vmatmul.mubr.f32.gmra.mrb[0].mxu0 %v3572
        %v3671 = vpop.f32.mrb[0].mxu0
        %v3672 = vadd.f32 0.0, %v3671
        %v3673 = vpop.f32.mrb[0].mxu0
        %3674 = vmatprep.mubr.f32.mxu0 0.0
        %3675 = vmatmul.mubr.f32.gmra.mrb[0].mxu0 %v3575
        %v3676 = vpop.f32.mrb[0].mxu0
        %v3677 = vadd.f32 0.0, %v3676
        %v3678 = vpop.f32.mrb[0].mxu0
        %3679 = vmatprep.mubr.f32.mxu0 0.0
        %3680 = vmatmul.mubr.f32.gmra.mrb[0].mxu0 %v3578
        %v3681 = vpop.f32.mrb[0].mxu0
        %v3682 = vadd.f32 0.0, %v3681
        %v3683 = vpop.f32.mrb[0].mxu0
        %3684 = vmatprep.mubr.f32.mxu0 0.0
        %3685 = vmatmul.mubr.f32.gmra.mrb[0].mxu0 %v3581
        %v3686 = vpop.f32.mrb[0].mxu0
        %v3687 = vadd.f32 0.0, %v3686
        %v3688 = vpop.f32.mrb[0].mxu0
        %3689 = vmatprep.mubr.f32.mxu0 0.0
        %3690 = vmatmul.mubr.f32.gmra.mrb[0].mxu0 %v3584
        %v3691 = vpop.f32.mrb[0].mxu0
        %v3692 = vadd.f32 0.0, %v3691
        %v3693 = vpop.f32.mrb[0].mxu0
        %3694 = vmatprep.mubr.f32.mxu0 0.0
        %3695 = vmatmul.mubr.f32.gmra.mrb[0].mxu0 %v3587
        %v3696 = vpop.f32.mrb[0].mxu0
        %v3697 = vadd.f32 0.0, %v3696
        %v3698 = vpop.f32.mrb[0].mxu0
        %3699 = vmatprep.mubr.f32.mxu0 0.0
        %3700 = vmatmul.mubr.f32.gmra.mrb[0].mxu0 %v3590
        %v3701 = vpop.f32.mrb[0].mxu0
        %v3702 = vadd.f32 0.0, %v3701
        %v3703 = vpop.f32.mrb[0].mxu0
        %3704 = vmatprep.mubr.f32.mxu0 0.0
        %3705 = vmatmul.mubr.f32.gmra.mrb[0].mxu0 %v3593
        %v3706 = vpop.f32.mrb[0].mxu0
        %v3707 = vadd.f32 0.0, %v3706
        %v3708 = vpop.f32.mrb[0].mxu0
        %3709 = vdwg.mxu0
        %v3711 = vsel %vm2431, %v3544, 0
        %v3714 = vsel %vm2431, %v3545, 0
        %3716 = vmatprep.subr.mxu0 0.0
        %3717 = vmatpush1.msra.mxu0 %v3556
        %3718 = vmatprep.subr.mxu0 0.0
        %3719 = vmatpush1.msra.mxu0 %v3557
        %3720 = vmatprep.subr.mxu0 0.0
        %3721 = vmatpush1.msra.mxu0 %v3558
        %3722 = vmatprep.subr.mxu0 0.0
        %3723 = vmatpush1.msra.mxu0 %v3559
        %3724 = vmatprep.subr.mxu0 0.0
        %3725 = vmatpush1.msra.mxu0 0.0
        %3726 = vmatprep.subr.mxu0 0.0
        %3727 = vmatpush1.msra.mxu0 0.0
        %3728 = vmatprep.subr.mxu0 0.0
        %3729 = vmatpush1.msra.mxu0 0.0
        %3730 = vmatprep.subr.mxu0 0.0
        %3731 = vmatpush1.msra.mxu0 0.0
        %3732 = vmatprep.subr.mxu0 0.0
        %3733 = vmatpush1.msra.mxu0 0.0
        %3734 = vmatprep.subr.mxu0 0.0
        %3735 = vmatpush1.msra.mxu0 0.0
        %3736 = vmatprep.subr.mxu0 0.0
        %3737 = vmatpush1.msra.mxu0 0.0
        %3738 = vmatprep.subr.mxu0 0.0
        %3739 = vmatpush1.msra.mxu0 0.0
        %3740 = vmatprep.subr.mxu0 0.0
        %3741 = vmatpush1.msra.mxu0 0.0
        %3742 = vmatprep.subr.mxu0 0.0
        %3743 = vmatpush1.msra.mxu0 0.0
        %3744 = vmatprep.subr.mxu0 0.0
        %3745 = vmatpush1.msra.mxu0 0.0
        %3746 = vmatprep.subr.mxu0 0.0
        %3747 = vmatpush1.msra.mxu0 0.0
        %3748 = vmatprep.subr.mxu0 0.0
        %3749 = vmatpush1.msra.mxu0 0.0
        %3750 = vmatprep.subr.mxu0 0.0
        %3751 = vmatpush1.msra.mxu0 0.0
        %3752 = vmatprep.subr.mxu0 0.0
        %3753 = vmatpush1.msra.mxu0 0.0
        %3754 = vmatprep.subr.mxu0 0.0
        %3755 = vmatpush1.msra.mxu0 0.0
        %3756 = vmatprep.subr.mxu0 0.0
        %3757 = vmatpush1.msra.mxu0 0.0
        %3758 = vmatprep.subr.mxu0 0.0
        %3759 = vmatpush1.msra.mxu0 0.0
        %3760 = vmatprep.subr.mxu0 0.0
        %3761 = vmatpush1.msra.mxu0 0.0
        %3762 = vmatprep.subr.mxu0 0.0
        %3763 = vmatpush1.msra.mxu0 0.0
        %3764 = vmatprep.subr.mxu0 0.0
        %3765 = vmatpush1.msra.mxu0 0.0
        %3766 = vmatprep.subr.mxu0 0.0
        %3767 = vmatpush1.msra.mxu0 0.0
        %3768 = vmatprep.subr.mxu0 0.0
        %3769 = vmatpush1.msra.mxu0 0.0
        %3770 = vmatprep.subr.mxu0 0.0
        %3771 = vmatpush1.msra.mxu0 0.0
        %3772 = vmatprep.subr.mxu0 0.0
        %3773 = vmatpush1.msra.mxu0 0.0
        %3774 = vmatprep.subr.mxu0 0.0
        %3775 = vmatpush1.msra.mxu0 0.0
        %3776 = vmatprep.subr.mxu0 0.0
        %3777 = vmatpush1.msra.mxu0 0.0
        %3778 = vmatprep.subr.mxu0 0.0
        %3779 = vmatpush1.msra.mxu0 0.0
        %3780 = vmatprep.mubr.f32.mxu0 0.0
        %3781 = vmatmul.mubr.f32.gmra.mrb[0].mxu0 %v3711
        %v3782 = vpop.f32.mrb[0].mxu0
        %v3783 = vadd.f32 %v3662, %v3782
        %v3784 = vpop.f32.mrb[0].mxu0
        %3785 = vmatprep.mubr.f32.mxu0 0.0
        %3786 = vmatmul.mubr.f32.gmra.mrb[0].mxu0 %v3714
        %v3787 = vpop.f32.mrb[0].mxu0
        %v3788 = vadd.f32 %v3667, %v3787
        %v3789 = vpop.f32.mrb[0].mxu0
        %3790 = vmatprep.mubr.f32.mxu0 0.0
        %3791 = vmatmul.mubr.f32.gmra.mrb[0].mxu0 %v3566
        %v3792 = vpop.f32.mrb[0].mxu0
        %v3793 = vadd.f32 %v3672, %v3792
        %v3794 = vpop.f32.mrb[0].mxu0
        %3795 = vmatprep.mubr.f32.mxu0 0.0
        %3796 = vmatmul.mubr.f32.gmra.mrb[0].mxu0 %v3569
        %v3797 = vpop.f32.mrb[0].mxu0
        %v3798 = vadd.f32 %v3677, %v3797
        %v3799 = vpop.f32.mrb[0].mxu0
        %3800 = vmatprep.mubr.f32.mxu0 0.0
        %3801 = vmatmul.mubr.f32.gmra.mrb[0].mxu0 %v3572
        %v3802 = vpop.f32.mrb[0].mxu0
        %v3803 = vadd.f32 %v3682, %v3802
        %v3804 = vpop.f32.mrb[0].mxu0
        %3805 = vmatprep.mubr.f32.mxu0 0.0
        %3806 = vmatmul.mubr.f32.gmra.mrb[0].mxu0 %v3575
        %v3807 = vpop.f32.mrb[0].mxu0
        %v3808 = vadd.f32 %v3687, %v3807
        %v3809 = vpop.f32.mrb[0].mxu0
        %3810 = vmatprep.mubr.f32.mxu0 0.0
        %3811 = vmatmul.mubr.f32.gmra.mrb[0].mxu0 %v3578
        %v3812 = vpop.f32.mrb[0].mxu0
        %v3813 = vadd.f32 %v3692, %v3812
        %v3814 = vpop.f32.mrb[0].mxu0
        %3815 = vmatprep.mubr.f32.mxu0 0.0
        %3816 = vmatmul.mubr.f32.gmra.mrb[0].mxu0 %v3581
        %v3817 = vpop.f32.mrb[0].mxu0
        %v3818 = vadd.f32 %v3697, %v3817
        %v3819 = vpop.f32.mrb[0].mxu0
        %3820 = vmatprep.mubr.f32.mxu0 0.0
        %3821 = vmatmul.mubr.f32.gmra.mrb[0].mxu0 %v3584
        %v3822 = vpop.f32.mrb[0].mxu0
        %v3823 = vadd.f32 %v3702, %v3822
        %v3824 = vpop.f32.mrb[0].mxu0
        %3825 = vmatprep.mubr.f32.mxu0 0.0
        %3826 = vmatmul.mubr.f32.gmra.mrb[0].mxu0 %v3587
        %v3827 = vpop.f32.mrb[0].mxu0
        %v3828 = vadd.f32 %v3707, %v3827
        %v3829 = vpop.f32.mrb[0].mxu0
        %3830 = vdwg.mxu0
        %v3831 = vld [vmem:[#allocation27] sm:$0x1]
        %v3833 = vlaneseq
        %v3834 = vshrl.u32 %v3833, 7
        %v3835 = vsub.s32 0, %v3834
        %v3836 = vrot.slane %v3831, %v3835
        %v3838 = vadd.f32 %v3783, %v3836
        %v3839 = vadd.f32 %v3788, %v3836
        %v3840 = vadd.f32 %v3793, %v3836
        %v3841 = vadd.f32 %v3798, %v3836
        %v3842 = vadd.f32 %v3803, %v3836
        %v3843 = vadd.f32 %v3808, %v3836
        %v3844 = vadd.f32 %v3813, %v3836
        %v3845 = vadd.f32 %v3818, %v3836
        %v3846 = vadd.f32 %v3823, %v3836
        %v3847 = vadd.f32 %v3828, %v3836
        %v3848 = vadd.f32 %v3838, %v3546
        %v3849 = vadd.f32 %v3839, %v3547
        %v3850 = vadd.f32 %v3840, %v3548
        %v3851 = vadd.f32 %v3841, %v3549
        %v3852 = vadd.f32 %v3842, %v3550
        %v3853 = vadd.f32 %v3843, %v3551
        %v3854 = vadd.f32 %v3844, %v3552
        %v3855 = vadd.f32 %v3845, %v3553
        %v3856 = vadd.f32 %v3846, %v3554
        %v3857 = vadd.f32 %v3847, %v3555
        %v3858 = vxor.u32 %v3838, 2147483648
        %v3859 = vxor.u32 %v3839, 2147483648
        %v3860 = vxor.u32 %v3840, 2147483648
        %v3861 = vxor.u32 %v3841, 2147483648
        %v3862 = vxor.u32 %v3842, 2147483648
        %v3863 = vxor.u32 %v3843, 2147483648
        %v3864 = vxor.u32 %v3844, 2147483648
        %v3865 = vxor.u32 %v3845, 2147483648
        %v3866 = vxor.u32 %v3846, 2147483648
        %v3867 = vxor.u32 %v3847, 2147483648
        %v3868 = vmul.f32 %v3858, 1.442695
        %v3869 = vpow.pop %v3868
        %v3870 = vmul.f32 %v3859, 1.442695
        %v3871 = vpow.pop %v3870
        %v3872 = vmul.f32 %v3860, 1.442695
        %v3873 = vpow.pop %v3872
        %v3874 = vmul.f32 %v3861, 1.442695
        %v3875 = vpow.pop %v3874
        %v3876 = vmul.f32 %v3862, 1.442695
        %v3877 = vpow.pop %v3876
        %v3878 = vmul.f32 %v3863, 1.442695
        %v3879 = vpow.pop %v3878
        %v3880 = vmul.f32 %v3864, 1.442695
        %v3881 = vpow.pop %v3880
        %v3882 = vmul.f32 %v3865, 1.442695
        %v3883 = vpow.pop %v3882
        %v3884 = vmul.f32 %v3866, 1.442695
        %v3885 = vpow.pop %v3884
        %v3886 = vmul.f32 %v3867, 1.442695
        %v3887 = vpow.pop %v3886
        %v3888 = vadd.f32 %v3869, 1.0
        %v3889 = vadd.f32 %v3871, 1.0
        %v3890 = vadd.f32 %v3873, 1.0
        %v3891 = vadd.f32 %v3875, 1.0
        %v3892 = vadd.f32 %v3877, 1.0
        %v3893 = vadd.f32 %v3879, 1.0
        %v3894 = vadd.f32 %v3881, 1.0
        %v3895 = vadd.f32 %v3883, 1.0
        %v3896 = vadd.f32 %v3885, 1.0
        %v3897 = vadd.f32 %v3887, 1.0
        %v3898 = vrcp.pop %v3888
        %v3899 = vmul.f32 1.0, %v3898
        %v3900 = vrcp.pop %v3889
        %v3901 = vmul.f32 1.0, %v3900
        %v3902 = vrcp.pop %v3890
        %v3903 = vmul.f32 1.0, %v3902
        %v3904 = vrcp.pop %v3891
        %v3905 = vmul.f32 1.0, %v3904
        %v3906 = vrcp.pop %v3892
        %v3907 = vmul.f32 1.0, %v3906
        %v3908 = vrcp.pop %v3893
        %v3909 = vmul.f32 1.0, %v3908
        %v3910 = vrcp.pop %v3894
        %v3911 = vmul.f32 1.0, %v3910
        %v3912 = vrcp.pop %v3895
        %v3913 = vmul.f32 1.0, %v3912
        %v3914 = vrcp.pop %v3896
        %v3915 = vmul.f32 1.0, %v3914
        %v3916 = vrcp.pop %v3897
        %v3917 = vmul.f32 1.0, %v3916
        %3928 = vrot.lane.b32.xlu0 %v3899, 96
        %v3929 = vpop.permute.xlu0 %3928
        %3930 = vrot.lane.b32.xlu0 %v3901, 96
        %v3931 = vpop.permute.xlu0 %3930
        %3932 = vrot.lane.b32.xlu0 %v3903, 96
        %v3933 = vpop.permute.xlu0 %3932
        %3934 = vrot.lane.b32.xlu0 %v3905, 96
        %v3935 = vpop.permute.xlu0 %3934
        %3936 = vrot.lane.b32.xlu0 %v3907, 96
        %v3937 = vpop.permute.xlu0 %3936
        %3938 = vrot.lane.b32.xlu0 %v3909, 96
        %v3939 = vpop.permute.xlu0 %3938
        %3940 = vrot.lane.b32.xlu0 %v3911, 96
        %v3941 = vpop.permute.xlu0 %3940
        %3942 = vrot.lane.b32.xlu0 %v3913, 96
        %v3943 = vpop.permute.xlu0 %3942
        %3944 = vrot.lane.b32.xlu0 %v3915, 96
        %v3945 = vpop.permute.xlu0 %3944
        %3946 = vrot.lane.b32.xlu0 %v3917, 96
        %v3947 = vpop.permute.xlu0 %3946
        %v3958 = vmul.f32 %v3848, %v3929
        %v3959 = vmul.f32 %v3849, %v3931
        %v3960 = vmul.f32 %v3850, %v3933
        %v3961 = vmul.f32 %v3851, %v3935
        %v3962 = vmul.f32 %v3852, %v3937
        %v3963 = vmul.f32 %v3853, %v3939
        %v3964 = vmul.f32 %v3854, %v3941
        %v3965 = vmul.f32 %v3855, %v3943
        %v3966 = vmul.f32 %v3856, %v3945
        %v3967 = vmul.f32 %v3857, %v3947
        %v3968 = vld [vmem:[#allocation18] sm:$0xff]
        %v3969 = vld [vmem:[#allocation18 + $0x8] sm:$0xff]
        %v3970 = vld [vmem:[#allocation18 + $0x10] sm:$0xff]
        %v3971 = vld [vmem:[#allocation18 + $0x18] sm:$0xff]
        %v3973 = vsel %vm2431, %v3958, 0
        %v3976 = vsel %vm2431, %v3959, 0
        %v3979 = vsel %vm2431, %v3960, 0
        %v3982 = vsel %vm2431, %v3961, 0
        %v3985 = vsel %vm2431, %v3962, 0
        %v3988 = vsel %vm2431, %v3963, 0
        %v3991 = vsel %vm2431, %v3964, 0
        %v3994 = vsel %vm2431, %v3965, 0
        %v3997 = vsel %vm2431, %v3966, 0
        %v4000 = vsel %vm2431, %v3967, 0
        %4002 = vmatprep.subr.mxu0 0.0
        %4003 = vmatpush1.msra.mxu0 %v3968
        %4004 = vmatprep.subr.mxu0 0.0
        %4005 = vmatpush1.msra.mxu0 %v3969
        %4006 = vmatprep.subr.mxu0 0.0
        %4007 = vmatpush1.msra.mxu0 %v3970
        %4008 = vmatprep.subr.mxu0 0.0
        %4009 = vmatpush1.msra.mxu0 %v3971
        %4010 = vmatprep.subr.mxu0 0.0
        %4011 = vmatpush1.msra.mxu0 0.0
        %4012 = vmatprep.subr.mxu0 0.0
        %4013 = vmatpush1.msra.mxu0 0.0
        %4014 = vmatprep.subr.mxu0 0.0
        %4015 = vmatpush1.msra.mxu0 0.0
        %4016 = vmatprep.subr.mxu0 0.0
        %4017 = vmatpush1.msra.mxu0 0.0
        %4018 = vmatprep.subr.mxu0 0.0
        %4019 = vmatpush1.msra.mxu0 0.0
        %4020 = vmatprep.subr.mxu0 0.0
        %4021 = vmatpush1.msra.mxu0 0.0
        %4022 = vmatprep.subr.mxu0 0.0
        %4023 = vmatpush1.msra.mxu0 0.0
        %4024 = vmatprep.subr.mxu0 0.0
        %4025 = vmatpush1.msra.mxu0 0.0
        %4026 = vmatprep.subr.mxu0 0.0
        %4027 = vmatpush1.msra.mxu0 0.0
        %4028 = vmatprep.subr.mxu0 0.0
        %4029 = vmatpush1.msra.mxu0 0.0
        %4030 = vmatprep.subr.mxu0 0.0
        %4031 = vmatpush1.msra.mxu0 0.0
        %4032 = vmatprep.subr.mxu0 0.0
        %4033 = vmatpush1.msra.mxu0 0.0
        %4034 = vmatprep.subr.mxu0 0.0
        %4035 = vmatpush1.msra.mxu0 0.0
        %4036 = vmatprep.subr.mxu0 0.0
        %4037 = vmatpush1.msra.mxu0 0.0
        %4038 = vmatprep.subr.mxu0 0.0
        %4039 = vmatpush1.msra.mxu0 0.0
        %4040 = vmatprep.subr.mxu0 0.0
        %4041 = vmatpush1.msra.mxu0 0.0
        %4042 = vmatprep.subr.mxu0 0.0
        %4043 = vmatpush1.msra.mxu0 0.0
        %4044 = vmatprep.subr.mxu0 0.0
        %4045 = vmatpush1.msra.mxu0 0.0
        %4046 = vmatprep.subr.mxu0 0.0
        %4047 = vmatpush1.msra.mxu0 0.0
        %4048 = vmatprep.subr.mxu0 0.0
        %4049 = vmatpush1.msra.mxu0 0.0
        %4050 = vmatprep.subr.mxu0 0.0
        %4051 = vmatpush1.msra.mxu0 0.0
        %4052 = vmatprep.subr.mxu0 0.0
        %4053 = vmatpush1.msra.mxu0 0.0
        %4054 = vmatprep.subr.mxu0 0.0
        %4055 = vmatpush1.msra.mxu0 0.0
        %4056 = vmatprep.subr.mxu0 0.0
        %4057 = vmatpush1.msra.mxu0 0.0
        %4058 = vmatprep.subr.mxu0 0.0
        %4059 = vmatpush1.msra.mxu0 0.0
        %4060 = vmatprep.subr.mxu0 0.0
        %4061 = vmatpush1.msra.mxu0 0.0
        %4062 = vmatprep.subr.mxu0 0.0
        %4063 = vmatpush1.msra.mxu0 0.0
        %4064 = vmatprep.subr.mxu0 0.0
        %4065 = vmatpush1.msra.mxu0 0.0
        %4066 = vmatprep.mubr.f32.mxu0 0.0
        %4067 = vmatmul.mubr.f32.gmra.mrb[0].mxu0 %v3973
        %v4068 = vpop.f32.mrb[0].mxu0
        %v4069 = vadd.f32 0.0, %v4068
        %v4070 = vpop.f32.mrb[0].mxu0
        %4071 = vmatprep.mubr.f32.mxu0 0.0
        %4072 = vmatmul.mubr.f32.gmra.mrb[0].mxu0 %v3976
        %v4073 = vpop.f32.mrb[0].mxu0
        %v4074 = vadd.f32 0.0, %v4073
        %v4075 = vpop.f32.mrb[0].mxu0
        %4076 = vmatprep.mubr.f32.mxu0 0.0
        %4077 = vmatmul.mubr.f32.gmra.mrb[0].mxu0 %v3979
        %v4078 = vpop.f32.mrb[0].mxu0
        %v4079 = vadd.f32 0.0, %v4078
        %v4080 = vpop.f32.mrb[0].mxu0
        %4081 = vmatprep.mubr.f32.mxu0 0.0
        %4082 = vmatmul.mubr.f32.gmra.mrb[0].mxu0 %v3982
        %v4083 = vpop.f32.mrb[0].mxu0
        %v4084 = vadd.f32 0.0, %v4083
        %v4085 = vpop.f32.mrb[0].mxu0
        %4086 = vmatprep.mubr.f32.mxu0 0.0
        %4087 = vmatmul.mubr.f32.gmra.mrb[0].mxu0 %v3985
        %v4088 = vpop.f32.mrb[0].mxu0
        %v4089 = vadd.f32 0.0, %v4088
        %v4090 = vpop.f32.mrb[0].mxu0
        %4091 = vmatprep.mubr.f32.mxu0 0.0
        %4092 = vmatmul.mubr.f32.gmra.mrb[0].mxu0 %v3988
        %v4093 = vpop.f32.mrb[0].mxu0
        %v4094 = vadd.f32 0.0, %v4093
        %v4095 = vpop.f32.mrb[0].mxu0
        %4096 = vmatprep.mubr.f32.mxu0 0.0
        %4097 = vmatmul.mubr.f32.gmra.mrb[0].mxu0 %v3991
        %v4098 = vpop.f32.mrb[0].mxu0
        %v4099 = vadd.f32 0.0, %v4098
        %v4100 = vpop.f32.mrb[0].mxu0
        %4101 = vmatprep.mubr.f32.mxu0 0.0
        %4102 = vmatmul.mubr.f32.gmra.mrb[0].mxu0 %v3994
        %v4103 = vpop.f32.mrb[0].mxu0
        %v4104 = vadd.f32 0.0, %v4103
        %v4105 = vpop.f32.mrb[0].mxu0
        %4106 = vmatprep.mubr.f32.mxu0 0.0
        %4107 = vmatmul.mubr.f32.gmra.mrb[0].mxu0 %v3997
        %v4108 = vpop.f32.mrb[0].mxu0
        %v4109 = vadd.f32 0.0, %v4108
        %v4110 = vpop.f32.mrb[0].mxu0
        %4111 = vmatprep.mubr.f32.mxu0 0.0
        %4112 = vmatmul.mubr.f32.gmra.mrb[0].mxu0 %v4000
        %v4113 = vpop.f32.mrb[0].mxu0
        %v4114 = vadd.f32 0.0, %v4113
        %v4115 = vpop.f32.mrb[0].mxu0
        %4116 = vdwg.mxu0
        %v4117 = vld [vmem:[#allocation15] sm:$0xff]
        %v4118 = vld [vmem:[#allocation15 + $0x8] sm:$0xff]
        %v4119 = vld [vmem:[#allocation15 + $0x10] sm:$0xff]
        %v4120 = vld [vmem:[#allocation15 + $0x18] sm:$0xff]
        %v4121 = vld [vmem:[#allocation15 + $0x20] sm:$0xff]
        %v4122 = vld [vmem:[#allocation15 + $0x28] sm:$0xff]
        %v4123 = vld [vmem:[#allocation15 + $0x30] sm:$0xff]
        %v4124 = vld [vmem:[#allocation15 + $0x38] sm:$0xff]
        %v4125 = vld [vmem:[#allocation15 + $0x40] sm:$0xff]
        %v4126 = vld [vmem:[#allocation15 + $0x48] sm:$0xff]
        %v4127 = vld [vmem:[#allocation17] sm:$0x1]
        %v4129 = vlaneseq
        %v4130 = vshrl.u32 %v4129, 7
        %v4131 = vsub.s32 0, %v4130
        %v4132 = vrot.slane %v4127, %v4131
        %vm4134 = vcmask 654336
        %v4136 = vsel %vm4134, %v4117, 0
        %v4139 = vsel %vm4134, %v4118, 0
        %v4142 = vsel %vm4134, %v4119, 0
        %v4145 = vsel %vm4134, %v4120, 0
        %v4148 = vsel %vm4134, %v4121, 0
        %v4151 = vsel %vm4134, %v4122, 0
        %v4154 = vsel %vm4134, %v4123, 0
        %v4157 = vsel %vm4134, %v4124, 0
        %v4160 = vsel %vm4134, %v4125, 0
        %v4163 = vsel %vm4134, %v4126, 0
        %4165 = vmatprep.subr.mxu0 0.0
        %4166 = vmatpush1.msra.mxu0 %v4069
        %4167 = vmatprep.subr.mxu0 0.0
        %4168 = vmatpush1.msra.mxu0 %v4074
        %4169 = vmatprep.subr.mxu0 0.0
        %4170 = vmatpush1.msra.mxu0 %v4079
        %4171 = vmatprep.subr.mxu0 0.0
        %4172 = vmatpush1.msra.mxu0 %v4084
        %4173 = vmatprep.subr.mxu0 0.0
        %4174 = vmatpush1.msra.mxu0 %v4089
        %4175 = vmatprep.subr.mxu0 0.0
        %4176 = vmatpush1.msra.mxu0 %v4094
        %4177 = vmatprep.subr.mxu0 0.0
        %4178 = vmatpush1.msra.mxu0 %v4099
        %4179 = vmatprep.subr.mxu0 0.0
        %4180 = vmatpush1.msra.mxu0 %v4104
        %4181 = vmatprep.subr.mxu0 0.0
        %4182 = vmatpush1.msra.mxu0 %v4109
        %4183 = vmatprep.subr.mxu0 0.0
        %4184 = vmatpush1.msra.mxu0 %v4114
        %4185 = vmatprep.subr.mxu0 0.0
        %4186 = vmatpush1.msra.mxu0 0.0
        %4187 = vmatprep.subr.mxu0 0.0
        %4188 = vmatpush1.msra.mxu0 0.0
        %4189 = vmatprep.subr.mxu0 0.0
        %4190 = vmatpush1.msra.mxu0 0.0
        %4191 = vmatprep.subr.mxu0 0.0
        %4192 = vmatpush1.msra.mxu0 0.0
        %4193 = vmatprep.subr.mxu0 0.0
        %4194 = vmatpush1.msra.mxu0 0.0
        %4195 = vmatprep.subr.mxu0 0.0
        %4196 = vmatpush1.msra.mxu0 0.0
        %4197 = vmatprep.subr.mxu0 0.0
        %4198 = vmatpush1.msra.mxu0 0.0
        %4199 = vmatprep.subr.mxu0 0.0
        %4200 = vmatpush1.msra.mxu0 0.0
        %4201 = vmatprep.subr.mxu0 0.0
        %4202 = vmatpush1.msra.mxu0 0.0
        %4203 = vmatprep.subr.mxu0 0.0
        %4204 = vmatpush1.msra.mxu0 0.0
        %4205 = vmatprep.subr.mxu0 0.0
        %4206 = vmatpush1.msra.mxu0 0.0
        %4207 = vmatprep.subr.mxu0 0.0
        %4208 = vmatpush1.msra.mxu0 0.0
        %4209 = vmatprep.subr.mxu0 0.0
        %4210 = vmatpush1.msra.mxu0 0.0
        %4211 = vmatprep.subr.mxu0 0.0
        %4212 = vmatpush1.msra.mxu0 0.0
        %4213 = vmatprep.subr.mxu0 0.0
        %4214 = vmatpush1.msra.mxu0 0.0
        %4215 = vmatprep.subr.mxu0 0.0
        %4216 = vmatpush1.msra.mxu0 0.0
        %4217 = vmatprep.subr.mxu0 0.0
        %4218 = vmatpush1.msra.mxu0 0.0
        %4219 = vmatprep.subr.mxu0 0.0
        %4220 = vmatpush1.msra.mxu0 0.0
        %4221 = vmatprep.subr.mxu0 0.0
        %4222 = vmatpush1.msra.mxu0 0.0
        %4223 = vmatprep.subr.mxu0 0.0
        %4224 = vmatpush1.msra.mxu0 0.0
        %4225 = vmatprep.subr.mxu0 0.0
        %4226 = vmatpush1.msra.mxu0 0.0
        %4227 = vmatprep.subr.mxu0 0.0
        %4228 = vmatpush1.msra.mxu0 0.0
        %4229 = vmatprep.mubr.f32.mxu0 0.0
        %4230 = vmatmul.mubr.f32.gmra.mrb[0].mxu0 %v4136
        %v4231 = vpop.f32.mrb[0].mxu0
        %v4232 = vadd.f32 %v4132, %v4231
        %v4233 = vpop.f32.mrb[0].mxu0
        %4234 = vmatprep.mubr.f32.mxu0 0.0
        %4235 = vmatmul.mubr.f32.gmra.mrb[0].mxu0 %v4139
        %v4236 = vpop.f32.mrb[0].mxu0
        %v4237 = vadd.f32 %v4132, %v4236
        %v4238 = vpop.f32.mrb[0].mxu0
        %4239 = vmatprep.mubr.f32.mxu0 0.0
        %4240 = vmatmul.mubr.f32.gmra.mrb[0].mxu0 %v4142
        %v4241 = vpop.f32.mrb[0].mxu0
        %v4242 = vadd.f32 %v4132, %v4241
        %v4243 = vpop.f32.mrb[0].mxu0
        %4244 = vmatprep.mubr.f32.mxu0 0.0
        %4245 = vmatmul.mubr.f32.gmra.mrb[0].mxu0 %v4145
        %v4246 = vpop.f32.mrb[0].mxu0
        %v4247 = vadd.f32 %v4132, %v4246
        %v4248 = vpop.f32.mrb[0].mxu0
        %4249 = vmatprep.mubr.f32.mxu0 0.0
        %4250 = vmatmul.mubr.f32.gmra.mrb[0].mxu0 %v4148
        %v4251 = vpop.f32.mrb[0].mxu0
        %v4252 = vadd.f32 %v4132, %v4251
        %v4253 = vpop.f32.mrb[0].mxu0
        %4254 = vmatprep.mubr.f32.mxu0 0.0
        %4255 = vmatmul.mubr.f32.gmra.mrb[0].mxu0 %v4151
        %v4256 = vpop.f32.mrb[0].mxu0
        %v4257 = vadd.f32 %v4132, %v4256
        %v4258 = vpop.f32.mrb[0].mxu0
        %4259 = vmatprep.mubr.f32.mxu0 0.0
        %4260 = vmatmul.mubr.f32.gmra.mrb[0].mxu0 %v4154
        %v4261 = vpop.f32.mrb[0].mxu0
        %v4262 = vadd.f32 %v4132, %v4261
        %v4263 = vpop.f32.mrb[0].mxu0
        %4264 = vmatprep.mubr.f32.mxu0 0.0
        %4265 = vmatmul.mubr.f32.gmra.mrb[0].mxu0 %v4157
        %v4266 = vpop.f32.mrb[0].mxu0
        %v4267 = vadd.f32 %v4132, %v4266
        %v4268 = vpop.f32.mrb[0].mxu0
        %4269 = vmatprep.mubr.f32.mxu0 0.0
        %4270 = vmatmul.mubr.f32.gmra.mrb[0].mxu0 %v4160
        %v4271 = vpop.f32.mrb[0].mxu0
        %v4272 = vadd.f32 %v4132, %v4271
        %v4273 = vpop.f32.mrb[0].mxu0
        %4274 = vmatprep.mubr.f32.mxu0 0.0
        %4275 = vmatmul.mubr.f32.gmra.mrb[0].mxu0 %v4163
        %v4276 = vpop.f32.mrb[0].mxu0
        %v4277 = vadd.f32 %v4132, %v4276
        %v4278 = vpop.f32.mrb[0].mxu0
        %4279 = vdwg.mxu0
        %v4280 = vmax.f32 %v4232, 0.0
        %v4281 = vmax.f32 %v4237, 0.0
        %v4282 = vmax.f32 %v4242, 0.0
        %v4283 = vmax.f32 %v4247, 0.0
        %v4284 = vmax.f32 %v4252, 0.0
        %v4285 = vmax.f32 %v4257, 0.0
        %v4286 = vmax.f32 %v4262, 0.0
        %v4287 = vmax.f32 %v4267, 0.0
        %v4288 = vmax.f32 %v4272, 0.0
        %v4289 = vmax.f32 %v4277, 0.0
        %v4290 = vld [vmem:[#allocation32] sm:$0xff]
        %v4291 = vld [vmem:[#allocation32 + $0x8] sm:$0xff]
        %v4292 = vld [vmem:[#allocation32 + $0x10] sm:$0xff]
        %v4293 = vld [vmem:[#allocation32 + $0x18] sm:$0xff]
        %s4294 = scalar_lea.vmem [#allocation32], 32
        %v4295 = vld [vmem:[%s4294] sm:$0xff]
        %v4296 = vld [vmem:[%s4294 + $0x8] sm:$0xff]
        %v4297 = vld [vmem:[%s4294 + $0x10] sm:$0xff]
        %v4298 = vld [vmem:[%s4294 + $0x18] sm:$0xff]
        %v4300 = vsel %vm2431, %v4282, 0
        %v4303 = vsel %vm2431, %v4283, 0
        %v4306 = vsel %vm2431, %v4284, 0
        %v4309 = vsel %vm2431, %v4285, 0
        %v4312 = vsel %vm2431, %v4286, 0
        %v4315 = vsel %vm2431, %v4287, 0
        %v4318 = vsel %vm2431, %v4288, 0
        %v4321 = vsel %vm2431, %v4289, 0
        %4323 = vmatprep.subr.mxu0 0.0
        %4324 = vmatpush1.msra.mxu0 %v4295
        %4325 = vmatprep.subr.mxu0 0.0
        %4326 = vmatpush1.msra.mxu0 %v4296
        %4327 = vmatprep.subr.mxu0 0.0
        %4328 = vmatpush1.msra.mxu0 %v4297
        %4329 = vmatprep.subr.mxu0 0.0
        %4330 = vmatpush1.msra.mxu0 %v4298
        %4331 = vmatprep.subr.mxu0 0.0
        %4332 = vmatpush1.msra.mxu0 0.0
        %4333 = vmatprep.subr.mxu0 0.0
        %4334 = vmatpush1.msra.mxu0 0.0
        %4335 = vmatprep.subr.mxu0 0.0
        %4336 = vmatpush1.msra.mxu0 0.0
        %4337 = vmatprep.subr.mxu0 0.0
        %4338 = vmatpush1.msra.mxu0 0.0
        %4339 = vmatprep.subr.mxu0 0.0
        %4340 = vmatpush1.msra.mxu0 0.0
        %4341 = vmatprep.subr.mxu0 0.0
        %4342 = vmatpush1.msra.mxu0 0.0
        %4343 = vmatprep.subr.mxu0 0.0
        %4344 = vmatpush1.msra.mxu0 0.0
        %4345 = vmatprep.subr.mxu0 0.0
        %4346 = vmatpush1.msra.mxu0 0.0
        %4347 = vmatprep.subr.mxu0 0.0
        %4348 = vmatpush1.msra.mxu0 0.0
        %4349 = vmatprep.subr.mxu0 0.0
        %4350 = vmatpush1.msra.mxu0 0.0
        %4351 = vmatprep.subr.mxu0 0.0
        %4352 = vmatpush1.msra.mxu0 0.0
        %4353 = vmatprep.subr.mxu0 0.0
        %4354 = vmatpush1.msra.mxu0 0.0
        %4355 = vmatprep.subr.mxu0 0.0
        %4356 = vmatpush1.msra.mxu0 0.0
        %4357 = vmatprep.subr.mxu0 0.0
        %4358 = vmatpush1.msra.mxu0 0.0
        %4359 = vmatprep.subr.mxu0 0.0
        %4360 = vmatpush1.msra.mxu0 0.0
        %4361 = vmatprep.subr.mxu0 0.0
        %4362 = vmatpush1.msra.mxu0 0.0
        %4363 = vmatprep.subr.mxu0 0.0
        %4364 = vmatpush1.msra.mxu0 0.0
        %4365 = vmatprep.subr.mxu0 0.0
        %4366 = vmatpush1.msra.mxu0 0.0
        %4367 = vmatprep.subr.mxu0 0.0
        %4368 = vmatpush1.msra.mxu0 0.0
        %4369 = vmatprep.subr.mxu0 0.0
        %4370 = vmatpush1.msra.mxu0 0.0
        %4371 = vmatprep.subr.mxu0 0.0
        %4372 = vmatpush1.msra.mxu0 0.0
        %4373 = vmatprep.subr.mxu0 0.0
        %4374 = vmatpush1.msra.mxu0 0.0
        %4375 = vmatprep.subr.mxu0 0.0
        %4376 = vmatpush1.msra.mxu0 0.0
        %4377 = vmatprep.subr.mxu0 0.0
        %4378 = vmatpush1.msra.mxu0 0.0
        %4379 = vmatprep.subr.mxu0 0.0
        %4380 = vmatpush1.msra.mxu0 0.0
        %4381 = vmatprep.subr.mxu0 0.0
        %4382 = vmatpush1.msra.mxu0 0.0
        %4383 = vmatprep.subr.mxu0 0.0
        %4384 = vmatpush1.msra.mxu0 0.0
        %4385 = vmatprep.subr.mxu0 0.0
        %4386 = vmatpush1.msra.mxu0 0.0
        %4387 = vmatprep.mubr.f32.mxu0 0.0
        %4388 = vmatmul.mubr.f32.gmra.mrb[0].mxu0 %v4300
        %v4389 = vpop.f32.mrb[0].mxu0
        %v4390 = vadd.f32 0.0, %v4389
        %v4391 = vpop.f32.mrb[0].mxu0
        %4392 = vmatprep.mubr.f32.mxu0 0.0
        %4393 = vmatmul.mubr.f32.gmra.mrb[0].mxu0 %v4303
        %v4394 = vpop.f32.mrb[0].mxu0
        %v4395 = vadd.f32 0.0, %v4394
        %v4396 = vpop.f32.mrb[0].mxu0
        %4397 = vmatprep.mubr.f32.mxu0 0.0
        %4398 = vmatmul.mubr.f32.gmra.mrb[0].mxu0 %v4306
        %v4399 = vpop.f32.mrb[0].mxu0
        %v4400 = vadd.f32 0.0, %v4399
        %v4401 = vpop.f32.mrb[0].mxu0
        %4402 = vmatprep.mubr.f32.mxu0 0.0
        %4403 = vmatmul.mubr.f32.gmra.mrb[0].mxu0 %v4309
        %v4404 = vpop.f32.mrb[0].mxu0
        %v4405 = vadd.f32 0.0, %v4404
        %v4406 = vpop.f32.mrb[0].mxu0
        %4407 = vmatprep.mubr.f32.mxu0 0.0
        %4408 = vmatmul.mubr.f32.gmra.mrb[0].mxu0 %v4312
        %v4409 = vpop.f32.mrb[0].mxu0
        %v4410 = vadd.f32 0.0, %v4409
        %v4411 = vpop.f32.mrb[0].mxu0
        %4412 = vmatprep.mubr.f32.mxu0 0.0
        %4413 = vmatmul.mubr.f32.gmra.mrb[0].mxu0 %v4315
        %v4414 = vpop.f32.mrb[0].mxu0
        %v4415 = vadd.f32 0.0, %v4414
        %v4416 = vpop.f32.mrb[0].mxu0
        %4417 = vmatprep.mubr.f32.mxu0 0.0
        %4418 = vmatmul.mubr.f32.gmra.mrb[0].mxu0 %v4318
        %v4419 = vpop.f32.mrb[0].mxu0
        %v4420 = vadd.f32 0.0, %v4419
        %v4421 = vpop.f32.mrb[0].mxu0
        %4422 = vmatprep.mubr.f32.mxu0 0.0
        %4423 = vmatmul.mubr.f32.gmra.mrb[0].mxu0 %v4321
        %v4424 = vpop.f32.mrb[0].mxu0
        %v4425 = vadd.f32 0.0, %v4424
        %v4426 = vpop.f32.mrb[0].mxu0
        %4427 = vdwg.mxu0
        %v4429 = vsel %vm2431, %v4280, 0
        %v4432 = vsel %vm2431, %v4281, 0
        %4434 = vmatprep.subr.mxu0 0.0
        %4435 = vmatpush1.msra.mxu0 %v4290
        %4436 = vmatprep.subr.mxu0 0.0
        %4437 = vmatpush1.msra.mxu0 %v4291
        %4438 = vmatprep.subr.mxu0 0.0
        %4439 = vmatpush1.msra.mxu0 %v4292
        %4440 = vmatprep.subr.mxu0 0.0
        %4441 = vmatpush1.msra.mxu0 %v4293
        %4442 = vmatprep.subr.mxu0 0.0
        %4443 = vmatpush1.msra.mxu0 0.0
        %4444 = vmatprep.subr.mxu0 0.0
        %4445 = vmatpush1.msra.mxu0 0.0
        %4446 = vmatprep.subr.mxu0 0.0
        %4447 = vmatpush1.msra.mxu0 0.0
        %4448 = vmatprep.subr.mxu0 0.0
        %4449 = vmatpush1.msra.mxu0 0.0
        %4450 = vmatprep.subr.mxu0 0.0
        %4451 = vmatpush1.msra.mxu0 0.0
        %4452 = vmatprep.subr.mxu0 0.0
        %4453 = vmatpush1.msra.mxu0 0.0
        %4454 = vmatprep.subr.mxu0 0.0
        %4455 = vmatpush1.msra.mxu0 0.0
        %4456 = vmatprep.subr.mxu0 0.0
        %4457 = vmatpush1.msra.mxu0 0.0
        %4458 = vmatprep.subr.mxu0 0.0
        %4459 = vmatpush1.msra.mxu0 0.0
        %4460 = vmatprep.subr.mxu0 0.0
        %4461 = vmatpush1.msra.mxu0 0.0
        %4462 = vmatprep.subr.mxu0 0.0
        %4463 = vmatpush1.msra.mxu0 0.0
        %4464 = vmatprep.subr.mxu0 0.0
        %4465 = vmatpush1.msra.mxu0 0.0
        %4466 = vmatprep.subr.mxu0 0.0
        %4467 = vmatpush1.msra.mxu0 0.0
        %4468 = vmatprep.subr.mxu0 0.0
        %4469 = vmatpush1.msra.mxu0 0.0
        %4470 = vmatprep.subr.mxu0 0.0
        %4471 = vmatpush1.msra.mxu0 0.0
        %4472 = vmatprep.subr.mxu0 0.0
        %4473 = vmatpush1.msra.mxu0 0.0
        %4474 = vmatprep.subr.mxu0 0.0
        %4475 = vmatpush1.msra.mxu0 0.0
        %4476 = vmatprep.subr.mxu0 0.0
        %4477 = vmatpush1.msra.mxu0 0.0
        %4478 = vmatprep.subr.mxu0 0.0
        %4479 = vmatpush1.msra.mxu0 0.0
        %4480 = vmatprep.subr.mxu0 0.0
        %4481 = vmatpush1.msra.mxu0 0.0
        %4482 = vmatprep.subr.mxu0 0.0
        %4483 = vmatpush1.msra.mxu0 0.0
        %4484 = vmatprep.subr.mxu0 0.0
        %4485 = vmatpush1.msra.mxu0 0.0
        %4486 = vmatprep.subr.mxu0 0.0
        %4487 = vmatpush1.msra.mxu0 0.0
        %4488 = vmatprep.subr.mxu0 0.0
        %4489 = vmatpush1.msra.mxu0 0.0
        %4490 = vmatprep.subr.mxu0 0.0
        %4491 = vmatpush1.msra.mxu0 0.0
        %4492 = vmatprep.subr.mxu0 0.0
        %4493 = vmatpush1.msra.mxu0 0.0
        %4494 = vmatprep.subr.mxu0 0.0
        %4495 = vmatpush1.msra.mxu0 0.0
        %4496 = vmatprep.subr.mxu0 0.0
        %4497 = vmatpush1.msra.mxu0 0.0
        %4498 = vmatprep.mubr.f32.mxu0 0.0
        %4499 = vmatmul.mubr.f32.gmra.mrb[0].mxu0 %v4429
        %v4500 = vpop.f32.mrb[0].mxu0
        %v4501 = vadd.f32 %v4390, %v4500
        %v4502 = vpop.f32.mrb[0].mxu0
        %4503 = vmatprep.mubr.f32.mxu0 0.0
        %4504 = vmatmul.mubr.f32.gmra.mrb[0].mxu0 %v4432
        %v4505 = vpop.f32.mrb[0].mxu0
        %v4506 = vadd.f32 %v4395, %v4505
        %v4507 = vpop.f32.mrb[0].mxu0
        %4508 = vmatprep.mubr.f32.mxu0 0.0
        %4509 = vmatmul.mubr.f32.gmra.mrb[0].mxu0 %v4300
        %v4510 = vpop.f32.mrb[0].mxu0
        %v4511 = vadd.f32 %v4400, %v4510
        %v4512 = vpop.f32.mrb[0].mxu0
        %4513 = vmatprep.mubr.f32.mxu0 0.0
        %4514 = vmatmul.mubr.f32.gmra.mrb[0].mxu0 %v4303
        %v4515 = vpop.f32.mrb[0].mxu0
        %v4516 = vadd.f32 %v4405, %v4515
        %v4517 = vpop.f32.mrb[0].mxu0
        %4518 = vmatprep.mubr.f32.mxu0 0.0
        %4519 = vmatmul.mubr.f32.gmra.mrb[0].mxu0 %v4306
        %v4520 = vpop.f32.mrb[0].mxu0
        %v4521 = vadd.f32 %v4410, %v4520
        %v4522 = vpop.f32.mrb[0].mxu0
        %4523 = vmatprep.mubr.f32.mxu0 0.0
        %4524 = vmatmul.mubr.f32.gmra.mrb[0].mxu0 %v4309
        %v4525 = vpop.f32.mrb[0].mxu0
        %v4526 = vadd.f32 %v4415, %v4525
        %v4527 = vpop.f32.mrb[0].mxu0
        %4528 = vmatprep.mubr.f32.mxu0 0.0
        %4529 = vmatmul.mubr.f32.gmra.mrb[0].mxu0 %v4312
        %v4530 = vpop.f32.mrb[0].mxu0
        %v4531 = vadd.f32 %v4420, %v4530
        %v4532 = vpop.f32.mrb[0].mxu0
        %4533 = vmatprep.mubr.f32.mxu0 0.0
        %4534 = vmatmul.mubr.f32.gmra.mrb[0].mxu0 %v4315
        %v4535 = vpop.f32.mrb[0].mxu0
        %v4536 = vadd.f32 %v4425, %v4535
        %v4537 = vpop.f32.mrb[0].mxu0
        %4538 = vdwg.mxu0
        %v4539 = vld [vmem:[#allocation30] sm:$0x1]
        %v4541 = vlaneseq
        %v4542 = vshrl.u32 %v4541, 7
        %v4543 = vsub.s32 0, %v4542
        %v4544 = vrot.slane %v4539, %v4543
        %v4546 = vadd.f32 %v4501, %v4544
        %v4547 = vadd.f32 %v4506, %v4544
        %v4548 = vadd.f32 %v4511, %v4544
        %v4549 = vadd.f32 %v4516, %v4544
        %v4550 = vadd.f32 %v4521, %v4544
        %v4551 = vadd.f32 %v4526, %v4544
        %v4552 = vadd.f32 %v4531, %v4544
        %v4553 = vadd.f32 %v4536, %v4544
        %v4554 = vadd.f32 %v4546, %v4282
        %v4555 = vadd.f32 %v4547, %v4283
        %v4556 = vadd.f32 %v4548, %v4284
        %v4557 = vadd.f32 %v4549, %v4285
        %v4558 = vadd.f32 %v4550, %v4286
        %v4559 = vadd.f32 %v4551, %v4287
        %v4560 = vadd.f32 %v4552, %v4288
        %v4561 = vadd.f32 %v4553, %v4289
        %v4562 = vxor.u32 %v4546, 2147483648
        %v4563 = vxor.u32 %v4547, 2147483648
        %v4564 = vxor.u32 %v4548, 2147483648
        %v4565 = vxor.u32 %v4549, 2147483648
        %v4566 = vxor.u32 %v4550, 2147483648
        %v4567 = vxor.u32 %v4551, 2147483648
        %v4568 = vxor.u32 %v4552, 2147483648
        %v4569 = vxor.u32 %v4553, 2147483648
        %v4570 = vmul.f32 %v4562, 1.442695
        %v4571 = vpow.pop %v4570
        %v4572 = vmul.f32 %v4563, 1.442695
        %v4573 = vpow.pop %v4572
        %v4574 = vmul.f32 %v4564, 1.442695
        %v4575 = vpow.pop %v4574
        %v4576 = vmul.f32 %v4565, 1.442695
        %v4577 = vpow.pop %v4576
        %v4578 = vmul.f32 %v4566, 1.442695
        %v4579 = vpow.pop %v4578
        %v4580 = vmul.f32 %v4567, 1.442695
        %v4581 = vpow.pop %v4580
        %v4582 = vmul.f32 %v4568, 1.442695
        %v4583 = vpow.pop %v4582
        %v4584 = vmul.f32 %v4569, 1.442695
        %v4585 = vpow.pop %v4584
        %v4586 = vadd.f32 %v4571, 1.0
        %v4587 = vadd.f32 %v4573, 1.0
        %v4588 = vadd.f32 %v4575, 1.0
        %v4589 = vadd.f32 %v4577, 1.0
        %v4590 = vadd.f32 %v4579, 1.0
        %v4591 = vadd.f32 %v4581, 1.0
        %v4592 = vadd.f32 %v4583, 1.0
        %v4593 = vadd.f32 %v4585, 1.0
        %v4594 = vrcp.pop %v4586
        %v4595 = vmul.f32 1.0, %v4594
        %v4596 = vrcp.pop %v4587
        %v4597 = vmul.f32 1.0, %v4596
        %v4598 = vrcp.pop %v4588
        %v4599 = vmul.f32 1.0, %v4598
        %v4600 = vrcp.pop %v4589
        %v4601 = vmul.f32 1.0, %v4600
        %v4602 = vrcp.pop %v4590
        %v4603 = vmul.f32 1.0, %v4602
        %v4604 = vrcp.pop %v4591
        %v4605 = vmul.f32 1.0, %v4604
        %v4606 = vrcp.pop %v4592
        %v4607 = vmul.f32 1.0, %v4606
        %v4608 = vrcp.pop %v4593
        %v4609 = vmul.f32 1.0, %v4608
        %4618 = vrot.lane.b32.xlu0 %v4595, 96
        %v4619 = vpop.permute.xlu0 %4618
        %4620 = vrot.lane.b32.xlu0 %v4597, 96
        %v4621 = vpop.permute.xlu0 %4620
        %4622 = vrot.lane.b32.xlu0 %v4599, 96
        %v4623 = vpop.permute.xlu0 %4622
        %4624 = vrot.lane.b32.xlu0 %v4601, 96
        %v4625 = vpop.permute.xlu0 %4624
        %4626 = vrot.lane.b32.xlu0 %v4603, 96
        %v4627 = vpop.permute.xlu0 %4626
        %4628 = vrot.lane.b32.xlu0 %v4605, 96
        %v4629 = vpop.permute.xlu0 %4628
        %4630 = vrot.lane.b32.xlu0 %v4607, 96
        %v4631 = vpop.permute.xlu0 %4630
        %4632 = vrot.lane.b32.xlu0 %v4609, 96
        %v4633 = vpop.permute.xlu0 %4632
        %v4642 = vmul.f32 %v4554, %v4619
        %v4643 = vmul.f32 %v4555, %v4621
        %v4644 = vmul.f32 %v4556, %v4623
        %v4645 = vmul.f32 %v4557, %v4625
        %v4646 = vmul.f32 %v4558, %v4627
        %v4647 = vmul.f32 %v4559, %v4629
        %v4648 = vmul.f32 %v4560, %v4631
        %v4649 = vmul.f32 %v4561, %v4633
        %v4650 = vsel %vm2431, %v4642, 0.0
        %4651 = vadd.xlane.f32.xlu0 %v4650
        %v4652 = vpop.xlane.xlu0 %4651
        %v4653 = vsel %vm2431, %v4643, 0.0
        %4654 = vadd.xlane.f32.xlu0 %v4653
        %v4655 = vpop.xlane.xlu0 %4654
        %v4656 = vsel %vm2431, %v4644, 0.0
        %4657 = vadd.xlane.f32.xlu0 %v4656
        %v4658 = vpop.xlane.xlu0 %4657
        %v4659 = vsel %vm2431, %v4645, 0.0
        %4660 = vadd.xlane.f32.xlu0 %v4659
        %v4661 = vpop.xlane.xlu0 %4660
        %v4662 = vsel %vm2431, %v4646, 0.0
        %4663 = vadd.xlane.f32.xlu0 %v4662
        %v4664 = vpop.xlane.xlu0 %4663
        %v4665 = vsel %vm2431, %v4647, 0.0
        %4666 = vadd.xlane.f32.xlu0 %v4665
        %v4667 = vpop.xlane.xlu0 %4666
        %v4668 = vsel %vm2431, %v4648, 0.0
        %4669 = vadd.xlane.f32.xlu0 %v4668
        %v4670 = vpop.xlane.xlu0 %4669
        %v4671 = vsel %vm2431, %v4649, 0.0
        %4672 = vadd.xlane.f32.xlu0 %v4671
        %v4673 = vpop.xlane.xlu0 %4672
        %v4674 = vmul.f32 %v4652, %v3322
        %v4675 = vmul.f32 %v4655, %v3322
        %v4676 = vmul.f32 %v4658, %v3322
        %v4677 = vmul.f32 %v4661, %v3322
        %v4678 = vmul.f32 %v4664, %v3322
        %v4679 = vmul.f32 %v4667, %v3322
        %v4680 = vmul.f32 %v4670, %v3322
        %v4681 = vmul.f32 %v4673, %v3322
        %v4682 = vadd.f32 %v4674, %v4675
        %v4683 = vrot.slane %v4682, 4
        %v4684 = vadd.f32 %v4682, %v4683
        %v4685 = vrot.slane %v4684, 2
        %v4686 = vadd.f32 %v4684, %v4685
        %v4687 = vrot.slane %v4686, 1
        %v4688 = vadd.f32 %v4686, %v4687
        %v4689 = vadd.f32 %v4676, %v4677
        %v4690 = vrot.slane %v4689, 4
        %v4691 = vadd.f32 %v4689, %v4690
        %v4692 = vrot.slane %v4691, 2
        %v4693 = vadd.f32 %v4691, %v4692
        %v4694 = vrot.slane %v4693, 1
        %v4695 = vadd.f32 %v4693, %v4694
        %v4696 = vadd.f32 %v4678, %v4679
        %v4697 = vrot.slane %v4696, 4
        %v4698 = vadd.f32 %v4696, %v4697
        %v4699 = vrot.slane %v4698, 2
        %v4700 = vadd.f32 %v4698, %v4699
        %v4701 = vrot.slane %v4700, 1
        %v4702 = vadd.f32 %v4700, %v4701
        %v4703 = vadd.f32 %v4680, %v4681
        %v4704 = vrot.slane %v4703, 4
        %v4705 = vadd.f32 %v4703, %v4704
        %v4706 = vrot.slane %v4705, 2
        %v4707 = vadd.f32 %v4705, %v4706
        %v4708 = vrot.slane %v4707, 1
        %v4709 = vadd.f32 %v4707, %v4708
        %v4710 = vmul.f32 %v4688, %v3377
        %v4711 = vmul.f32 %v4695, %v3377
        %v4712 = vmul.f32 %v4702, %v3377
        %v4713 = vmul.f32 %v4709, %v3377
        %v4714 = vsub.f32 %v4642, %v4710
        %v4715 = vsub.f32 %v4643, %v4710
        %v4716 = vsub.f32 %v4644, %v4711
        %v4717 = vsub.f32 %v4645, %v4711
        %v4718 = vsub.f32 %v4646, %v4712
        %v4719 = vsub.f32 %v4647, %v4712
        %v4720 = vsub.f32 %v4648, %v4713
        %v4721 = vsub.f32 %v4649, %v4713
        %v4722 = vmul.f32 %v4714, %v4714
        %v4723 = vmul.f32 %v4715, %v4715
        %v4724 = vmul.f32 %v4716, %v4716
        %v4725 = vmul.f32 %v4717, %v4717
        %v4726 = vmul.f32 %v4718, %v4718
        %v4727 = vmul.f32 %v4719, %v4719
        %v4728 = vmul.f32 %v4720, %v4720
        %v4729 = vmul.f32 %v4721, %v4721
        %v4730 = vsel %vm2431, %v4722, 0.0
        %4731 = vadd.xlane.f32.xlu0 %v4730
        %v4732 = vpop.xlane.xlu0 %4731
        %v4733 = vsel %vm2431, %v4723, 0.0
        %4734 = vadd.xlane.f32.xlu0 %v4733
        %v4735 = vpop.xlane.xlu0 %4734
        %v4736 = vsel %vm2431, %v4724, 0.0
        %4737 = vadd.xlane.f32.xlu0 %v4736
        %v4738 = vpop.xlane.xlu0 %4737
        %v4739 = vsel %vm2431, %v4725, 0.0
        %4740 = vadd.xlane.f32.xlu0 %v4739
        %v4741 = vpop.xlane.xlu0 %4740
        %v4742 = vsel %vm2431, %v4726, 0.0
        %4743 = vadd.xlane.f32.xlu0 %v4742
        %v4744 = vpop.xlane.xlu0 %4743
        %v4745 = vsel %vm2431, %v4727, 0.0
        %4746 = vadd.xlane.f32.xlu0 %v4745
        %v4747 = vpop.xlane.xlu0 %4746
        %v4748 = vsel %vm2431, %v4728, 0.0
        %4749 = vadd.xlane.f32.xlu0 %v4748
        %v4750 = vpop.xlane.xlu0 %4749
        %v4751 = vsel %vm2431, %v4729, 0.0
        %4752 = vadd.xlane.f32.xlu0 %v4751
        %v4753 = vpop.xlane.xlu0 %4752
        %v4754 = vmul.f32 %v4732, %v3322
        %v4755 = vmul.f32 %v4735, %v3322
        %v4756 = vmul.f32 %v4738, %v3322
        %v4757 = vmul.f32 %v4741, %v3322
        %v4758 = vmul.f32 %v4744, %v3322
        %v4759 = vmul.f32 %v4747, %v3322
        %v4760 = vmul.f32 %v4750, %v3322
        %v4761 = vmul.f32 %v4753, %v3322
        %v4762 = vadd.f32 %v4754, %v4755
        %v4763 = vrot.slane %v4762, 4
        %v4764 = vadd.f32 %v4762, %v4763
        %v4765 = vrot.slane %v4764, 2
        %v4766 = vadd.f32 %v4764, %v4765
        %v4767 = vrot.slane %v4766, 1
        %v4768 = vadd.f32 %v4766, %v4767
        %v4769 = vadd.f32 %v4756, %v4757
        %v4770 = vrot.slane %v4769, 4
        %v4771 = vadd.f32 %v4769, %v4770
        %v4772 = vrot.slane %v4771, 2
        %v4773 = vadd.f32 %v4771, %v4772
        %v4774 = vrot.slane %v4773, 1
        %v4775 = vadd.f32 %v4773, %v4774
        %v4776 = vadd.f32 %v4758, %v4759
        %v4777 = vrot.slane %v4776, 4
        %v4778 = vadd.f32 %v4776, %v4777
        %v4779 = vrot.slane %v4778, 2
        %v4780 = vadd.f32 %v4778, %v4779
        %v4781 = vrot.slane %v4780, 1
        %v4782 = vadd.f32 %v4780, %v4781
        %v4783 = vadd.f32 %v4760, %v4761
        %v4784 = vrot.slane %v4783, 4
        %v4785 = vadd.f32 %v4783, %v4784
        %v4786 = vrot.slane %v4785, 2
        %v4787 = vadd.f32 %v4785, %v4786
        %v4788 = vrot.slane %v4787, 1
        %v4789 = vadd.f32 %v4787, %v4788
        %v4790 = vmul.f32 %v4768, %v3377
        %v4791 = vmul.f32 %v4775, %v3377
        %v4792 = vmul.f32 %v4782, %v3377
        %v4793 = vmul.f32 %v4789, %v3377
        %v4794 = vadd.f32 %v4790, 1e-05
        %v4795 = vadd.f32 %v4791, 1e-05
        %v4796 = vadd.f32 %v4792, 1e-05
        %v4797 = vadd.f32 %v4793, 1e-05
        %v4798 = vrsqrt.pop %v4794
        %v4799 = vrsqrt.pop %v4795
        %v4800 = vrsqrt.pop %v4796
        %v4801 = vrsqrt.pop %v4797
        %v4802 = vmul.f32 %v4714, %v4798
        %v4803 = vmul.f32 %v4715, %v4798
        %v4804 = vmul.f32 %v4716, %v4799
        %v4805 = vmul.f32 %v4717, %v4799
        %v4806 = vmul.f32 %v4718, %v4800
        %v4807 = vmul.f32 %v4719, %v4800
        %v4808 = vmul.f32 %v4720, %v4801
        %v4809 = vmul.f32 %v4721, %v4801
        %v4810 = vld [vmem:[#allocation12] sm:$0xff]
        %v4811 = vld [vmem:[#allocation12 + $0x8] sm:$0xff]
        %v4812 = vmul.f32 %v4802, %v4810
        %v4813 = vmul.f32 %v4803, %v4811
        %v4814 = vmul.f32 %v4804, %v4810
        %v4815 = vmul.f32 %v4805, %v4811
        %v4816 = vmul.f32 %v4806, %v4810
        %v4817 = vmul.f32 %v4807, %v4811
        %v4818 = vmul.f32 %v4808, %v4810
        %v4819 = vmul.f32 %v4809, %v4811
        %v4820 = vld [vmem:[#allocation11] sm:$0xff]
        %v4821 = vld [vmem:[#allocation11 + $0x8] sm:$0xff]
        %v4822 = vadd.f32 %v4812, %v4820
        %v4823 = vadd.f32 %v4813, %v4821
        %v4824 = vadd.f32 %v4814, %v4820
        %v4825 = vadd.f32 %v4815, %v4821
        %v4826 = vadd.f32 %v4816, %v4820
        %v4827 = vadd.f32 %v4817, %v4821
        %v4828 = vadd.f32 %v4818, %v4820
        %v4829 = vadd.f32 %v4819, %v4821
        %v4830 = vld [vmem:[#allocation50] sm:$0x1]
        %v4832 = vlaneseq
        %v4833 = vshrl.u32 %v4832, 7
        %v4834 = vsub.s32 0, %v4833
        %v4835 = vrot.slane %v4830, %v4834
        %v4837 = vmul.f32 %v2070, %v4835
        %v4838 = vmul.f32 %v2075, %v4835
        %v4839 = vmul.f32 %v2080, %v4835
        %v4840 = vmul.f32 %v2085, %v4835
        %v4841 = vmul.f32 %v2090, %v4835
        %v4842 = vmul.f32 %v2095, %v4835
        %v4843 = vmul.f32 %v2100, %v4835
        %v4844 = vmul.f32 %v2105, %v4835
        %v4845 = vmul.f32 %v2110, %v4835
        %v4846 = vmul.f32 %v2115, %v4835
        %v4847 = vmul.f32 %v2120, %v4835
        %v4848 = vmul.f32 %v2125, %v4835
        %v4849 = vadd.f32 %v4837, 0.0
        %v4850 = vadd.f32 %v4838, 0.0
        %v4851 = vadd.f32 %v4839, 0.0
        %v4852 = vadd.f32 %v4840, 0.0
        %v4853 = vadd.f32 %v4841, 0.0
        %v4854 = vadd.f32 %v4842, 0.0
        %v4855 = vadd.f32 %v4843, 0.0
        %v4856 = vadd.f32 %v4844, 0.0
        %v4857 = vadd.f32 %v4845, 0.0
        %v4858 = vadd.f32 %v4846, 0.0
        %v4859 = vadd.f32 %v4847, 0.0
        %v4860 = vadd.f32 %v4848, 0.0
        %s4861 = scalar_lea.vmem [#allocation50], 1
        %v4862 = vld [vmem:[%s4861] sm:$0x1]
        %v4864 = vlaneseq
        %v4865 = vshrl.u32 %v4864, 7
        %v4866 = vsub.s32 0, %v4865
        %v4867 = vrot.slane %v4862, %v4866
        %v4869 = vmul.f32 %v2080, %v4867
        %v4870 = vmul.f32 %v2085, %v4867
        %v4871 = vmul.f32 %v2090, %v4867
        %v4872 = vmul.f32 %v2095, %v4867
        %v4873 = vmul.f32 %v2100, %v4867
        %v4874 = vmul.f32 %v2105, %v4867
        %v4875 = vmul.f32 %v2110, %v4867
        %v4876 = vmul.f32 %v2115, %v4867
        %v4877 = vmul.f32 %v2120, %v4867
        %v4878 = vmul.f32 %v2125, %v4867
        %v4879 = vmul.f32 %v2130, %v4867
        %v4880 = vmul.f32 %v2135, %v4867
        %v4881 = vadd.f32 %v4849, %v4869
        %v4882 = vadd.f32 %v4850, %v4870
        %v4883 = vadd.f32 %v4851, %v4871
        %v4884 = vadd.f32 %v4852, %v4872
        %v4885 = vadd.f32 %v4853, %v4873
        %v4886 = vadd.f32 %v4854, %v4874
        %v4887 = vadd.f32 %v4855, %v4875
        %v4888 = vadd.f32 %v4856, %v4876
        %v4889 = vadd.f32 %v4857, %v4877
        %v4890 = vadd.f32 %v4858, %v4878
        %v4891 = vadd.f32 %v4859, %v4879
        %v4892 = vadd.f32 %v4860, %v4880
        %s4893 = scalar_lea.vmem [#allocation50], 2
        %v4894 = vld [vmem:[%s4893] sm:$0x1]
        %v4896 = vlaneseq
        %v4897 = vshrl.u32 %v4896, 7
        %v4898 = vsub.s32 0, %v4897
        %v4899 = vrot.slane %v4894, %v4898
        %v4901 = vmul.f32 %v2090, %v4899
        %v4902 = vmul.f32 %v2095, %v4899
        %v4903 = vmul.f32 %v2100, %v4899
        %v4904 = vmul.f32 %v2105, %v4899
        %v4905 = vmul.f32 %v2110, %v4899
        %v4906 = vmul.f32 %v2115, %v4899
        %v4907 = vmul.f32 %v2120, %v4899
        %v4908 = vmul.f32 %v2125, %v4899
        %v4909 = vmul.f32 %v2130, %v4899
        %v4910 = vmul.f32 %v2135, %v4899
        %v4911 = vmul.f32 %v2176, %v4899
        %v4912 = vmul.f32 %v2181, %v4899
        %v4913 = vadd.f32 %v4881, %v4901
        %v4914 = vadd.f32 %v4882, %v4902
        %v4915 = vadd.f32 %v4883, %v4903
        %v4916 = vadd.f32 %v4884, %v4904
        %v4917 = vadd.f32 %v4885, %v4905
        %v4918 = vadd.f32 %v4886, %v4906
        %v4919 = vadd.f32 %v4887, %v4907
        %v4920 = vadd.f32 %v4888, %v4908
        %v4921 = vadd.f32 %v4889, %v4909
        %v4922 = vadd.f32 %v4890, %v4910
        %v4923 = vadd.f32 %v4891, %v4911
        %v4924 = vadd.f32 %v4892, %v4912
        %v4925 = vld [vmem:[#allocation47] sm:$0x1]
        %v4927 = vlaneseq
        %v4928 = vshrl.u32 %v4927, 7
        %v4929 = vsub.s32 0, %v4928
        %v4930 = vrot.slane %v4925, %v4929
        %v4932 = vadd.f32 %v4913, %v4930
        %v4933 = vadd.f32 %v4914, %v4930
        %v4934 = vadd.f32 %v4915, %v4930
        %v4935 = vadd.f32 %v4916, %v4930
        %v4936 = vadd.f32 %v4917, %v4930
        %v4937 = vadd.f32 %v4918, %v4930
        %v4938 = vadd.f32 %v4919, %v4930
        %v4939 = vadd.f32 %v4920, %v4930
        %v4940 = vadd.f32 %v4921, %v4930
        %v4941 = vadd.f32 %v4922, %v4930
        %v4942 = vadd.f32 %v4923, %v4930
        %v4943 = vadd.f32 %v4924, %v4930
        %v4944 = vld [vmem:[#allocation48] sm:$0x1]
        %v4946 = vlaneseq
        %v4947 = vshrl.u32 %v4946, 7
        %v4948 = vsub.s32 0, %v4947
        %v4949 = vrot.slane %v4944, %v4948
        %v4951 = vmul.f32 %v2090, %v4949
        %v4952 = vmul.f32 %v2095, %v4949
        %v4953 = vmul.f32 %v2100, %v4949
        %v4954 = vmul.f32 %v2105, %v4949
        %v4955 = vmul.f32 %v2110, %v4949
        %v4956 = vmul.f32 %v2115, %v4949
        %v4957 = vmul.f32 %v2120, %v4949
        %v4958 = vmul.f32 %v2125, %v4949
        %v4959 = vmul.f32 %v2130, %v4949
        %v4960 = vmul.f32 %v2135, %v4949
        %v4961 = vmul.f32 %v2176, %v4949
        %v4962 = vmul.f32 %v2181, %v4949
        %v4963 = vadd.f32 %v4932, %v4951
        %v4964 = vadd.f32 %v4933, %v4952
        %v4965 = vadd.f32 %v4934, %v4953
        %v4966 = vadd.f32 %v4935, %v4954
        %v4967 = vadd.f32 %v4936, %v4955
        %v4968 = vadd.f32 %v4937, %v4956
        %v4969 = vadd.f32 %v4938, %v4957
        %v4970 = vadd.f32 %v4939, %v4958
        %v4971 = vadd.f32 %v4940, %v4959
        %v4972 = vadd.f32 %v4941, %v4960
        %v4973 = vadd.f32 %v4942, %v4961
        %v4974 = vadd.f32 %v4943, %v4962
        %v4975 = vxor.u32 %v4932, 2147483648
        %v4976 = vxor.u32 %v4933, 2147483648
        %v4977 = vxor.u32 %v4934, 2147483648
        %v4978 = vxor.u32 %v4935, 2147483648
        %v4979 = vxor.u32 %v4936, 2147483648
        %v4980 = vxor.u32 %v4937, 2147483648
        %v4981 = vxor.u32 %v4938, 2147483648
        %v4982 = vxor.u32 %v4939, 2147483648
        %v4983 = vxor.u32 %v4940, 2147483648
        %v4984 = vxor.u32 %v4941, 2147483648
        %v4985 = vxor.u32 %v4942, 2147483648
        %v4986 = vxor.u32 %v4943, 2147483648
        %v4987 = vmul.f32 %v4975, 1.442695
        %v4988 = vpow.pop %v4987
        %v4989 = vmul.f32 %v4976, 1.442695
        %v4990 = vpow.pop %v4989
        %v4991 = vmul.f32 %v4977, 1.442695
        %v4992 = vpow.pop %v4991
        %v4993 = vmul.f32 %v4978, 1.442695
        %v4994 = vpow.pop %v4993
        %v4995 = vmul.f32 %v4979, 1.442695
        %v4996 = vpow.pop %v4995
        %v4997 = vmul.f32 %v4980, 1.442695
        %v4998 = vpow.pop %v4997
        %v4999 = vmul.f32 %v4981, 1.442695
        %v5000 = vpow.pop %v4999
        %v5001 = vmul.f32 %v4982, 1.442695
        %v5002 = vpow.pop %v5001
        %v5003 = vmul.f32 %v4983, 1.442695
        %v5004 = vpow.pop %v5003
        %v5005 = vmul.f32 %v4984, 1.442695
        %v5006 = vpow.pop %v5005
        %v5007 = vmul.f32 %v4985, 1.442695
        %v5008 = vpow.pop %v5007
        %v5009 = vmul.f32 %v4986, 1.442695
        %v5010 = vpow.pop %v5009
        %v5011 = vadd.f32 %v4988, 1.0
        %v5012 = vadd.f32 %v4990, 1.0
        %v5013 = vadd.f32 %v4992, 1.0
        %v5014 = vadd.f32 %v4994, 1.0
        %v5015 = vadd.f32 %v4996, 1.0
        %v5016 = vadd.f32 %v4998, 1.0
        %v5017 = vadd.f32 %v5000, 1.0
        %v5018 = vadd.f32 %v5002, 1.0
        %v5019 = vadd.f32 %v5004, 1.0
        %v5020 = vadd.f32 %v5006, 1.0
        %v5021 = vadd.f32 %v5008, 1.0
        %v5022 = vadd.f32 %v5010, 1.0
        %v5023 = vrcp.pop %v5011
        %v5024 = vmul.f32 1.0, %v5023
        %v5025 = vrcp.pop %v5012
        %v5026 = vmul.f32 1.0, %v5025
        %v5027 = vrcp.pop %v5013
        %v5028 = vmul.f32 1.0, %v5027
        %v5029 = vrcp.pop %v5014
        %v5030 = vmul.f32 1.0, %v5029
        %v5031 = vrcp.pop %v5015
        %v5032 = vmul.f32 1.0, %v5031
        %v5033 = vrcp.pop %v5016
        %v5034 = vmul.f32 1.0, %v5033
        %v5035 = vrcp.pop %v5017
        %v5036 = vmul.f32 1.0, %v5035
        %v5037 = vrcp.pop %v5018
        %v5038 = vmul.f32 1.0, %v5037
        %v5039 = vrcp.pop %v5019
        %v5040 = vmul.f32 1.0, %v5039
        %v5041 = vrcp.pop %v5020
        %v5042 = vmul.f32 1.0, %v5041
        %v5043 = vrcp.pop %v5021
        %v5044 = vmul.f32 1.0, %v5043
        %v5045 = vrcp.pop %v5022
        %v5046 = vmul.f32 1.0, %v5045
        %5059 = vrot.lane.b32.xlu0 %v5024, 96
        %v5060 = vpop.permute.xlu0 %5059
        %5061 = vrot.lane.b32.xlu0 %v5026, 96
        %v5062 = vpop.permute.xlu0 %5061
        %5063 = vrot.lane.b32.xlu0 %v5028, 96
        %v5064 = vpop.permute.xlu0 %5063
        %5065 = vrot.lane.b32.xlu0 %v5030, 96
        %v5066 = vpop.permute.xlu0 %5065
        %5067 = vrot.lane.b32.xlu0 %v5032, 96
        %v5068 = vpop.permute.xlu0 %5067
        %5069 = vrot.lane.b32.xlu0 %v5034, 96
        %v5070 = vpop.permute.xlu0 %5069
        %5071 = vrot.lane.b32.xlu0 %v5036, 96
        %v5072 = vpop.permute.xlu0 %5071
        %5073 = vrot.lane.b32.xlu0 %v5038, 96
        %v5074 = vpop.permute.xlu0 %5073
        %5075 = vrot.lane.b32.xlu0 %v5040, 96
        %v5076 = vpop.permute.xlu0 %5075
        %5077 = vrot.lane.b32.xlu0 %v5042, 96
        %v5078 = vpop.permute.xlu0 %5077
        %5079 = vrot.lane.b32.xlu0 %v5044, 96
        %v5080 = vpop.permute.xlu0 %5079
        %5081 = vrot.lane.b32.xlu0 %v5046, 96
        %v5082 = vpop.permute.xlu0 %5081
        %v5095 = vmul.f32 %v4963, %v5060
        %v5096 = vmul.f32 %v4964, %v5062
        %v5097 = vmul.f32 %v4965, %v5064
        %v5098 = vmul.f32 %v4966, %v5066
        %v5099 = vmul.f32 %v4967, %v5068
        %v5100 = vmul.f32 %v4968, %v5070
        %v5101 = vmul.f32 %v4969, %v5072
        %v5102 = vmul.f32 %v4970, %v5074
        %v5103 = vmul.f32 %v4971, %v5076
        %v5104 = vmul.f32 %v4972, %v5078
        %v5105 = vmul.f32 %v4973, %v5080
        %v5106 = vmul.f32 %v4974, %v5082
        %v5107 = vld [vmem:[%s75] sm:$0xff]
        %v5108 = vld [vmem:[%s75 + $0x8] sm:$0xff]
        %v5109 = vld [vmem:[%s75 + $0x10] sm:$0xff]
        %v5110 = vld [vmem:[%s75 + $0x18] sm:$0xff]
        %v5112 = vsel %vm2431, %v5095, 0
        %v5115 = vsel %vm2431, %v5096, 0
        %v5118 = vsel %vm2431, %v5097, 0
        %v5121 = vsel %vm2431, %v5098, 0
        %v5124 = vsel %vm2431, %v5099, 0
        %v5127 = vsel %vm2431, %v5100, 0
        %v5130 = vsel %vm2431, %v5101, 0
        %v5133 = vsel %vm2431, %v5102, 0
        %v5136 = vsel %vm2431, %v5103, 0
        %v5139 = vsel %vm2431, %v5104, 0
        %v5142 = vsel %vm2431, %v5105, 0
        %v5145 = vsel %vm2431, %v5106, 0
        %5147 = vmatprep.subr.mxu0 0.0
        %5148 = vmatpush1.msra.mxu0 %v5107
        %5149 = vmatprep.subr.mxu0 0.0
        %5150 = vmatpush1.msra.mxu0 %v5108
        %5151 = vmatprep.subr.mxu0 0.0
        %5152 = vmatpush1.msra.mxu0 %v5109
        %5153 = vmatprep.subr.mxu0 0.0
        %5154 = vmatpush1.msra.mxu0 %v5110
        %5155 = vmatprep.subr.mxu0 0.0
        %5156 = vmatpush1.msra.mxu0 0.0
        %5157 = vmatprep.subr.mxu0 0.0
        %5158 = vmatpush1.msra.mxu0 0.0
        %5159 = vmatprep.subr.mxu0 0.0
        %5160 = vmatpush1.msra.mxu0 0.0
        %5161 = vmatprep.subr.mxu0 0.0
        %5162 = vmatpush1.msra.mxu0 0.0
        %5163 = vmatprep.subr.mxu0 0.0
        %5164 = vmatpush1.msra.mxu0 0.0
        %5165 = vmatprep.subr.mxu0 0.0
        %5166 = vmatpush1.msra.mxu0 0.0
        %5167 = vmatprep.subr.mxu0 0.0
        %5168 = vmatpush1.msra.mxu0 0.0
        %5169 = vmatprep.subr.mxu0 0.0
        %5170 = vmatpush1.msra.mxu0 0.0
        %5171 = vmatprep.subr.mxu0 0.0
        %5172 = vmatpush1.msra.mxu0 0.0
        %5173 = vmatprep.subr.mxu0 0.0
        %5174 = vmatpush1.msra.mxu0 0.0
        %5175 = vmatprep.subr.mxu0 0.0
        %5176 = vmatpush1.msra.mxu0 0.0
        %5177 = vmatprep.subr.mxu0 0.0
        %5178 = vmatpush1.msra.mxu0 0.0
        %5179 = vmatprep.subr.mxu0 0.0
        %5180 = vmatpush1.msra.mxu0 0.0
        %5181 = vmatprep.subr.mxu0 0.0
        %5182 = vmatpush1.msra.mxu0 0.0
        %5183 = vmatprep.subr.mxu0 0.0
        %5184 = vmatpush1.msra.mxu0 0.0
        %5185 = vmatprep.subr.mxu0 0.0
        %5186 = vmatpush1.msra.mxu0 0.0
        %5187 = vmatprep.subr.mxu0 0.0
        %5188 = vmatpush1.msra.mxu0 0.0
        %5189 = vmatprep.subr.mxu0 0.0
        %5190 = vmatpush1.msra.mxu0 0.0
        %5191 = vmatprep.subr.mxu0 0.0
        %5192 = vmatpush1.msra.mxu0 0.0
        %5193 = vmatprep.subr.mxu0 0.0
        %5194 = vmatpush1.msra.mxu0 0.0
        %5195 = vmatprep.subr.mxu0 0.0
        %5196 = vmatpush1.msra.mxu0 0.0
        %5197 = vmatprep.subr.mxu0 0.0
        %5198 = vmatpush1.msra.mxu0 0.0
        %5199 = vmatprep.subr.mxu0 0.0
        %5200 = vmatpush1.msra.mxu0 0.0
        %5201 = vmatprep.subr.mxu0 0.0
        %5202 = vmatpush1.msra.mxu0 0.0
        %5203 = vmatprep.subr.mxu0 0.0
        %5204 = vmatpush1.msra.mxu0 0.0
        %5205 = vmatprep.subr.mxu0 0.0
        %5206 = vmatpush1.msra.mxu0 0.0
        %5207 = vmatprep.subr.mxu0 0.0
        %5208 = vmatpush1.msra.mxu0 0.0
        %5209 = vmatprep.subr.mxu0 0.0
        %5210 = vmatpush1.msra.mxu0 0.0
        %5211 = vmatprep.mubr.f32.mxu0 0.0
        %5212 = vmatmul.mubr.f32.gmra.mrb[0].mxu0 %v5112
        %v5213 = vpop.f32.mrb[0].mxu0
        %v5214 = vadd.f32 0.0, %v5213
        %v5215 = vpop.f32.mrb[0].mxu0
        %5216 = vmatprep.mubr.f32.mxu0 0.0
        %5217 = vmatmul.mubr.f32.gmra.mrb[0].mxu0 %v5115
        %v5218 = vpop.f32.mrb[0].mxu0
        %v5219 = vadd.f32 0.0, %v5218
        %v5220 = vpop.f32.mrb[0].mxu0
        %5221 = vmatprep.mubr.f32.mxu0 0.0
        %5222 = vmatmul.mubr.f32.gmra.mrb[0].mxu0 %v5118
        %v5223 = vpop.f32.mrb[0].mxu0
        %v5224 = vadd.f32 0.0, %v5223
        %v5225 = vpop.f32.mrb[0].mxu0
        %5226 = vmatprep.mubr.f32.mxu0 0.0
        %5227 = vmatmul.mubr.f32.gmra.mrb[0].mxu0 %v5121
        %v5228 = vpop.f32.mrb[0].mxu0
        %v5229 = vadd.f32 0.0, %v5228
        %v5230 = vpop.f32.mrb[0].mxu0
        %5231 = vmatprep.mubr.f32.mxu0 0.0
        %5232 = vmatmul.mubr.f32.gmra.mrb[0].mxu0 %v5124
        %v5233 = vpop.f32.mrb[0].mxu0
        %v5234 = vadd.f32 0.0, %v5233
        %v5235 = vpop.f32.mrb[0].mxu0
        %5236 = vmatprep.mubr.f32.mxu0 0.0
        %5237 = vmatmul.mubr.f32.gmra.mrb[0].mxu0 %v5127
        %v5238 = vpop.f32.mrb[0].mxu0
        %v5239 = vadd.f32 0.0, %v5238
        %v5240 = vpop.f32.mrb[0].mxu0
        %5241 = vmatprep.mubr.f32.mxu0 0.0
        %5242 = vmatmul.mubr.f32.gmra.mrb[0].mxu0 %v5130
        %v5243 = vpop.f32.mrb[0].mxu0
        %v5244 = vadd.f32 0.0, %v5243
        %v5245 = vpop.f32.mrb[0].mxu0
        %5246 = vmatprep.mubr.f32.mxu0 0.0
        %5247 = vmatmul.mubr.f32.gmra.mrb[0].mxu0 %v5133
        %v5248 = vpop.f32.mrb[0].mxu0
        %v5249 = vadd.f32 0.0, %v5248
        %v5250 = vpop.f32.mrb[0].mxu0
        %5251 = vmatprep.mubr.f32.mxu0 0.0
        %5252 = vmatmul.mubr.f32.gmra.mrb[0].mxu0 %v5136
        %v5253 = vpop.f32.mrb[0].mxu0
        %v5254 = vadd.f32 0.0, %v5253
        %v5255 = vpop.f32.mrb[0].mxu0
        %5256 = vmatprep.mubr.f32.mxu0 0.0
        %5257 = vmatmul.mubr.f32.gmra.mrb[0].mxu0 %v5139
        %v5258 = vpop.f32.mrb[0].mxu0
        %v5259 = vadd.f32 0.0, %v5258
        %v5260 = vpop.f32.mrb[0].mxu0
        %5261 = vmatprep.mubr.f32.mxu0 0.0
        %5262 = vmatmul.mubr.f32.gmra.mrb[0].mxu0 %v5142
        %v5263 = vpop.f32.mrb[0].mxu0
        %v5264 = vadd.f32 0.0, %v5263
        %v5265 = vpop.f32.mrb[0].mxu0
        %5266 = vmatprep.mubr.f32.mxu0 0.0
        %5267 = vmatmul.mubr.f32.gmra.mrb[0].mxu0 %v5145
        %v5268 = vpop.f32.mrb[0].mxu0
        %v5269 = vadd.f32 0.0, %v5268
        %v5270 = vpop.f32.mrb[0].mxu0
        %5271 = vdwg.mxu0
        %v5272 = vld [vmem:[%s71] sm:$0xff]
        %v5273 = vld [vmem:[%s71 + $0x8] sm:$0xff]
        %v5274 = vld [vmem:[%s71 + $0x10] sm:$0xff]
        %v5275 = vld [vmem:[%s71 + $0x18] sm:$0xff]
        %v5276 = vld [vmem:[%s71 + $0x20] sm:$0xff]
        %v5277 = vld [vmem:[%s71 + $0x28] sm:$0xff]
        %v5278 = vld [vmem:[%s71 + $0x30] sm:$0xff]
        %v5279 = vld [vmem:[%s71 + $0x38] sm:$0xff]
        %v5280 = vld [vmem:[%s71 + $0x40] sm:$0xff]
        %v5281 = vld [vmem:[%s71 + $0x48] sm:$0xff]
        %v5282 = vld [vmem:[%s71 + $0x50] sm:$0xff]
        %v5283 = vld [vmem:[%s71 + $0x58] sm:$0xff]
        %v5284 = vld [vmem:[#allocation45] sm:$0x1]
        %v5286 = vlaneseq
        %v5287 = vshrl.u32 %v5286, 7
        %v5288 = vsub.s32 0, %v5287
        %v5289 = vrot.slane %v5284, %v5288
        %vm5291 = vcmask 785408
        %v5293 = vsel %vm5291, %v5272, 0
        %v5296 = vsel %vm5291, %v5273, 0
        %v5299 = vsel %vm5291, %v5274, 0
        %v5302 = vsel %vm5291, %v5275, 0
        %v5305 = vsel %vm5291, %v5276, 0
        %v5308 = vsel %vm5291, %v5277, 0
        %v5311 = vsel %vm5291, %v5278, 0
        %v5314 = vsel %vm5291, %v5279, 0
        %v5317 = vsel %vm5291, %v5280, 0
        %v5320 = vsel %vm5291, %v5281, 0
        %v5323 = vsel %vm5291, %v5282, 0
        %v5326 = vsel %vm5291, %v5283, 0
        %5328 = vmatprep.subr.mxu0 0.0
        %5329 = vmatpush1.msra.mxu0 %v5214
        %5330 = vmatprep.subr.mxu0 0.0
        %5331 = vmatpush1.msra.mxu0 %v5219
        %5332 = vmatprep.subr.mxu0 0.0
        %5333 = vmatpush1.msra.mxu0 %v5224
        %5334 = vmatprep.subr.mxu0 0.0
        %5335 = vmatpush1.msra.mxu0 %v5229
        %5336 = vmatprep.subr.mxu0 0.0
        %5337 = vmatpush1.msra.mxu0 %v5234
        %5338 = vmatprep.subr.mxu0 0.0
        %5339 = vmatpush1.msra.mxu0 %v5239
        %5340 = vmatprep.subr.mxu0 0.0
        %5341 = vmatpush1.msra.mxu0 %v5244
        %5342 = vmatprep.subr.mxu0 0.0
        %5343 = vmatpush1.msra.mxu0 %v5249
        %5344 = vmatprep.subr.mxu0 0.0
        %5345 = vmatpush1.msra.mxu0 %v5254
        %5346 = vmatprep.subr.mxu0 0.0
        %5347 = vmatpush1.msra.mxu0 %v5259
        %5348 = vmatprep.subr.mxu0 0.0
        %5349 = vmatpush1.msra.mxu0 %v5264
        %5350 = vmatprep.subr.mxu0 0.0
        %5351 = vmatpush1.msra.mxu0 %v5269
        %5352 = vmatprep.subr.mxu0 0.0
        %5353 = vmatpush1.msra.mxu0 0.0
        %5354 = vmatprep.subr.mxu0 0.0
        %5355 = vmatpush1.msra.mxu0 0.0
        %5356 = vmatprep.subr.mxu0 0.0
        %5357 = vmatpush1.msra.mxu0 0.0
        %5358 = vmatprep.subr.mxu0 0.0
        %5359 = vmatpush1.msra.mxu0 0.0
        %5360 = vmatprep.subr.mxu0 0.0
        %5361 = vmatpush1.msra.mxu0 0.0
        %5362 = vmatprep.subr.mxu0 0.0
        %5363 = vmatpush1.msra.mxu0 0.0
        %5364 = vmatprep.subr.mxu0 0.0
        %5365 = vmatpush1.msra.mxu0 0.0
        %5366 = vmatprep.subr.mxu0 0.0
        %5367 = vmatpush1.msra.mxu0 0.0
        %5368 = vmatprep.subr.mxu0 0.0
        %5369 = vmatpush1.msra.mxu0 0.0
        %5370 = vmatprep.subr.mxu0 0.0
        %5371 = vmatpush1.msra.mxu0 0.0
        %5372 = vmatprep.subr.mxu0 0.0
        %5373 = vmatpush1.msra.mxu0 0.0
        %5374 = vmatprep.subr.mxu0 0.0
        %5375 = vmatpush1.msra.mxu0 0.0
        %5376 = vmatprep.subr.mxu0 0.0
        %5377 = vmatpush1.msra.mxu0 0.0
        %5378 = vmatprep.subr.mxu0 0.0
        %5379 = vmatpush1.msra.mxu0 0.0
        %5380 = vmatprep.subr.mxu0 0.0
        %5381 = vmatpush1.msra.mxu0 0.0
        %5382 = vmatprep.subr.mxu0 0.0
        %5383 = vmatpush1.msra.mxu0 0.0
        %5384 = vmatprep.subr.mxu0 0.0
        %5385 = vmatpush1.msra.mxu0 0.0
        %5386 = vmatprep.subr.mxu0 0.0
        %5387 = vmatpush1.msra.mxu0 0.0
        %5388 = vmatprep.subr.mxu0 0.0
        %5389 = vmatpush1.msra.mxu0 0.0
        %5390 = vmatprep.subr.mxu0 0.0
        %5391 = vmatpush1.msra.mxu0 0.0
        %5392 = vmatprep.mubr.f32.mxu0 0.0
        %5393 = vmatmul.mubr.f32.gmra.mrb[0].mxu0 %v5293
        %v5394 = vpop.f32.mrb[0].mxu0
        %v5395 = vadd.f32 %v5289, %v5394
        %v5396 = vpop.f32.mrb[0].mxu0
        %5397 = vmatprep.mubr.f32.mxu0 0.0
        %5398 = vmatmul.mubr.f32.gmra.mrb[0].mxu0 %v5296
        %v5399 = vpop.f32.mrb[0].mxu0
        %v5400 = vadd.f32 %v5289, %v5399
        %v5401 = vpop.f32.mrb[0].mxu0
        %5402 = vmatprep.mubr.f32.mxu0 0.0
        %5403 = vmatmul.mubr.f32.gmra.mrb[0].mxu0 %v5299
        %v5404 = vpop.f32.mrb[0].mxu0
        %v5405 = vadd.f32 %v5289, %v5404
        %v5406 = vpop.f32.mrb[0].mxu0
        %5407 = vmatprep.mubr.f32.mxu0 0.0
        %5408 = vmatmul.mubr.f32.gmra.mrb[0].mxu0 %v5302
        %v5409 = vpop.f32.mrb[0].mxu0
        %v5410 = vadd.f32 %v5289, %v5409
        %v5411 = vpop.f32.mrb[0].mxu0
        %5412 = vmatprep.mubr.f32.mxu0 0.0
        %5413 = vmatmul.mubr.f32.gmra.mrb[0].mxu0 %v5305
        %v5414 = vpop.f32.mrb[0].mxu0
        %v5415 = vadd.f32 %v5289, %v5414
        %v5416 = vpop.f32.mrb[0].mxu0
        %5417 = vmatprep.mubr.f32.mxu0 0.0
        %5418 = vmatmul.mubr.f32.gmra.mrb[0].mxu0 %v5308
        %v5419 = vpop.f32.mrb[0].mxu0
        %v5420 = vadd.f32 %v5289, %v5419
        %v5421 = vpop.f32.mrb[0].mxu0
        %5422 = vmatprep.mubr.f32.mxu0 0.0
        %5423 = vmatmul.mubr.f32.gmra.mrb[0].mxu0 %v5311
        %v5424 = vpop.f32.mrb[0].mxu0
        %v5425 = vadd.f32 %v5289, %v5424
        %v5426 = vpop.f32.mrb[0].mxu0
        %5427 = vmatprep.mubr.f32.mxu0 0.0
        %5428 = vmatmul.mubr.f32.gmra.mrb[0].mxu0 %v5314
        %v5429 = vpop.f32.mrb[0].mxu0
        %v5430 = vadd.f32 %v5289, %v5429
        %v5431 = vpop.f32.mrb[0].mxu0
        %5432 = vmatprep.mubr.f32.mxu0 0.0
        %5433 = vmatmul.mubr.f32.gmra.mrb[0].mxu0 %v5317
        %v5434 = vpop.f32.mrb[0].mxu0
        %v5435 = vadd.f32 %v5289, %v5434
        %v5436 = vpop.f32.mrb[0].mxu0
        %5437 = vmatprep.mubr.f32.mxu0 0.0
        %5438 = vmatmul.mubr.f32.gmra.mrb[0].mxu0 %v5320
        %v5439 = vpop.f32.mrb[0].mxu0
        %v5440 = vadd.f32 %v5289, %v5439
        %v5441 = vpop.f32.mrb[0].mxu0
        %5442 = vmatprep.mubr.f32.mxu0 0.0
        %5443 = vmatmul.mubr.f32.gmra.mrb[0].mxu0 %v5323
        %v5444 = vpop.f32.mrb[0].mxu0
        %v5445 = vadd.f32 %v5289, %v5444
        %v5446 = vpop.f32.mrb[0].mxu0
        %5447 = vmatprep.mubr.f32.mxu0 0.0
        %5448 = vmatmul.mubr.f32.gmra.mrb[0].mxu0 %v5326
        %v5449 = vpop.f32.mrb[0].mxu0
        %v5450 = vadd.f32 %v5289, %v5449
        %v5451 = vpop.f32.mrb[0].mxu0
        %5452 = vdwg.mxu0
        %v5453 = vmax.f32 %v5395, 0.0
        %v5454 = vmax.f32 %v5400, 0.0
        %v5455 = vmax.f32 %v5405, 0.0
        %v5456 = vmax.f32 %v5410, 0.0
        %v5457 = vmax.f32 %v5415, 0.0
        %v5458 = vmax.f32 %v5420, 0.0
        %v5459 = vmax.f32 %v5425, 0.0
        %v5460 = vmax.f32 %v5430, 0.0
        %v5461 = vmax.f32 %v5435, 0.0
        %v5462 = vmax.f32 %v5440, 0.0
        %v5463 = vmax.f32 %v5445, 0.0
        %v5464 = vmax.f32 %v5450, 0.0
        %v5465 = vld [vmem:[#allocation53] sm:$0xff]
        %v5466 = vld [vmem:[#allocation53 + $0x8] sm:$0xff]
        %v5467 = vld [vmem:[#allocation53 + $0x10] sm:$0xff]
        %v5468 = vld [vmem:[#allocation53 + $0x18] sm:$0xff]
        %s5469 = scalar_lea.vmem [#allocation53], 32
        %v5470 = vld [vmem:[%s5469] sm:$0xff]
        %v5471 = vld [vmem:[%s5469 + $0x8] sm:$0xff]
        %v5472 = vld [vmem:[%s5469 + $0x10] sm:$0xff]
        %v5473 = vld [vmem:[%s5469 + $0x18] sm:$0xff]
        %v5475 = vsel %vm2431, %v5455, 0
        %v5478 = vsel %vm2431, %v5456, 0
        %v5481 = vsel %vm2431, %v5457, 0
        %v5484 = vsel %vm2431, %v5458, 0
        %v5487 = vsel %vm2431, %v5459, 0
        %v5490 = vsel %vm2431, %v5460, 0
        %v5493 = vsel %vm2431, %v5461, 0
        %v5496 = vsel %vm2431, %v5462, 0
        %5498 = vmatprep.subr.mxu0 0.0
        %5499 = vmatpush1.msra.mxu0 %v5470
        %5500 = vmatprep.subr.mxu0 0.0
        %5501 = vmatpush1.msra.mxu0 %v5471
        %5502 = vmatprep.subr.mxu0 0.0
        %5503 = vmatpush1.msra.mxu0 %v5472
        %5504 = vmatprep.subr.mxu0 0.0
        %5505 = vmatpush1.msra.mxu0 %v5473
        %5506 = vmatprep.subr.mxu0 0.0
        %5507 = vmatpush1.msra.mxu0 0.0
        %5508 = vmatprep.subr.mxu0 0.0
        %5509 = vmatpush1.msra.mxu0 0.0
        %5510 = vmatprep.subr.mxu0 0.0
        %5511 = vmatpush1.msra.mxu0 0.0
        %5512 = vmatprep.subr.mxu0 0.0
        %5513 = vmatpush1.msra.mxu0 0.0
        %5514 = vmatprep.subr.mxu0 0.0
        %5515 = vmatpush1.msra.mxu0 0.0
        %5516 = vmatprep.subr.mxu0 0.0
        %5517 = vmatpush1.msra.mxu0 0.0
        %5518 = vmatprep.subr.mxu0 0.0
        %5519 = vmatpush1.msra.mxu0 0.0
        %5520 = vmatprep.subr.mxu0 0.0
        %5521 = vmatpush1.msra.mxu0 0.0
        %5522 = vmatprep.subr.mxu0 0.0
        %5523 = vmatpush1.msra.mxu0 0.0
        %5524 = vmatprep.subr.mxu0 0.0
        %5525 = vmatpush1.msra.mxu0 0.0
        %5526 = vmatprep.subr.mxu0 0.0
        %5527 = vmatpush1.msra.mxu0 0.0
        %5528 = vmatprep.subr.mxu0 0.0
        %5529 = vmatpush1.msra.mxu0 0.0
        %5530 = vmatprep.subr.mxu0 0.0
        %5531 = vmatpush1.msra.mxu0 0.0
        %5532 = vmatprep.subr.mxu0 0.0
        %5533 = vmatpush1.msra.mxu0 0.0
        %5534 = vmatprep.subr.mxu0 0.0
        %5535 = vmatpush1.msra.mxu0 0.0
        %5536 = vmatprep.subr.mxu0 0.0
        %5537 = vmatpush1.msra.mxu0 0.0
        %5538 = vmatprep.subr.mxu0 0.0
        %5539 = vmatpush1.msra.mxu0 0.0
        %5540 = vmatprep.subr.mxu0 0.0
        %5541 = vmatpush1.msra.mxu0 0.0
        %5542 = vmatprep.subr.mxu0 0.0
        %5543 = vmatpush1.msra.mxu0 0.0
        %5544 = vmatprep.subr.mxu0 0.0
        %5545 = vmatpush1.msra.mxu0 0.0
        %5546 = vmatprep.subr.mxu0 0.0
        %5547 = vmatpush1.msra.mxu0 0.0
        %5548 = vmatprep.subr.mxu0 0.0
        %5549 = vmatpush1.msra.mxu0 0.0
        %5550 = vmatprep.subr.mxu0 0.0
        %5551 = vmatpush1.msra.mxu0 0.0
        %5552 = vmatprep.subr.mxu0 0.0
        %5553 = vmatpush1.msra.mxu0 0.0
        %5554 = vmatprep.subr.mxu0 0.0
        %5555 = vmatpush1.msra.mxu0 0.0
        %5556 = vmatprep.subr.mxu0 0.0
        %5557 = vmatpush1.msra.mxu0 0.0
        %5558 = vmatprep.subr.mxu0 0.0
        %5559 = vmatpush1.msra.mxu0 0.0
        %5560 = vmatprep.subr.mxu0 0.0
        %5561 = vmatpush1.msra.mxu0 0.0
        %5562 = vmatprep.mubr.f32.mxu0 0.0
        %5563 = vmatmul.mubr.f32.gmra.mrb[0].mxu0 %v5475
        %v5564 = vpop.f32.mrb[0].mxu0
        %v5565 = vadd.f32 0.0, %v5564
        %v5566 = vpop.f32.mrb[0].mxu0
        %5567 = vmatprep.mubr.f32.mxu0 0.0
        %5568 = vmatmul.mubr.f32.gmra.mrb[0].mxu0 %v5478
        %v5569 = vpop.f32.mrb[0].mxu0
        %v5570 = vadd.f32 0.0, %v5569
        %v5571 = vpop.f32.mrb[0].mxu0
        %5572 = vmatprep.mubr.f32.mxu0 0.0
        %5573 = vmatmul.mubr.f32.gmra.mrb[0].mxu0 %v5481
        %v5574 = vpop.f32.mrb[0].mxu0
        %v5575 = vadd.f32 0.0, %v5574
        %v5576 = vpop.f32.mrb[0].mxu0
        %5577 = vmatprep.mubr.f32.mxu0 0.0
        %5578 = vmatmul.mubr.f32.gmra.mrb[0].mxu0 %v5484
        %v5579 = vpop.f32.mrb[0].mxu0
        %v5580 = vadd.f32 0.0, %v5579
        %v5581 = vpop.f32.mrb[0].mxu0
        %5582 = vmatprep.mubr.f32.mxu0 0.0
        %5583 = vmatmul.mubr.f32.gmra.mrb[0].mxu0 %v5487
        %v5584 = vpop.f32.mrb[0].mxu0
        %v5585 = vadd.f32 0.0, %v5584
        %v5586 = vpop.f32.mrb[0].mxu0
        %5587 = vmatprep.mubr.f32.mxu0 0.0
        %5588 = vmatmul.mubr.f32.gmra.mrb[0].mxu0 %v5490
        %v5589 = vpop.f32.mrb[0].mxu0
        %v5590 = vadd.f32 0.0, %v5589
        %v5591 = vpop.f32.mrb[0].mxu0
        %5592 = vmatprep.mubr.f32.mxu0 0.0
        %5593 = vmatmul.mubr.f32.gmra.mrb[0].mxu0 %v5493
        %v5594 = vpop.f32.mrb[0].mxu0
        %v5595 = vadd.f32 0.0, %v5594
        %v5596 = vpop.f32.mrb[0].mxu0
        %5597 = vmatprep.mubr.f32.mxu0 0.0
        %5598 = vmatmul.mubr.f32.gmra.mrb[0].mxu0 %v5496
        %v5599 = vpop.f32.mrb[0].mxu0
        %v5600 = vadd.f32 0.0, %v5599
        %v5601 = vpop.f32.mrb[0].mxu0
        %5602 = vdwg.mxu0
        %v5604 = vsel %vm2431, %v5453, 0
        %v5607 = vsel %vm2431, %v5454, 0
        %5609 = vmatprep.subr.mxu0 0.0
        %5610 = vmatpush1.msra.mxu0 %v5465
        %5611 = vmatprep.subr.mxu0 0.0
        %5612 = vmatpush1.msra.mxu0 %v5466
        %5613 = vmatprep.subr.mxu0 0.0
        %5614 = vmatpush1.msra.mxu0 %v5467
        %5615 = vmatprep.subr.mxu0 0.0
        %5616 = vmatpush1.msra.mxu0 %v5468
        %5617 = vmatprep.subr.mxu0 0.0
        %5618 = vmatpush1.msra.mxu0 0.0
        %5619 = vmatprep.subr.mxu0 0.0
        %5620 = vmatpush1.msra.mxu0 0.0
        %5621 = vmatprep.subr.mxu0 0.0
        %5622 = vmatpush1.msra.mxu0 0.0
        %5623 = vmatprep.subr.mxu0 0.0
        %5624 = vmatpush1.msra.mxu0 0.0
        %5625 = vmatprep.subr.mxu0 0.0
        %5626 = vmatpush1.msra.mxu0 0.0
        %5627 = vmatprep.subr.mxu0 0.0
        %5628 = vmatpush1.msra.mxu0 0.0
        %5629 = vmatprep.subr.mxu0 0.0
        %5630 = vmatpush1.msra.mxu0 0.0
        %5631 = vmatprep.subr.mxu0 0.0
        %5632 = vmatpush1.msra.mxu0 0.0
        %5633 = vmatprep.subr.mxu0 0.0
        %5634 = vmatpush1.msra.mxu0 0.0
        %5635 = vmatprep.subr.mxu0 0.0
        %5636 = vmatpush1.msra.mxu0 0.0
        %5637 = vmatprep.subr.mxu0 0.0
        %5638 = vmatpush1.msra.mxu0 0.0
        %5639 = vmatprep.subr.mxu0 0.0
        %5640 = vmatpush1.msra.mxu0 0.0
        %5641 = vmatprep.subr.mxu0 0.0
        %5642 = vmatpush1.msra.mxu0 0.0
        %5643 = vmatprep.subr.mxu0 0.0
        %5644 = vmatpush1.msra.mxu0 0.0
        %5645 = vmatprep.subr.mxu0 0.0
        %5646 = vmatpush1.msra.mxu0 0.0
        %5647 = vmatprep.subr.mxu0 0.0
        %5648 = vmatpush1.msra.mxu0 0.0
        %5649 = vmatprep.subr.mxu0 0.0
        %5650 = vmatpush1.msra.mxu0 0.0
        %5651 = vmatprep.subr.mxu0 0.0
        %5652 = vmatpush1.msra.mxu0 0.0
        %5653 = vmatprep.subr.mxu0 0.0
        %5654 = vmatpush1.msra.mxu0 0.0
        %5655 = vmatprep.subr.mxu0 0.0
        %5656 = vmatpush1.msra.mxu0 0.0
        %5657 = vmatprep.subr.mxu0 0.0
        %5658 = vmatpush1.msra.mxu0 0.0
        %5659 = vmatprep.subr.mxu0 0.0
        %5660 = vmatpush1.msra.mxu0 0.0
        %5661 = vmatprep.subr.mxu0 0.0
        %5662 = vmatpush1.msra.mxu0 0.0
        %5663 = vmatprep.subr.mxu0 0.0
        %5664 = vmatpush1.msra.mxu0 0.0
        %5665 = vmatprep.subr.mxu0 0.0
        %5666 = vmatpush1.msra.mxu0 0.0
        %5667 = vmatprep.subr.mxu0 0.0
        %5668 = vmatpush1.msra.mxu0 0.0
        %5669 = vmatprep.subr.mxu0 0.0
        %5670 = vmatpush1.msra.mxu0 0.0
        %5671 = vmatprep.subr.mxu0 0.0
        %5672 = vmatpush1.msra.mxu0 0.0
        %5673 = vmatprep.mubr.f32.mxu0 0.0
        %5674 = vmatmul.mubr.f32.gmra.mrb[0].mxu0 %v5604
        %v5675 = vpop.f32.mrb[0].mxu0
        %v5676 = vadd.f32 %v5565, %v5675
        %v5677 = vpop.f32.mrb[0].mxu0
        %5678 = vmatprep.mubr.f32.mxu0 0.0
        %5679 = vmatmul.mubr.f32.gmra.mrb[0].mxu0 %v5607
        %v5680 = vpop.f32.mrb[0].mxu0
        %v5681 = vadd.f32 %v5570, %v5680
        %v5682 = vpop.f32.mrb[0].mxu0
        %5683 = vmatprep.mubr.f32.mxu0 0.0
        %5684 = vmatmul.mubr.f32.gmra.mrb[0].mxu0 %v5475
        %v5685 = vpop.f32.mrb[0].mxu0
        %v5686 = vadd.f32 %v5575, %v5685
        %v5687 = vpop.f32.mrb[0].mxu0
        %5688 = vmatprep.mubr.f32.mxu0 0.0
        %5689 = vmatmul.mubr.f32.gmra.mrb[0].mxu0 %v5478
        %v5690 = vpop.f32.mrb[0].mxu0
        %v5691 = vadd.f32 %v5580, %v5690
        %v5692 = vpop.f32.mrb[0].mxu0
        %5693 = vmatprep.mubr.f32.mxu0 0.0
        %5694 = vmatmul.mubr.f32.gmra.mrb[0].mxu0 %v5481
        %v5695 = vpop.f32.mrb[0].mxu0
        %v5696 = vadd.f32 %v5585, %v5695
        %v5697 = vpop.f32.mrb[0].mxu0
        %5698 = vmatprep.mubr.f32.mxu0 0.0
        %5699 = vmatmul.mubr.f32.gmra.mrb[0].mxu0 %v5484
        %v5700 = vpop.f32.mrb[0].mxu0
        %v5701 = vadd.f32 %v5590, %v5700
        %v5702 = vpop.f32.mrb[0].mxu0
        %5703 = vmatprep.mubr.f32.mxu0 0.0
        %5704 = vmatmul.mubr.f32.gmra.mrb[0].mxu0 %v5487
        %v5705 = vpop.f32.mrb[0].mxu0
        %v5706 = vadd.f32 %v5595, %v5705
        %v5707 = vpop.f32.mrb[0].mxu0
        %5708 = vmatprep.mubr.f32.mxu0 0.0
        %5709 = vmatmul.mubr.f32.gmra.mrb[0].mxu0 %v5490
        %v5710 = vpop.f32.mrb[0].mxu0
        %v5711 = vadd.f32 %v5600, %v5710
        %v5712 = vpop.f32.mrb[0].mxu0
        %5713 = vdwg.mxu0
        %s5714 = scalar_lea.vmem [#allocation53], 64
        %v5715 = vld [vmem:[%s5714] sm:$0xff]
        %v5716 = vld [vmem:[%s5714 + $0x8] sm:$0xff]
        %v5717 = vld [vmem:[%s5714 + $0x10] sm:$0xff]
        %v5718 = vld [vmem:[%s5714 + $0x18] sm:$0xff]
        %v5720 = vsel %vm2431, %v5463, 0
        %v5723 = vsel %vm2431, %v5464, 0
        %5725 = vmatprep.subr.mxu0 0.0
        %5726 = vmatpush1.msra.mxu0 %v5715
        %5727 = vmatprep.subr.mxu0 0.0
        %5728 = vmatpush1.msra.mxu0 %v5716
        %5729 = vmatprep.subr.mxu0 0.0
        %5730 = vmatpush1.msra.mxu0 %v5717
        %5731 = vmatprep.subr.mxu0 0.0
        %5732 = vmatpush1.msra.mxu0 %v5718
        %5733 = vmatprep.subr.mxu0 0.0
        %5734 = vmatpush1.msra.mxu0 0.0
        %5735 = vmatprep.subr.mxu0 0.0
        %5736 = vmatpush1.msra.mxu0 0.0
        %5737 = vmatprep.subr.mxu0 0.0
        %5738 = vmatpush1.msra.mxu0 0.0
        %5739 = vmatprep.subr.mxu0 0.0
        %5740 = vmatpush1.msra.mxu0 0.0
        %5741 = vmatprep.subr.mxu0 0.0
        %5742 = vmatpush1.msra.mxu0 0.0
        %5743 = vmatprep.subr.mxu0 0.0
        %5744 = vmatpush1.msra.mxu0 0.0
        %5745 = vmatprep.subr.mxu0 0.0
        %5746 = vmatpush1.msra.mxu0 0.0
        %5747 = vmatprep.subr.mxu0 0.0
        %5748 = vmatpush1.msra.mxu0 0.0
        %5749 = vmatprep.subr.mxu0 0.0
        %5750 = vmatpush1.msra.mxu0 0.0
        %5751 = vmatprep.subr.mxu0 0.0
        %5752 = vmatpush1.msra.mxu0 0.0
        %5753 = vmatprep.subr.mxu0 0.0
        %5754 = vmatpush1.msra.mxu0 0.0
        %5755 = vmatprep.subr.mxu0 0.0
        %5756 = vmatpush1.msra.mxu0 0.0
        %5757 = vmatprep.subr.mxu0 0.0
        %5758 = vmatpush1.msra.mxu0 0.0
        %5759 = vmatprep.subr.mxu0 0.0
        %5760 = vmatpush1.msra.mxu0 0.0
        %5761 = vmatprep.subr.mxu0 0.0
        %5762 = vmatpush1.msra.mxu0 0.0
        %5763 = vmatprep.subr.mxu0 0.0
        %5764 = vmatpush1.msra.mxu0 0.0
        %5765 = vmatprep.subr.mxu0 0.0
        %5766 = vmatpush1.msra.mxu0 0.0
        %5767 = vmatprep.subr.mxu0 0.0
        %5768 = vmatpush1.msra.mxu0 0.0
        %5769 = vmatprep.subr.mxu0 0.0
        %5770 = vmatpush1.msra.mxu0 0.0
        %5771 = vmatprep.subr.mxu0 0.0
        %5772 = vmatpush1.msra.mxu0 0.0
        %5773 = vmatprep.subr.mxu0 0.0
        %5774 = vmatpush1.msra.mxu0 0.0
        %5775 = vmatprep.subr.mxu0 0.0
        %5776 = vmatpush1.msra.mxu0 0.0
        %5777 = vmatprep.subr.mxu0 0.0
        %5778 = vmatpush1.msra.mxu0 0.0
        %5779 = vmatprep.subr.mxu0 0.0
        %5780 = vmatpush1.msra.mxu0 0.0
        %5781 = vmatprep.subr.mxu0 0.0
        %5782 = vmatpush1.msra.mxu0 0.0
        %5783 = vmatprep.subr.mxu0 0.0
        %5784 = vmatpush1.msra.mxu0 0.0
        %5785 = vmatprep.subr.mxu0 0.0
        %5786 = vmatpush1.msra.mxu0 0.0
        %5787 = vmatprep.subr.mxu0 0.0
        %5788 = vmatpush1.msra.mxu0 0.0
        %5789 = vmatprep.mubr.f32.mxu0 0.0
        %5790 = vmatmul.mubr.f32.gmra.mrb[0].mxu0 %v5481
        %v5791 = vpop.f32.mrb[0].mxu0
        %v5792 = vadd.f32 0.0, %v5791
        %v5793 = vpop.f32.mrb[0].mxu0
        %5794 = vmatprep.mubr.f32.mxu0 0.0
        %5795 = vmatmul.mubr.f32.gmra.mrb[0].mxu0 %v5484
        %v5796 = vpop.f32.mrb[0].mxu0
        %v5797 = vadd.f32 0.0, %v5796
        %v5798 = vpop.f32.mrb[0].mxu0
        %5799 = vmatprep.mubr.f32.mxu0 0.0
        %5800 = vmatmul.mubr.f32.gmra.mrb[0].mxu0 %v5487
        %v5801 = vpop.f32.mrb[0].mxu0
        %v5802 = vadd.f32 0.0, %v5801
        %v5803 = vpop.f32.mrb[0].mxu0
        %5804 = vmatprep.mubr.f32.mxu0 0.0
        %5805 = vmatmul.mubr.f32.gmra.mrb[0].mxu0 %v5490
        %v5806 = vpop.f32.mrb[0].mxu0
        %v5807 = vadd.f32 0.0, %v5806
        %v5808 = vpop.f32.mrb[0].mxu0
        %5809 = vmatprep.mubr.f32.mxu0 0.0
        %5810 = vmatmul.mubr.f32.gmra.mrb[0].mxu0 %v5493
        %v5811 = vpop.f32.mrb[0].mxu0
        %v5812 = vadd.f32 0.0, %v5811
        %v5813 = vpop.f32.mrb[0].mxu0
        %5814 = vmatprep.mubr.f32.mxu0 0.0
        %5815 = vmatmul.mubr.f32.gmra.mrb[0].mxu0 %v5496
        %v5816 = vpop.f32.mrb[0].mxu0
        %v5817 = vadd.f32 0.0, %v5816
        %v5818 = vpop.f32.mrb[0].mxu0
        %5819 = vmatprep.mubr.f32.mxu0 0.0
        %5820 = vmatmul.mubr.f32.gmra.mrb[0].mxu0 %v5720
        %v5821 = vpop.f32.mrb[0].mxu0
        %v5822 = vadd.f32 0.0, %v5821
        %v5823 = vpop.f32.mrb[0].mxu0
        %5824 = vmatprep.mubr.f32.mxu0 0.0
        %5825 = vmatmul.mubr.f32.gmra.mrb[0].mxu0 %v5723
        %v5826 = vpop.f32.mrb[0].mxu0
        %v5827 = vadd.f32 0.0, %v5826
        %v5828 = vpop.f32.mrb[0].mxu0
        %5829 = vdwg.mxu0
        %v5830 = vadd.f32 %v5676, %v5792
        %v5831 = vadd.f32 %v5681, %v5797
        %v5832 = vadd.f32 %v5686, %v5802
        %v5833 = vadd.f32 %v5691, %v5807
        %v5834 = vadd.f32 %v5696, %v5812
        %v5835 = vadd.f32 %v5701, %v5817
        %v5836 = vadd.f32 %v5706, %v5822
        %v5837 = vadd.f32 %v5711, %v5827
        %v5838 = vld [vmem:[#allocation51] sm:$0x1]
        %v5840 = vlaneseq
        %v5841 = vshrl.u32 %v5840, 7
        %v5842 = vsub.s32 0, %v5841
        %v5843 = vrot.slane %v5838, %v5842
        %v5845 = vadd.f32 %v5830, %v5843
        %v5846 = vadd.f32 %v5831, %v5843
        %v5847 = vadd.f32 %v5832, %v5843
        %v5848 = vadd.f32 %v5833, %v5843
        %v5849 = vadd.f32 %v5834, %v5843
        %v5850 = vadd.f32 %v5835, %v5843
        %v5851 = vadd.f32 %v5836, %v5843
        %v5852 = vadd.f32 %v5837, %v5843
        %v5853 = vadd.f32 %v5845, %v5457
        %v5854 = vadd.f32 %v5846, %v5458
        %v5855 = vadd.f32 %v5847, %v5459
        %v5856 = vadd.f32 %v5848, %v5460
        %v5857 = vadd.f32 %v5849, %v5461
        %v5858 = vadd.f32 %v5850, %v5462
        %v5859 = vadd.f32 %v5851, %v5463
        %v5860 = vadd.f32 %v5852, %v5464
        %v5861 = vxor.u32 %v5845, 2147483648
        %v5862 = vxor.u32 %v5846, 2147483648
        %v5863 = vxor.u32 %v5847, 2147483648
        %v5864 = vxor.u32 %v5848, 2147483648
        %v5865 = vxor.u32 %v5849, 2147483648
        %v5866 = vxor.u32 %v5850, 2147483648
        %v5867 = vxor.u32 %v5851, 2147483648
        %v5868 = vxor.u32 %v5852, 2147483648
        %v5869 = vmul.f32 %v5861, 1.442695
        %v5870 = vpow.pop %v5869
        %v5871 = vmul.f32 %v5862, 1.442695
        %v5872 = vpow.pop %v5871
        %v5873 = vmul.f32 %v5863, 1.442695
        %v5874 = vpow.pop %v5873
        %v5875 = vmul.f32 %v5864, 1.442695
        %v5876 = vpow.pop %v5875
        %v5877 = vmul.f32 %v5865, 1.442695
        %v5878 = vpow.pop %v5877
        %v5879 = vmul.f32 %v5866, 1.442695
        %v5880 = vpow.pop %v5879
        %v5881 = vmul.f32 %v5867, 1.442695
        %v5882 = vpow.pop %v5881
        %v5883 = vmul.f32 %v5868, 1.442695
        %v5884 = vpow.pop %v5883
        %v5885 = vadd.f32 %v5870, 1.0
        %v5886 = vadd.f32 %v5872, 1.0
        %v5887 = vadd.f32 %v5874, 1.0
        %v5888 = vadd.f32 %v5876, 1.0
        %v5889 = vadd.f32 %v5878, 1.0
        %v5890 = vadd.f32 %v5880, 1.0
        %v5891 = vadd.f32 %v5882, 1.0
        %v5892 = vadd.f32 %v5884, 1.0
        %v5893 = vrcp.pop %v5885
        %v5894 = vmul.f32 1.0, %v5893
        %v5895 = vrcp.pop %v5886
        %v5896 = vmul.f32 1.0, %v5895
        %v5897 = vrcp.pop %v5887
        %v5898 = vmul.f32 1.0, %v5897
        %v5899 = vrcp.pop %v5888
        %v5900 = vmul.f32 1.0, %v5899
        %v5901 = vrcp.pop %v5889
        %v5902 = vmul.f32 1.0, %v5901
        %v5903 = vrcp.pop %v5890
        %v5904 = vmul.f32 1.0, %v5903
        %v5905 = vrcp.pop %v5891
        %v5906 = vmul.f32 1.0, %v5905
        %v5907 = vrcp.pop %v5892
        %v5908 = vmul.f32 1.0, %v5907
        %5917 = vrot.lane.b32.xlu0 %v5894, 96
        %v5918 = vpop.permute.xlu0 %5917
        %5919 = vrot.lane.b32.xlu0 %v5896, 96
        %v5920 = vpop.permute.xlu0 %5919
        %5921 = vrot.lane.b32.xlu0 %v5898, 96
        %v5922 = vpop.permute.xlu0 %5921
        %5923 = vrot.lane.b32.xlu0 %v5900, 96
        %v5924 = vpop.permute.xlu0 %5923
        %5925 = vrot.lane.b32.xlu0 %v5902, 96
        %v5926 = vpop.permute.xlu0 %5925
        %5927 = vrot.lane.b32.xlu0 %v5904, 96
        %v5928 = vpop.permute.xlu0 %5927
        %5929 = vrot.lane.b32.xlu0 %v5906, 96
        %v5930 = vpop.permute.xlu0 %5929
        %5931 = vrot.lane.b32.xlu0 %v5908, 96
        %v5932 = vpop.permute.xlu0 %5931
        %v5941 = vmul.f32 %v5853, %v5918
        %v5942 = vmul.f32 %v5854, %v5920
        %v5943 = vmul.f32 %v5855, %v5922
        %v5944 = vmul.f32 %v5856, %v5924
        %v5945 = vmul.f32 %v5857, %v5926
        %v5946 = vmul.f32 %v5858, %v5928
        %v5947 = vmul.f32 %v5859, %v5930
        %v5948 = vmul.f32 %v5860, %v5932
        %v5949 = vsel %vm2431, %v5941, 0.0
        %5950 = vadd.xlane.f32.xlu0 %v5949
        %v5951 = vpop.xlane.xlu0 %5950
        %v5952 = vsel %vm2431, %v5942, 0.0
        %5953 = vadd.xlane.f32.xlu0 %v5952
        %v5954 = vpop.xlane.xlu0 %5953
        %v5955 = vsel %vm2431, %v5943, 0.0
        %5956 = vadd.xlane.f32.xlu0 %v5955
        %v5957 = vpop.xlane.xlu0 %5956
        %v5958 = vsel %vm2431, %v5944, 0.0
        %5959 = vadd.xlane.f32.xlu0 %v5958
        %v5960 = vpop.xlane.xlu0 %5959
        %v5961 = vsel %vm2431, %v5945, 0.0
        %5962 = vadd.xlane.f32.xlu0 %v5961
        %v5963 = vpop.xlane.xlu0 %5962
        %v5964 = vsel %vm2431, %v5946, 0.0
        %5965 = vadd.xlane.f32.xlu0 %v5964
        %v5966 = vpop.xlane.xlu0 %5965
        %v5967 = vsel %vm2431, %v5947, 0.0
        %5968 = vadd.xlane.f32.xlu0 %v5967
        %v5969 = vpop.xlane.xlu0 %5968
        %v5970 = vsel %vm2431, %v5948, 0.0
        %5971 = vadd.xlane.f32.xlu0 %v5970
        %v5972 = vpop.xlane.xlu0 %5971
        %v5973 = vmul.f32 %v5951, %v3322
        %v5974 = vmul.f32 %v5954, %v3322
        %v5975 = vmul.f32 %v5957, %v3322
        %v5976 = vmul.f32 %v5960, %v3322
        %v5977 = vmul.f32 %v5963, %v3322
        %v5978 = vmul.f32 %v5966, %v3322
        %v5979 = vmul.f32 %v5969, %v3322
        %v5980 = vmul.f32 %v5972, %v3322
        %v5981 = vadd.f32 %v5973, %v5974
        %v5982 = vrot.slane %v5981, 4
        %v5983 = vadd.f32 %v5981, %v5982
        %v5984 = vrot.slane %v5983, 2
        %v5985 = vadd.f32 %v5983, %v5984
        %v5986 = vrot.slane %v5985, 1
        %v5987 = vadd.f32 %v5985, %v5986
        %v5988 = vadd.f32 %v5975, %v5976
        %v5989 = vrot.slane %v5988, 4
        %v5990 = vadd.f32 %v5988, %v5989
        %v5991 = vrot.slane %v5990, 2
        %v5992 = vadd.f32 %v5990, %v5991
        %v5993 = vrot.slane %v5992, 1
        %v5994 = vadd.f32 %v5992, %v5993
        %v5995 = vadd.f32 %v5977, %v5978
        %v5996 = vrot.slane %v5995, 4
        %v5997 = vadd.f32 %v5995, %v5996
        %v5998 = vrot.slane %v5997, 2
        %v5999 = vadd.f32 %v5997, %v5998
        %v6000 = vrot.slane %v5999, 1
        %v6001 = vadd.f32 %v5999, %v6000
        %v6002 = vadd.f32 %v5979, %v5980
        %v6003 = vrot.slane %v6002, 4
        %v6004 = vadd.f32 %v6002, %v6003
        %v6005 = vrot.slane %v6004, 2
        %v6006 = vadd.f32 %v6004, %v6005
        %v6007 = vrot.slane %v6006, 1
        %v6008 = vadd.f32 %v6006, %v6007
        %v6009 = vmul.f32 %v5987, %v3377
        %v6010 = vmul.f32 %v5994, %v3377
        %v6011 = vmul.f32 %v6001, %v3377
        %v6012 = vmul.f32 %v6008, %v3377
        %v6013 = vsub.f32 %v5941, %v6009
        %v6014 = vsub.f32 %v5942, %v6009
        %v6015 = vsub.f32 %v5943, %v6010
        %v6016 = vsub.f32 %v5944, %v6010
        %v6017 = vsub.f32 %v5945, %v6011
        %v6018 = vsub.f32 %v5946, %v6011
        %v6019 = vsub.f32 %v5947, %v6012
        %v6020 = vsub.f32 %v5948, %v6012
        %v6021 = vmul.f32 %v6013, %v6013
        %v6022 = vmul.f32 %v6014, %v6014
        %v6023 = vmul.f32 %v6015, %v6015
        %v6024 = vmul.f32 %v6016, %v6016
        %v6025 = vmul.f32 %v6017, %v6017
        %v6026 = vmul.f32 %v6018, %v6018
        %v6027 = vmul.f32 %v6019, %v6019
        %v6028 = vmul.f32 %v6020, %v6020
        %v6029 = vsel %vm2431, %v6021, 0.0
        %6030 = vadd.xlane.f32.xlu0 %v6029
        %v6031 = vpop.xlane.xlu0 %6030
        %v6032 = vsel %vm2431, %v6022, 0.0
        %6033 = vadd.xlane.f32.xlu0 %v6032
        %v6034 = vpop.xlane.xlu0 %6033
        %v6035 = vsel %vm2431, %v6023, 0.0
        %6036 = vadd.xlane.f32.xlu0 %v6035
        %v6037 = vpop.xlane.xlu0 %6036
        %v6038 = vsel %vm2431, %v6024, 0.0
        %6039 = vadd.xlane.f32.xlu0 %v6038
        %v6040 = vpop.xlane.xlu0 %6039
        %v6041 = vsel %vm2431, %v6025, 0.0
        %6042 = vadd.xlane.f32.xlu0 %v6041
        %v6043 = vpop.xlane.xlu0 %6042
        %v6044 = vsel %vm2431, %v6026, 0.0
        %6045 = vadd.xlane.f32.xlu0 %v6044
        %v6046 = vpop.xlane.xlu0 %6045
        %v6047 = vsel %vm2431, %v6027, 0.0
        %6048 = vadd.xlane.f32.xlu0 %v6047
        %v6049 = vpop.xlane.xlu0 %6048
        %v6050 = vsel %vm2431, %v6028, 0.0
        %6051 = vadd.xlane.f32.xlu0 %v6050
        %v6052 = vpop.xlane.xlu0 %6051
        %v6053 = vmul.f32 %v6031, %v3322
        %v6054 = vmul.f32 %v6034, %v3322
        %v6055 = vmul.f32 %v6037, %v3322
        %v6056 = vmul.f32 %v6040, %v3322
        %v6057 = vmul.f32 %v6043, %v3322
        %v6058 = vmul.f32 %v6046, %v3322
        %v6059 = vmul.f32 %v6049, %v3322
        %v6060 = vmul.f32 %v6052, %v3322
        %v6061 = vadd.f32 %v6053, %v6054
        %v6062 = vrot.slane %v6061, 4
        %v6063 = vadd.f32 %v6061, %v6062
        %v6064 = vrot.slane %v6063, 2
        %v6065 = vadd.f32 %v6063, %v6064
        %v6066 = vrot.slane %v6065, 1
        %v6067 = vadd.f32 %v6065, %v6066
        %v6068 = vadd.f32 %v6055, %v6056
        %v6069 = vrot.slane %v6068, 4
        %v6070 = vadd.f32 %v6068, %v6069
        %v6071 = vrot.slane %v6070, 2
        %v6072 = vadd.f32 %v6070, %v6071
        %v6073 = vrot.slane %v6072, 1
        %v6074 = vadd.f32 %v6072, %v6073
        %v6075 = vadd.f32 %v6057, %v6058
        %v6076 = vrot.slane %v6075, 4
        %v6077 = vadd.f32 %v6075, %v6076
        %v6078 = vrot.slane %v6077, 2
        %v6079 = vadd.f32 %v6077, %v6078
        %v6080 = vrot.slane %v6079, 1
        %v6081 = vadd.f32 %v6079, %v6080
        %v6082 = vadd.f32 %v6059, %v6060
        %v6083 = vrot.slane %v6082, 4
        %v6084 = vadd.f32 %v6082, %v6083
        %v6085 = vrot.slane %v6084, 2
        %v6086 = vadd.f32 %v6084, %v6085
        %v6087 = vrot.slane %v6086, 1
        %v6088 = vadd.f32 %v6086, %v6087
        %v6089 = vmul.f32 %v6067, %v3377
        %v6090 = vmul.f32 %v6074, %v3377
        %v6091 = vmul.f32 %v6081, %v3377
        %v6092 = vmul.f32 %v6088, %v3377
        %v6093 = vadd.f32 %v6089, 1e-05
        %v6094 = vadd.f32 %v6090, 1e-05
        %v6095 = vadd.f32 %v6091, 1e-05
        %v6096 = vadd.f32 %v6092, 1e-05
        %v6097 = vrsqrt.pop %v6093
        %v6098 = vrsqrt.pop %v6094
        %v6099 = vrsqrt.pop %v6095
        %v6100 = vrsqrt.pop %v6096
        %v6101 = vmul.f32 %v6013, %v6097
        %v6102 = vmul.f32 %v6014, %v6097
        %v6103 = vmul.f32 %v6015, %v6098
        %v6104 = vmul.f32 %v6016, %v6098
        %v6105 = vmul.f32 %v6017, %v6099
        %v6106 = vmul.f32 %v6018, %v6099
        %v6107 = vmul.f32 %v6019, %v6100
        %v6108 = vmul.f32 %v6020, %v6100
        %v6109 = vld [vmem:[#allocation44] sm:$0xff]
        %v6110 = vld [vmem:[#allocation44 + $0x8] sm:$0xff]
        %v6111 = vmul.f32 %v6101, %v6109
        %v6112 = vmul.f32 %v6102, %v6110
        %v6113 = vmul.f32 %v6103, %v6109
        %v6114 = vmul.f32 %v6104, %v6110
        %v6115 = vmul.f32 %v6105, %v6109
        %v6116 = vmul.f32 %v6106, %v6110
        %v6117 = vmul.f32 %v6107, %v6109
        %v6118 = vmul.f32 %v6108, %v6110
        %v6119 = vld [vmem:[#allocation42] sm:$0xff]
        %v6120 = vld [vmem:[#allocation42 + $0x8] sm:$0xff]
        %v6121 = vadd.f32 %v6111, %v6119
        %v6122 = vadd.f32 %v6112, %v6120
        %v6123 = vadd.f32 %v6113, %v6119
        %v6124 = vadd.f32 %v6114, %v6120
        %v6125 = vadd.f32 %v6115, %v6119
        %v6126 = vadd.f32 %v6116, %v6120
        %v6127 = vadd.f32 %v6117, %v6119
        %v6128 = vadd.f32 %v6118, %v6120
        %v6129 = vld [vmem:[%s101] sm:$0x1]
        %v6131 = vlaneseq
        %v6132 = vshrl.u32 %v6131, 7
        %v6133 = vsub.s32 0, %v6132
        %v6134 = vrot.slane %v6129, %v6133
        %v6136 = vmul.f32 %v2070, %v6134
        %v6137 = vmul.f32 %v2075, %v6134
        %v6138 = vmul.f32 %v2080, %v6134
        %v6139 = vmul.f32 %v2085, %v6134
        %v6140 = vmul.f32 %v2090, %v6134
        %v6141 = vmul.f32 %v2095, %v6134
        %v6142 = vmul.f32 %v2100, %v6134
        %v6143 = vmul.f32 %v2105, %v6134
        %v6144 = vadd.f32 %v6136, 0.0
        %v6145 = vadd.f32 %v6137, 0.0
        %v6146 = vadd.f32 %v6138, 0.0
        %v6147 = vadd.f32 %v6139, 0.0
        %v6148 = vadd.f32 %v6140, 0.0
        %v6149 = vadd.f32 %v6141, 0.0
        %v6150 = vadd.f32 %v6142, 0.0
        %v6151 = vadd.f32 %v6143, 0.0
        %s6152 = scalar_lea.vmem %s101, 1
        %v6153 = vld [vmem:[%s6152] sm:$0x1]
        %v6155 = vlaneseq
        %v6156 = vshrl.u32 %v6155, 7
        %v6157 = vsub.s32 0, %v6156
        %v6158 = vrot.slane %v6153, %v6157
        %v6160 = vmul.f32 %v2080, %v6158
        %v6161 = vmul.f32 %v2085, %v6158
        %v6162 = vmul.f32 %v2090, %v6158
        %v6163 = vmul.f32 %v2095, %v6158
        %v6164 = vmul.f32 %v2100, %v6158
        %v6165 = vmul.f32 %v2105, %v6158
        %v6166 = vmul.f32 %v2110, %v6158
        %v6167 = vmul.f32 %v2115, %v6158
        %v6168 = vadd.f32 %v6144, %v6160
        %v6169 = vadd.f32 %v6145, %v6161
        %v6170 = vadd.f32 %v6146, %v6162
        %v6171 = vadd.f32 %v6147, %v6163
        %v6172 = vadd.f32 %v6148, %v6164
        %v6173 = vadd.f32 %v6149, %v6165
        %v6174 = vadd.f32 %v6150, %v6166
        %v6175 = vadd.f32 %v6151, %v6167
        %s6176 = scalar_lea.vmem %s101, 2
        %v6177 = vld [vmem:[%s6176] sm:$0x1]
        %v6179 = vlaneseq
        %v6180 = vshrl.u32 %v6179, 7
        %v6181 = vsub.s32 0, %v6180
        %v6182 = vrot.slane %v6177, %v6181
        %v6184 = vmul.f32 %v2090, %v6182
        %v6185 = vmul.f32 %v2095, %v6182
        %v6186 = vmul.f32 %v2100, %v6182
        %v6187 = vmul.f32 %v2105, %v6182
        %v6188 = vmul.f32 %v2110, %v6182
        %v6189 = vmul.f32 %v2115, %v6182
        %v6190 = vmul.f32 %v2120, %v6182
        %v6191 = vmul.f32 %v2125, %v6182
        %v6192 = vadd.f32 %v6168, %v6184
        %v6193 = vadd.f32 %v6169, %v6185
        %v6194 = vadd.f32 %v6170, %v6186
        %v6195 = vadd.f32 %v6171, %v6187
        %v6196 = vadd.f32 %v6172, %v6188
        %v6197 = vadd.f32 %v6173, %v6189
        %v6198 = vadd.f32 %v6174, %v6190
        %v6199 = vadd.f32 %v6175, %v6191
        %s6200 = scalar_lea.vmem %s101, 3
        %v6201 = vld [vmem:[%s6200] sm:$0x1]
        %v6203 = vlaneseq
        %v6204 = vshrl.u32 %v6203, 7
        %v6205 = vsub.s32 0, %v6204
        %v6206 = vrot.slane %v6201, %v6205
        %v6208 = vmul.f32 %v2100, %v6206
        %v6209 = vmul.f32 %v2105, %v6206
        %v6210 = vmul.f32 %v2110, %v6206
        %v6211 = vmul.f32 %v2115, %v6206
        %v6212 = vmul.f32 %v2120, %v6206
        %v6213 = vmul.f32 %v2125, %v6206
        %v6214 = vmul.f32 %v2130, %v6206
        %v6215 = vmul.f32 %v2135, %v6206
        %v6216 = vadd.f32 %v6192, %v6208
        %v6217 = vadd.f32 %v6193, %v6209
        %v6218 = vadd.f32 %v6194, %v6210
        %v6219 = vadd.f32 %v6195, %v6211
        %v6220 = vadd.f32 %v6196, %v6212
        %v6221 = vadd.f32 %v6197, %v6213
        %v6222 = vadd.f32 %v6198, %v6214
        %v6223 = vadd.f32 %v6199, %v6215
        %s6224 = scalar_lea.vmem %s101, 4
        %v6225 = vld [vmem:[%s6224] sm:$0x1]
        %v6227 = vlaneseq
        %v6228 = vshrl.u32 %v6227, 7
        %v6229 = vsub.s32 0, %v6228
        %v6230 = vrot.slane %v6225, %v6229
        %v6232 = vmul.f32 %v2110, %v6230
        %v6233 = vmul.f32 %v2115, %v6230
        %v6234 = vmul.f32 %v2120, %v6230
        %v6235 = vmul.f32 %v2125, %v6230
        %v6236 = vmul.f32 %v2130, %v6230
        %v6237 = vmul.f32 %v2135, %v6230
        %v6238 = vmul.f32 %v2176, %v6230
        %v6239 = vmul.f32 %v2181, %v6230
        %v6240 = vadd.f32 %v6216, %v6232
        %v6241 = vadd.f32 %v6217, %v6233
        %v6242 = vadd.f32 %v6218, %v6234
        %v6243 = vadd.f32 %v6219, %v6235
        %v6244 = vadd.f32 %v6220, %v6236
        %v6245 = vadd.f32 %v6221, %v6237
        %v6246 = vadd.f32 %v6222, %v6238
        %v6247 = vadd.f32 %v6223, %v6239
        %v6248 = vld [vmem:[#allocation60] sm:$0x1]
        %v6250 = vlaneseq
        %v6251 = vshrl.u32 %v6250, 7
        %v6252 = vsub.s32 0, %v6251
        %v6253 = vrot.slane %v6248, %v6252
        %v6255 = vadd.f32 %v6240, %v6253
        %v6256 = vadd.f32 %v6241, %v6253
        %v6257 = vadd.f32 %v6242, %v6253
        %v6258 = vadd.f32 %v6243, %v6253
        %v6259 = vadd.f32 %v6244, %v6253
        %v6260 = vadd.f32 %v6245, %v6253
        %v6261 = vadd.f32 %v6246, %v6253
        %v6262 = vadd.f32 %v6247, %v6253
        %v6263 = vld [vmem:[#allocation62] sm:$0x1]
        %v6265 = vlaneseq
        %v6266 = vshrl.u32 %v6265, 7
        %v6267 = vsub.s32 0, %v6266
        %v6268 = vrot.slane %v6263, %v6267
        %v6270 = vmul.f32 %v2110, %v6268
        %v6271 = vmul.f32 %v2115, %v6268
        %v6272 = vmul.f32 %v2120, %v6268
        %v6273 = vmul.f32 %v2125, %v6268
        %v6274 = vmul.f32 %v2130, %v6268
        %v6275 = vmul.f32 %v2135, %v6268
        %v6276 = vmul.f32 %v2176, %v6268
        %v6277 = vmul.f32 %v2181, %v6268
        %v6278 = vadd.f32 %v6255, %v6270
        %v6279 = vadd.f32 %v6256, %v6271
        %v6280 = vadd.f32 %v6257, %v6272
        %v6281 = vadd.f32 %v6258, %v6273
        %v6282 = vadd.f32 %v6259, %v6274
        %v6283 = vadd.f32 %v6260, %v6275
        %v6284 = vadd.f32 %v6261, %v6276
        %v6285 = vadd.f32 %v6262, %v6277
        %v6286 = vxor.u32 %v6255, 2147483648
        %v6287 = vxor.u32 %v6256, 2147483648
        %v6288 = vxor.u32 %v6257, 2147483648
        %v6289 = vxor.u32 %v6258, 2147483648
        %v6290 = vxor.u32 %v6259, 2147483648
        %v6291 = vxor.u32 %v6260, 2147483648
        %v6292 = vxor.u32 %v6261, 2147483648
        %v6293 = vxor.u32 %v6262, 2147483648
        %v6294 = vmul.f32 %v6286, 1.442695
        %v6295 = vpow.pop %v6294
        %v6296 = vmul.f32 %v6287, 1.442695
        %v6297 = vpow.pop %v6296
        %v6298 = vmul.f32 %v6288, 1.442695
        %v6299 = vpow.pop %v6298
        %v6300 = vmul.f32 %v6289, 1.442695
        %v6301 = vpow.pop %v6300
        %v6302 = vmul.f32 %v6290, 1.442695
        %v6303 = vpow.pop %v6302
        %v6304 = vmul.f32 %v6291, 1.442695
        %v6305 = vpow.pop %v6304
        %v6306 = vmul.f32 %v6292, 1.442695
        %v6307 = vpow.pop %v6306
        %v6308 = vmul.f32 %v6293, 1.442695
        %v6309 = vpow.pop %v6308
        %v6310 = vadd.f32 %v6295, 1.0
        %v6311 = vadd.f32 %v6297, 1.0
        %v6312 = vadd.f32 %v6299, 1.0
        %v6313 = vadd.f32 %v6301, 1.0
        %v6314 = vadd.f32 %v6303, 1.0
        %v6315 = vadd.f32 %v6305, 1.0
        %v6316 = vadd.f32 %v6307, 1.0
        %v6317 = vadd.f32 %v6309, 1.0
        %v6318 = vrcp.pop %v6310
        %v6319 = vmul.f32 1.0, %v6318
        %v6320 = vrcp.pop %v6311
        %v6321 = vmul.f32 1.0, %v6320
        %v6322 = vrcp.pop %v6312
        %v6323 = vmul.f32 1.0, %v6322
        %v6324 = vrcp.pop %v6313
        %v6325 = vmul.f32 1.0, %v6324
        %v6326 = vrcp.pop %v6314
        %v6327 = vmul.f32 1.0, %v6326
        %v6328 = vrcp.pop %v6315
        %v6329 = vmul.f32 1.0, %v6328
        %v6330 = vrcp.pop %v6316
        %v6331 = vmul.f32 1.0, %v6330
        %v6332 = vrcp.pop %v6317
        %v6333 = vmul.f32 1.0, %v6332
        %6342 = vrot.lane.b32.xlu0 %v6319, 96
        %v6343 = vpop.permute.xlu0 %6342
        %6344 = vrot.lane.b32.xlu0 %v6321, 96
        %v6345 = vpop.permute.xlu0 %6344
        %6346 = vrot.lane.b32.xlu0 %v6323, 96
        %v6347 = vpop.permute.xlu0 %6346
        %6348 = vrot.lane.b32.xlu0 %v6325, 96
        %v6349 = vpop.permute.xlu0 %6348
        %6350 = vrot.lane.b32.xlu0 %v6327, 96
        %v6351 = vpop.permute.xlu0 %6350
        %6352 = vrot.lane.b32.xlu0 %v6329, 96
        %v6353 = vpop.permute.xlu0 %6352
        %6354 = vrot.lane.b32.xlu0 %v6331, 96
        %v6355 = vpop.permute.xlu0 %6354
        %6356 = vrot.lane.b32.xlu0 %v6333, 96
        %v6357 = vpop.permute.xlu0 %6356
        %v6366 = vmul.f32 %v6278, %v6343
        %v6367 = vmul.f32 %v6279, %v6345
        %v6368 = vmul.f32 %v6280, %v6347
        %v6369 = vmul.f32 %v6281, %v6349
        %v6370 = vmul.f32 %v6282, %v6351
        %v6371 = vmul.f32 %v6283, %v6353
        %v6372 = vmul.f32 %v6284, %v6355
        %v6373 = vmul.f32 %v6285, %v6357
        %v6374 = vld [vmem:[%s95] sm:$0xff]
        %v6375 = vld [vmem:[%s95 + $0x8] sm:$0xff]
        %v6376 = vld [vmem:[%s95 + $0x10] sm:$0xff]
        %v6377 = vld [vmem:[%s95 + $0x18] sm:$0xff]
        %v6379 = vsel %vm2431, %v6366, 0
        %v6382 = vsel %vm2431, %v6367, 0
        %v6385 = vsel %vm2431, %v6368, 0
        %v6388 = vsel %vm2431, %v6369, 0
        %v6391 = vsel %vm2431, %v6370, 0
        %v6394 = vsel %vm2431, %v6371, 0
        %v6397 = vsel %vm2431, %v6372, 0
        %v6400 = vsel %vm2431, %v6373, 0
        %6402 = vmatprep.subr.mxu0 0.0
        %6403 = vmatpush1.msra.mxu0 %v6374
        %6404 = vmatprep.subr.mxu0 0.0
        %6405 = vmatpush1.msra.mxu0 %v6375
        %6406 = vmatprep.subr.mxu0 0.0
        %6407 = vmatpush1.msra.mxu0 %v6376
        %6408 = vmatprep.subr.mxu0 0.0
        %6409 = vmatpush1.msra.mxu0 %v6377
        %6410 = vmatprep.subr.mxu0 0.0
        %6411 = vmatpush1.msra.mxu0 0.0
        %6412 = vmatprep.subr.mxu0 0.0
        %6413 = vmatpush1.msra.mxu0 0.0
        %6414 = vmatprep.subr.mxu0 0.0
        %6415 = vmatpush1.msra.mxu0 0.0
        %6416 = vmatprep.subr.mxu0 0.0
        %6417 = vmatpush1.msra.mxu0 0.0
        %6418 = vmatprep.subr.mxu0 0.0
        %6419 = vmatpush1.msra.mxu0 0.0
        %6420 = vmatprep.subr.mxu0 0.0
        %6421 = vmatpush1.msra.mxu0 0.0
        %6422 = vmatprep.subr.mxu0 0.0
        %6423 = vmatpush1.msra.mxu0 0.0
        %6424 = vmatprep.subr.mxu0 0.0
        %6425 = vmatpush1.msra.mxu0 0.0
        %6426 = vmatprep.subr.mxu0 0.0
        %6427 = vmatpush1.msra.mxu0 0.0
        %6428 = vmatprep.subr.mxu0 0.0
        %6429 = vmatpush1.msra.mxu0 0.0
        %6430 = vmatprep.subr.mxu0 0.0
        %6431 = vmatpush1.msra.mxu0 0.0
        %6432 = vmatprep.subr.mxu0 0.0
        %6433 = vmatpush1.msra.mxu0 0.0
        %6434 = vmatprep.subr.mxu0 0.0
        %6435 = vmatpush1.msra.mxu0 0.0
        %6436 = vmatprep.subr.mxu0 0.0
        %6437 = vmatpush1.msra.mxu0 0.0
        %6438 = vmatprep.subr.mxu0 0.0
        %6439 = vmatpush1.msra.mxu0 0.0
        %6440 = vmatprep.subr.mxu0 0.0
        %6441 = vmatpush1.msra.mxu0 0.0
        %6442 = vmatprep.subr.mxu0 0.0
        %6443 = vmatpush1.msra.mxu0 0.0
        %6444 = vmatprep.subr.mxu0 0.0
        %6445 = vmatpush1.msra.mxu0 0.0
        %6446 = vmatprep.subr.mxu0 0.0
        %6447 = vmatpush1.msra.mxu0 0.0
        %6448 = vmatprep.subr.mxu0 0.0
        %6449 = vmatpush1.msra.mxu0 0.0
        %6450 = vmatprep.subr.mxu0 0.0
        %6451 = vmatpush1.msra.mxu0 0.0
        %6452 = vmatprep.subr.mxu0 0.0
        %6453 = vmatpush1.msra.mxu0 0.0
        %6454 = vmatprep.subr.mxu0 0.0
        %6455 = vmatpush1.msra.mxu0 0.0
        %6456 = vmatprep.subr.mxu0 0.0
        %6457 = vmatpush1.msra.mxu0 0.0
        %6458 = vmatprep.subr.mxu0 0.0
        %6459 = vmatpush1.msra.mxu0 0.0
        %6460 = vmatprep.subr.mxu0 0.0
        %6461 = vmatpush1.msra.mxu0 0.0
        %6462 = vmatprep.subr.mxu0 0.0
        %6463 = vmatpush1.msra.mxu0 0.0
        %6464 = vmatprep.subr.mxu0 0.0
        %6465 = vmatpush1.msra.mxu0 0.0
        %6466 = vmatprep.mubr.f32.mxu0 0.0
        %6467 = vmatmul.mubr.f32.gmra.mrb[0].mxu0 %v6379
        %v6468 = vpop.f32.mrb[0].mxu0
        %v6469 = vadd.f32 0.0, %v6468
        %v6470 = vpop.f32.mrb[0].mxu0
        %6471 = vmatprep.mubr.f32.mxu0 0.0
        %6472 = vmatmul.mubr.f32.gmra.mrb[0].mxu0 %v6382
        %v6473 = vpop.f32.mrb[0].mxu0
        %v6474 = vadd.f32 0.0, %v6473
        %v6475 = vpop.f32.mrb[0].mxu0
        %6476 = vmatprep.mubr.f32.mxu0 0.0
        %6477 = vmatmul.mubr.f32.gmra.mrb[0].mxu0 %v6385
        %v6478 = vpop.f32.mrb[0].mxu0
        %v6479 = vadd.f32 0.0, %v6478
        %v6480 = vpop.f32.mrb[0].mxu0
        %6481 = vmatprep.mubr.f32.mxu0 0.0
        %6482 = vmatmul.mubr.f32.gmra.mrb[0].mxu0 %v6388
        %v6483 = vpop.f32.mrb[0].mxu0
        %v6484 = vadd.f32 0.0, %v6483
        %v6485 = vpop.f32.mrb[0].mxu0
        %6486 = vmatprep.mubr.f32.mxu0 0.0
        %6487 = vmatmul.mubr.f32.gmra.mrb[0].mxu0 %v6391
        %v6488 = vpop.f32.mrb[0].mxu0
        %v6489 = vadd.f32 0.0, %v6488
        %v6490 = vpop.f32.mrb[0].mxu0
        %6491 = vmatprep.mubr.f32.mxu0 0.0
        %6492 = vmatmul.mubr.f32.gmra.mrb[0].mxu0 %v6394
        %v6493 = vpop.f32.mrb[0].mxu0
        %v6494 = vadd.f32 0.0, %v6493
        %v6495 = vpop.f32.mrb[0].mxu0
        %6496 = vmatprep.mubr.f32.mxu0 0.0
        %6497 = vmatmul.mubr.f32.gmra.mrb[0].mxu0 %v6397
        %v6498 = vpop.f32.mrb[0].mxu0
        %v6499 = vadd.f32 0.0, %v6498
        %v6500 = vpop.f32.mrb[0].mxu0
        %6501 = vmatprep.mubr.f32.mxu0 0.0
        %6502 = vmatmul.mubr.f32.gmra.mrb[0].mxu0 %v6400
        %v6503 = vpop.f32.mrb[0].mxu0
        %v6504 = vadd.f32 0.0, %v6503
        %v6505 = vpop.f32.mrb[0].mxu0
        %6506 = vdwg.mxu0
        %v6507 = vld [vmem:[#allocation57] sm:$0xff]
        %v6508 = vld [vmem:[#allocation57 + $0x8] sm:$0xff]
        %v6509 = vld [vmem:[#allocation57 + $0x10] sm:$0xff]
        %v6510 = vld [vmem:[#allocation57 + $0x18] sm:$0xff]
        %v6511 = vld [vmem:[#allocation57 + $0x20] sm:$0xff]
        %v6512 = vld [vmem:[#allocation57 + $0x28] sm:$0xff]
        %v6513 = vld [vmem:[#allocation57 + $0x30] sm:$0xff]
        %v6514 = vld [vmem:[#allocation57 + $0x38] sm:$0xff]
        %v6515 = vld [vmem:[#allocation59] sm:$0x1]
        %v6517 = vlaneseq
        %v6518 = vshrl.u32 %v6517, 7
        %v6519 = vsub.s32 0, %v6518
        %v6520 = vrot.slane %v6515, %v6519
        %vm6522 = vcmask 523264
        %v6524 = vsel %vm6522, %v6507, 0
        %v6527 = vsel %vm6522, %v6508, 0
        %v6530 = vsel %vm6522, %v6509, 0
        %v6533 = vsel %vm6522, %v6510, 0
        %v6536 = vsel %vm6522, %v6511, 0
        %v6539 = vsel %vm6522, %v6512, 0
        %v6542 = vsel %vm6522, %v6513, 0
        %v6545 = vsel %vm6522, %v6514, 0
        %6547 = vmatprep.subr.mxu0 0.0
        %6548 = vmatpush1.msra.mxu0 %v6469
        %6549 = vmatprep.subr.mxu0 0.0
        %6550 = vmatpush1.msra.mxu0 %v6474
        %6551 = vmatprep.subr.mxu0 0.0
        %6552 = vmatpush1.msra.mxu0 %v6479
        %6553 = vmatprep.subr.mxu0 0.0
        %6554 = vmatpush1.msra.mxu0 %v6484
        %6555 = vmatprep.subr.mxu0 0.0
        %6556 = vmatpush1.msra.mxu0 %v6489
        %6557 = vmatprep.subr.mxu0 0.0
        %6558 = vmatpush1.msra.mxu0 %v6494
        %6559 = vmatprep.subr.mxu0 0.0
        %6560 = vmatpush1.msra.mxu0 %v6499
        %6561 = vmatprep.subr.mxu0 0.0
        %6562 = vmatpush1.msra.mxu0 %v6504
        %6563 = vmatprep.subr.mxu0 0.0
        %6564 = vmatpush1.msra.mxu0 0.0
        %6565 = vmatprep.subr.mxu0 0.0
        %6566 = vmatpush1.msra.mxu0 0.0
        %6567 = vmatprep.subr.mxu0 0.0
        %6568 = vmatpush1.msra.mxu0 0.0
        %6569 = vmatprep.subr.mxu0 0.0
        %6570 = vmatpush1.msra.mxu0 0.0
        %6571 = vmatprep.subr.mxu0 0.0
        %6572 = vmatpush1.msra.mxu0 0.0
        %6573 = vmatprep.subr.mxu0 0.0
        %6574 = vmatpush1.msra.mxu0 0.0
        %6575 = vmatprep.subr.mxu0 0.0
        %6576 = vmatpush1.msra.mxu0 0.0
        %6577 = vmatprep.subr.mxu0 0.0
        %6578 = vmatpush1.msra.mxu0 0.0
        %6579 = vmatprep.subr.mxu0 0.0
        %6580 = vmatpush1.msra.mxu0 0.0
        %6581 = vmatprep.subr.mxu0 0.0
        %6582 = vmatpush1.msra.mxu0 0.0
        %6583 = vmatprep.subr.mxu0 0.0
        %6584 = vmatpush1.msra.mxu0 0.0
        %6585 = vmatprep.subr.mxu0 0.0
        %6586 = vmatpush1.msra.mxu0 0.0
        %6587 = vmatprep.subr.mxu0 0.0
        %6588 = vmatpush1.msra.mxu0 0.0
        %6589 = vmatprep.subr.mxu0 0.0
        %6590 = vmatpush1.msra.mxu0 0.0
        %6591 = vmatprep.subr.mxu0 0.0
        %6592 = vmatpush1.msra.mxu0 0.0
        %6593 = vmatprep.subr.mxu0 0.0
        %6594 = vmatpush1.msra.mxu0 0.0
        %6595 = vmatprep.subr.mxu0 0.0
        %6596 = vmatpush1.msra.mxu0 0.0
        %6597 = vmatprep.subr.mxu0 0.0
        %6598 = vmatpush1.msra.mxu0 0.0
        %6599 = vmatprep.subr.mxu0 0.0
        %6600 = vmatpush1.msra.mxu0 0.0
        %6601 = vmatprep.subr.mxu0 0.0
        %6602 = vmatpush1.msra.mxu0 0.0
        %6603 = vmatprep.subr.mxu0 0.0
        %6604 = vmatpush1.msra.mxu0 0.0
        %6605 = vmatprep.subr.mxu0 0.0
        %6606 = vmatpush1.msra.mxu0 0.0
        %6607 = vmatprep.subr.mxu0 0.0
        %6608 = vmatpush1.msra.mxu0 0.0
        %6609 = vmatprep.subr.mxu0 0.0
        %6610 = vmatpush1.msra.mxu0 0.0
        %6611 = vmatprep.mubr.f32.mxu0 0.0
        %6612 = vmatmul.mubr.f32.gmra.mrb[0].mxu0 %v6524
        %v6613 = vpop.f32.mrb[0].mxu0
        %v6614 = vadd.f32 %v6520, %v6613
        %v6615 = vpop.f32.mrb[0].mxu0
        %6616 = vmatprep.mubr.f32.mxu0 0.0
        %6617 = vmatmul.mubr.f32.gmra.mrb[0].mxu0 %v6527
        %v6618 = vpop.f32.mrb[0].mxu0
        %v6619 = vadd.f32 %v6520, %v6618
        %v6620 = vpop.f32.mrb[0].mxu0
        %6621 = vmatprep.mubr.f32.mxu0 0.0
        %6622 = vmatmul.mubr.f32.gmra.mrb[0].mxu0 %v6530
        %v6623 = vpop.f32.mrb[0].mxu0
        %v6624 = vadd.f32 %v6520, %v6623
        %v6625 = vpop.f32.mrb[0].mxu0
        %6626 = vmatprep.mubr.f32.mxu0 0.0
        %6627 = vmatmul.mubr.f32.gmra.mrb[0].mxu0 %v6533
        %v6628 = vpop.f32.mrb[0].mxu0
        %v6629 = vadd.f32 %v6520, %v6628
        %v6630 = vpop.f32.mrb[0].mxu0
        %6631 = vmatprep.mubr.f32.mxu0 0.0
        %6632 = vmatmul.mubr.f32.gmra.mrb[0].mxu0 %v6536
        %v6633 = vpop.f32.mrb[0].mxu0
        %v6634 = vadd.f32 %v6520, %v6633
        %v6635 = vpop.f32.mrb[0].mxu0
        %6636 = vmatprep.mubr.f32.mxu0 0.0
        %6637 = vmatmul.mubr.f32.gmra.mrb[0].mxu0 %v6539
        %v6638 = vpop.f32.mrb[0].mxu0
        %v6639 = vadd.f32 %v6520, %v6638
        %v6640 = vpop.f32.mrb[0].mxu0
        %6641 = vmatprep.mubr.f32.mxu0 0.0
        %6642 = vmatmul.mubr.f32.gmra.mrb[0].mxu0 %v6542
        %v6643 = vpop.f32.mrb[0].mxu0
        %v6644 = vadd.f32 %v6520, %v6643
        %v6645 = vpop.f32.mrb[0].mxu0
        %6646 = vmatprep.mubr.f32.mxu0 0.0
        %6647 = vmatmul.mubr.f32.gmra.mrb[0].mxu0 %v6545
        %v6648 = vpop.f32.mrb[0].mxu0
        %v6649 = vadd.f32 %v6520, %v6648
        %v6650 = vpop.f32.mrb[0].mxu0
        %6651 = vdwg.mxu0
        %v6652 = vmax.f32 %v6614, 0.0
        %v6653 = vmax.f32 %v6619, 0.0
        %v6654 = vmax.f32 %v6624, 0.0
        %v6655 = vmax.f32 %v6629, 0.0
        %v6656 = vmax.f32 %v6634, 0.0
        %v6657 = vmax.f32 %v6639, 0.0
        %v6658 = vmax.f32 %v6644, 0.0
        %v6659 = vmax.f32 %v6649, 0.0
        %v6660 = vsel %vm2431, %v6652, 0.0
        %6661 = vadd.xlane.f32.xlu0 %v6660
        %v6662 = vpop.xlane.xlu0 %6661
        %v6663 = vsel %vm2431, %v6653, 0.0
        %6664 = vadd.xlane.f32.xlu0 %v6663
        %v6665 = vpop.xlane.xlu0 %6664
        %v6666 = vsel %vm2431, %v6654, 0.0
        %6667 = vadd.xlane.f32.xlu0 %v6666
        %v6668 = vpop.xlane.xlu0 %6667
        %v6669 = vsel %vm2431, %v6655, 0.0
        %6670 = vadd.xlane.f32.xlu0 %v6669
        %v6671 = vpop.xlane.xlu0 %6670
        %v6672 = vsel %vm2431, %v6656, 0.0
        %6673 = vadd.xlane.f32.xlu0 %v6672
        %v6674 = vpop.xlane.xlu0 %6673
        %v6675 = vsel %vm2431, %v6657, 0.0
        %6676 = vadd.xlane.f32.xlu0 %v6675
        %v6677 = vpop.xlane.xlu0 %6676
        %v6678 = vsel %vm2431, %v6658, 0.0
        %6679 = vadd.xlane.f32.xlu0 %v6678
        %v6680 = vpop.xlane.xlu0 %6679
        %v6681 = vsel %vm2431, %v6659, 0.0
        %6682 = vadd.xlane.f32.xlu0 %v6681
        %v6683 = vpop.xlane.xlu0 %6682
        %v6684 = vmul.f32 %v6662, %v3322
        %v6685 = vmul.f32 %v6665, %v3322
        %v6686 = vmul.f32 %v6668, %v3322
        %v6687 = vmul.f32 %v6671, %v3322
        %v6688 = vmul.f32 %v6674, %v3322
        %v6689 = vmul.f32 %v6677, %v3322
        %v6690 = vmul.f32 %v6680, %v3322
        %v6691 = vmul.f32 %v6683, %v3322
        %v6692 = vadd.f32 %v6684, %v6685
        %v6693 = vrot.slane %v6692, 4
        %v6694 = vadd.f32 %v6692, %v6693
        %v6695 = vrot.slane %v6694, 2
        %v6696 = vadd.f32 %v6694, %v6695
        %v6697 = vrot.slane %v6696, 1
        %v6698 = vadd.f32 %v6696, %v6697
        %v6699 = vadd.f32 %v6686, %v6687
        %v6700 = vrot.slane %v6699, 4
        %v6701 = vadd.f32 %v6699, %v6700
        %v6702 = vrot.slane %v6701, 2
        %v6703 = vadd.f32 %v6701, %v6702
        %v6704 = vrot.slane %v6703, 1
        %v6705 = vadd.f32 %v6703, %v6704
        %v6706 = vadd.f32 %v6688, %v6689
        %v6707 = vrot.slane %v6706, 4
        %v6708 = vadd.f32 %v6706, %v6707
        %v6709 = vrot.slane %v6708, 2
        %v6710 = vadd.f32 %v6708, %v6709
        %v6711 = vrot.slane %v6710, 1
        %v6712 = vadd.f32 %v6710, %v6711
        %v6713 = vadd.f32 %v6690, %v6691
        %v6714 = vrot.slane %v6713, 4
        %v6715 = vadd.f32 %v6713, %v6714
        %v6716 = vrot.slane %v6715, 2
        %v6717 = vadd.f32 %v6715, %v6716
        %v6718 = vrot.slane %v6717, 1
        %v6719 = vadd.f32 %v6717, %v6718
        %v6720 = vmul.f32 %v6698, %v3377
        %v6721 = vmul.f32 %v6705, %v3377
        %v6722 = vmul.f32 %v6712, %v3377
        %v6723 = vmul.f32 %v6719, %v3377
        %v6724 = vsub.f32 %v6652, %v6720
        %v6725 = vsub.f32 %v6653, %v6720
        %v6726 = vsub.f32 %v6654, %v6721
        %v6727 = vsub.f32 %v6655, %v6721
        %v6728 = vsub.f32 %v6656, %v6722
        %v6729 = vsub.f32 %v6657, %v6722
        %v6730 = vsub.f32 %v6658, %v6723
        %v6731 = vsub.f32 %v6659, %v6723
        %v6732 = vmul.f32 %v6724, %v6724
        %v6733 = vmul.f32 %v6725, %v6725
        %v6734 = vmul.f32 %v6726, %v6726
        %v6735 = vmul.f32 %v6727, %v6727
        %v6736 = vmul.f32 %v6728, %v6728
        %v6737 = vmul.f32 %v6729, %v6729
        %v6738 = vmul.f32 %v6730, %v6730
        %v6739 = vmul.f32 %v6731, %v6731
        %v6740 = vsel %vm2431, %v6732, 0.0
        %6741 = vadd.xlane.f32.xlu0 %v6740
        %v6742 = vpop.xlane.xlu0 %6741
        %v6743 = vsel %vm2431, %v6733, 0.0
        %6744 = vadd.xlane.f32.xlu0 %v6743
        %v6745 = vpop.xlane.xlu0 %6744
        %v6746 = vsel %vm2431, %v6734, 0.0
        %6747 = vadd.xlane.f32.xlu0 %v6746
        %v6748 = vpop.xlane.xlu0 %6747
        %v6749 = vsel %vm2431, %v6735, 0.0
        %6750 = vadd.xlane.f32.xlu0 %v6749
        %v6751 = vpop.xlane.xlu0 %6750
        %v6752 = vsel %vm2431, %v6736, 0.0
        %6753 = vadd.xlane.f32.xlu0 %v6752
        %v6754 = vpop.xlane.xlu0 %6753
        %v6755 = vsel %vm2431, %v6737, 0.0
        %6756 = vadd.xlane.f32.xlu0 %v6755
        %v6757 = vpop.xlane.xlu0 %6756
        %v6758 = vsel %vm2431, %v6738, 0.0
        %6759 = vadd.xlane.f32.xlu0 %v6758
        %v6760 = vpop.xlane.xlu0 %6759
        %v6761 = vsel %vm2431, %v6739, 0.0
        %6762 = vadd.xlane.f32.xlu0 %v6761
        %v6763 = vpop.xlane.xlu0 %6762
        %v6764 = vmul.f32 %v6742, %v3322
        %v6765 = vmul.f32 %v6745, %v3322
        %v6766 = vmul.f32 %v6748, %v3322
        %v6767 = vmul.f32 %v6751, %v3322
        %v6768 = vmul.f32 %v6754, %v3322
        %v6769 = vmul.f32 %v6757, %v3322
        %v6770 = vmul.f32 %v6760, %v3322
        %v6771 = vmul.f32 %v6763, %v3322
        %v6772 = vadd.f32 %v6764, %v6765
        %v6773 = vrot.slane %v6772, 4
        %v6774 = vadd.f32 %v6772, %v6773
        %v6775 = vrot.slane %v6774, 2
        %v6776 = vadd.f32 %v6774, %v6775
        %v6777 = vrot.slane %v6776, 1
        %v6778 = vadd.f32 %v6776, %v6777
        %v6779 = vadd.f32 %v6766, %v6767
        %v6780 = vrot.slane %v6779, 4
        %v6781 = vadd.f32 %v6779, %v6780
        %v6782 = vrot.slane %v6781, 2
        %v6783 = vadd.f32 %v6781, %v6782
        %v6784 = vrot.slane %v6783, 1
        %v6785 = vadd.f32 %v6783, %v6784
        %v6786 = vadd.f32 %v6768, %v6769
        %v6787 = vrot.slane %v6786, 4
        %v6788 = vadd.f32 %v6786, %v6787
        %v6789 = vrot.slane %v6788, 2
        %v6790 = vadd.f32 %v6788, %v6789
        %v6791 = vrot.slane %v6790, 1
        %v6792 = vadd.f32 %v6790, %v6791
        %v6793 = vadd.f32 %v6770, %v6771
        %v6794 = vrot.slane %v6793, 4
        %v6795 = vadd.f32 %v6793, %v6794
        %v6796 = vrot.slane %v6795, 2
        %v6797 = vadd.f32 %v6795, %v6796
        %v6798 = vrot.slane %v6797, 1
        %v6799 = vadd.f32 %v6797, %v6798
        %v6800 = vmul.f32 %v6778, %v3377
        %v6801 = vmul.f32 %v6785, %v3377
        %v6802 = vmul.f32 %v6792, %v3377
        %v6803 = vmul.f32 %v6799, %v3377
        %v6804 = vadd.f32 %v6800, 1e-05
        %v6805 = vadd.f32 %v6801, 1e-05
        %v6806 = vadd.f32 %v6802, 1e-05
        %v6807 = vadd.f32 %v6803, 1e-05
        %v6808 = vrsqrt.pop %v6804
        %v6809 = vrsqrt.pop %v6805
        %v6810 = vrsqrt.pop %v6806
        %v6811 = vrsqrt.pop %v6807
        %v6812 = vmul.f32 %v6724, %v6808
        %v6813 = vmul.f32 %v6725, %v6808
        %v6814 = vmul.f32 %v6726, %v6809
        %v6815 = vmul.f32 %v6727, %v6809
        %v6816 = vmul.f32 %v6728, %v6810
        %v6817 = vmul.f32 %v6729, %v6810
        %v6818 = vmul.f32 %v6730, %v6811
        %v6819 = vmul.f32 %v6731, %v6811
        %v6820 = vld [vmem:[#allocation56] sm:$0xff]
        %v6821 = vld [vmem:[#allocation56 + $0x8] sm:$0xff]
        %v6822 = vmul.f32 %v6812, %v6820
        %v6823 = vmul.f32 %v6813, %v6821
        %v6824 = vmul.f32 %v6814, %v6820
        %v6825 = vmul.f32 %v6815, %v6821
        %v6826 = vmul.f32 %v6816, %v6820
        %v6827 = vmul.f32 %v6817, %v6821
        %v6828 = vmul.f32 %v6818, %v6820
        %v6829 = vmul.f32 %v6819, %v6821
        %v6830 = vld [vmem:[#allocation54] sm:$0xff]
        %v6831 = vld [vmem:[#allocation54 + $0x8] sm:$0xff]
        %v6832 = vadd.f32 %v6822, %v6830
        %v6833 = vadd.f32 %v6823, %v6831
        %v6834 = vadd.f32 %v6824, %v6830
        %v6835 = vadd.f32 %v6825, %v6831
        %v6836 = vadd.f32 %v6826, %v6830
        %v6837 = vadd.f32 %v6827, %v6831
        %v6838 = vadd.f32 %v6828, %v6830
        %v6839 = vadd.f32 %v6829, %v6831
        %v6840 = vld [vmem:[#allocation3] sm:$0x1]
        %v6842 = vlaneseq
        %v6843 = vshrl.u32 %v6842, 7
        %v6844 = vsub.s32 0, %v6843
        %v6845 = vrot.slane %v6840, %v6844
        %v6847 = vadd.f32 %v6845, 0.0
        %v6848 = vld [vmem:[%s7] sm:$0xff]
        %v6849 = vld [vmem:[%s7 + $0x8] sm:$0xff]
        %v6850 = vld [vmem:[%s7 + $0x10] sm:$0xff]
        %v6851 = vld [vmem:[%s7 + $0x18] sm:$0xff]
        %v6853 = vsel %vm2431, %v6832, 0
        %v6856 = vsel %vm2431, %v6833, 0
        %v6859 = vsel %vm2431, %v6834, 0
        %v6862 = vsel %vm2431, %v6835, 0
        %v6865 = vsel %vm2431, %v6836, 0
        %v6868 = vsel %vm2431, %v6837, 0
        %v6871 = vsel %vm2431, %v6838, 0
        %v6874 = vsel %vm2431, %v6839, 0
        %v6877 = vsel %vm2431, %v6121, 0
        %v6880 = vsel %vm2431, %v6122, 0
        %v6883 = vsel %vm2431, %v6123, 0
        %v6886 = vsel %vm2431, %v6124, 0
        %v6889 = vsel %vm2431, %v6125, 0
        %v6892 = vsel %vm2431, %v6126, 0
        %v6895 = vsel %vm2431, %v6127, 0
        %v6898 = vsel %vm2431, %v6128, 0
        %v6901 = vsel %vm2431, %v4822, 0
        %v6904 = vsel %vm2431, %v4823, 0
        %v6907 = vsel %vm2431, %v4824, 0
        %v6910 = vsel %vm2431, %v4825, 0
        %v6913 = vsel %vm2431, %v4826, 0
        %v6916 = vsel %vm2431, %v4827, 0
        %v6919 = vsel %vm2431, %v4828, 0
        %v6922 = vsel %vm2431, %v4829, 0
        %6924 = vmatprep.subr.mxu0 0.0
        %6925 = vmatpush1.msra.mxu0 %v6848
        %6926 = vmatprep.subr.mxu0 0.0
        %6927 = vmatpush1.msra.mxu0 %v6849
        %6928 = vmatprep.subr.mxu0 0.0
        %6929 = vmatpush1.msra.mxu0 %v6850
        %6930 = vmatprep.subr.mxu0 0.0
        %6931 = vmatpush1.msra.mxu0 %v6851
        %6932 = vmatprep.subr.mxu0 0.0
        %6933 = vmatpush1.msra.mxu0 0.0
        %6934 = vmatprep.subr.mxu0 0.0
        %6935 = vmatpush1.msra.mxu0 0.0
        %6936 = vmatprep.subr.mxu0 0.0
        %6937 = vmatpush1.msra.mxu0 0.0
        %6938 = vmatprep.subr.mxu0 0.0
        %6939 = vmatpush1.msra.mxu0 0.0
        %6940 = vmatprep.subr.mxu0 0.0
        %6941 = vmatpush1.msra.mxu0 0.0
        %6942 = vmatprep.subr.mxu0 0.0
        %6943 = vmatpush1.msra.mxu0 0.0
        %6944 = vmatprep.subr.mxu0 0.0
        %6945 = vmatpush1.msra.mxu0 0.0
        %6946 = vmatprep.subr.mxu0 0.0
        %6947 = vmatpush1.msra.mxu0 0.0
        %6948 = vmatprep.subr.mxu0 0.0
        %6949 = vmatpush1.msra.mxu0 0.0
        %6950 = vmatprep.subr.mxu0 0.0
        %6951 = vmatpush1.msra.mxu0 0.0
        %6952 = vmatprep.subr.mxu0 0.0
        %6953 = vmatpush1.msra.mxu0 0.0
        %6954 = vmatprep.subr.mxu0 0.0
        %6955 = vmatpush1.msra.mxu0 0.0
        %6956 = vmatprep.subr.mxu0 0.0
        %6957 = vmatpush1.msra.mxu0 0.0
        %6958 = vmatprep.subr.mxu0 0.0
        %6959 = vmatpush1.msra.mxu0 0.0
        %6960 = vmatprep.subr.mxu0 0.0
        %6961 = vmatpush1.msra.mxu0 0.0
        %6962 = vmatprep.subr.mxu0 0.0
        %6963 = vmatpush1.msra.mxu0 0.0
        %6964 = vmatprep.subr.mxu0 0.0
        %6965 = vmatpush1.msra.mxu0 0.0
        %6966 = vmatprep.subr.mxu0 0.0
        %6967 = vmatpush1.msra.mxu0 0.0
        %6968 = vmatprep.subr.mxu0 0.0
        %6969 = vmatpush1.msra.mxu0 0.0
        %6970 = vmatprep.subr.mxu0 0.0
        %6971 = vmatpush1.msra.mxu0 0.0
        %6972 = vmatprep.subr.mxu0 0.0
        %6973 = vmatpush1.msra.mxu0 0.0
        %6974 = vmatprep.subr.mxu0 0.0
        %6975 = vmatpush1.msra.mxu0 0.0
        %6976 = vmatprep.subr.mxu0 0.0
        %6977 = vmatpush1.msra.mxu0 0.0
        %6978 = vmatprep.subr.mxu0 0.0
        %6979 = vmatpush1.msra.mxu0 0.0
        %6980 = vmatprep.subr.mxu0 0.0
        %6981 = vmatpush1.msra.mxu0 0.0
        %6982 = vmatprep.subr.mxu0 0.0
        %6983 = vmatpush1.msra.mxu0 0.0
        %6984 = vmatprep.subr.mxu0 0.0
        %6985 = vmatpush1.msra.mxu0 0.0
        %6986 = vmatprep.subr.mxu0 0.0
        %6987 = vmatpush1.msra.mxu0 0.0
        %6988 = vmatprep.mubr.f32.mxu0 0.0
        %6989 = vmatmul.mubr.f32.gmra.mrb[0].mxu0 %v6853
        %v6990 = vpop.f32.mrb[0].mxu0
        %v6991 = vadd.f32 0.0, %v6990
        %v6992 = vpop.f32.mrb[0].mxu0
        %6993 = vmatprep.mubr.f32.mxu0 0.0
        %6994 = vmatmul.mubr.f32.gmra.mrb[0].mxu0 %v6856
        %v6995 = vpop.f32.mrb[0].mxu0
        %v6996 = vadd.f32 0.0, %v6995
        %v6997 = vpop.f32.mrb[0].mxu0
        %6998 = vmatprep.mubr.f32.mxu0 0.0
        %6999 = vmatmul.mubr.f32.gmra.mrb[0].mxu0 %v6859
        %v7000 = vpop.f32.mrb[0].mxu0
        %v7001 = vadd.f32 0.0, %v7000
        %v7002 = vpop.f32.mrb[0].mxu0
        %7003 = vmatprep.mubr.f32.mxu0 0.0
        %7004 = vmatmul.mubr.f32.gmra.mrb[0].mxu0 %v6862
        %v7005 = vpop.f32.mrb[0].mxu0
        %v7006 = vadd.f32 0.0, %v7005
        %v7007 = vpop.f32.mrb[0].mxu0
        %7008 = vmatprep.mubr.f32.mxu0 0.0
        %7009 = vmatmul.mubr.f32.gmra.mrb[0].mxu0 %v6865
        %v7010 = vpop.f32.mrb[0].mxu0
        %v7011 = vadd.f32 0.0, %v7010
        %v7012 = vpop.f32.mrb[0].mxu0
        %7013 = vmatprep.mubr.f32.mxu0 0.0
        %7014 = vmatmul.mubr.f32.gmra.mrb[0].mxu0 %v6868
        %v7015 = vpop.f32.mrb[0].mxu0
        %v7016 = vadd.f32 0.0, %v7015
        %v7017 = vpop.f32.mrb[0].mxu0
        %7018 = vmatprep.mubr.f32.mxu0 0.0
        %7019 = vmatmul.mubr.f32.gmra.mrb[0].mxu0 %v6871
        %v7020 = vpop.f32.mrb[0].mxu0
        %v7021 = vadd.f32 0.0, %v7020
        %v7022 = vpop.f32.mrb[0].mxu0
        %7023 = vmatprep.mubr.f32.mxu0 0.0
        %7024 = vmatmul.mubr.f32.gmra.mrb[0].mxu0 %v6874
        %v7025 = vpop.f32.mrb[0].mxu0
        %v7026 = vadd.f32 0.0, %v7025
        %v7027 = vpop.f32.mrb[0].mxu0
        %7028 = vmatprep.mubr.f32.mxu0 0.0
        %7029 = vmatmul.mubr.f32.gmra.mrb[0].mxu0 %v6877
        %v7030 = vpop.f32.mrb[0].mxu0
        %v7031 = vadd.f32 0.0, %v7030
        %v7032 = vpop.f32.mrb[0].mxu0
        %7033 = vmatprep.mubr.f32.mxu0 0.0
        %7034 = vmatmul.mubr.f32.gmra.mrb[0].mxu0 %v6880
        %v7035 = vpop.f32.mrb[0].mxu0
        %v7036 = vadd.f32 0.0, %v7035
        %v7037 = vpop.f32.mrb[0].mxu0
        %7038 = vmatprep.mubr.f32.mxu0 0.0
        %7039 = vmatmul.mubr.f32.gmra.mrb[0].mxu0 %v6883
        %v7040 = vpop.f32.mrb[0].mxu0
        %v7041 = vadd.f32 0.0, %v7040
        %v7042 = vpop.f32.mrb[0].mxu0
        %7043 = vmatprep.mubr.f32.mxu0 0.0
        %7044 = vmatmul.mubr.f32.gmra.mrb[0].mxu0 %v6886
        %v7045 = vpop.f32.mrb[0].mxu0
        %v7046 = vadd.f32 0.0, %v7045
        %v7047 = vpop.f32.mrb[0].mxu0
        %7048 = vmatprep.mubr.f32.mxu0 0.0
        %7049 = vmatmul.mubr.f32.gmra.mrb[0].mxu0 %v6889
        %v7050 = vpop.f32.mrb[0].mxu0
        %v7051 = vadd.f32 0.0, %v7050
        %v7052 = vpop.f32.mrb[0].mxu0
        %7053 = vmatprep.mubr.f32.mxu0 0.0
        %7054 = vmatmul.mubr.f32.gmra.mrb[0].mxu0 %v6892
        %v7055 = vpop.f32.mrb[0].mxu0
        %v7056 = vadd.f32 0.0, %v7055
        %v7057 = vpop.f32.mrb[0].mxu0
        %7058 = vmatprep.mubr.f32.mxu0 0.0
        %7059 = vmatmul.mubr.f32.gmra.mrb[0].mxu0 %v6895
        %v7060 = vpop.f32.mrb[0].mxu0
        %v7061 = vadd.f32 0.0, %v7060
        %v7062 = vpop.f32.mrb[0].mxu0
        %7063 = vmatprep.mubr.f32.mxu0 0.0
        %7064 = vmatmul.mubr.f32.gmra.mrb[0].mxu0 %v6898
        %v7065 = vpop.f32.mrb[0].mxu0
        %v7066 = vadd.f32 0.0, %v7065
        %v7067 = vpop.f32.mrb[0].mxu0
        %7068 = vmatprep.mubr.f32.mxu0 0.0
        %7069 = vmatmul.mubr.f32.gmra.mrb[0].mxu0 %v6901
        %v7070 = vpop.f32.mrb[0].mxu0
        %v7071 = vadd.f32 0.0, %v7070
        %v7072 = vpop.f32.mrb[0].mxu0
        %7073 = vmatprep.mubr.f32.mxu0 0.0
        %7074 = vmatmul.mubr.f32.gmra.mrb[0].mxu0 %v6904
        %v7075 = vpop.f32.mrb[0].mxu0
        %v7076 = vadd.f32 0.0, %v7075
        %v7077 = vpop.f32.mrb[0].mxu0
        %7078 = vmatprep.mubr.f32.mxu0 0.0
        %7079 = vmatmul.mubr.f32.gmra.mrb[0].mxu0 %v6907
        %v7080 = vpop.f32.mrb[0].mxu0
        %v7081 = vadd.f32 0.0, %v7080
        %v7082 = vpop.f32.mrb[0].mxu0
        %7083 = vmatprep.mubr.f32.mxu0 0.0
        %7084 = vmatmul.mubr.f32.gmra.mrb[0].mxu0 %v6910
        %v7085 = vpop.f32.mrb[0].mxu0
        %v7086 = vadd.f32 0.0, %v7085
        %v7087 = vpop.f32.mrb[0].mxu0
        %7088 = vmatprep.mubr.f32.mxu0 0.0
        %7089 = vmatmul.mubr.f32.gmra.mrb[0].mxu0 %v6913
        %v7090 = vpop.f32.mrb[0].mxu0
        %v7091 = vadd.f32 0.0, %v7090
        %v7092 = vpop.f32.mrb[0].mxu0
        %7093 = vmatprep.mubr.f32.mxu0 0.0
        %7094 = vmatmul.mubr.f32.gmra.mrb[0].mxu0 %v6916
        %v7095 = vpop.f32.mrb[0].mxu0
        %v7096 = vadd.f32 0.0, %v7095
        %v7097 = vpop.f32.mrb[0].mxu0
        %7098 = vmatprep.mubr.f32.mxu0 0.0
        %7099 = vmatmul.mubr.f32.gmra.mrb[0].mxu0 %v6919
        %v7100 = vpop.f32.mrb[0].mxu0
        %v7101 = vadd.f32 0.0, %v7100
        %v7102 = vpop.f32.mrb[0].mxu0
        %7103 = vmatprep.mubr.f32.mxu0 0.0
        %7104 = vmatmul.mubr.f32.gmra.mrb[0].mxu0 %v6922
        %v7105 = vpop.f32.mrb[0].mxu0
        %v7106 = vadd.f32 0.0, %v7105
        %v7107 = vpop.f32.mrb[0].mxu0
        %7108 = vdwg.mxu0
        %v7109 = vld [vmem:[#allocation6] sm:$0xff]
        %v7110 = vld [vmem:[#allocation6 + $0x8] sm:$0xff]
        %v7111 = vld [vmem:[#allocation6 + $0x10] sm:$0xff]
        %v7112 = vld [vmem:[#allocation6 + $0x18] sm:$0xff]
        %v7113 = vld [vmem:[#allocation6 + $0x20] sm:$0xff]
        %v7114 = vld [vmem:[#allocation6 + $0x28] sm:$0xff]
        %v7115 = vld [vmem:[#allocation6 + $0x30] sm:$0xff]
        %v7116 = vld [vmem:[#allocation6 + $0x38] sm:$0xff]
        %v7117 = vld [vmem:[#allocation6 + $0x40] sm:$0xff]
        %v7118 = vld [vmem:[#allocation6 + $0x48] sm:$0xff]
        %v7119 = vld [vmem:[#allocation6 + $0x50] sm:$0xff]
        %v7120 = vld [vmem:[#allocation6 + $0x58] sm:$0xff]
        %v7121 = vld [vmem:[#allocation6 + $0x60] sm:$0xff]
        %v7122 = vld [vmem:[#allocation6 + $0x68] sm:$0xff]
        %v7123 = vld [vmem:[#allocation6 + $0x70] sm:$0xff]
        %v7124 = vld [vmem:[#allocation6 + $0x78] sm:$0xff]
        %v7126 = vsel %vm6522, %v7110, 0
        %v7129 = vsel %vm6522, %v7112, 0
        %v7132 = vsel %vm6522, %v7114, 0
        %v7135 = vsel %vm6522, %v7116, 0
        %v7138 = vsel %vm6522, %v7118, 0
        %v7141 = vsel %vm6522, %v7120, 0
        %v7144 = vsel %vm6522, %v7122, 0
        %v7147 = vsel %vm6522, %v7124, 0
        %7149 = vmatprep.subr.mxu0 0.0
        %7150 = vmatpush1.msra.mxu0 %v6991
        %7151 = vmatprep.subr.mxu0 0.0
        %7152 = vmatpush1.msra.mxu0 %v6996
        %7153 = vmatprep.subr.mxu0 0.0
        %7154 = vmatpush1.msra.mxu0 %v7001
        %7155 = vmatprep.subr.mxu0 0.0
        %7156 = vmatpush1.msra.mxu0 %v7006
        %7157 = vmatprep.subr.mxu0 0.0
        %7158 = vmatpush1.msra.mxu0 %v7011
        %7159 = vmatprep.subr.mxu0 0.0
        %7160 = vmatpush1.msra.mxu0 %v7016
        %7161 = vmatprep.subr.mxu0 0.0
        %7162 = vmatpush1.msra.mxu0 %v7021
        %7163 = vmatprep.subr.mxu0 0.0
        %7164 = vmatpush1.msra.mxu0 %v7026
        %7165 = vmatprep.subr.mxu0 0.0
        %7166 = vmatpush1.msra.mxu0 %v7031
        %7167 = vmatprep.subr.mxu0 0.0
        %7168 = vmatpush1.msra.mxu0 %v7036
        %7169 = vmatprep.subr.mxu0 0.0
        %7170 = vmatpush1.msra.mxu0 %v7041
        %7171 = vmatprep.subr.mxu0 0.0
        %7172 = vmatpush1.msra.mxu0 %v7046
        %7173 = vmatprep.subr.mxu0 0.0
        %7174 = vmatpush1.msra.mxu0 %v7051
        %7175 = vmatprep.subr.mxu0 0.0
        %7176 = vmatpush1.msra.mxu0 %v7056
        %7177 = vmatprep.subr.mxu0 0.0
        %7178 = vmatpush1.msra.mxu0 %v7061
        %7179 = vmatprep.subr.mxu0 0.0
        %7180 = vmatpush1.msra.mxu0 %v7066
        %7181 = vmatprep.subr.mxu0 0.0
        %7182 = vmatpush1.msra.mxu0 %v7071
        %7183 = vmatprep.subr.mxu0 0.0
        %7184 = vmatpush1.msra.mxu0 %v7076
        %7185 = vmatprep.subr.mxu0 0.0
        %7186 = vmatpush1.msra.mxu0 %v7081
        %7187 = vmatprep.subr.mxu0 0.0
        %7188 = vmatpush1.msra.mxu0 %v7086
        %7189 = vmatprep.subr.mxu0 0.0
        %7190 = vmatpush1.msra.mxu0 %v7091
        %7191 = vmatprep.subr.mxu0 0.0
        %7192 = vmatpush1.msra.mxu0 %v7096
        %7193 = vmatprep.subr.mxu0 0.0
        %7194 = vmatpush1.msra.mxu0 %v7101
        %7195 = vmatprep.subr.mxu0 0.0
        %7196 = vmatpush1.msra.mxu0 %v7106
        %7197 = vmatprep.subr.mxu0 0.0
        %7198 = vmatpush1.msra.mxu0 0.0
        %7199 = vmatprep.subr.mxu0 0.0
        %7200 = vmatpush1.msra.mxu0 0.0
        %7201 = vmatprep.subr.mxu0 0.0
        %7202 = vmatpush1.msra.mxu0 0.0
        %7203 = vmatprep.subr.mxu0 0.0
        %7204 = vmatpush1.msra.mxu0 0.0
        %7205 = vmatprep.subr.mxu0 0.0
        %7206 = vmatpush1.msra.mxu0 0.0
        %7207 = vmatprep.subr.mxu0 0.0
        %7208 = vmatpush1.msra.mxu0 0.0
        %7209 = vmatprep.subr.mxu0 0.0
        %7210 = vmatpush1.msra.mxu0 0.0
        %7211 = vmatprep.subr.mxu0 0.0
        %7212 = vmatpush1.msra.mxu0 0.0
        %7213 = vmatprep.mubr.f32.mxu0 %v7126
        %7214 = vmatmul.mubr.f32.gmra.mrb[0].mxu0 %v7109
        %v7215 = vpop.f32.mrb[0].mxu0
        %v7216 = vadd.f32 0.0, %v7215
        %v7217 = vpop.f32.mrb[0].mxu0
        %7218 = vmatprep.mubr.f32.mxu0 %v7129
        %7219 = vmatmul.mubr.f32.gmra.mrb[0].mxu0 %v7111
        %v7220 = vpop.f32.mrb[0].mxu0
        %v7221 = vadd.f32 0.0, %v7220
        %v7222 = vpop.f32.mrb[0].mxu0
        %7223 = vmatprep.mubr.f32.mxu0 %v7132
        %7224 = vmatmul.mubr.f32.gmra.mrb[0].mxu0 %v7113
        %v7225 = vpop.f32.mrb[0].mxu0
        %v7226 = vadd.f32 0.0, %v7225
        %v7227 = vpop.f32.mrb[0].mxu0
        %7228 = vmatprep.mubr.f32.mxu0 %v7135
        %7229 = vmatmul.mubr.f32.gmra.mrb[0].mxu0 %v7115
        %v7230 = vpop.f32.mrb[0].mxu0
        %v7231 = vadd.f32 0.0, %v7230
        %v7232 = vpop.f32.mrb[0].mxu0
        %7233 = vmatprep.mubr.f32.mxu0 %v7138
        %7234 = vmatmul.mubr.f32.gmra.mrb[0].mxu0 %v7117
        %v7235 = vpop.f32.mrb[0].mxu0
        %v7236 = vadd.f32 0.0, %v7235
        %v7237 = vpop.f32.mrb[0].mxu0
        %7238 = vmatprep.mubr.f32.mxu0 %v7141
        %7239 = vmatmul.mubr.f32.gmra.mrb[0].mxu0 %v7119
        %v7240 = vpop.f32.mrb[0].mxu0
        %v7241 = vadd.f32 0.0, %v7240
        %v7242 = vpop.f32.mrb[0].mxu0
        %7243 = vmatprep.mubr.f32.mxu0 %v7144
        %7244 = vmatmul.mubr.f32.gmra.mrb[0].mxu0 %v7121
        %v7245 = vpop.f32.mrb[0].mxu0
        %v7246 = vadd.f32 0.0, %v7245
        %v7247 = vpop.f32.mrb[0].mxu0
        %7248 = vmatprep.mubr.f32.mxu0 %v7147
        %7249 = vmatmul.mubr.f32.gmra.mrb[0].mxu0 %v7123
        %v7250 = vpop.f32.mrb[0].mxu0
        %v7251 = vadd.f32 0.0, %v7250
        %v7252 = vpop.f32.mrb[0].mxu0
        %7253 = vdwg.mxu0
        %v7254 = vadd.f32 %v6847, %v7216
        %v7255 = vadd.f32 %v6847, %v7221
        %v7256 = vadd.f32 %v6847, %v7226
        %v7257 = vadd.f32 %v6847, %v7231
        %v7258 = vadd.f32 %v6847, %v7236
        %v7259 = vadd.f32 %v6847, %v7241
        %v7260 = vadd.f32 %v6847, %v7246
        %v7261 = vadd.f32 %v6847, %v7251
        %s7262 = scalar_lea.vmem %s7, 32
        %v7263 = vld [vmem:[%s7262] sm:$0xff]
        %v7264 = vld [vmem:[%s7262 + $0x8] sm:$0xff]
        %v7265 = vld [vmem:[%s7262 + $0x10] sm:$0xff]
        %v7266 = vld [vmem:[%s7262 + $0x18] sm:$0xff]
        %7267 = vmatprep.subr.mxu0 0.0
        %7268 = vmatpush1.msra.mxu0 %v7263
        %7269 = vmatprep.subr.mxu0 0.0
        %7270 = vmatpush1.msra.mxu0 %v7264
        %7271 = vmatprep.subr.mxu0 0.0
        %7272 = vmatpush1.msra.mxu0 %v7265
        %7273 = vmatprep.subr.mxu0 0.0
        %7274 = vmatpush1.msra.mxu0 %v7266
        %7275 = vmatprep.subr.mxu0 0.0
        %7276 = vmatpush1.msra.mxu0 0.0
        %7277 = vmatprep.subr.mxu0 0.0
        %7278 = vmatpush1.msra.mxu0 0.0
        %7279 = vmatprep.subr.mxu0 0.0
        %7280 = vmatpush1.msra.mxu0 0.0
        %7281 = vmatprep.subr.mxu0 0.0
        %7282 = vmatpush1.msra.mxu0 0.0
        %7283 = vmatprep.subr.mxu0 0.0
        %7284 = vmatpush1.msra.mxu0 0.0
        %7285 = vmatprep.subr.mxu0 0.0
        %7286 = vmatpush1.msra.mxu0 0.0
        %7287 = vmatprep.subr.mxu0 0.0
        %7288 = vmatpush1.msra.mxu0 0.0
        %7289 = vmatprep.subr.mxu0 0.0
        %7290 = vmatpush1.msra.mxu0 0.0
        %7291 = vmatprep.subr.mxu0 0.0
        %7292 = vmatpush1.msra.mxu0 0.0
        %7293 = vmatprep.subr.mxu0 0.0
        %7294 = vmatpush1.msra.mxu0 0.0
        %7295 = vmatprep.subr.mxu0 0.0
        %7296 = vmatpush1.msra.mxu0 0.0
        %7297 = vmatprep.subr.mxu0 0.0
        %7298 = vmatpush1.msra.mxu0 0.0
        %7299 = vmatprep.subr.mxu0 0.0
        %7300 = vmatpush1.msra.mxu0 0.0
        %7301 = vmatprep.subr.mxu0 0.0
        %7302 = vmatpush1.msra.mxu0 0.0
        %7303 = vmatprep.subr.mxu0 0.0
        %7304 = vmatpush1.msra.mxu0 0.0
        %7305 = vmatprep.subr.mxu0 0.0
        %7306 = vmatpush1.msra.mxu0 0.0
        %7307 = vmatprep.subr.mxu0 0.0
        %7308 = vmatpush1.msra.mxu0 0.0
        %7309 = vmatprep.subr.mxu0 0.0
        %7310 = vmatpush1.msra.mxu0 0.0
        %7311 = vmatprep.subr.mxu0 0.0
        %7312 = vmatpush1.msra.mxu0 0.0
        %7313 = vmatprep.subr.mxu0 0.0
        %7314 = vmatpush1.msra.mxu0 0.0
        %7315 = vmatprep.subr.mxu0 0.0
        %7316 = vmatpush1.msra.mxu0 0.0
        %7317 = vmatprep.subr.mxu0 0.0
        %7318 = vmatpush1.msra.mxu0 0.0
        %7319 = vmatprep.subr.mxu0 0.0
        %7320 = vmatpush1.msra.mxu0 0.0
        %7321 = vmatprep.subr.mxu0 0.0
        %7322 = vmatpush1.msra.mxu0 0.0
        %7323 = vmatprep.subr.mxu0 0.0
        %7324 = vmatpush1.msra.mxu0 0.0
        %7325 = vmatprep.subr.mxu0 0.0
        %7326 = vmatpush1.msra.mxu0 0.0
        %7327 = vmatprep.subr.mxu0 0.0
        %7328 = vmatpush1.msra.mxu0 0.0
        %7329 = vmatprep.subr.mxu0 0.0
        %7330 = vmatpush1.msra.mxu0 0.0
        %7331 = vmatprep.mubr.f32.mxu0 0.0
        %7332 = vmatmul.mubr.f32.gmra.mrb[0].mxu0 %v6853
        %v7333 = vpop.f32.mrb[0].mxu0
        %v7334 = vadd.f32 0.0, %v7333
        %v7335 = vpop.f32.mrb[0].mxu0
        %7336 = vmatprep.mubr.f32.mxu0 0.0
        %7337 = vmatmul.mubr.f32.gmra.mrb[0].mxu0 %v6856
        %v7338 = vpop.f32.mrb[0].mxu0
        %v7339 = vadd.f32 0.0, %v7338
        %v7340 = vpop.f32.mrb[0].mxu0
        %7341 = vmatprep.mubr.f32.mxu0 0.0
        %7342 = vmatmul.mubr.f32.gmra.mrb[0].mxu0 %v6859
        %v7343 = vpop.f32.mrb[0].mxu0
        %v7344 = vadd.f32 0.0, %v7343
        %v7345 = vpop.f32.mrb[0].mxu0
        %7346 = vmatprep.mubr.f32.mxu0 0.0
        %7347 = vmatmul.mubr.f32.gmra.mrb[0].mxu0 %v6862
        %v7348 = vpop.f32.mrb[0].mxu0
        %v7349 = vadd.f32 0.0, %v7348
        %v7350 = vpop.f32.mrb[0].mxu0
        %7351 = vmatprep.mubr.f32.mxu0 0.0
        %7352 = vmatmul.mubr.f32.gmra.mrb[0].mxu0 %v6865
        %v7353 = vpop.f32.mrb[0].mxu0
        %v7354 = vadd.f32 0.0, %v7353
        %v7355 = vpop.f32.mrb[0].mxu0
        %7356 = vmatprep.mubr.f32.mxu0 0.0
        %7357 = vmatmul.mubr.f32.gmra.mrb[0].mxu0 %v6868
        %v7358 = vpop.f32.mrb[0].mxu0
        %v7359 = vadd.f32 0.0, %v7358
        %v7360 = vpop.f32.mrb[0].mxu0
        %7361 = vmatprep.mubr.f32.mxu0 0.0
        %7362 = vmatmul.mubr.f32.gmra.mrb[0].mxu0 %v6871
        %v7363 = vpop.f32.mrb[0].mxu0
        %v7364 = vadd.f32 0.0, %v7363
        %v7365 = vpop.f32.mrb[0].mxu0
        %7366 = vmatprep.mubr.f32.mxu0 0.0
        %7367 = vmatmul.mubr.f32.gmra.mrb[0].mxu0 %v6874
        %v7368 = vpop.f32.mrb[0].mxu0
        %v7369 = vadd.f32 0.0, %v7368
        %v7370 = vpop.f32.mrb[0].mxu0
        %7371 = vmatprep.mubr.f32.mxu0 0.0
        %7372 = vmatmul.mubr.f32.gmra.mrb[0].mxu0 %v6877
        %v7373 = vpop.f32.mrb[0].mxu0
        %v7374 = vadd.f32 0.0, %v7373
        %v7375 = vpop.f32.mrb[0].mxu0
        %7376 = vmatprep.mubr.f32.mxu0 0.0
        %7377 = vmatmul.mubr.f32.gmra.mrb[0].mxu0 %v6880
        %v7378 = vpop.f32.mrb[0].mxu0
        %v7379 = vadd.f32 0.0, %v7378
        %v7380 = vpop.f32.mrb[0].mxu0
        %7381 = vmatprep.mubr.f32.mxu0 0.0
        %7382 = vmatmul.mubr.f32.gmra.mrb[0].mxu0 %v6883
        %v7383 = vpop.f32.mrb[0].mxu0
        %v7384 = vadd.f32 0.0, %v7383
        %v7385 = vpop.f32.mrb[0].mxu0
        %7386 = vmatprep.mubr.f32.mxu0 0.0
        %7387 = vmatmul.mubr.f32.gmra.mrb[0].mxu0 %v6886
        %v7388 = vpop.f32.mrb[0].mxu0
        %v7389 = vadd.f32 0.0, %v7388
        %v7390 = vpop.f32.mrb[0].mxu0
        %7391 = vmatprep.mubr.f32.mxu0 0.0
        %7392 = vmatmul.mubr.f32.gmra.mrb[0].mxu0 %v6889
        %v7393 = vpop.f32.mrb[0].mxu0
        %v7394 = vadd.f32 0.0, %v7393
        %v7395 = vpop.f32.mrb[0].mxu0
        %7396 = vmatprep.mubr.f32.mxu0 0.0
        %7397 = vmatmul.mubr.f32.gmra.mrb[0].mxu0 %v6892
        %v7398 = vpop.f32.mrb[0].mxu0
        %v7399 = vadd.f32 0.0, %v7398
        %v7400 = vpop.f32.mrb[0].mxu0
        %7401 = vmatprep.mubr.f32.mxu0 0.0
        %7402 = vmatmul.mubr.f32.gmra.mrb[0].mxu0 %v6895
        %v7403 = vpop.f32.mrb[0].mxu0
        %v7404 = vadd.f32 0.0, %v7403
        %v7405 = vpop.f32.mrb[0].mxu0
        %7406 = vmatprep.mubr.f32.mxu0 0.0
        %7407 = vmatmul.mubr.f32.gmra.mrb[0].mxu0 %v6898
        %v7408 = vpop.f32.mrb[0].mxu0
        %v7409 = vadd.f32 0.0, %v7408
        %v7410 = vpop.f32.mrb[0].mxu0
        %7411 = vmatprep.mubr.f32.mxu0 0.0
        %7412 = vmatmul.mubr.f32.gmra.mrb[0].mxu0 %v6901
        %v7413 = vpop.f32.mrb[0].mxu0
        %v7414 = vadd.f32 0.0, %v7413
        %v7415 = vpop.f32.mrb[0].mxu0
        %7416 = vmatprep.mubr.f32.mxu0 0.0
        %7417 = vmatmul.mubr.f32.gmra.mrb[0].mxu0 %v6904
        %v7418 = vpop.f32.mrb[0].mxu0
        %v7419 = vadd.f32 0.0, %v7418
        %v7420 = vpop.f32.mrb[0].mxu0
        %7421 = vmatprep.mubr.f32.mxu0 0.0
        %7422 = vmatmul.mubr.f32.gmra.mrb[0].mxu0 %v6907
        %v7423 = vpop.f32.mrb[0].mxu0
        %v7424 = vadd.f32 0.0, %v7423
        %v7425 = vpop.f32.mrb[0].mxu0
        %7426 = vmatprep.mubr.f32.mxu0 0.0
        %7427 = vmatmul.mubr.f32.gmra.mrb[0].mxu0 %v6910
        %v7428 = vpop.f32.mrb[0].mxu0
        %v7429 = vadd.f32 0.0, %v7428
        %v7430 = vpop.f32.mrb[0].mxu0
        %7431 = vmatprep.mubr.f32.mxu0 0.0
        %7432 = vmatmul.mubr.f32.gmra.mrb[0].mxu0 %v6913
        %v7433 = vpop.f32.mrb[0].mxu0
        %v7434 = vadd.f32 0.0, %v7433
        %v7435 = vpop.f32.mrb[0].mxu0
        %7436 = vmatprep.mubr.f32.mxu0 0.0
        %7437 = vmatmul.mubr.f32.gmra.mrb[0].mxu0 %v6916
        %v7438 = vpop.f32.mrb[0].mxu0
        %v7439 = vadd.f32 0.0, %v7438
        %v7440 = vpop.f32.mrb[0].mxu0
        %7441 = vmatprep.mubr.f32.mxu0 0.0
        %7442 = vmatmul.mubr.f32.gmra.mrb[0].mxu0 %v6919
        %v7443 = vpop.f32.mrb[0].mxu0
        %v7444 = vadd.f32 0.0, %v7443
        %v7445 = vpop.f32.mrb[0].mxu0
        %7446 = vmatprep.mubr.f32.mxu0 0.0
        %7447 = vmatmul.mubr.f32.gmra.mrb[0].mxu0 %v6922
        %v7448 = vpop.f32.mrb[0].mxu0
        %v7449 = vadd.f32 0.0, %v7448
        %v7450 = vpop.f32.mrb[0].mxu0
        %7451 = vdwg.mxu0
        %s7452 = scalar_lea.vmem [#allocation6], 128
        %v7453 = vld [vmem:[%s7452] sm:$0xff]
        %v7454 = vld [vmem:[%s7452 + $0x8] sm:$0xff]
        %v7455 = vld [vmem:[%s7452 + $0x10] sm:$0xff]
        %v7456 = vld [vmem:[%s7452 + $0x18] sm:$0xff]
        %v7457 = vld [vmem:[%s7452 + $0x20] sm:$0xff]
        %v7458 = vld [vmem:[%s7452 + $0x28] sm:$0xff]
        %v7459 = vld [vmem:[%s7452 + $0x30] sm:$0xff]
        %v7460 = vld [vmem:[%s7452 + $0x38] sm:$0xff]
        %v7461 = vld [vmem:[%s7452 + $0x40] sm:$0xff]
        %v7462 = vld [vmem:[%s7452 + $0x48] sm:$0xff]
        %v7463 = vld [vmem:[%s7452 + $0x50] sm:$0xff]
        %v7464 = vld [vmem:[%s7452 + $0x58] sm:$0xff]
        %v7465 = vld [vmem:[%s7452 + $0x60] sm:$0xff]
        %v7466 = vld [vmem:[%s7452 + $0x68] sm:$0xff]
        %v7467 = vld [vmem:[%s7452 + $0x70] sm:$0xff]
        %v7468 = vld [vmem:[%s7452 + $0x78] sm:$0xff]
        %v7470 = vsel %vm6522, %v7454, 0
        %v7473 = vsel %vm6522, %v7456, 0
        %v7476 = vsel %vm6522, %v7458, 0
        %v7479 = vsel %vm6522, %v7460, 0
        %v7482 = vsel %vm6522, %v7462, 0
        %v7485 = vsel %vm6522, %v7464, 0
        %v7488 = vsel %vm6522, %v7466, 0
        %v7491 = vsel %vm6522, %v7468, 0
        %7493 = vmatprep.subr.mxu0 0.0
        %7494 = vmatpush1.msra.mxu0 %v7334
        %7495 = vmatprep.subr.mxu0 0.0
        %7496 = vmatpush1.msra.mxu0 %v7339
        %7497 = vmatprep.subr.mxu0 0.0
        %7498 = vmatpush1.msra.mxu0 %v7344
        %7499 = vmatprep.subr.mxu0 0.0
        %7500 = vmatpush1.msra.mxu0 %v7349
        %7501 = vmatprep.subr.mxu0 0.0
        %7502 = vmatpush1.msra.mxu0 %v7354
        %7503 = vmatprep.subr.mxu0 0.0
        %7504 = vmatpush1.msra.mxu0 %v7359
        %7505 = vmatprep.subr.mxu0 0.0
        %7506 = vmatpush1.msra.mxu0 %v7364
        %7507 = vmatprep.subr.mxu0 0.0
        %7508 = vmatpush1.msra.mxu0 %v7369
        %7509 = vmatprep.subr.mxu0 0.0
        %7510 = vmatpush1.msra.mxu0 %v7374
        %7511 = vmatprep.subr.mxu0 0.0
        %7512 = vmatpush1.msra.mxu0 %v7379
        %7513 = vmatprep.subr.mxu0 0.0
        %7514 = vmatpush1.msra.mxu0 %v7384
        %7515 = vmatprep.subr.mxu0 0.0
        %7516 = vmatpush1.msra.mxu0 %v7389
        %7517 = vmatprep.subr.mxu0 0.0
        %7518 = vmatpush1.msra.mxu0 %v7394
        %7519 = vmatprep.subr.mxu0 0.0
        %7520 = vmatpush1.msra.mxu0 %v7399
        %7521 = vmatprep.subr.mxu0 0.0
        %7522 = vmatpush1.msra.mxu0 %v7404
        %7523 = vmatprep.subr.mxu0 0.0
        %7524 = vmatpush1.msra.mxu0 %v7409
        %7525 = vmatprep.subr.mxu0 0.0
        %7526 = vmatpush1.msra.mxu0 %v7414
        %7527 = vmatprep.subr.mxu0 0.0
        %7528 = vmatpush1.msra.mxu0 %v7419
        %7529 = vmatprep.subr.mxu0 0.0
        %7530 = vmatpush1.msra.mxu0 %v7424
        %7531 = vmatprep.subr.mxu0 0.0
        %7532 = vmatpush1.msra.mxu0 %v7429
        %7533 = vmatprep.subr.mxu0 0.0
        %7534 = vmatpush1.msra.mxu0 %v7434
        %7535 = vmatprep.subr.mxu0 0.0
        %7536 = vmatpush1.msra.mxu0 %v7439
        %7537 = vmatprep.subr.mxu0 0.0
        %7538 = vmatpush1.msra.mxu0 %v7444
        %7539 = vmatprep.subr.mxu0 0.0
        %7540 = vmatpush1.msra.mxu0 %v7449
        %7541 = vmatprep.subr.mxu0 0.0
        %7542 = vmatpush1.msra.mxu0 0.0
        %7543 = vmatprep.subr.mxu0 0.0
        %7544 = vmatpush1.msra.mxu0 0.0
        %7545 = vmatprep.subr.mxu0 0.0
        %7546 = vmatpush1.msra.mxu0 0.0
        %7547 = vmatprep.subr.mxu0 0.0
        %7548 = vmatpush1.msra.mxu0 0.0
        %7549 = vmatprep.subr.mxu0 0.0
        %7550 = vmatpush1.msra.mxu0 0.0
        %7551 = vmatprep.subr.mxu0 0.0
        %7552 = vmatpush1.msra.mxu0 0.0
        %7553 = vmatprep.subr.mxu0 0.0
        %7554 = vmatpush1.msra.mxu0 0.0
        %7555 = vmatprep.subr.mxu0 0.0
        %7556 = vmatpush1.msra.mxu0 0.0
        %7557 = vmatprep.mubr.f32.mxu0 %v7470
        %7558 = vmatmul.mubr.f32.gmra.mrb[0].mxu0 %v7453
        %v7559 = vpop.f32.mrb[0].mxu0
        %v7560 = vadd.f32 0.0, %v7559
        %v7561 = vpop.f32.mrb[0].mxu0
        %7562 = vmatprep.mubr.f32.mxu0 %v7473
        %7563 = vmatmul.mubr.f32.gmra.mrb[0].mxu0 %v7455
        %v7564 = vpop.f32.mrb[0].mxu0
        %v7565 = vadd.f32 0.0, %v7564
        %v7566 = vpop.f32.mrb[0].mxu0
        %7567 = vmatprep.mubr.f32.mxu0 %v7476
        %7568 = vmatmul.mubr.f32.gmra.mrb[0].mxu0 %v7457
        %v7569 = vpop.f32.mrb[0].mxu0
        %v7570 = vadd.f32 0.0, %v7569
        %v7571 = vpop.f32.mrb[0].mxu0
        %7572 = vmatprep.mubr.f32.mxu0 %v7479
        %7573 = vmatmul.mubr.f32.gmra.mrb[0].mxu0 %v7459
        %v7574 = vpop.f32.mrb[0].mxu0
        %v7575 = vadd.f32 0.0, %v7574
        %v7576 = vpop.f32.mrb[0].mxu0
        %7577 = vmatprep.mubr.f32.mxu0 %v7482
        %7578 = vmatmul.mubr.f32.gmra.mrb[0].mxu0 %v7461
        %v7579 = vpop.f32.mrb[0].mxu0
        %v7580 = vadd.f32 0.0, %v7579
        %v7581 = vpop.f32.mrb[0].mxu0
        %7582 = vmatprep.mubr.f32.mxu0 %v7485
        %7583 = vmatmul.mubr.f32.gmra.mrb[0].mxu0 %v7463
        %v7584 = vpop.f32.mrb[0].mxu0
        %v7585 = vadd.f32 0.0, %v7584
        %v7586 = vpop.f32.mrb[0].mxu0
        %7587 = vmatprep.mubr.f32.mxu0 %v7488
        %7588 = vmatmul.mubr.f32.gmra.mrb[0].mxu0 %v7465
        %v7589 = vpop.f32.mrb[0].mxu0
        %v7590 = vadd.f32 0.0, %v7589
        %v7591 = vpop.f32.mrb[0].mxu0
        %7592 = vmatprep.mubr.f32.mxu0 %v7491
        %7593 = vmatmul.mubr.f32.gmra.mrb[0].mxu0 %v7467
        %v7594 = vpop.f32.mrb[0].mxu0
        %v7595 = vadd.f32 0.0, %v7594
        %v7596 = vpop.f32.mrb[0].mxu0
        %7597 = vdwg.mxu0
        %v7598 = vadd.f32 %v7254, %v7560
        %v7599 = vadd.f32 %v7255, %v7565
        %v7600 = vadd.f32 %v7256, %v7570
        %v7601 = vadd.f32 %v7257, %v7575
        %v7602 = vadd.f32 %v7258, %v7580
        %v7603 = vadd.f32 %v7259, %v7585
        %v7604 = vadd.f32 %v7260, %v7590
        %v7605 = vadd.f32 %v7261, %v7595
        %s7606 = scalar_lea.vmem %s7, 64
        %v7607 = vld [vmem:[%s7606] sm:$0xff]
        %v7608 = vld [vmem:[%s7606 + $0x8] sm:$0xff]
        %v7609 = vld [vmem:[%s7606 + $0x10] sm:$0xff]
        %v7610 = vld [vmem:[%s7606 + $0x18] sm:$0xff]
        %7611 = vmatprep.subr.mxu0 0.0
        %7612 = vmatpush1.msra.mxu0 %v7607
        %7613 = vmatprep.subr.mxu0 0.0
        %7614 = vmatpush1.msra.mxu0 %v7608
        %7615 = vmatprep.subr.mxu0 0.0
        %7616 = vmatpush1.msra.mxu0 %v7609
        %7617 = vmatprep.subr.mxu0 0.0
        %7618 = vmatpush1.msra.mxu0 %v7610
        %7619 = vmatprep.subr.mxu0 0.0
        %7620 = vmatpush1.msra.mxu0 0.0
        %7621 = vmatprep.subr.mxu0 0.0
        %7622 = vmatpush1.msra.mxu0 0.0
        %7623 = vmatprep.subr.mxu0 0.0
        %7624 = vmatpush1.msra.mxu0 0.0
        %7625 = vmatprep.subr.mxu0 0.0
        %7626 = vmatpush1.msra.mxu0 0.0
        %7627 = vmatprep.subr.mxu0 0.0
        %7628 = vmatpush1.msra.mxu0 0.0
        %7629 = vmatprep.subr.mxu0 0.0
        %7630 = vmatpush1.msra.mxu0 0.0
        %7631 = vmatprep.subr.mxu0 0.0
        %7632 = vmatpush1.msra.mxu0 0.0
        %7633 = vmatprep.subr.mxu0 0.0
        %7634 = vmatpush1.msra.mxu0 0.0
        %7635 = vmatprep.subr.mxu0 0.0
        %7636 = vmatpush1.msra.mxu0 0.0
        %7637 = vmatprep.subr.mxu0 0.0
        %7638 = vmatpush1.msra.mxu0 0.0
        %7639 = vmatprep.subr.mxu0 0.0
        %7640 = vmatpush1.msra.mxu0 0.0
        %7641 = vmatprep.subr.mxu0 0.0
        %7642 = vmatpush1.msra.mxu0 0.0
        %7643 = vmatprep.subr.mxu0 0.0
        %7644 = vmatpush1.msra.mxu0 0.0
        %7645 = vmatprep.subr.mxu0 0.0
        %7646 = vmatpush1.msra.mxu0 0.0
        %7647 = vmatprep.subr.mxu0 0.0
        %7648 = vmatpush1.msra.mxu0 0.0
        %7649 = vmatprep.subr.mxu0 0.0
        %7650 = vmatpush1.msra.mxu0 0.0
        %7651 = vmatprep.subr.mxu0 0.0
        %7652 = vmatpush1.msra.mxu0 0.0
        %7653 = vmatprep.subr.mxu0 0.0
        %7654 = vmatpush1.msra.mxu0 0.0
        %7655 = vmatprep.subr.mxu0 0.0
        %7656 = vmatpush1.msra.mxu0 0.0
        %7657 = vmatprep.subr.mxu0 0.0
        %7658 = vmatpush1.msra.mxu0 0.0
        %7659 = vmatprep.subr.mxu0 0.0
        %7660 = vmatpush1.msra.mxu0 0.0
        %7661 = vmatprep.subr.mxu0 0.0
        %7662 = vmatpush1.msra.mxu0 0.0
        %7663 = vmatprep.subr.mxu0 0.0
        %7664 = vmatpush1.msra.mxu0 0.0
        %7665 = vmatprep.subr.mxu0 0.0
        %7666 = vmatpush1.msra.mxu0 0.0
        %7667 = vmatprep.subr.mxu0 0.0
        %7668 = vmatpush1.msra.mxu0 0.0
        %7669 = vmatprep.subr.mxu0 0.0
        %7670 = vmatpush1.msra.mxu0 0.0
        %7671 = vmatprep.subr.mxu0 0.0
        %7672 = vmatpush1.msra.mxu0 0.0
        %7673 = vmatprep.subr.mxu0 0.0
        %7674 = vmatpush1.msra.mxu0 0.0
        %7675 = vmatprep.mubr.f32.mxu0 0.0
        %7676 = vmatmul.mubr.f32.gmra.mrb[0].mxu0 %v6853
        %v7677 = vpop.f32.mrb[0].mxu0
        %v7678 = vadd.f32 0.0, %v7677
        %v7679 = vpop.f32.mrb[0].mxu0
        %7680 = vmatprep.mubr.f32.mxu0 0.0
        %7681 = vmatmul.mubr.f32.gmra.mrb[0].mxu0 %v6856
        %v7682 = vpop.f32.mrb[0].mxu0
        %v7683 = vadd.f32 0.0, %v7682
        %v7684 = vpop.f32.mrb[0].mxu0
        %7685 = vmatprep.mubr.f32.mxu0 0.0
        %7686 = vmatmul.mubr.f32.gmra.mrb[0].mxu0 %v6859
        %v7687 = vpop.f32.mrb[0].mxu0
        %v7688 = vadd.f32 0.0, %v7687
        %v7689 = vpop.f32.mrb[0].mxu0
        %7690 = vmatprep.mubr.f32.mxu0 0.0
        %7691 = vmatmul.mubr.f32.gmra.mrb[0].mxu0 %v6862
        %v7692 = vpop.f32.mrb[0].mxu0
        %v7693 = vadd.f32 0.0, %v7692
        %v7694 = vpop.f32.mrb[0].mxu0
        %7695 = vmatprep.mubr.f32.mxu0 0.0
        %7696 = vmatmul.mubr.f32.gmra.mrb[0].mxu0 %v6865
        %v7697 = vpop.f32.mrb[0].mxu0
        %v7698 = vadd.f32 0.0, %v7697
        %v7699 = vpop.f32.mrb[0].mxu0
        %7700 = vmatprep.mubr.f32.mxu0 0.0
        %7701 = vmatmul.mubr.f32.gmra.mrb[0].mxu0 %v6868
        %v7702 = vpop.f32.mrb[0].mxu0
        %v7703 = vadd.f32 0.0, %v7702
        %v7704 = vpop.f32.mrb[0].mxu0
        %7705 = vmatprep.mubr.f32.mxu0 0.0
        %7706 = vmatmul.mubr.f32.gmra.mrb[0].mxu0 %v6871
        %v7707 = vpop.f32.mrb[0].mxu0
        %v7708 = vadd.f32 0.0, %v7707
        %v7709 = vpop.f32.mrb[0].mxu0
        %7710 = vmatprep.mubr.f32.mxu0 0.0
        %7711 = vmatmul.mubr.f32.gmra.mrb[0].mxu0 %v6874
        %v7712 = vpop.f32.mrb[0].mxu0
        %v7713 = vadd.f32 0.0, %v7712
        %v7714 = vpop.f32.mrb[0].mxu0
        %7715 = vmatprep.mubr.f32.mxu0 0.0
        %7716 = vmatmul.mubr.f32.gmra.mrb[0].mxu0 %v6877
        %v7717 = vpop.f32.mrb[0].mxu0
        %v7718 = vadd.f32 0.0, %v7717
        %v7719 = vpop.f32.mrb[0].mxu0
        %7720 = vmatprep.mubr.f32.mxu0 0.0
        %7721 = vmatmul.mubr.f32.gmra.mrb[0].mxu0 %v6880
        %v7722 = vpop.f32.mrb[0].mxu0
        %v7723 = vadd.f32 0.0, %v7722
        %v7724 = vpop.f32.mrb[0].mxu0
        %7725 = vmatprep.mubr.f32.mxu0 0.0
        %7726 = vmatmul.mubr.f32.gmra.mrb[0].mxu0 %v6883
        %v7727 = vpop.f32.mrb[0].mxu0
        %v7728 = vadd.f32 0.0, %v7727
        %v7729 = vpop.f32.mrb[0].mxu0
        %7730 = vmatprep.mubr.f32.mxu0 0.0
        %7731 = vmatmul.mubr.f32.gmra.mrb[0].mxu0 %v6886
        %v7732 = vpop.f32.mrb[0].mxu0
        %v7733 = vadd.f32 0.0, %v7732
        %v7734 = vpop.f32.mrb[0].mxu0
        %7735 = vmatprep.mubr.f32.mxu0 0.0
        %7736 = vmatmul.mubr.f32.gmra.mrb[0].mxu0 %v6889
        %v7737 = vpop.f32.mrb[0].mxu0
        %v7738 = vadd.f32 0.0, %v7737
        %v7739 = vpop.f32.mrb[0].mxu0
        %7740 = vmatprep.mubr.f32.mxu0 0.0
        %7741 = vmatmul.mubr.f32.gmra.mrb[0].mxu0 %v6892
        %v7742 = vpop.f32.mrb[0].mxu0
        %v7743 = vadd.f32 0.0, %v7742
        %v7744 = vpop.f32.mrb[0].mxu0
        %7745 = vmatprep.mubr.f32.mxu0 0.0
        %7746 = vmatmul.mubr.f32.gmra.mrb[0].mxu0 %v6895
        %v7747 = vpop.f32.mrb[0].mxu0
        %v7748 = vadd.f32 0.0, %v7747
        %v7749 = vpop.f32.mrb[0].mxu0
        %7750 = vmatprep.mubr.f32.mxu0 0.0
        %7751 = vmatmul.mubr.f32.gmra.mrb[0].mxu0 %v6898
        %v7752 = vpop.f32.mrb[0].mxu0
        %v7753 = vadd.f32 0.0, %v7752
        %v7754 = vpop.f32.mrb[0].mxu0
        %7755 = vmatprep.mubr.f32.mxu0 0.0
        %7756 = vmatmul.mubr.f32.gmra.mrb[0].mxu0 %v6901
        %v7757 = vpop.f32.mrb[0].mxu0
        %v7758 = vadd.f32 0.0, %v7757
        %v7759 = vpop.f32.mrb[0].mxu0
        %7760 = vmatprep.mubr.f32.mxu0 0.0
        %7761 = vmatmul.mubr.f32.gmra.mrb[0].mxu0 %v6904
        %v7762 = vpop.f32.mrb[0].mxu0
        %v7763 = vadd.f32 0.0, %v7762
        %v7764 = vpop.f32.mrb[0].mxu0
        %7765 = vmatprep.mubr.f32.mxu0 0.0
        %7766 = vmatmul.mubr.f32.gmra.mrb[0].mxu0 %v6907
        %v7767 = vpop.f32.mrb[0].mxu0
        %v7768 = vadd.f32 0.0, %v7767
        %v7769 = vpop.f32.mrb[0].mxu0
        %7770 = vmatprep.mubr.f32.mxu0 0.0
        %7771 = vmatmul.mubr.f32.gmra.mrb[0].mxu0 %v6910
        %v7772 = vpop.f32.mrb[0].mxu0
        %v7773 = vadd.f32 0.0, %v7772
        %v7774 = vpop.f32.mrb[0].mxu0
        %7775 = vmatprep.mubr.f32.mxu0 0.0
        %7776 = vmatmul.mubr.f32.gmra.mrb[0].mxu0 %v6913
        %v7777 = vpop.f32.mrb[0].mxu0
        %v7778 = vadd.f32 0.0, %v7777
        %v7779 = vpop.f32.mrb[0].mxu0
        %7780 = vmatprep.mubr.f32.mxu0 0.0
        %7781 = vmatmul.mubr.f32.gmra.mrb[0].mxu0 %v6916
        %v7782 = vpop.f32.mrb[0].mxu0
        %v7783 = vadd.f32 0.0, %v7782
        %v7784 = vpop.f32.mrb[0].mxu0
        %7785 = vmatprep.mubr.f32.mxu0 0.0
        %7786 = vmatmul.mubr.f32.gmra.mrb[0].mxu0 %v6919
        %v7787 = vpop.f32.mrb[0].mxu0
        %v7788 = vadd.f32 0.0, %v7787
        %v7789 = vpop.f32.mrb[0].mxu0
        %7790 = vmatprep.mubr.f32.mxu0 0.0
        %7791 = vmatmul.mubr.f32.gmra.mrb[0].mxu0 %v6922
        %v7792 = vpop.f32.mrb[0].mxu0
        %v7793 = vadd.f32 0.0, %v7792
        %v7794 = vpop.f32.mrb[0].mxu0
        %7795 = vdwg.mxu0
        %s7796 = scalar_lea.vmem [#allocation6], 256
        %v7797 = vld [vmem:[%s7796] sm:$0xff]
        %v7798 = vld [vmem:[%s7796 + $0x8] sm:$0xff]
        %v7799 = vld [vmem:[%s7796 + $0x10] sm:$0xff]
        %v7800 = vld [vmem:[%s7796 + $0x18] sm:$0xff]
        %v7801 = vld [vmem:[%s7796 + $0x20] sm:$0xff]
        %v7802 = vld [vmem:[%s7796 + $0x28] sm:$0xff]
        %v7803 = vld [vmem:[%s7796 + $0x30] sm:$0xff]
        %v7804 = vld [vmem:[%s7796 + $0x38] sm:$0xff]
        %v7805 = vld [vmem:[%s7796 + $0x40] sm:$0xff]
        %v7806 = vld [vmem:[%s7796 + $0x48] sm:$0xff]
        %v7807 = vld [vmem:[%s7796 + $0x50] sm:$0xff]
        %v7808 = vld [vmem:[%s7796 + $0x58] sm:$0xff]
        %v7809 = vld [vmem:[%s7796 + $0x60] sm:$0xff]
        %v7810 = vld [vmem:[%s7796 + $0x68] sm:$0xff]
        %v7811 = vld [vmem:[%s7796 + $0x70] sm:$0xff]
        %v7812 = vld [vmem:[%s7796 + $0x78] sm:$0xff]
        %v7814 = vsel %vm6522, %v7798, 0
        %v7817 = vsel %vm6522, %v7800, 0
        %v7820 = vsel %vm6522, %v7802, 0
        %v7823 = vsel %vm6522, %v7804, 0
        %v7826 = vsel %vm6522, %v7806, 0
        %v7829 = vsel %vm6522, %v7808, 0
        %v7832 = vsel %vm6522, %v7810, 0
        %v7835 = vsel %vm6522, %v7812, 0
        %7837 = vmatprep.subr.mxu0 0.0
        %7838 = vmatpush1.msra.mxu0 %v7678
        %7839 = vmatprep.subr.mxu0 0.0
        %7840 = vmatpush1.msra.mxu0 %v7683
        %7841 = vmatprep.subr.mxu0 0.0
        %7842 = vmatpush1.msra.mxu0 %v7688
        %7843 = vmatprep.subr.mxu0 0.0
        %7844 = vmatpush1.msra.mxu0 %v7693
        %7845 = vmatprep.subr.mxu0 0.0
        %7846 = vmatpush1.msra.mxu0 %v7698
        %7847 = vmatprep.subr.mxu0 0.0
        %7848 = vmatpush1.msra.mxu0 %v7703
        %7849 = vmatprep.subr.mxu0 0.0
        %7850 = vmatpush1.msra.mxu0 %v7708
        %7851 = vmatprep.subr.mxu0 0.0
        %7852 = vmatpush1.msra.mxu0 %v7713
        %7853 = vmatprep.subr.mxu0 0.0
        %7854 = vmatpush1.msra.mxu0 %v7718
        %7855 = vmatprep.subr.mxu0 0.0
        %7856 = vmatpush1.msra.mxu0 %v7723
        %7857 = vmatprep.subr.mxu0 0.0
        %7858 = vmatpush1.msra.mxu0 %v7728
        %7859 = vmatprep.subr.mxu0 0.0
        %7860 = vmatpush1.msra.mxu0 %v7733
        %7861 = vmatprep.subr.mxu0 0.0
        %7862 = vmatpush1.msra.mxu0 %v7738
        %7863 = vmatprep.subr.mxu0 0.0
        %7864 = vmatpush1.msra.mxu0 %v7743
        %7865 = vmatprep.subr.mxu0 0.0
        %7866 = vmatpush1.msra.mxu0 %v7748
        %7867 = vmatprep.subr.mxu0 0.0
        %7868 = vmatpush1.msra.mxu0 %v7753
        %7869 = vmatprep.subr.mxu0 0.0
        %7870 = vmatpush1.msra.mxu0 %v7758
        %7871 = vmatprep.subr.mxu0 0.0
        %7872 = vmatpush1.msra.mxu0 %v7763
        %7873 = vmatprep.subr.mxu0 0.0
        %7874 = vmatpush1.msra.mxu0 %v7768
        %7875 = vmatprep.subr.mxu0 0.0
        %7876 = vmatpush1.msra.mxu0 %v7773
        %7877 = vmatprep.subr.mxu0 0.0
        %7878 = vmatpush1.msra.mxu0 %v7778
        %7879 = vmatprep.subr.mxu0 0.0
        %7880 = vmatpush1.msra.mxu0 %v7783
        %7881 = vmatprep.subr.mxu0 0.0
        %7882 = vmatpush1.msra.mxu0 %v7788
        %7883 = vmatprep.subr.mxu0 0.0
        %7884 = vmatpush1.msra.mxu0 %v7793
        %7885 = vmatprep.subr.mxu0 0.0
        %7886 = vmatpush1.msra.mxu0 0.0
        %7887 = vmatprep.subr.mxu0 0.0
        %7888 = vmatpush1.msra.mxu0 0.0
        %7889 = vmatprep.subr.mxu0 0.0
        %7890 = vmatpush1.msra.mxu0 0.0
        %7891 = vmatprep.subr.mxu0 0.0
        %7892 = vmatpush1.msra.mxu0 0.0
        %7893 = vmatprep.subr.mxu0 0.0
        %7894 = vmatpush1.msra.mxu0 0.0
        %7895 = vmatprep.subr.mxu0 0.0
        %7896 = vmatpush1.msra.mxu0 0.0
        %7897 = vmatprep.subr.mxu0 0.0
        %7898 = vmatpush1.msra.mxu0 0.0
        %7899 = vmatprep.subr.mxu0 0.0
        %7900 = vmatpush1.msra.mxu0 0.0
        %7901 = vmatprep.mubr.f32.mxu0 %v7814
        %7902 = vmatmul.mubr.f32.gmra.mrb[0].mxu0 %v7797
        %v7903 = vpop.f32.mrb[0].mxu0
        %v7904 = vadd.f32 0.0, %v7903
        %v7905 = vpop.f32.mrb[0].mxu0
        %7906 = vmatprep.mubr.f32.mxu0 %v7817
        %7907 = vmatmul.mubr.f32.gmra.mrb[0].mxu0 %v7799
        %v7908 = vpop.f32.mrb[0].mxu0
        %v7909 = vadd.f32 0.0, %v7908
        %v7910 = vpop.f32.mrb[0].mxu0
        %7911 = vmatprep.mubr.f32.mxu0 %v7820
        %7912 = vmatmul.mubr.f32.gmra.mrb[0].mxu0 %v7801
        %v7913 = vpop.f32.mrb[0].mxu0
        %v7914 = vadd.f32 0.0, %v7913
        %v7915 = vpop.f32.mrb[0].mxu0
        %7916 = vmatprep.mubr.f32.mxu0 %v7823
        %7917 = vmatmul.mubr.f32.gmra.mrb[0].mxu0 %v7803
        %v7918 = vpop.f32.mrb[0].mxu0
        %v7919 = vadd.f32 0.0, %v7918
        %v7920 = vpop.f32.mrb[0].mxu0
        %7921 = vmatprep.mubr.f32.mxu0 %v7826
        %7922 = vmatmul.mubr.f32.gmra.mrb[0].mxu0 %v7805
        %v7923 = vpop.f32.mrb[0].mxu0
        %v7924 = vadd.f32 0.0, %v7923
        %v7925 = vpop.f32.mrb[0].mxu0
        %7926 = vmatprep.mubr.f32.mxu0 %v7829
        %7927 = vmatmul.mubr.f32.gmra.mrb[0].mxu0 %v7807
        %v7928 = vpop.f32.mrb[0].mxu0
        %v7929 = vadd.f32 0.0, %v7928
        %v7930 = vpop.f32.mrb[0].mxu0
        %7931 = vmatprep.mubr.f32.mxu0 %v7832
        %7932 = vmatmul.mubr.f32.gmra.mrb[0].mxu0 %v7809
        %v7933 = vpop.f32.mrb[0].mxu0
        %v7934 = vadd.f32 0.0, %v7933
        %v7935 = vpop.f32.mrb[0].mxu0
        %7936 = vmatprep.mubr.f32.mxu0 %v7835
        %7937 = vmatmul.mubr.f32.gmra.mrb[0].mxu0 %v7811
        %v7938 = vpop.f32.mrb[0].mxu0
        %v7939 = vadd.f32 0.0, %v7938
        %v7940 = vpop.f32.mrb[0].mxu0
        %7941 = vdwg.mxu0
        %v7942 = vadd.f32 %v7598, %v7904
        %v7943 = vadd.f32 %v7599, %v7909
        %v7944 = vadd.f32 %v7600, %v7914
        %v7945 = vadd.f32 %v7601, %v7919
        %v7946 = vadd.f32 %v7602, %v7924
        %v7947 = vadd.f32 %v7603, %v7929
        %v7948 = vadd.f32 %v7604, %v7934
        %v7949 = vadd.f32 %v7605, %v7939
        %v7950 = vld [vmem:[#allocation33] sm:$0x1]
        %v7952 = vlaneseq
        %v7953 = vshrl.u32 %v7952, 7
        %v7954 = vsub.s32 0, %v7953
        %v7955 = vrot.slane %v7950, %v7954
        %v7957 = vadd.f32 %v7955, 0.0
        %v7958 = vld [vmem:[%s59] sm:$0xff]
        %v7959 = vld [vmem:[%s59 + $0x8] sm:$0xff]
        %v7960 = vld [vmem:[%s59 + $0x10] sm:$0xff]
        %v7961 = vld [vmem:[%s59 + $0x18] sm:$0xff]
        %v7963 = vsel %vm2431, %v7942, 0
        %v7966 = vsel %vm2431, %v7943, 0
        %7968 = vmatprep.subr.mxu0 0.0
        %7969 = vmatpush1.msra.mxu0 %v7958
        %7970 = vmatprep.subr.mxu0 0.0
        %7971 = vmatpush1.msra.mxu0 %v7959
        %7972 = vmatprep.subr.mxu0 0.0
        %7973 = vmatpush1.msra.mxu0 %v7960
        %7974 = vmatprep.subr.mxu0 0.0
        %7975 = vmatpush1.msra.mxu0 %v7961
        %7976 = vmatprep.subr.mxu0 0.0
        %7977 = vmatpush1.msra.mxu0 0.0
        %7978 = vmatprep.subr.mxu0 0.0
        %7979 = vmatpush1.msra.mxu0 0.0
        %7980 = vmatprep.subr.mxu0 0.0
        %7981 = vmatpush1.msra.mxu0 0.0
        %7982 = vmatprep.subr.mxu0 0.0
        %7983 = vmatpush1.msra.mxu0 0.0
        %7984 = vmatprep.subr.mxu0 0.0
        %7985 = vmatpush1.msra.mxu0 0.0
        %7986 = vmatprep.subr.mxu0 0.0
        %7987 = vmatpush1.msra.mxu0 0.0
        %7988 = vmatprep.subr.mxu0 0.0
        %7989 = vmatpush1.msra.mxu0 0.0
        %7990 = vmatprep.subr.mxu0 0.0
        %7991 = vmatpush1.msra.mxu0 0.0
        %7992 = vmatprep.subr.mxu0 0.0
        %7993 = vmatpush1.msra.mxu0 0.0
        %7994 = vmatprep.subr.mxu0 0.0
        %7995 = vmatpush1.msra.mxu0 0.0
        %7996 = vmatprep.subr.mxu0 0.0
        %7997 = vmatpush1.msra.mxu0 0.0
        %7998 = vmatprep.subr.mxu0 0.0
        %7999 = vmatpush1.msra.mxu0 0.0
        %8000 = vmatprep.subr.mxu0 0.0
        %8001 = vmatpush1.msra.mxu0 0.0
        %8002 = vmatprep.subr.mxu0 0.0
        %8003 = vmatpush1.msra.mxu0 0.0
        %8004 = vmatprep.subr.mxu0 0.0
        %8005 = vmatpush1.msra.mxu0 0.0
        %8006 = vmatprep.subr.mxu0 0.0
        %8007 = vmatpush1.msra.mxu0 0.0
        %8008 = vmatprep.subr.mxu0 0.0
        %8009 = vmatpush1.msra.mxu0 0.0
        %8010 = vmatprep.subr.mxu0 0.0
        %8011 = vmatpush1.msra.mxu0 0.0
        %8012 = vmatprep.subr.mxu0 0.0
        %8013 = vmatpush1.msra.mxu0 0.0
        %8014 = vmatprep.subr.mxu0 0.0
        %8015 = vmatpush1.msra.mxu0 0.0
        %8016 = vmatprep.subr.mxu0 0.0
        %8017 = vmatpush1.msra.mxu0 0.0
        %8018 = vmatprep.subr.mxu0 0.0
        %8019 = vmatpush1.msra.mxu0 0.0
        %8020 = vmatprep.subr.mxu0 0.0
        %8021 = vmatpush1.msra.mxu0 0.0
        %8022 = vmatprep.subr.mxu0 0.0
        %8023 = vmatpush1.msra.mxu0 0.0
        %8024 = vmatprep.subr.mxu0 0.0
        %8025 = vmatpush1.msra.mxu0 0.0
        %8026 = vmatprep.subr.mxu0 0.0
        %8027 = vmatpush1.msra.mxu0 0.0
        %8028 = vmatprep.subr.mxu0 0.0
        %8029 = vmatpush1.msra.mxu0 0.0
        %8030 = vmatprep.subr.mxu0 0.0
        %8031 = vmatpush1.msra.mxu0 0.0
        %8032 = vmatprep.mubr.f32.mxu0 0.0
        %8033 = vmatmul.mubr.f32.gmra.mrb[0].mxu0 %v7963
        %v8034 = vpop.f32.mrb[0].mxu0
        %v8035 = vadd.f32 0.0, %v8034
        %v8036 = vpop.f32.mrb[0].mxu0
        %8037 = vmatprep.mubr.f32.mxu0 0.0
        %8038 = vmatmul.mubr.f32.gmra.mrb[0].mxu0 %v7966
        %v8039 = vpop.f32.mrb[0].mxu0
        %v8040 = vadd.f32 0.0, %v8039
        %v8041 = vpop.f32.mrb[0].mxu0
        %8042 = vdwg.mxu0
        %v8043 = vadd.f32 %v7957, %v8035
        %v8044 = vadd.f32 %v7957, %v8040
        %s8045 = scalar_lea.vmem %s59, 32
        %v8046 = vld [vmem:[%s8045] sm:$0xff]
        %v8047 = vld [vmem:[%s8045 + $0x8] sm:$0xff]
        %v8048 = vld [vmem:[%s8045 + $0x10] sm:$0xff]
        %v8049 = vld [vmem:[%s8045 + $0x18] sm:$0xff]
        %v8051 = vsel %vm2431, %v7944, 0
        %v8054 = vsel %vm2431, %v7945, 0
        %8056 = vmatprep.subr.mxu0 0.0
        %8057 = vmatpush1.msra.mxu0 %v8046
        %8058 = vmatprep.subr.mxu0 0.0
        %8059 = vmatpush1.msra.mxu0 %v8047
        %8060 = vmatprep.subr.mxu0 0.0
        %8061 = vmatpush1.msra.mxu0 %v8048
        %8062 = vmatprep.subr.mxu0 0.0
        %8063 = vmatpush1.msra.mxu0 %v8049
        %8064 = vmatprep.subr.mxu0 0.0
        %8065 = vmatpush1.msra.mxu0 0.0
        %8066 = vmatprep.subr.mxu0 0.0
        %8067 = vmatpush1.msra.mxu0 0.0
        %8068 = vmatprep.subr.mxu0 0.0
        %8069 = vmatpush1.msra.mxu0 0.0
        %8070 = vmatprep.subr.mxu0 0.0
        %8071 = vmatpush1.msra.mxu0 0.0
        %8072 = vmatprep.subr.mxu0 0.0
        %8073 = vmatpush1.msra.mxu0 0.0
        %8074 = vmatprep.subr.mxu0 0.0
        %8075 = vmatpush1.msra.mxu0 0.0
        %8076 = vmatprep.subr.mxu0 0.0
        %8077 = vmatpush1.msra.mxu0 0.0
        %8078 = vmatprep.subr.mxu0 0.0
        %8079 = vmatpush1.msra.mxu0 0.0
        %8080 = vmatprep.subr.mxu0 0.0
        %8081 = vmatpush1.msra.mxu0 0.0
        %8082 = vmatprep.subr.mxu0 0.0
        %8083 = vmatpush1.msra.mxu0 0.0
        %8084 = vmatprep.subr.mxu0 0.0
        %8085 = vmatpush1.msra.mxu0 0.0
        %8086 = vmatprep.subr.mxu0 0.0
        %8087 = vmatpush1.msra.mxu0 0.0
        %8088 = vmatprep.subr.mxu0 0.0
        %8089 = vmatpush1.msra.mxu0 0.0
        %8090 = vmatprep.subr.mxu0 0.0
        %8091 = vmatpush1.msra.mxu0 0.0
        %8092 = vmatprep.subr.mxu0 0.0
        %8093 = vmatpush1.msra.mxu0 0.0
        %8094 = vmatprep.subr.mxu0 0.0
        %8095 = vmatpush1.msra.mxu0 0.0
        %8096 = vmatprep.subr.mxu0 0.0
        %8097 = vmatpush1.msra.mxu0 0.0
        %8098 = vmatprep.subr.mxu0 0.0
        %8099 = vmatpush1.msra.mxu0 0.0
        %8100 = vmatprep.subr.mxu0 0.0
        %8101 = vmatpush1.msra.mxu0 0.0
        %8102 = vmatprep.subr.mxu0 0.0
        %8103 = vmatpush1.msra.mxu0 0.0
        %8104 = vmatprep.subr.mxu0 0.0
        %8105 = vmatpush1.msra.mxu0 0.0
        %8106 = vmatprep.subr.mxu0 0.0
        %8107 = vmatpush1.msra.mxu0 0.0
        %8108 = vmatprep.subr.mxu0 0.0
        %8109 = vmatpush1.msra.mxu0 0.0
        %8110 = vmatprep.subr.mxu0 0.0
        %8111 = vmatpush1.msra.mxu0 0.0
        %8112 = vmatprep.subr.mxu0 0.0
        %8113 = vmatpush1.msra.mxu0 0.0
        %8114 = vmatprep.subr.mxu0 0.0
        %8115 = vmatpush1.msra.mxu0 0.0
        %8116 = vmatprep.subr.mxu0 0.0
        %8117 = vmatpush1.msra.mxu0 0.0
        %8118 = vmatprep.subr.mxu0 0.0
        %8119 = vmatpush1.msra.mxu0 0.0
        %8120 = vmatprep.mubr.f32.mxu0 0.0
        %8121 = vmatmul.mubr.f32.gmra.mrb[0].mxu0 %v8051
        %v8122 = vpop.f32.mrb[0].mxu0
        %v8123 = vadd.f32 0.0, %v8122
        %v8124 = vpop.f32.mrb[0].mxu0
        %8125 = vmatprep.mubr.f32.mxu0 0.0
        %8126 = vmatmul.mubr.f32.gmra.mrb[0].mxu0 %v8054
        %v8127 = vpop.f32.mrb[0].mxu0
        %v8128 = vadd.f32 0.0, %v8127
        %v8129 = vpop.f32.mrb[0].mxu0
        %8130 = vdwg.mxu0
        %v8131 = vadd.f32 %v8043, %v8123
        %v8132 = vadd.f32 %v8044, %v8128
        %s8133 = scalar_lea.vmem %s59, 64
        %v8134 = vld [vmem:[%s8133] sm:$0xff]
        %v8135 = vld [vmem:[%s8133 + $0x8] sm:$0xff]
        %v8136 = vld [vmem:[%s8133 + $0x10] sm:$0xff]
        %v8137 = vld [vmem:[%s8133 + $0x18] sm:$0xff]
        %v8139 = vsel %vm2431, %v7946, 0
        %v8142 = vsel %vm2431, %v7947, 0
        %8144 = vmatprep.subr.mxu0 0.0
        %8145 = vmatpush1.msra.mxu0 %v8134
        %8146 = vmatprep.subr.mxu0 0.0
        %8147 = vmatpush1.msra.mxu0 %v8135
        %8148 = vmatprep.subr.mxu0 0.0
        %8149 = vmatpush1.msra.mxu0 %v8136
        %8150 = vmatprep.subr.mxu0 0.0
        %8151 = vmatpush1.msra.mxu0 %v8137
        %8152 = vmatprep.subr.mxu0 0.0
        %8153 = vmatpush1.msra.mxu0 0.0
        %8154 = vmatprep.subr.mxu0 0.0
        %8155 = vmatpush1.msra.mxu0 0.0
        %8156 = vmatprep.subr.mxu0 0.0
        %8157 = vmatpush1.msra.mxu0 0.0
        %8158 = vmatprep.subr.mxu0 0.0
        %8159 = vmatpush1.msra.mxu0 0.0
        %8160 = vmatprep.subr.mxu0 0.0
        %8161 = vmatpush1.msra.mxu0 0.0
        %8162 = vmatprep.subr.mxu0 0.0
        %8163 = vmatpush1.msra.mxu0 0.0
        %8164 = vmatprep.subr.mxu0 0.0
        %8165 = vmatpush1.msra.mxu0 0.0
        %8166 = vmatprep.subr.mxu0 0.0
        %8167 = vmatpush1.msra.mxu0 0.0
        %8168 = vmatprep.subr.mxu0 0.0
        %8169 = vmatpush1.msra.mxu0 0.0
        %8170 = vmatprep.subr.mxu0 0.0
        %8171 = vmatpush1.msra.mxu0 0.0
        %8172 = vmatprep.subr.mxu0 0.0
        %8173 = vmatpush1.msra.mxu0 0.0
        %8174 = vmatprep.subr.mxu0 0.0
        %8175 = vmatpush1.msra.mxu0 0.0
        %8176 = vmatprep.subr.mxu0 0.0
        %8177 = vmatpush1.msra.mxu0 0.0
        %8178 = vmatprep.subr.mxu0 0.0
        %8179 = vmatpush1.msra.mxu0 0.0
        %8180 = vmatprep.subr.mxu0 0.0
        %8181 = vmatpush1.msra.mxu0 0.0
        %8182 = vmatprep.subr.mxu0 0.0
        %8183 = vmatpush1.msra.mxu0 0.0
        %8184 = vmatprep.subr.mxu0 0.0
        %8185 = vmatpush1.msra.mxu0 0.0
        %8186 = vmatprep.subr.mxu0 0.0
        %8187 = vmatpush1.msra.mxu0 0.0
        %8188 = vmatprep.subr.mxu0 0.0
        %8189 = vmatpush1.msra.mxu0 0.0
        %8190 = vmatprep.subr.mxu0 0.0
        %8191 = vmatpush1.msra.mxu0 0.0
        %8192 = vmatprep.subr.mxu0 0.0
        %8193 = vmatpush1.msra.mxu0 0.0
        %8194 = vmatprep.subr.mxu0 0.0
        %8195 = vmatpush1.msra.mxu0 0.0
        %8196 = vmatprep.subr.mxu0 0.0
        %8197 = vmatpush1.msra.mxu0 0.0
        %8198 = vmatprep.subr.mxu0 0.0
        %8199 = vmatpush1.msra.mxu0 0.0
        %8200 = vmatprep.subr.mxu0 0.0
        %8201 = vmatpush1.msra.mxu0 0.0
        %8202 = vmatprep.subr.mxu0 0.0
        %8203 = vmatpush1.msra.mxu0 0.0
        %8204 = vmatprep.subr.mxu0 0.0
        %8205 = vmatpush1.msra.mxu0 0.0
        %8206 = vmatprep.subr.mxu0 0.0
        %8207 = vmatpush1.msra.mxu0 0.0
        %8208 = vmatprep.mubr.f32.mxu0 0.0
        %8209 = vmatmul.mubr.f32.gmra.mrb[0].mxu0 %v8139
        %v8210 = vpop.f32.mrb[0].mxu0
        %v8211 = vadd.f32 0.0, %v8210
        %v8212 = vpop.f32.mrb[0].mxu0
        %8213 = vmatprep.mubr.f32.mxu0 0.0
        %8214 = vmatmul.mubr.f32.gmra.mrb[0].mxu0 %v8142
        %v8215 = vpop.f32.mrb[0].mxu0
        %v8216 = vadd.f32 0.0, %v8215
        %v8217 = vpop.f32.mrb[0].mxu0
        %8218 = vdwg.mxu0
        %v8219 = vadd.f32 %v8131, %v8211
        %v8220 = vadd.f32 %v8132, %v8216
        %s8221 = scalar_lea.vmem %s59, 96
        %v8222 = vld [vmem:[%s8221] sm:$0xff]
        %v8223 = vld [vmem:[%s8221 + $0x8] sm:$0xff]
        %v8224 = vld [vmem:[%s8221 + $0x10] sm:$0xff]
        %v8225 = vld [vmem:[%s8221 + $0x18] sm:$0xff]
        %v8227 = vsel %vm2431, %v7948, 0
        %v8230 = vsel %vm2431, %v7949, 0
        %8232 = vmatprep.subr.mxu0 0.0
        %8233 = vmatpush1.msra.mxu0 %v8222
        %8234 = vmatprep.subr.mxu0 0.0
        %8235 = vmatpush1.msra.mxu0 %v8223
        %8236 = vmatprep.subr.mxu0 0.0
        %8237 = vmatpush1.msra.mxu0 %v8224
        %8238 = vmatprep.subr.mxu0 0.0
        %8239 = vmatpush1.msra.mxu0 %v8225
        %8240 = vmatprep.subr.mxu0 0.0
        %8241 = vmatpush1.msra.mxu0 0.0
        %8242 = vmatprep.subr.mxu0 0.0
        %8243 = vmatpush1.msra.mxu0 0.0
        %8244 = vmatprep.subr.mxu0 0.0
        %8245 = vmatpush1.msra.mxu0 0.0
        %8246 = vmatprep.subr.mxu0 0.0
        %8247 = vmatpush1.msra.mxu0 0.0
        %8248 = vmatprep.subr.mxu0 0.0
        %8249 = vmatpush1.msra.mxu0 0.0
        %8250 = vmatprep.subr.mxu0 0.0
        %8251 = vmatpush1.msra.mxu0 0.0
        %8252 = vmatprep.subr.mxu0 0.0
        %8253 = vmatpush1.msra.mxu0 0.0
        %8254 = vmatprep.subr.mxu0 0.0
        %8255 = vmatpush1.msra.mxu0 0.0
        %8256 = vmatprep.subr.mxu0 0.0
        %8257 = vmatpush1.msra.mxu0 0.0
        %8258 = vmatprep.subr.mxu0 0.0
        %8259 = vmatpush1.msra.mxu0 0.0
        %8260 = vmatprep.subr.mxu0 0.0
        %8261 = vmatpush1.msra.mxu0 0.0
        %8262 = vmatprep.subr.mxu0 0.0
        %8263 = vmatpush1.msra.mxu0 0.0
        %8264 = vmatprep.subr.mxu0 0.0
        %8265 = vmatpush1.msra.mxu0 0.0
        %8266 = vmatprep.subr.mxu0 0.0
        %8267 = vmatpush1.msra.mxu0 0.0
        %8268 = vmatprep.subr.mxu0 0.0
        %8269 = vmatpush1.msra.mxu0 0.0
        %8270 = vmatprep.subr.mxu0 0.0
        %8271 = vmatpush1.msra.mxu0 0.0
        %8272 = vmatprep.subr.mxu0 0.0
        %8273 = vmatpush1.msra.mxu0 0.0
        %8274 = vmatprep.subr.mxu0 0.0
        %8275 = vmatpush1.msra.mxu0 0.0
        %8276 = vmatprep.subr.mxu0 0.0
        %8277 = vmatpush1.msra.mxu0 0.0
        %8278 = vmatprep.subr.mxu0 0.0
        %8279 = vmatpush1.msra.mxu0 0.0
        %8280 = vmatprep.subr.mxu0 0.0
        %8281 = vmatpush1.msra.mxu0 0.0
        %8282 = vmatprep.subr.mxu0 0.0
        %8283 = vmatpush1.msra.mxu0 0.0
        %8284 = vmatprep.subr.mxu0 0.0
        %8285 = vmatpush1.msra.mxu0 0.0
        %8286 = vmatprep.subr.mxu0 0.0
        %8287 = vmatpush1.msra.mxu0 0.0
        %8288 = vmatprep.subr.mxu0 0.0
        %8289 = vmatpush1.msra.mxu0 0.0
        %8290 = vmatprep.subr.mxu0 0.0
        %8291 = vmatpush1.msra.mxu0 0.0
        %8292 = vmatprep.subr.mxu0 0.0
        %8293 = vmatpush1.msra.mxu0 0.0
        %8294 = vmatprep.subr.mxu0 0.0
        %8295 = vmatpush1.msra.mxu0 0.0
        %8296 = vmatprep.mubr.f32.mxu0 0.0
        %8297 = vmatmul.mubr.f32.gmra.mrb[0].mxu0 %v8227
        %v8298 = vpop.f32.mrb[0].mxu0
        %v8299 = vadd.f32 0.0, %v8298
        %v8300 = vpop.f32.mrb[0].mxu0
        %8301 = vmatprep.mubr.f32.mxu0 0.0
        %8302 = vmatmul.mubr.f32.gmra.mrb[0].mxu0 %v8230
        %v8303 = vpop.f32.mrb[0].mxu0
        %v8304 = vadd.f32 0.0, %v8303
        %v8305 = vpop.f32.mrb[0].mxu0
        %8306 = vdwg.mxu0
        %v8307 = vadd.f32 %v8219, %v8299
        %v8308 = vadd.f32 %v8220, %v8304
        %v8309 = vsel %vm2431, %v8307, 0.0
        %v8310 = vsel %vm2431, %v8308, 0.0
        %v8311 = vadd.f32 %v8309, %v8310
        %8312 = vadd.xlane.f32.xlu0 %v8311
        %v8313 = vpop.xlane.xlu0 %8312
        %v8314 = vrot.slane %v8313, 4
        %v8315 = vadd.f32 %v8313, %v8314
        %v8316 = vrot.slane %v8315, 2
        %v8317 = vadd.f32 %v8315, %v8316
        %v8318 = vrot.slane %v8317, 1
        %v8319 = vadd.f32 %v8317, %v8318
        %s8320 = vtos %v8319
        %v8321 = vstv %s8320
        %v8322 = vrcp.pop 512.0
        %v8323 = vmul.f32 %v8321, %v8322
        %v8324 = vsub.f32 %v8307, %v8323
        %v8325 = vsub.f32 %v8308, %v8323
        %v8326 = vmul.f32 %v8324, %v8324
        %v8327 = vmul.f32 %v8325, %v8325
        %v8328 = vsel %vm2431, %v8326, 0.0
        %v8329 = vsel %vm2431, %v8327, 0.0
        %v8330 = vadd.f32 %v8328, %v8329
        %8331 = vadd.xlane.f32.xlu0 %v8330
        %v8332 = vpop.xlane.xlu0 %8331
        %v8333 = vrot.slane %v8332, 4
        %v8334 = vadd.f32 %v8332, %v8333
        %v8335 = vrot.slane %v8334, 2
        %v8336 = vadd.f32 %v8334, %v8335
        %v8337 = vrot.slane %v8336, 1
        %v8338 = vadd.f32 %v8336, %v8337
        %s8339 = vtos %v8338
        %v8340 = vstv %s8339
        %v8341 = vmul.f32 %v8340, %v8322
        %v8342 = vadd.f32 %v8341, 1e-05
        %v8343 = vrsqrt.pop %v8342
        %v8344 = vmul.f32 %v8324, %v8343
        %v8345 = vmul.f32 %v8325, %v8343
        %v8346 = vld [vmem:[#allocation39] sm:$0xff]
        %v8347 = vld [vmem:[#allocation39 + $0x8] sm:$0xff]
        %v8348 = vmul.f32 %v8344, %v8346
        %v8349 = vmul.f32 %v8345, %v8347
        %v8350 = vld [vmem:[#allocation36] sm:$0xff]
        %v8351 = vld [vmem:[#allocation36 + $0x8] sm:$0xff]
        %v8352 = vadd.f32 %v8348, %v8350
        %v8353 = vadd.f32 %v8349, %v8351
        %v8354 = vld [vmem:[#allocation41] sm:$0xff]
        %v8355 = vld [vmem:[#allocation41 + $0x8] sm:$0xff]
        %v8356 = vld [vmem:[#allocation41 + $0x10] sm:$0xff]
        %v8357 = vld [vmem:[#allocation41 + $0x18] sm:$0xff]
        %v8358 = vld [vmem:[#allocation35] sm:$0x1]
        %v8360 = vlaneseq
        %v8361 = vshrl.u32 %v8360, 7
        %v8362 = vsub.s32 0, %v8361
        %v8363 = vrot.slane %v8358, %v8362
        %v8366 = vsel %vm2431, %v8352, 0
        %v8369 = vsel %vm2431, %v8353, 0
        %8371 = vmatprep.subr.mxu0 0.0
        %8372 = vmatpush1.msra.mxu0 %v8354
        %8373 = vmatprep.subr.mxu0 0.0
        %8374 = vmatpush1.msra.mxu0 %v8355
        %8375 = vmatprep.subr.mxu0 0.0
        %8376 = vmatpush1.msra.mxu0 %v8356
        %8377 = vmatprep.subr.mxu0 0.0
        %8378 = vmatpush1.msra.mxu0 %v8357
        %8379 = vmatprep.subr.mxu0 0.0
        %8380 = vmatpush1.msra.mxu0 0.0
        %8381 = vmatprep.subr.mxu0 0.0
        %8382 = vmatpush1.msra.mxu0 0.0
        %8383 = vmatprep.subr.mxu0 0.0
        %8384 = vmatpush1.msra.mxu0 0.0
        %8385 = vmatprep.subr.mxu0 0.0
        %8386 = vmatpush1.msra.mxu0 0.0
        %8387 = vmatprep.subr.mxu0 0.0
        %8388 = vmatpush1.msra.mxu0 0.0
        %8389 = vmatprep.subr.mxu0 0.0
        %8390 = vmatpush1.msra.mxu0 0.0
        %8391 = vmatprep.subr.mxu0 0.0
        %8392 = vmatpush1.msra.mxu0 0.0
        %8393 = vmatprep.subr.mxu0 0.0
        %8394 = vmatpush1.msra.mxu0 0.0
        %8395 = vmatprep.subr.mxu0 0.0
        %8396 = vmatpush1.msra.mxu0 0.0
        %8397 = vmatprep.subr.mxu0 0.0
        %8398 = vmatpush1.msra.mxu0 0.0
        %8399 = vmatprep.subr.mxu0 0.0
        %8400 = vmatpush1.msra.mxu0 0.0
        %8401 = vmatprep.subr.mxu0 0.0
        %8402 = vmatpush1.msra.mxu0 0.0
        %8403 = vmatprep.subr.mxu0 0.0
        %8404 = vmatpush1.msra.mxu0 0.0
        %8405 = vmatprep.subr.mxu0 0.0
        %8406 = vmatpush1.msra.mxu0 0.0
        %8407 = vmatprep.subr.mxu0 0.0
        %8408 = vmatpush1.msra.mxu0 0.0
        %8409 = vmatprep.subr.mxu0 0.0
        %8410 = vmatpush1.msra.mxu0 0.0
        %8411 = vmatprep.subr.mxu0 0.0
        %8412 = vmatpush1.msra.mxu0 0.0
        %8413 = vmatprep.subr.mxu0 0.0
        %8414 = vmatpush1.msra.mxu0 0.0
        %8415 = vmatprep.subr.mxu0 0.0
        %8416 = vmatpush1.msra.mxu0 0.0
        %8417 = vmatprep.subr.mxu0 0.0
        %8418 = vmatpush1.msra.mxu0 0.0
        %8419 = vmatprep.subr.mxu0 0.0
        %8420 = vmatpush1.msra.mxu0 0.0
        %8421 = vmatprep.subr.mxu0 0.0
        %8422 = vmatpush1.msra.mxu0 0.0
        %8423 = vmatprep.subr.mxu0 0.0
        %8424 = vmatpush1.msra.mxu0 0.0
        %8425 = vmatprep.subr.mxu0 0.0
        %8426 = vmatpush1.msra.mxu0 0.0
        %8427 = vmatprep.subr.mxu0 0.0
        %8428 = vmatpush1.msra.mxu0 0.0
        %8429 = vmatprep.subr.mxu0 0.0
        %8430 = vmatpush1.msra.mxu0 0.0
        %8431 = vmatprep.subr.mxu0 0.0
        %8432 = vmatpush1.msra.mxu0 0.0
        %8433 = vmatprep.subr.mxu0 0.0
        %8434 = vmatpush1.msra.mxu0 0.0
        %8435 = vmatprep.mubr.f32.mxu0 0.0
        %8436 = vmatmul.mubr.f32.gmra.mrb[0].mxu0 %v8366
        %v8437 = vpop.f32.mrb[0].mxu0
        %v8438 = vadd.f32 %v8363, %v8437
        %v8439 = vpop.f32.mrb[0].mxu0
        %8440 = vmatprep.mubr.f32.mxu0 0.0
        %8441 = vmatmul.mubr.f32.gmra.mrb[0].mxu0 %v8369
        %v8442 = vpop.f32.mrb[0].mxu0
        %v8443 = vadd.f32 %v8363, %v8442
        %v8444 = vpop.f32.mrb[0].mxu0
        %8445 = vdwg.mxu0
        %v8446 = vld [vmem:[%s63] sm:$0xff]
        %v8447 = vld [vmem:[%s63 + $0x8] sm:$0xff]
        %v8448 = vld [vmem:[%s63 + $0x10] sm:$0xff]
        %v8449 = vld [vmem:[%s63 + $0x18] sm:$0xff]
        %v8450 = vld [vmem:[#allocation2] sm:$0x1]
        %v8452 = vlaneseq
        %v8453 = vshrl.u32 %v8452, 7
        %v8454 = vsub.s32 0, %v8453
        %v8455 = vrot.slane %v8450, %v8454
        %v8458 = vsel %vm2431, %v8438, 0
        %v8461 = vsel %vm2431, %v8443, 0
        %8463 = vmatprep.subr.mxu0 0.0
        %8464 = vmatpush1.msra.mxu0 %v8446
        %8465 = vmatprep.subr.mxu0 0.0
        %8466 = vmatpush1.msra.mxu0 %v8447
        %8467 = vmatprep.subr.mxu0 0.0
        %8468 = vmatpush1.msra.mxu0 %v8448
        %8469 = vmatprep.subr.mxu0 0.0
        %8470 = vmatpush1.msra.mxu0 %v8449
        %8471 = vmatprep.subr.mxu0 0.0
        %8472 = vmatpush1.msra.mxu0 0.0
        %8473 = vmatprep.subr.mxu0 0.0
        %8474 = vmatpush1.msra.mxu0 0.0
        %8475 = vmatprep.subr.mxu0 0.0
        %8476 = vmatpush1.msra.mxu0 0.0
        %8477 = vmatprep.subr.mxu0 0.0
        %8478 = vmatpush1.msra.mxu0 0.0
        %8479 = vmatprep.subr.mxu0 0.0
        %8480 = vmatpush1.msra.mxu0 0.0
        %8481 = vmatprep.subr.mxu0 0.0
        %8482 = vmatpush1.msra.mxu0 0.0
        %8483 = vmatprep.subr.mxu0 0.0
        %8484 = vmatpush1.msra.mxu0 0.0
        %8485 = vmatprep.subr.mxu0 0.0
        %8486 = vmatpush1.msra.mxu0 0.0
        %8487 = vmatprep.subr.mxu0 0.0
        %8488 = vmatpush1.msra.mxu0 0.0
        %8489 = vmatprep.subr.mxu0 0.0
        %8490 = vmatpush1.msra.mxu0 0.0
        %8491 = vmatprep.subr.mxu0 0.0
        %8492 = vmatpush1.msra.mxu0 0.0
        %8493 = vmatprep.subr.mxu0 0.0
        %8494 = vmatpush1.msra.mxu0 0.0
        %8495 = vmatprep.subr.mxu0 0.0
        %8496 = vmatpush1.msra.mxu0 0.0
        %8497 = vmatprep.subr.mxu0 0.0
        %8498 = vmatpush1.msra.mxu0 0.0
        %8499 = vmatprep.subr.mxu0 0.0
        %8500 = vmatpush1.msra.mxu0 0.0
        %8501 = vmatprep.subr.mxu0 0.0
        %8502 = vmatpush1.msra.mxu0 0.0
        %8503 = vmatprep.subr.mxu0 0.0
        %8504 = vmatpush1.msra.mxu0 0.0
        %8505 = vmatprep.subr.mxu0 0.0
        %8506 = vmatpush1.msra.mxu0 0.0
        %8507 = vmatprep.subr.mxu0 0.0
        %8508 = vmatpush1.msra.mxu0 0.0
        %8509 = vmatprep.subr.mxu0 0.0
        %8510 = vmatpush1.msra.mxu0 0.0
        %8511 = vmatprep.subr.mxu0 0.0
        %8512 = vmatpush1.msra.mxu0 0.0
        %8513 = vmatprep.subr.mxu0 0.0
        %8514 = vmatpush1.msra.mxu0 0.0
        %8515 = vmatprep.subr.mxu0 0.0
        %8516 = vmatpush1.msra.mxu0 0.0
        %8517 = vmatprep.subr.mxu0 0.0
        %8518 = vmatpush1.msra.mxu0 0.0
        %8519 = vmatprep.subr.mxu0 0.0
        %8520 = vmatpush1.msra.mxu0 0.0
        %8521 = vmatprep.subr.mxu0 0.0
        %8522 = vmatpush1.msra.mxu0 0.0
        %8523 = vmatprep.subr.mxu0 0.0
        %8524 = vmatpush1.msra.mxu0 0.0
        %8525 = vmatprep.subr.mxu0 0.0
        %8526 = vmatpush1.msra.mxu0 0.0
        %8527 = vmatprep.mubr.f32.mxu0 0.0
        %8528 = vmatmul.mubr.f32.gmra.mrb[0].mxu0 %v8458
        %v8529 = vpop.f32.mrb[0].mxu0
        %v8530 = vadd.f32 %v8455, %v8529
        %v8531 = vpop.f32.mrb[0].mxu0
        %8532 = vmatprep.mubr.f32.mxu0 0.0
        %8533 = vmatmul.mubr.f32.gmra.mrb[0].mxu0 %v8461
        %v8534 = vpop.f32.mrb[0].mxu0
        %v8535 = vadd.f32 %v8455, %v8534
        %v8536 = vpop.f32.mrb[0].mxu0
        %8537 = vdwg.mxu0
        %v8538 = vld [vmem:[%s65] sm:$0xff]
        %v8539 = vld [vmem:[%s65 + $0x8] sm:$0xff]
        %8541 = vset.pattern.permute.xlu0 0
        %8542 = vperm.xlu0 %8541, %v8530
        %v8543 = vpop.permute.xlu0 %8542
        %8546 = vset.pattern.permute.xlu0 0
        %8547 = vperm.xlu0 %8546, %v8535
        %v8548 = vpop.permute.xlu0 %8547
        %v8550 = vmul.f32 %v8543, %v8538
        %v8551 = vmul.f32 %v8548, %v8539
        %vm8552 = vcmask 56320
        %v8553 = vsel %vm8552, %v8550, 0.0
        %v8554 = vsel %vm8552, %v8551, 0.0
        %v8555 = vadd.f32 %v8553, %v8554
        %v8556 = vrot.slane %v8555, 4
        %v8557 = vadd.f32 %v8555, %v8556
        %v8558 = vrot.slane %v8557, 2
        %v8559 = vadd.f32 %v8557, %v8558
        %v8560 = vrot.slane %v8559, 1
        %v8561 = vadd.f32 %v8559, %v8560
        %v8562 = vld [vmem:[#allocation38] sm:$0x1]
        %v8563 = vadd.f32 %v8561, %v8562
        %vm8564 = vcmask 49152
        %8565 = vst.msk [vmem:[%s2044] sm:$0x1] %vm8564, %v8563
        %s8566 = sand.u32 %s1223, 1
        %s8567 = scalar_lea.sflag [#allocation5], %s8566
        %s8568 = sand.u32 %s1223, 1
        %s8569 = scalar_lea.vmem [#allocation63], %s8568
        // Predicated region
        $region381: #{stpgcn_bottom_up_forward.1} parent=223 // pred_check
          %p8570 = pneg %p1233
        $region382: #{stpgcn_bottom_up_forward.1} parent=223 // pred_check_branch
          %8572 = sbr.rel (%p8570) target = $region384
        $region383: #{stpgcn_bottom_up_forward.1} parent=223 // pred_region
          %s8574 = ssub.s32 16, 16
          %8575 = vsyncadd %s8567, %s8574
          %s8576 = smul.addr %s139, 16
          %s8577 = scalar_lea.hbm %s103, %s8576
          %s8579 = sshll.u32 %s8569, 4
          %s8580 = int_to_ptr.vmem [resolvable:$true] %s8579
          %8582 = dma.vmem_to_hbm [thread:$0]  %s8580, 16, %s8577, %s8567
        $region384: #{stpgcn_bottom_up_forward.1} parent=223 // pred_fallthru
          _
      $region224: #{stpgcn_bottom_up_forward.1} parent=5 // pred_fallthru
        _
      %p8583 = scmp.le.s32.totalorder 2, %s134
      // Predicated region
      $region385: #{stpgcn_bottom_up_forward.1} parent=5 // pred_check
        %p8584 = pneg %p8583
      $region386: #{stpgcn_bottom_up_forward.1} parent=5 // pred_check_branch
        %8586 = sbr.rel (%p8584) target = $region388
      $region387: #{stpgcn_bottom_up_forward.1} parent=5 // pred_region
        %s8587 = ssub.s32 %s134, 2
        // Predicated region
        $region389: #{stpgcn_bottom_up_forward.1} parent=387 // pred_check
          %p8588 = pneg %p1239
        $region390: #{stpgcn_bottom_up_forward.1} parent=387 // pred_check_branch
          %8590 = sbr.rel (%p8588) target = $region392
        $region391: #{stpgcn_bottom_up_forward.1} parent=387 // pred_region
          %s8591 = sand.u32 %s1224, 1
          %s8592 = scalar_lea.sflag [#allocation5], %s8591
          %s8593 = sand.u32 %s1224, 1
          %s8594 = scalar_lea.vmem [#allocation63], %s8593
          %8595 = dma.done %s8592, 16
        $region392: #{stpgcn_bottom_up_forward.1} parent=387 // pred_fallthru
          _
      $region388: #{stpgcn_bottom_up_forward.1} parent=5 // pred_fallthru
        _
    $region6: #{stpgcn_bottom_up_forward.1} parent=1 // loop_footer
      %s138 = sadd.s32 1, %s134
    $region7: #{stpgcn_bottom_up_forward.1} parent=1 // loop_footer_branch
      %133 = sbr.rel target = $region3
    $region8: #{stpgcn_bottom_up_forward.1} parent=1 // loop_exit
      _
    %8596 = vsyncpa [#allocation4], 1
    %s8597 = scalar_lea.sflag [#allocation4], 1
    %8598 = vsyncpa %s8597, 1
    %8599 = vsyncpa [#allocation7], 1
    %8600 = vsyncpa [#allocation10], 1
    %8601 = vsyncpa [#allocation13], 1
    %8602 = vsyncpa [#allocation16], 1
    %8603 = vsyncpa [#allocation19], 1
    %8604 = vsyncpa [#allocation22], 1
    %8605 = vsyncpa [#allocation25], 1
    %8606 = vsyncpa [#allocation28], 1
    %8607 = vsyncpa [#allocation31], 1
    %8608 = vsyncpa [#allocation34], 1
    %8609 = vsyncpa [#allocation37], 1
    %8610 = vsyncpa [#allocation40], 1
    %8611 = vsyncpa [#allocation43], 1
    %8612 = vsyncpa [#allocation46], 1
    %8613 = vsyncpa [#allocation49], 1
    %8614 = vsyncpa [#allocation52], 1
    %8615 = vsyncpa [#allocation55], 1
    %8616 = vsyncpa [#allocation58], 1
    %8617 = vsyncpa [#allocation61], 1
    %8618 = vsyncpa [#allocation5], 1
    %s8619 = scalar_lea.sflag [#allocation5], 1
    %8620 = vsyncpa %s8619, 1

</llo_original>
